<compile_context>
chip_gen: v7x
topology: tpu7x:2x2x1
jax: 0.10.0
libtpu: 0.0.40
codegen_flags: <defaults>
</compile_context>

<pallas_src>
import functools

import jax
import jax.numpy as jnp
import numpy as np
from jax.experimental import pallas as pl
from jax.experimental.pallas import tpu as pltpu

_BN_EPS = 1e-5


# ----------------------------------------------------------------------------
# Small helpers
# ----------------------------------------------------------------------------
def _round_up(a, m):
    return (a + m - 1) // m * m


def _sublane_multiple(dtype):
    # sublane packing: f32 -> 8, bf16 -> 16, int8/fp8 -> 32
    return {4: 8, 2: 16, 1: 32}.get(jnp.dtype(dtype).itemsize, 8)


def fold_bn(gamma, beta, mean, var, eps=_BN_EPS):
    scale = gamma / jnp.sqrt(var + eps)
    shift = beta - mean * scale
    return scale, shift


def _vmem_capacity_bytes():
    try:
        cap = getattr(pltpu.get_tpu_info(), "vmem_capacity_bytes", None)
        if cap:
            return int(cap)
    except Exception:
        pass
    return 128 * 2**20      # v5e / v6e physical VMEM; v7x reports its own 64 MiB


# ----------------------------------------------------------------------------
# Fused BasicBlock kernel (one batch element per grid step)
# ----------------------------------------------------------------------------
def _basic_block_kernel(x_ref, ml_ref, mr_ref, w1_ref, b1_ref, w2_ref, b2_ref, *rest,
                        W, HW, PAD, has_proj):
    if has_proj:
        wsc_ref, bsc_ref, o_ref, xbuf, ybuf = rest
    else:
        o_ref, xbuf, ybuf = rest

    ml = ml_ref[...]     # (HW, 1): 0 where w == 0,   else 1  (left wrap-around mask)
    mr = mr_ref[...]     # (HW, 1): 0 where w == W-1, else 1  (right wrap-around mask)

    def stage(buf, val):
        # Interior [PAD, PAD+HW) is fully overwritten every step; only the small halo
        # rows need zeroing (handles the vertical conv boundary).
        c = buf.shape[-1]
        z = jnp.zeros((PAD, c), buf.dtype)
        buf[0:PAD, :] = z
        buf[PAD + HW:HW + 2 * PAD, :] = z
        buf[PAD:PAD + HW, :] = val

    def conv3x3(buf, w_ref, b_ref):
        # 9 per-tap matmuls accumulating in f32; taps are shifted dense slices of the
        # staged flat image — no im2col materialization, no padded-width waste.
        acc = None
        for t in range(9):
            kh, kw = divmod(t, 3)
            start = PAD + (kh - 1) * W + (kw - 1)
            tap = buf[start:start + HW, :]
            if kw == 0:
                tap = tap * ml
            elif kw == 2:
                tap = tap * mr
            p = jnp.dot(tap, w_ref[t], preferred_element_type=jnp.float32)
            acc = p if acc is None else acc + p
        return acc + b_ref[...]

    x = x_ref[0]                                             # (HW, Cin), input dtype

    # ---- conv1 + bn1(scale folded into w1) + relu
    stage(xbuf, x)
    o1 = jnp.maximum(conv3x3(xbuf, w1_ref, b1_ref), 0.0)     # (HW, C1) f32

    # ---- conv2 + bn2(scale folded into w2); intermediate never leaves VMEM
    stage(ybuf, o1.astype(ybuf.dtype))
    o2 = conv3x3(ybuf, w2_ref, b2_ref)                       # (HW, C2) f32

    # ---- fused shortcut: 1x1 conv + folded bn, or identity
    if has_proj:
        sc = jnp.dot(x, wsc_ref[...],
                     preferred_element_type=jnp.float32) + bsc_ref[...]
    else:
        sc = x.astype(jnp.float32)

    o_ref[0] = jnp.maximum(o2 + sc, 0.0).astype(o_ref.dtype)


def _vmem_bytes_estimate(HW, PAD, Cin, C1, C2, itemsize):
    est = 2 * HW * (Cin + C2) * itemsize                        # double-buffered in/out
    est += (9 * Cin * C1 + 9 * C1 * C2 + Cin * C2) * itemsize   # folded weights
    est += 2 * HW * itemsize                                    # column masks
    est += (HW + 2 * PAD) * (Cin + C1) * itemsize               # staging buffers
    est += HW * (C1 + 2 * C2) * 4                               # f32 accumulators
    return est


# ----------------------------------------------------------------------------
# pallas_call wrapper (NHWC in / NHWC out)
# ----------------------------------------------------------------------------
def basic_block_fused(x_nhwc, params, *, has_proj):
    N, H, W, Cin = x_nhwc.shape
    dt = x_nhwc.dtype
    C1 = params["w1"].shape[-1]
    C2 = params["w2"].shape[-1]
    if not has_proj:
        assert Cin == C2, "identity shortcut requires in_planes == expansion*planes"
    HW = H * W
    PAD = _round_up(W + 1, _sublane_multiple(dt))   # aligned halo rows in staging bufs

    # Fold BN scales into conv weights at trace time; only the bias goes to the kernel.
    s1, sh1 = fold_bn(*params["bn1"])
    s2, sh2 = fold_bn(*params["bn2"])
    w1f = (params["w1"] * s1).reshape(9, Cin, C1).astype(dt)    # (kh*kw, Cin, C1)
    w2f = (params["w2"] * s2).reshape(9, C1, C2).astype(dt)
    b1 = sh1.reshape(1, C1).astype(jnp.float32)
    b2 = sh2.reshape(1, C2).astype(jnp.float32)

    # Column masks for the flat-tap horizontal wrap-around (built statically).
    col = np.arange(HW, dtype=np.int64) % W
    mask_l = jnp.asarray((col != 0).astype(np.float32).reshape(HW, 1), dt)
    mask_r = jnp.asarray((col != W - 1).astype(np.float32).reshape(HW, 1), dt)

    x_flat = x_nhwc.reshape(N, HW, Cin)              # free contiguous reshape in HBM

    args = [x_flat, mask_l, mask_r, w1f, b1, w2f, b2]
    in_specs = [
        pl.BlockSpec((1, HW, Cin), lambda n: (n, 0, 0)),
        pl.BlockSpec((HW, 1), lambda n: (0, 0)),
        pl.BlockSpec((HW, 1), lambda n: (0, 0)),
        pl.BlockSpec((9, Cin, C1), lambda n: (0, 0, 0)),
        pl.BlockSpec((1, C1), lambda n: (0, 0)),
        pl.BlockSpec((9, C1, C2), lambda n: (0, 0, 0)),
        pl.BlockSpec((1, C2), lambda n: (0, 0)),
    ]
    flops_per_img = 2 * HW * (9 * Cin * C1 + 9 * C1 * C2)
    if has_proj:
        ssc, shsc = fold_bn(*params["bn_sc"])
        wscf = (params["w_sc"] * ssc).astype(dt)                # (Cin, C2)
        bsc = shsc.reshape(1, C2).astype(jnp.float32)
        args += [wscf, bsc]
        in_specs += [pl.BlockSpec((Cin, C2), lambda n: (0, 0)),
                     pl.BlockSpec((1, C2), lambda n: (0, 0))]
        flops_per_img += 2 * HW * Cin * C2

    itemsize = jnp.dtype(dt).itemsize
    bytes_accessed = int(
        N * HW * (Cin + C2) * itemsize
        + (9 * Cin * C1 + 9 * C1 * C2 + (Cin * C2 if has_proj else 0)) * itemsize
        + 2 * HW * itemsize + (C1 + 2 * C2) * 4)

    kernel = functools.partial(_basic_block_kernel, W=W, HW=HW, PAD=PAD,
                               has_proj=has_proj)

    vmem_est = _vmem_bytes_estimate(HW, PAD, Cin, C1, C2, itemsize)
    cap = _vmem_capacity_bytes()
    vmem_limit = int(min(max(2 * vmem_est, 16 * 2**20), (3 * cap) // 4))

    out_flat = pl.pallas_call(
        kernel,
        out_shape=jax.ShapeDtypeStruct((N, HW, C2), dt),
        grid=(N,),
        in_specs=in_specs,
        out_specs=pl.BlockSpec((1, HW, C2), lambda n: (n, 0, 0)),
        scratch_shapes=[pltpu.VMEM((HW + 2 * PAD, Cin), dt),    # staged x (zero halos)
                        pltpu.VMEM((HW + 2 * PAD, C1), dt)],    # staged conv1 output
        compiler_params=pltpu.CompilerParams(
            dimension_semantics=("parallel",),
            vmem_limit_bytes=vmem_limit),
        cost_estimate=pl.CostEstimate(flops=N * flops_per_img,
                                      transcendentals=0,
                                      bytes_accessed=bytes_accessed),
    )(*args)
    return out_flat.reshape(N, H, W, C2)


# ----------------------------------------------------------------------------
# Parameters + module-boundary forward (NCHW in / NCHW out, like the PyTorch spec)
# ----------------------------------------------------------------------------
def init_basic_block_params(key, in_planes, planes, stride=1):
    ks = jax.random.split(key, 6)

    def nrm(k, shape, s=0.1):
        return s * jax.random.normal(k, shape, jnp.float32)

    def bn_params(k):
        kg, kb, km, kv = jax.random.split(k, 4)
        gamma = 1.0 + 0.1 * jax.random.normal(kg, (planes,), jnp.float32)
        beta = 0.1 * jax.random.normal(kb, (planes,), jnp.float32)
        mean = 0.1 * jax.random.normal(km, (planes,), jnp.float32)
        var = jax.random.uniform(kv, (planes,), jnp.float32, minval=0.5, maxval=1.5)
        return (gamma, beta, mean, var)

    p = {
        "w1": nrm(ks[0], (3, 3, in_planes, planes)),   # HWIO
        "bn1": bn_params(ks[1]),
        "w2": nrm(ks[2], (3, 3, planes, planes)),
        "bn2": bn_params(ks[3]),
    }
    if stride != 1 or in_planes != planes:             # expansion = 1
        p["w_sc"] = nrm(ks[4], (in_planes, planes))    # 1x1 conv as (Cin, Cout)
        p["bn_sc"] = bn_params(ks[5])
    return p


def basic_block_forward(x_nchw, params, in_planes, planes, stride=1):
    # TODO(synk): stride>1 downsampling path not implemented in the Pallas kernel.
    assert stride == 1, "Pallas kernel implements the stride=1 BasicBlock config"
    x = jnp.transpose(x_nchw, (0, 2, 3, 1))            # NCHW -> NHWC
    has_proj = (stride != 1) or (in_planes != planes)
    out = basic_block_fused(x, params, has_proj=has_proj)
    return jnp.transpose(out, (0, 3, 1, 2))            # NHWC -> NCHW


# ----------------------------------------------------------------------------
# Pure-JAX reference for verification
# ----------------------------------------------------------------------------
def _ref_conv(x_nhwc, w_hwio, stride, padding):
    return jax.lax.conv_general_dilated(
        x_nhwc, w_hwio, window_strides=(stride, stride), padding=padding,
        dimension_numbers=("NHWC", "HWIO", "NHWC"))


def basic_block_reference(x_nchw, params, in_planes, planes, stride=1):
    x = jnp.transpose(x_nchw, (0, 2, 3, 1))
    s1, b1 = fold_bn(*params["bn1"])
    out = _ref_conv(x, params["w1"], stride, "SAME") * s1 + b1
    out = jnp.maximum(out, 0.0)
    s2, b2 = fold_bn(*params["bn2"])
    out = _ref_conv(out, params["w2"], 1, "SAME") * s2 + b2
    if stride != 1 or in_planes != planes:
        ssc, bsc = fold_bn(*params["bn_sc"])
        w_sc = params["w_sc"].reshape(1, 1, in_planes, planes)
        sc = _ref_conv(x, w_sc, stride, "VALID") * ssc + bsc
    else:
        sc = x
    out = jnp.maximum(out + sc, 0.0)
    return jnp.transpose(out, (0, 3, 1, 2))


# ----------------------------------------------------------------------------
if __name__ == "__main__":
    key = jax.random.PRNGKey(0)
    N, H, W = 2, 16, 16

    # Exercise both shortcut variants: 1x1 projection (4->8) and identity (8->8).
    for in_planes, planes in [(4, 8), (8, 8)]:
        k_x, k_p, key = jax.random.split(key, 3)
        x_nchw = jax.random.normal(k_x, (N, in_planes, H, W), jnp.float32)
        params = init_basic_block_params(k_p, in_planes, planes, stride=1)

        out = jax.block_until_ready(
            basic_block_forward(x_nchw, params, in_planes, planes, 1))
        ref = jax.block_until_ready(
            basic_block_reference(x_nchw, params, in_planes, planes, 1))

        assert out.shape == (N, planes, H, W), out.shape
        np.testing.assert_allclose(np.asarray(out), np.asarray(ref),
                                   rtol=1e-4, atol=2e-4)

    print("KERNEL_OK")
</pallas_src>

<mosaic_0001>
module attributes {stable_mosaic.version = 11 : i64} {
  func.func @_basic_block_kernel(%arg0: i32, %arg1: memref<1x256x4xf32, #tpu.memory_space<vmem>>, %arg2: memref<256x1xf32, #tpu.memory_space<vmem>>, %arg3: memref<256x1xf32, #tpu.memory_space<vmem>>, %arg4: memref<9x4x8xf32, #tpu.memory_space<vmem>>, %arg5: memref<1x8xf32, #tpu.memory_space<vmem>>, %arg6: memref<9x8x8xf32, #tpu.memory_space<vmem>>, %arg7: memref<1x8xf32, #tpu.memory_space<vmem>>, %arg8: memref<4x8xf32, #tpu.memory_space<vmem>>, %arg9: memref<1x8xf32, #tpu.memory_space<vmem>>, %arg10: memref<1x256x8xf32, #tpu.memory_space<vmem>>, %arg11: memref<304x4xf32, #tpu.memory_space<vmem>>, %arg12: memref<304x8xf32, #tpu.memory_space<vmem>>) attributes {dimension_semantics = [#tpu.dimension_semantics<parallel>], iteration_bounds = array<i64: 2>, scalar_prefetch = 0 : i64, scratch_operands = 2 : i64, tpu.core_type = #tpu.core_type<tc>, window_params = [{transform_indices = @transform_0, window_bounds = array<i64: 1, 256, 4>}, {pipeline_mode = #tpu.pipeline_mode<synchronous>, transform_indices = @transform_1, window_bounds = array<i64: 256, 1>}, {pipeline_mode = #tpu.pipeline_mode<synchronous>, transform_indices = @transform_2, window_bounds = array<i64: 256, 1>}, {pipeline_mode = #tpu.pipeline_mode<synchronous>, transform_indices = @transform_3, window_bounds = array<i64: 9, 4, 8>}, {pipeline_mode = #tpu.pipeline_mode<synchronous>, transform_indices = @transform_4, window_bounds = array<i64: 1, 8>}, {pipeline_mode = #tpu.pipeline_mode<synchronous>, transform_indices = @transform_5, window_bounds = array<i64: 9, 8, 8>}, {pipeline_mode = #tpu.pipeline_mode<synchronous>, transform_indices = @transform_6, window_bounds = array<i64: 1, 8>}, {pipeline_mode = #tpu.pipeline_mode<synchronous>, transform_indices = @transform_7, window_bounds = array<i64: 4, 8>}, {pipeline_mode = #tpu.pipeline_mode<synchronous>, transform_indices = @transform_8, window_bounds = array<i64: 1, 8>}, {transform_indices = @transform_9, window_bounds = array<i64: 1, 256, 8>}]} {
    %c0 = arith.constant 0 : index
    %c0_0 = arith.constant 0 : index
    %0 = vector.load %arg2[%c0, %c0_0] : memref<256x1xf32, #tpu.memory_space<vmem>>, vector<256x1xf32>
    %c0_1 = arith.constant 0 : index
    %c0_2 = arith.constant 0 : index
    %1 = vector.load %arg3[%c0_1, %c0_2] : memref<256x1xf32, #tpu.memory_space<vmem>>, vector<256x1xf32>
    %c0_3 = arith.constant 0 : index
    %c0_4 = arith.constant 0 : index
    %c0_5 = arith.constant 0 : index
    %2 = vector.load %arg1[%c0_3, %c0_4, %c0_5] : memref<1x256x4xf32, #tpu.memory_space<vmem>>, vector<1x256x4xf32>
    %3 = vector.shape_cast %2 : vector<1x256x4xf32> to vector<256x4xf32>
    %cst = arith.constant 0.000000e+00 : f32
    %4 = vector.broadcast %cst : f32 to vector<24x4xf32>
    %c0_6 = arith.constant 0 : index
    %c0_7 = arith.constant 0 : index
    %5 = vector.load %arg11[%c0_6, %c0_7] : memref<304x4xf32, #tpu.memory_space<vmem>>, vector<24x4xf32>
    tpu.vector_store %arg11[%c0_6, %c0_7], %4 {strides = array<i32>} : memref<304x4xf32, #tpu.memory_space<vmem>>, vector<24x4xf32>,
    %c280 = arith.constant 280 : index
    %c0_8 = arith.constant 0 : index
    %6 = vector.load %arg11[%c280, %c0_8] : memref<304x4xf32, #tpu.memory_space<vmem>>, vector<24x4xf32>
    tpu.vector_store %arg11[%c280, %c0_8], %4 {strides = array<i32>} : memref<304x4xf32, #tpu.memory_space<vmem>>, vector<24x4xf32>,
    %c24 = arith.constant 24 : index
    %c0_9 = arith.constant 0 : index
    %7 = vector.load %arg11[%c24, %c0_9] : memref<304x4xf32, #tpu.memory_space<vmem>>, vector<256x4xf32>
    tpu.vector_store %arg11[%c24, %c0_9], %3 {strides = array<i32>} : memref<304x4xf32, #tpu.memory_space<vmem>>, vector<256x4xf32>,
    %c7 = arith.constant 7 : index
    %c0_10 = arith.constant 0 : index
    %8 = vector.load %arg11[%c7, %c0_10] : memref<304x4xf32, #tpu.memory_space<vmem>>, vector<256x4xf32>
    %9 = vector.broadcast %0 : vector<256x1xf32> to vector<256x4xf32>
    %10 = arith.mulf %8, %9 : vector<256x4xf32>
    %c0_11 = arith.constant 0 : index
    %c0_12 = arith.constant 0 : index
    %c0_13 = arith.constant 0 : index
    %11 = vector.load %arg4[%c0_11, %c0_12, %c0_13] : memref<9x4x8xf32, #tpu.memory_space<vmem>>, vector<1x4x8xf32>
    %12 = vector.shape_cast %11 : vector<1x4x8xf32> to vector<4x8xf32>
    %cst_14 = arith.constant dense<0.000000e+00> : vector<256x8xf32>
    %13 = tpu.matmul %10, %12, %cst_14 {dimension_numbers = #tpu.dot_dimension_numbers<[1], [0], [0], [1], [0, 0, 1, 1], [], []>} : vector<256x4xf32>, vector<4x8xf32>, vector<256x8xf32> -> vector<256x8xf32>
    %c8 = arith.constant 8 : index
    %c0_15 = arith.constant 0 : index
    %14 = vector.load %arg11[%c8, %c0_15] : memref<304x4xf32, #tpu.memory_space<vmem>>, vector<256x4xf32>
    %c1 = arith.constant 1 : index
    %c0_16 = arith.constant 0 : index
    %c0_17 = arith.constant 0 : index
    %15 = vector.load %arg4[%c1, %c0_16, %c0_17] : memref<9x4x8xf32, #tpu.memory_space<vmem>>, vector<1x4x8xf32>
    %16 = vector.shape_cast %15 : vector<1x4x8xf32> to vector<4x8xf32>
    %cst_18 = arith.constant dense<0.000000e+00> : vector<256x8xf32>
    %17 = tpu.matmul %14, %16, %cst_18 {dimension_numbers = #tpu.dot_dimension_numbers<[1], [0], [0], [1], [0, 0, 1, 1], [], []>} : vector<256x4xf32>, vector<4x8xf32>, vector<256x8xf32> -> vector<256x8xf32>
    %18 = arith.addf %13, %17 : vector<256x8xf32>
    %c9 = arith.constant 9 : index
    %c0_19 = arith.constant 0 : index
    %19 = vector.load %arg11[%c9, %c0_19] : memref<304x4xf32, #tpu.memory_space<vmem>>, vector<256x4xf32>
    %20 = vector.broadcast %1 : vector<256x1xf32> to vector<256x4xf32>
    %21 = arith.mulf %19, %20 : vector<256x4xf32>
    %c2 = arith.constant 2 : index
    %c0_20 = arith.constant 0 : index
    %c0_21 = arith.constant 0 : index
    %22 = vector.load %arg4[%c2, %c0_20, %c0_21] : memref<9x4x8xf32, #tpu.memory_space<vmem>>, vector<1x4x8xf32>
    %23 = vector.shape_cast %22 : vector<1x4x8xf32> to vector<4x8xf32>
    %cst_22 = arith.constant dense<0.000000e+00> : vector<256x8xf32>
    %24 = tpu.matmul %21, %23, %cst_22 {dimension_numbers = #tpu.dot_dimension_numbers<[1], [0], [0], [1], [0, 0, 1, 1], [], []>} : vector<256x4xf32>, vector<4x8xf32>, vector<256x8xf32> -> vector<256x8xf32>
    %25 = arith.addf %18, %24 : vector<256x8xf32>
    %c23 = arith.constant 23 : index
    %c0_23 = arith.constant 0 : index
    %26 = vector.load %arg11[%c23, %c0_23] : memref<304x4xf32, #tpu.memory_space<vmem>>, vector<256x4xf32>
    %27 = vector.broadcast %0 : vector<256x1xf32> to vector<256x4xf32>
    %28 = arith.mulf %26, %27 : vector<256x4xf32>
    %c3 = arith.constant 3 : index
    %c0_24 = arith.constant 0 : index
    %c0_25 = arith.constant 0 : index
    %29 = vector.load %arg4[%c3, %c0_24, %c0_25] : memref<9x4x8xf32, #tpu.memory_space<vmem>>, vector<1x4x8xf32>
    %30 = vector.shape_cast %29 : vector<1x4x8xf32> to vector<4x8xf32>
    %cst_26 = arith.constant dense<0.000000e+00> : vector<256x8xf32>
    %31 = tpu.matmul %28, %30, %cst_26 {dimension_numbers = #tpu.dot_dimension_numbers<[1], [0], [0], [1], [0, 0, 1, 1], [], []>} : vector<256x4xf32>, vector<4x8xf32>, vector<256x8xf32> -> vector<256x8xf32>
    %32 = arith.addf %25, %31 : vector<256x8xf32>
    %c24_27 = arith.constant 24 : index
    %c0_28 = arith.constant 0 : index
    %33 = vector.load %arg11[%c24_27, %c0_28] : memref<304x4xf32, #tpu.memory_space<vmem>>, vector<256x4xf32>
    %c4 = arith.constant 4 : index
    %c0_29 = arith.constant 0 : index
    %c0_30 = arith.constant 0 : index
    %34 = vector.load %arg4[%c4, %c0_29, %c0_30] : memref<9x4x8xf32, #tpu.memory_space<vmem>>, vector<1x4x8xf32>
    %35 = vector.shape_cast %34 : vector<1x4x8xf32> to vector<4x8xf32>
    %cst_31 = arith.constant dense<0.000000e+00> : vector<256x8xf32>
    %36 = tpu.matmul %33, %35, %cst_31 {dimension_numbers = #tpu.dot_dimension_numbers<[1], [0], [0], [1], [0, 0, 1, 1], [], []>} : vector<256x4xf32>, vector<4x8xf32>, vector<256x8xf32> -> vector<256x8xf32>
    %37 = arith.addf %32, %36 : vector<256x8xf32>
    %c25 = arith.constant 25 : index
    %c0_32 = arith.constant 0 : index
    %38 = vector.load %arg11[%c25, %c0_32] : memref<304x4xf32, #tpu.memory_space<vmem>>, vector<256x4xf32>
    %39 = vector.broadcast %1 : vector<256x1xf32> to vector<256x4xf32>
    %40 = arith.mulf %38, %39 : vector<256x4xf32>
    %c5 = arith.constant 5 : index
    %c0_33 = arith.constant 0 : index
    %c0_34 = arith.constant 0 : index
    %41 = vector.load %arg4[%c5, %c0_33, %c0_34] : memref<9x4x8xf32, #tpu.memory_space<vmem>>, vector<1x4x8xf32>
    %42 = vector.shape_cast %41 : vector<1x4x8xf32> to vector<4x8xf32>
    %cst_35 = arith.constant dense<0.000000e+00> : vector<256x8xf32>
    %43 = tpu.matmul %40, %42, %cst_35 {dimension_numbers = #tpu.dot_dimension_numbers<[1], [0], [0], [1], [0, 0, 1, 1], [], []>} : vector<256x4xf32>, vector<4x8xf32>, vector<256x8xf32> -> vector<256x8xf32>
    %44 = arith.addf %37, %43 : vector<256x8xf32>
    %c39 = arith.constant 39 : index
    %c0_36 = arith.constant 0 : index
    %45 = vector.load %arg11[%c39, %c0_36] : memref<304x4xf32, #tpu.memory_space<vmem>>, vector<256x4xf32>
    %46 = vector.broadcast %0 : vector<256x1xf32> to vector<256x4xf32>
    %47 = arith.mulf %45, %46 : vector<256x4xf32>
    %c6 = arith.constant 6 : index
    %c0_37 = arith.constant 0 : index
    %c0_38 = arith.constant 0 : index
    %48 = vector.load %arg4[%c6, %c0_37, %c0_38] : memref<9x4x8xf32, #tpu.memory_space<vmem>>, vector<1x4x8xf32>
    %49 = vector.shape_cast %48 : vector<1x4x8xf32> to vector<4x8xf32>
    %cst_39 = arith.constant dense<0.000000e+00> : vector<256x8xf32>
    %50 = tpu.matmul %47, %49, %cst_39 {dimension_numbers = #tpu.dot_dimension_numbers<[1], [0], [0], [1], [0, 0, 1, 1], [], []>} : vector<256x4xf32>, vector<4x8xf32>, vector<256x8xf32> -> vector<256x8xf32>
    %51 = arith.addf %44, %50 : vector<256x8xf32>
    %c40 = arith.constant 40 : index
    %c0_40 = arith.constant 0 : index
    %52 = vector.load %arg11[%c40, %c0_40] : memref<304x4xf32, #tpu.memory_space<vmem>>, vector<256x4xf32>
    %c7_41 = arith.constant 7 : index
    %c0_42 = arith.constant 0 : index
    %c0_43 = arith.constant 0 : index
    %53 = vector.load %arg4[%c7_41, %c0_42, %c0_43] : memref<9x4x8xf32, #tpu.memory_space<vmem>>, vector<1x4x8xf32>
    %54 = vector.shape_cast %53 : vector<1x4x8xf32> to vector<4x8xf32>
    %cst_44 = arith.constant dense<0.000000e+00> : vector<256x8xf32>
    %55 = tpu.matmul %52, %54, %cst_44 {dimension_numbers = #tpu.dot_dimension_numbers<[1], [0], [0], [1], [0, 0, 1, 1], [], []>} : vector<256x4xf32>, vector<4x8xf32>, vector<256x8xf32> -> vector<256x8xf32>
    %56 = arith.addf %51, %55 : vector<256x8xf32>
    %c41 = arith.constant 41 : index
    %c0_45 = arith.constant 0 : index
    %57 = vector.load %arg11[%c41, %c0_45] : memref<304x4xf32, #tpu.memory_space<vmem>>, vector<256x4xf32>
    %58 = vector.broadcast %1 : vector<256x1xf32> to vector<256x4xf32>
    %59 = arith.mulf %57, %58 : vector<256x4xf32>
    %c8_46 = arith.constant 8 : index
    %c0_47 = arith.constant 0 : index
    %c0_48 = arith.constant 0 : index
    %60 = vector.load %arg4[%c8_46, %c0_47, %c0_48] : memref<9x4x8xf32, #tpu.memory_space<vmem>>, vector<1x4x8xf32>
    %61 = vector.shape_cast %60 : vector<1x4x8xf32> to vector<4x8xf32>
    %cst_49 = arith.constant dense<0.000000e+00> : vector<256x8xf32>
    %62 = tpu.matmul %59, %61, %cst_49 {dimension_numbers = #tpu.dot_dimension_numbers<[1], [0], [0], [1], [0, 0, 1, 1], [], []>} : vector<256x4xf32>, vector<4x8xf32>, vector<256x8xf32> -> vector<256x8xf32>
    %63 = arith.addf %56, %62 : vector<256x8xf32>
    %c0_50 = arith.constant 0 : index
    %c0_51 = arith.constant 0 : index
    %64 = vector.load %arg5[%c0_50, %c0_51] : memref<1x8xf32, #tpu.memory_space<vmem>>, vector<1x8xf32>
    %65 = vector.broadcast %64 : vector<1x8xf32> to vector<256x8xf32>
    %66 = arith.addf %63, %65 : vector<256x8xf32>
    %cst_52 = arith.constant 0.000000e+00 : f32
    %67 = vector.broadcast %cst_52 : f32 to vector<256x8xf32>
    %68 = arith.maximumf %66, %67 : vector<256x8xf32>
    %cst_53 = arith.constant 0.000000e+00 : f32
    %69 = vector.broadcast %cst_53 : f32 to vector<24x8xf32>
    %c0_54 = arith.constant 0 : index
    %c0_55 = arith.constant 0 : index
    %70 = vector.load %arg12[%c0_54, %c0_55] : memref<304x8xf32, #tpu.memory_space<vmem>>, vector<24x8xf32>
    tpu.vector_store %arg12[%c0_54, %c0_55], %69 {strides = array<i32>} : memref<304x8xf32, #tpu.memory_space<vmem>>, vector<24x8xf32>,
    %c280_56 = arith.constant 280 : index
    %c0_57 = arith.constant 0 : index
    %71 = vector.load %arg12[%c280_56, %c0_57] : memref<304x8xf32, #tpu.memory_space<vmem>>, vector<24x8xf32>
    tpu.vector_store %arg12[%c280_56, %c0_57], %69 {strides = array<i32>} : memref<304x8xf32, #tpu.memory_space<vmem>>, vector<24x8xf32>,
    %c24_58 = arith.constant 24 : index
    %c0_59 = arith.constant 0 : index
    %72 = vector.load %arg12[%c24_58, %c0_59] : memref<304x8xf32, #tpu.memory_space<vmem>>, vector<256x8xf32>
    tpu.vector_store %arg12[%c24_58, %c0_59], %68 {strides = array<i32>} : memref<304x8xf32, #tpu.memory_space<vmem>>, vector<256x8xf32>,
    %c7_60 = arith.constant 7 : index
    %c0_61 = arith.constant 0 : index
    %73 = vector.load %arg12[%c7_60, %c0_61] : memref<304x8xf32, #tpu.memory_space<vmem>>, vector<256x8xf32>
    %74 = vector.broadcast %0 : vector<256x1xf32> to vector<256x8xf32>
    %75 = arith.mulf %73, %74 : vector<256x8xf32>
    %c0_62 = arith.constant 0 : index
    %c0_63 = arith.constant 0 : index
    %c0_64 = arith.constant 0 : index
    %76 = vector.load %arg6[%c0_62, %c0_63, %c0_64] : memref<9x8x8xf32, #tpu.memory_space<vmem>>, vector<1x8x8xf32>
    %77 = vector.shape_cast %76 : vector<1x8x8xf32> to vector<8x8xf32>
    %cst_65 = arith.constant dense<0.000000e+00> : vector<256x8xf32>
    %78 = tpu.matmul %75, %77, %cst_65 {dimension_numbers = #tpu.dot_dimension_numbers<[1], [0], [0], [1], [0, 0, 1, 1], [], []>} : vector<256x8xf32>, vector<8x8xf32>, vector<256x8xf32> -> vector<256x8xf32>
    %c8_66 = arith.constant 8 : index
    %c0_67 = arith.constant 0 : index
    %79 = vector.load %arg12[%c8_66, %c0_67] : memref<304x8xf32, #tpu.memory_space<vmem>>, vector<256x8xf32>
    %c1_68 = arith.constant 1 : index
    %c0_69 = arith.constant 0 : index
    %c0_70 = arith.constant 0 : index
    %80 = vector.load %arg6[%c1_68, %c0_69, %c0_70] : memref<9x8x8xf32, #tpu.memory_space<vmem>>, vector<1x8x8xf32>
    %81 = vector.shape_cast %80 : vector<1x8x8xf32> to vector<8x8xf32>
    %cst_71 = arith.constant dense<0.000000e+00> : vector<256x8xf32>
    %82 = tpu.matmul %79, %81, %cst_71 {dimension_numbers = #tpu.dot_dimension_numbers<[1], [0], [0], [1], [0, 0, 1, 1], [], []>} : vector<256x8xf32>, vector<8x8xf32>, vector<256x8xf32> -> vector<256x8xf32>
    %83 = arith.addf %78, %82 : vector<256x8xf32>
    %c9_72 = arith.constant 9 : index
    %c0_73 = arith.constant 0 : index
    %84 = vector.load %arg12[%c9_72, %c0_73] : memref<304x8xf32, #tpu.memory_space<vmem>>, vector<256x8xf32>
    %85 = vector.broadcast %1 : vector<256x1xf32> to vector<256x8xf32>
    %86 = arith.mulf %84, %85 : vector<256x8xf32>
    %c2_74 = arith.constant 2 : index
    %c0_75 = arith.constant 0 : index
    %c0_76 = arith.constant 0 : index
    %87 = vector.load %arg6[%c2_74, %c0_75, %c0_76] : memref<9x8x8xf32, #tpu.memory_space<vmem>>, vector<1x8x8xf32>
    %88 = vector.shape_cast %87 : vector<1x8x8xf32> to vector<8x8xf32>
    %cst_77 = arith.constant dense<0.000000e+00> : vector<256x8xf32>
    %89 = tpu.matmul %86, %88, %cst_77 {dimension_numbers = #tpu.dot_dimension_numbers<[1], [0], [0], [1], [0, 0, 1, 1], [], []>} : vector<256x8xf32>, vector<8x8xf32>, vector<256x8xf32> -> vector<256x8xf32>
    %90 = arith.addf %83, %89 : vector<256x8xf32>
    %c23_78 = arith.constant 23 : index
    %c0_79 = arith.constant 0 : index
    %91 = vector.load %arg12[%c23_78, %c0_79] : memref<304x8xf32, #tpu.memory_space<vmem>>, vector<256x8xf32>
    %92 = vector.broadcast %0 : vector<256x1xf32> to vector<256x8xf32>
    %93 = arith.mulf %91, %92 : vector<256x8xf32>
    %c3_80 = arith.constant 3 : index
    %c0_81 = arith.constant 0 : index
    %c0_82 = arith.constant 0 : index
    %94 = vector.load %arg6[%c3_80, %c0_81, %c0_82] : memref<9x8x8xf32, #tpu.memory_space<vmem>>, vector<1x8x8xf32>
    %95 = vector.shape_cast %94 : vector<1x8x8xf32> to vector<8x8xf32>
    %cst_83 = arith.constant dense<0.000000e+00> : vector<256x8xf32>
    %96 = tpu.matmul %93, %95, %cst_83 {dimension_numbers = #tpu.dot_dimension_numbers<[1], [0], [0], [1], [0, 0, 1, 1], [], []>} : vector<256x8xf32>, vector<8x8xf32>, vector<256x8xf32> -> vector<256x8xf32>
    %97 = arith.addf %90, %96 : vector<256x8xf32>
    %c24_84 = arith.constant 24 : index
    %c0_85 = arith.constant 0 : index
    %98 = vector.load %arg12[%c24_84, %c0_85] : memref<304x8xf32, #tpu.memory_space<vmem>>, vector<256x8xf32>
    %c4_86 = arith.constant 4 : index
    %c0_87 = arith.constant 0 : index
    %c0_88 = arith.constant 0 : index
    %99 = vector.load %arg6[%c4_86, %c0_87, %c0_88] : memref<9x8x8xf32, #tpu.memory_space<vmem>>, vector<1x8x8xf32>
    %100 = vector.shape_cast %99 : vector<1x8x8xf32> to vector<8x8xf32>
    %cst_89 = arith.constant dense<0.000000e+00> : vector<256x8xf32>
    %101 = tpu.matmul %98, %100, %cst_89 {dimension_numbers = #tpu.dot_dimension_numbers<[1], [0], [0], [1], [0, 0, 1, 1], [], []>} : vector<256x8xf32>, vector<8x8xf32>, vector<256x8xf32> -> vector<256x8xf32>
    %102 = arith.addf %97, %101 : vector<256x8xf32>
    %c25_90 = arith.constant 25 : index
    %c0_91 = arith.constant 0 : index
    %103 = vector.load %arg12[%c25_90, %c0_91] : memref<304x8xf32, #tpu.memory_space<vmem>>, vector<256x8xf32>
    %104 = vector.broadcast %1 : vector<256x1xf32> to vector<256x8xf32>
    %105 = arith.mulf %103, %104 : vector<256x8xf32>
    %c5_92 = arith.constant 5 : index
    %c0_93 = arith.constant 0 : index
    %c0_94 = arith.constant 0 : index
    %106 = vector.load %arg6[%c5_92, %c0_93, %c0_94] : memref<9x8x8xf32, #tpu.memory_space<vmem>>, vector<1x8x8xf32>
    %107 = vector.shape_cast %106 : vector<1x8x8xf32> to vector<8x8xf32>
    %cst_95 = arith.constant dense<0.000000e+00> : vector<256x8xf32>
    %108 = tpu.matmul %105, %107, %cst_95 {dimension_numbers = #tpu.dot_dimension_numbers<[1], [0], [0], [1], [0, 0, 1, 1], [], []>} : vector<256x8xf32>, vector<8x8xf32>, vector<256x8xf32> -> vector<256x8xf32>
    %109 = arith.addf %102, %108 : vector<256x8xf32>
    %c39_96 = arith.constant 39 : index
    %c0_97 = arith.constant 0 : index
    %110 = vector.load %arg12[%c39_96, %c0_97] : memref<304x8xf32, #tpu.memory_space<vmem>>, vector<256x8xf32>
    %111 = vector.broadcast %0 : vector<256x1xf32> to vector<256x8xf32>
    %112 = arith.mulf %110, %111 : vector<256x8xf32>
    %c6_98 = arith.constant 6 : index
    %c0_99 = arith.constant 0 : index
    %c0_100 = arith.constant 0 : index
    %113 = vector.load %arg6[%c6_98, %c0_99, %c0_100] : memref<9x8x8xf32, #tpu.memory_space<vmem>>, vector<1x8x8xf32>
    %114 = vector.shape_cast %113 : vector<1x8x8xf32> to vector<8x8xf32>
    %cst_101 = arith.constant dense<0.000000e+00> : vector<256x8xf32>
    %115 = tpu.matmul %112, %114, %cst_101 {dimension_numbers = #tpu.dot_dimension_numbers<[1], [0], [0], [1], [0, 0, 1, 1], [], []>} : vector<256x8xf32>, vector<8x8xf32>, vector<256x8xf32> -> vector<256x8xf32>
    %116 = arith.addf %109, %115 : vector<256x8xf32>
    %c40_102 = arith.constant 40 : index
    %c0_103 = arith.constant 0 : index
    %117 = vector.load %arg12[%c40_102, %c0_103] : memref<304x8xf32, #tpu.memory_space<vmem>>, vector<256x8xf32>
    %c7_104 = arith.constant 7 : index
    %c0_105 = arith.constant 0 : index
    %c0_106 = arith.constant 0 : index
    %118 = vector.load %arg6[%c7_104, %c0_105, %c0_106] : memref<9x8x8xf32, #tpu.memory_space<vmem>>, vector<1x8x8xf32>
    %119 = vector.shape_cast %118 : vector<1x8x8xf32> to vector<8x8xf32>
    %cst_107 = arith.constant dense<0.000000e+00> : vector<256x8xf32>
    %120 = tpu.matmul %117, %119, %cst_107 {dimension_numbers = #tpu.dot_dimension_numbers<[1], [0], [0], [1], [0, 0, 1, 1], [], []>} : vector<256x8xf32>, vector<8x8xf32>, vector<256x8xf32> -> vector<256x8xf32>
    %121 = arith.addf %116, %120 : vector<256x8xf32>
    %c41_108 = arith.constant 41 : index
    %c0_109 = arith.constant 0 : index
    %122 = vector.load %arg12[%c41_108, %c0_109] : memref<304x8xf32, #tpu.memory_space<vmem>>, vector<256x8xf32>
    %123 = vector.broadcast %1 : vector<256x1xf32> to vector<256x8xf32>
    %124 = arith.mulf %122, %123 : vector<256x8xf32>
    %c8_110 = arith.constant 8 : index
    %c0_111 = arith.constant 0 : index
    %c0_112 = arith.constant 0 : index
    %125 = vector.load %arg6[%c8_110, %c0_111, %c0_112] : memref<9x8x8xf32, #tpu.memory_space<vmem>>, vector<1x8x8xf32>
    %126 = vector.shape_cast %125 : vector<1x8x8xf32> to vector<8x8xf32>
    %cst_113 = arith.constant dense<0.000000e+00> : vector<256x8xf32>
    %127 = tpu.matmul %124, %126, %cst_113 {dimension_numbers = #tpu.dot_dimension_numbers<[1], [0], [0], [1], [0, 0, 1, 1], [], []>} : vector<256x8xf32>, vector<8x8xf32>, vector<256x8xf32> -> vector<256x8xf32>
    %128 = arith.addf %121, %127 : vector<256x8xf32>
    %c0_114 = arith.constant 0 : index
    %c0_115 = arith.constant 0 : index
    %129 = vector.load %arg7[%c0_114, %c0_115] : memref<1x8xf32, #tpu.memory_space<vmem>>, vector<1x8xf32>
    %130 = vector.broadcast %129 : vector<1x8xf32> to vector<256x8xf32>
    %131 = arith.addf %128, %130 : vector<256x8xf32>
    %c0_116 = arith.constant 0 : index
    %c0_117 = arith.constant 0 : index
    %132 = vector.load %arg8[%c0_116, %c0_117] : memref<4x8xf32, #tpu.memory_space<vmem>>, vector<4x8xf32>
    %cst_118 = arith.constant dense<0.000000e+00> : vector<256x8xf32>
    %133 = tpu.matmul %3, %132, %cst_118 {dimension_numbers = #tpu.dot_dimension_numbers<[1], [0], [0], [1], [0, 0, 1, 1], [], []>} : vector<256x4xf32>, vector<4x8xf32>, vector<256x8xf32> -> vector<256x8xf32>
    %c0_119 = arith.constant 0 : index
    %c0_120 = arith.constant 0 : index
    %134 = vector.load %arg9[%c0_119, %c0_120] : memref<1x8xf32, #tpu.memory_space<vmem>>, vector<1x8xf32>
    %135 = vector.broadcast %134 : vector<1x8xf32> to vector<256x8xf32>
    %136 = arith.addf %133, %135 : vector<256x8xf32>
    %137 = arith.addf %131, %136 : vector<256x8xf32>
    %cst_121 = arith.constant 0.000000e+00 : f32
    %138 = vector.broadcast %cst_121 : f32 to vector<256x8xf32>
    %139 = arith.maximumf %137, %138 : vector<256x8xf32>
    %c0_122 = arith.constant 0 : index
    %c0_123 = arith.constant 0 : index
    %c0_124 = arith.constant 0 : index
    %140 = vector.load %arg10[%c0_122, %c0_123, %c0_124] : memref<1x256x8xf32, #tpu.memory_space<vmem>>, vector<1x256x8xf32>
    %141 = vector.shape_cast %140 : vector<1x256x8xf32> to vector<256x8xf32>
    %142 = vector.shape_cast %139 : vector<256x8xf32> to vector<1x256x8xf32>
    tpu.vector_store %arg10[%c0_122, %c0_123, %c0_124], %142 {strides = array<i32>} : memref<1x256x8xf32, #tpu.memory_space<vmem>>, vector<1x256x8xf32>,
    return
  }
  func.func @transform_0(%arg0: i32) -> (i32, i32, i32) {
    %c0_i32 = arith.constant 0 : i32
    %c0_i32_0 = arith.constant 0 : i32
    %c0_i32_1 = arith.constant 0 : i32
    return %arg0, %c0_i32, %c0_i32_0 : i32, i32, i32
  }
  func.func @transform_1(%arg0: i32) -> (i32, i32) {
    %c0_i32 = arith.constant 0 : i32
    %c0_i32_0 = arith.constant 0 : i32
    %c0_i32_1 = arith.constant 0 : i32
    return %c0_i32, %c0_i32_0 : i32, i32
  }
  func.func @transform_2(%arg0: i32) -> (i32, i32) {
    %c0_i32 = arith.constant 0 : i32
    %c0_i32_0 = arith.constant 0 : i32
    %c0_i32_1 = arith.constant 0 : i32
    return %c0_i32, %c0_i32_0 : i32, i32
  }
  func.func @transform_3(%arg0: i32) -> (i32, i32, i32) {
    %c0_i32 = arith.constant 0 : i32
    %c0_i32_0 = arith.constant 0 : i32
    %c0_i32_1 = arith.constant 0 : i32
    %c0_i32_2 = arith.constant 0 : i32
    return %c0_i32, %c0_i32_0, %c0_i32_1 : i32, i32, i32
  }
  func.func @transform_4(%arg0: i32) -> (i32, i32) {
    %c0_i32 = arith.constant 0 : i32
    %c0_i32_0 = arith.constant 0 : i32
    %c0_i32_1 = arith.constant 0 : i32
    return %c0_i32, %c0_i32_0 : i32, i32
  }
  func.func @transform_5(%arg0: i32) -> (i32, i32, i32) {
    %c0_i32 = arith.constant 0 : i32
    %c0_i32_0 = arith.constant 0 : i32
    %c0_i32_1 = arith.constant 0 : i32
    %c0_i32_2 = arith.constant 0 : i32
    return %c0_i32, %c0_i32_0, %c0_i32_1 : i32, i32, i32
  }
  func.func @transform_6(%arg0: i32) -> (i32, i32) {
    %c0_i32 = arith.constant 0 : i32
    %c0_i32_0 = arith.constant 0 : i32
    %c0_i32_1 = arith.constant 0 : i32
    return %c0_i32, %c0_i32_0 : i32, i32
  }
  func.func @transform_7(%arg0: i32) -> (i32, i32) {
    %c0_i32 = arith.constant 0 : i32
    %c0_i32_0 = arith.constant 0 : i32
    %c0_i32_1 = arith.constant 0 : i32
    return %c0_i32, %c0_i32_0 : i32, i32
  }
  func.func @transform_8(%arg0: i32) -> (i32, i32) {
    %c0_i32 = arith.constant 0 : i32
    %c0_i32_0 = arith.constant 0 : i32
    %c0_i32_1 = arith.constant 0 : i32
    return %c0_i32, %c0_i32_0 : i32, i32
  }
  func.func @transform_9(%arg0: i32) -> (i32, i32, i32) {
    %c0_i32 = arith.constant 0 : i32
    %c0_i32_0 = arith.constant 0 : i32
    %c0_i32_1 = arith.constant 0 : i32
    return %arg0, %c0_i32, %c0_i32_0 : i32, i32, i32
  }
}

</mosaic_0001>

<llo_original>
// kernel: tpu_custom_call.1
$region0: #{tpu_custom_call.1}
  #allocation0 [shape = 'u32[]', space=smem, size = 0x4, offset = 0x4, fixed_abs, tag = 'smem constant byte address 0x4 - core index']
  #allocation1 [shape = 'u32[144,128]{1,0:T(1,128)}', space=vmem, size = 0x12000, scoped, tag = 'internal scratch']
  #allocation2 [shape = 'f32[304,4]{1,0:T(8,128)}', space=vmem, size = 0x26000, scoped, tag = 'scratch operand']
  #allocation3 [shape = 'f32[304,8]{1,0:T(8,128)}', space=vmem, size = 0x26000, scoped, tag = 'scratch operand']
  %s0 = inlined_call_operand.vmem [shape: f32[2,256,4], index: 0, kind: input, shape index: {}]
  %s1 = inlined_call_operand.vmem [shape: f32[256,1], index: 1, kind: input, shape index: {}]
  %s2 = inlined_call_operand.vmem [shape: f32[256,1], index: 2, kind: input, shape index: {}]
  %s3 = inlined_call_operand.vmem [shape: f32[9,4,8], index: 3, kind: input, shape index: {}]
  %s4 = inlined_call_operand.vmem [shape: f32[1,8], index: 4, kind: input, shape index: {}]
  %s5 = inlined_call_operand.vmem [shape: f32[9,8,8], index: 5, kind: input, shape index: {}]
  %s6 = inlined_call_operand.vmem [shape: f32[1,8], index: 6, kind: input, shape index: {}]
  %s7 = inlined_call_operand.vmem [shape: f32[4,8], index: 7, kind: input, shape index: {}]
  %s8 = inlined_call_operand.vmem [shape: f32[1,8], index: 8, kind: input, shape index: {}]
  %s9 = inlined_call_operand.vmem [shape: f32[2,256,8], index: 9, kind: output, shape index: {}]
  %s10 = sld [smem:[#allocation0]]
  $region69: #{tpu_custom_call.1} parent=0
    _
  %s12 = ssub.s32 1, %s10
  %s13 = scalar_select 0, %s12, %s10
  loop: start=0, step=1, limit=4
  $region2: #{tpu_custom_call.1} parent=0 // loop_pre_header
    _
  $region3: #{tpu_custom_call.1} parent=0 // loop_header
    %s15 = sphi 0, %s19
    %p16 = scmp.ge.s32.totalorder %s15, 4
    %s25 = sphi 0, %s27
    %s28 = sphi 0, %s25
    %s29 = sphi 0, %s28
    %s45 = sphi 0, %s29
    %s49 = sphi 0, %s49
    %s51 = sphi 0, %s49
    %s52 = sphi 0, %s51
    %s66 = sphi 0, %s52
    %s70 = sphi 0, %s70
    %s72 = sphi 0, %s70
    %s73 = sphi 0, %s72
    %s87 = sphi 0, %s73
    %s91 = sphi 0, %s91
    %s93 = sphi 0, %s91
    %s94 = sphi 0, %s93
    %s108 = sphi 0, %s94
    %s112 = sphi 0, %s112
    %s114 = sphi 0, %s112
    %s115 = sphi 0, %s114
    %s129 = sphi 0, %s115
    %s133 = sphi 0, %s133
    %s135 = sphi 0, %s133
    %s136 = sphi 0, %s135
    %s150 = sphi 0, %s136
    %s154 = sphi 0, %s154
    %s156 = sphi 0, %s154
    %s157 = sphi 0, %s156
    %s171 = sphi 0, %s157
    %s175 = sphi 0, %s175
    %s177 = sphi 0, %s175
    %s178 = sphi 0, %s177
    %s192 = sphi 0, %s178
    %s196 = sphi 0, %s196
    %s198 = sphi 0, %s196
    %s199 = sphi 0, %s198
    %s213 = sphi 0, %s199
    %s219 = sphi 0, %s221
    %s222 = sphi 0, %s219
    %s223 = sphi 0, %s222
    %s239 = sphi 0, %s223
  $region4: #{tpu_custom_call.1} parent=0 // loop_header_branch
    %18 = sbr.rel (%p16) target = $region8
  $region5: #{tpu_custom_call.1} parent=0 // loop_body
    %s20 = ssub.s32 %s15, 1
    %s21 = ssub.s32 %s15, 2
    %s22 = sadd.s32 %s15, 1
    %s23 = ssub.s32 %s15, %s22
    %p24 = scmp.eq.s32.totalorder %s23, 0
    %s26 = sadd.s32 %s25, 1
    %s27 = scalar_select %p24, %s25, %s26
    %p30 = pneg %p24
    %p31 = scmp.eq.s32.totalorder %s15, 1
    %p32 = por %p30, %p31
    %p33 = scmp.ne.s32.totalorder %s25, %s28
    %p34 = scmp.eq.s32.totalorder %s15, 0
    %p35 = por %p33, %p34
    %p36 = scmp.ne.s32.totalorder %s25, %s28
    %p37 = scmp.eq.s32.totalorder %s20, 1
    %p38 = por %p36, %p37
    %p39 = scmp.ne.s32.totalorder %s28, %s29
    %p40 = scmp.eq.s32.totalorder %s20, 0
    %p41 = por %p39, %p40
    %p42 = scmp.ne.s32.totalorder %s28, %s29
    %p43 = scmp.eq.s32.totalorder %s21, 1
    %p44 = por %p42, %p43
    %p46 = scmp.ne.s32.totalorder %s29, %s45
    %p47 = scmp.eq.s32.totalorder %s21, 0
    %p48 = por %p46, %p47
    %s50 = sadd.s32 %s49, 1
    %p53 = scmp.eq.s32.totalorder %s15, 1
    %p54 = scmp.ne.s32.totalorder %s49, %s51
    %p55 = scmp.eq.s32.totalorder %s15, 0
    %p56 = por %p54, %p55
    %p57 = scmp.ne.s32.totalorder %s49, %s51
    %p58 = scmp.eq.s32.totalorder %s20, 1
    %p59 = por %p57, %p58
    %p60 = scmp.ne.s32.totalorder %s51, %s52
    %p61 = scmp.eq.s32.totalorder %s20, 0
    %p62 = por %p60, %p61
    %p63 = scmp.ne.s32.totalorder %s51, %s52
    %p64 = scmp.eq.s32.totalorder %s21, 1
    %p65 = por %p63, %p64
    %p67 = scmp.ne.s32.totalorder %s52, %s66
    %p68 = scmp.eq.s32.totalorder %s21, 0
    %p69 = por %p67, %p68
    %s71 = sadd.s32 %s70, 1
    %p74 = scmp.eq.s32.totalorder %s15, 1
    %p75 = scmp.ne.s32.totalorder %s70, %s72
    %p76 = scmp.eq.s32.totalorder %s15, 0
    %p77 = por %p75, %p76
    %p78 = scmp.ne.s32.totalorder %s70, %s72
    %p79 = scmp.eq.s32.totalorder %s20, 1
    %p80 = por %p78, %p79
    %p81 = scmp.ne.s32.totalorder %s72, %s73
    %p82 = scmp.eq.s32.totalorder %s20, 0
    %p83 = por %p81, %p82
    %p84 = scmp.ne.s32.totalorder %s72, %s73
    %p85 = scmp.eq.s32.totalorder %s21, 1
    %p86 = por %p84, %p85
    %p88 = scmp.ne.s32.totalorder %s73, %s87
    %p89 = scmp.eq.s32.totalorder %s21, 0
    %p90 = por %p88, %p89
    %s92 = sadd.s32 %s91, 1
    %p95 = scmp.eq.s32.totalorder %s15, 1
    %p96 = scmp.ne.s32.totalorder %s91, %s93
    %p97 = scmp.eq.s32.totalorder %s15, 0
    %p98 = por %p96, %p97
    %p99 = scmp.ne.s32.totalorder %s91, %s93
    %p100 = scmp.eq.s32.totalorder %s20, 1
    %p101 = por %p99, %p100
    %p102 = scmp.ne.s32.totalorder %s93, %s94
    %p103 = scmp.eq.s32.totalorder %s20, 0
    %p104 = por %p102, %p103
    %p105 = scmp.ne.s32.totalorder %s93, %s94
    %p106 = scmp.eq.s32.totalorder %s21, 1
    %p107 = por %p105, %p106
    %p109 = scmp.ne.s32.totalorder %s94, %s108
    %p110 = scmp.eq.s32.totalorder %s21, 0
    %p111 = por %p109, %p110
    %s113 = sadd.s32 %s112, 1
    %p116 = scmp.eq.s32.totalorder %s15, 1
    %p117 = scmp.ne.s32.totalorder %s112, %s114
    %p118 = scmp.eq.s32.totalorder %s15, 0
    %p119 = por %p117, %p118
    %p120 = scmp.ne.s32.totalorder %s112, %s114
    %p121 = scmp.eq.s32.totalorder %s20, 1
    %p122 = por %p120, %p121
    %p123 = scmp.ne.s32.totalorder %s114, %s115
    %p124 = scmp.eq.s32.totalorder %s20, 0
    %p125 = por %p123, %p124
    %p126 = scmp.ne.s32.totalorder %s114, %s115
    %p127 = scmp.eq.s32.totalorder %s21, 1
    %p128 = por %p126, %p127
    %p130 = scmp.ne.s32.totalorder %s115, %s129
    %p131 = scmp.eq.s32.totalorder %s21, 0
    %p132 = por %p130, %p131
    %s134 = sadd.s32 %s133, 1
    %p137 = scmp.eq.s32.totalorder %s15, 1
    %p138 = scmp.ne.s32.totalorder %s133, %s135
    %p139 = scmp.eq.s32.totalorder %s15, 0
    %p140 = por %p138, %p139
    %p141 = scmp.ne.s32.totalorder %s133, %s135
    %p142 = scmp.eq.s32.totalorder %s20, 1
    %p143 = por %p141, %p142
    %p144 = scmp.ne.s32.totalorder %s135, %s136
    %p145 = scmp.eq.s32.totalorder %s20, 0
    %p146 = por %p144, %p145
    %p147 = scmp.ne.s32.totalorder %s135, %s136
    %p148 = scmp.eq.s32.totalorder %s21, 1
    %p149 = por %p147, %p148
    %p151 = scmp.ne.s32.totalorder %s136, %s150
    %p152 = scmp.eq.s32.totalorder %s21, 0
    %p153 = por %p151, %p152
    %s155 = sadd.s32 %s154, 1
    %p158 = scmp.eq.s32.totalorder %s15, 1
    %p159 = scmp.ne.s32.totalorder %s154, %s156
    %p160 = scmp.eq.s32.totalorder %s15, 0
    %p161 = por %p159, %p160
    %p162 = scmp.ne.s32.totalorder %s154, %s156
    %p163 = scmp.eq.s32.totalorder %s20, 1
    %p164 = por %p162, %p163
    %p165 = scmp.ne.s32.totalorder %s156, %s157
    %p166 = scmp.eq.s32.totalorder %s20, 0
    %p167 = por %p165, %p166
    %p168 = scmp.ne.s32.totalorder %s156, %s157
    %p169 = scmp.eq.s32.totalorder %s21, 1
    %p170 = por %p168, %p169
    %p172 = scmp.ne.s32.totalorder %s157, %s171
    %p173 = scmp.eq.s32.totalorder %s21, 0
    %p174 = por %p172, %p173
    %s176 = sadd.s32 %s175, 1
    %p179 = scmp.eq.s32.totalorder %s15, 1
    %p180 = scmp.ne.s32.totalorder %s175, %s177
    %p181 = scmp.eq.s32.totalorder %s15, 0
    %p182 = por %p180, %p181
    %p183 = scmp.ne.s32.totalorder %s175, %s177
    %p184 = scmp.eq.s32.totalorder %s20, 1
    %p185 = por %p183, %p184
    %p186 = scmp.ne.s32.totalorder %s177, %s178
    %p187 = scmp.eq.s32.totalorder %s20, 0
    %p188 = por %p186, %p187
    %p189 = scmp.ne.s32.totalorder %s177, %s178
    %p190 = scmp.eq.s32.totalorder %s21, 1
    %p191 = por %p189, %p190
    %p193 = scmp.ne.s32.totalorder %s178, %s192
    %p194 = scmp.eq.s32.totalorder %s21, 0
    %p195 = por %p193, %p194
    %s197 = sadd.s32 %s196, 1
    %p200 = scmp.eq.s32.totalorder %s15, 1
    %p201 = scmp.ne.s32.totalorder %s196, %s198
    %p202 = scmp.eq.s32.totalorder %s15, 0
    %p203 = por %p201, %p202
    %p204 = scmp.ne.s32.totalorder %s196, %s198
    %p205 = scmp.eq.s32.totalorder %s20, 1
    %p206 = por %p204, %p205
    %p207 = scmp.ne.s32.totalorder %s198, %s199
    %p208 = scmp.eq.s32.totalorder %s20, 0
    %p209 = por %p207, %p208
    %p210 = scmp.ne.s32.totalorder %s198, %s199
    %p211 = scmp.eq.s32.totalorder %s21, 1
    %p212 = por %p210, %p211
    %p214 = scmp.ne.s32.totalorder %s199, %s213
    %p215 = scmp.eq.s32.totalorder %s21, 0
    %p216 = por %p214, %p215
    %s217 = ssub.s32 %s15, %s22
    %p218 = scmp.eq.s32.totalorder %s217, 0
    %s220 = sadd.s32 %s219, 1
    %s221 = scalar_select %p218, %s219, %s220
    %p224 = pneg %p218
    %p225 = scmp.eq.s32.totalorder %s15, 1
    %p226 = por %p224, %p225
    %p227 = scmp.ne.s32.totalorder %s219, %s222
    %p228 = scmp.eq.s32.totalorder %s15, 0
    %p229 = por %p227, %p228
    %p230 = scmp.ne.s32.totalorder %s219, %s222
    %p231 = scmp.eq.s32.totalorder %s20, 1
    %p232 = por %p230, %p231
    %p233 = scmp.ne.s32.totalorder %s222, %s223
    %p234 = scmp.eq.s32.totalorder %s20, 0
    %p235 = por %p233, %p234
    %p236 = scmp.ne.s32.totalorder %s222, %s223
    %p237 = scmp.eq.s32.totalorder %s21, 1
    %p238 = por %p236, %p237
    %p240 = scmp.ne.s32.totalorder %s223, %s239
    %p241 = scmp.eq.s32.totalorder %s21, 0
    %p242 = por %p240, %p241
    %p243 = scmp.le.s32.totalorder 1, %s15
    %p244 = scmp.lt.s32.totalorder %s15, 3
    %p245 = pnand %p243, %p244
    %p246 = pneg %p245
    // Predicated region
    $region9: #{tpu_custom_call.1} parent=5 // pred_check
      _
    $region10: #{tpu_custom_call.1} parent=5 // pred_check_branch
      %248 = sbr.rel (%p245) target = $region12
    $region11: #{tpu_custom_call.1} parent=5 // pred_region
      %s249 = ssub.s32 %s15, 1
      // Predicated region
      $region13: #{tpu_custom_call.1} parent=11 // pred_check
        %p250 = pneg %p62
      $region14: #{tpu_custom_call.1} parent=11 // pred_check_branch
        %252 = sbr.rel (%p250) target = $region16
      $region15: #{tpu_custom_call.1} parent=11 // pred_region
        _
      $region16: #{tpu_custom_call.1} parent=11 // pred_fallthru
        _
      // Predicated region
      $region17: #{tpu_custom_call.1} parent=11 // pred_check
        %p253 = pneg %p83
      $region18: #{tpu_custom_call.1} parent=11 // pred_check_branch
        %255 = sbr.rel (%p253) target = $region20
      $region19: #{tpu_custom_call.1} parent=11 // pred_region
        _
      $region20: #{tpu_custom_call.1} parent=11 // pred_fallthru
        _
      // Predicated region
      $region21: #{tpu_custom_call.1} parent=11 // pred_check
        %p256 = pneg %p104
      $region22: #{tpu_custom_call.1} parent=11 // pred_check_branch
        %258 = sbr.rel (%p256) target = $region24
      $region23: #{tpu_custom_call.1} parent=11 // pred_region
        _
      $region24: #{tpu_custom_call.1} parent=11 // pred_fallthru
        _
      // Predicated region
      $region25: #{tpu_custom_call.1} parent=11 // pred_check
        %p259 = pneg %p125
      $region26: #{tpu_custom_call.1} parent=11 // pred_check_branch
        %261 = sbr.rel (%p259) target = $region28
      $region27: #{tpu_custom_call.1} parent=11 // pred_region
        _
      $region28: #{tpu_custom_call.1} parent=11 // pred_fallthru
        _
      // Predicated region
      $region29: #{tpu_custom_call.1} parent=11 // pred_check
        %p262 = pneg %p146
      $region30: #{tpu_custom_call.1} parent=11 // pred_check_branch
        %264 = sbr.rel (%p262) target = $region32
      $region31: #{tpu_custom_call.1} parent=11 // pred_region
        _
      $region32: #{tpu_custom_call.1} parent=11 // pred_fallthru
        _
      // Predicated region
      $region33: #{tpu_custom_call.1} parent=11 // pred_check
        %p265 = pneg %p167
      $region34: #{tpu_custom_call.1} parent=11 // pred_check_branch
        %267 = sbr.rel (%p265) target = $region36
      $region35: #{tpu_custom_call.1} parent=11 // pred_region
        _
      $region36: #{tpu_custom_call.1} parent=11 // pred_fallthru
        _
      // Predicated region
      $region37: #{tpu_custom_call.1} parent=11 // pred_check
        %p268 = pneg %p188
      $region38: #{tpu_custom_call.1} parent=11 // pred_check_branch
        %270 = sbr.rel (%p268) target = $region40
      $region39: #{tpu_custom_call.1} parent=11 // pred_region
        _
      $region40: #{tpu_custom_call.1} parent=11 // pred_fallthru
        _
      // Predicated region
      $region41: #{tpu_custom_call.1} parent=11 // pred_check
        %p271 = pneg %p209
      $region42: #{tpu_custom_call.1} parent=11 // pred_check_branch
        %273 = sbr.rel (%p271) target = $region44
      $region43: #{tpu_custom_call.1} parent=11 // pred_region
        _
      $region44: #{tpu_custom_call.1} parent=11 // pred_fallthru
        _
    $region12: #{tpu_custom_call.1} parent=5 // pred_fallthru
      _
    %p274 = scmp.lt.s32.totalorder %s15, 2
    // Predicated region
    $region45: #{tpu_custom_call.1} parent=5 // pred_check
      %p275 = pneg %p274
    $region46: #{tpu_custom_call.1} parent=5 // pred_check_branch
      %277 = sbr.rel (%p275) target = $region48
    $region47: #{tpu_custom_call.1} parent=5 // pred_region
      // Predicated region
      $region49: #{tpu_custom_call.1} parent=47 // pred_check
        %p278 = pneg %p35
      $region50: #{tpu_custom_call.1} parent=47 // pred_check_branch
        %280 = sbr.rel (%p278) target = $region52
      $region51: #{tpu_custom_call.1} parent=47 // pred_region
        %p281 = scmp.lt.s32.totalorder %s15, 1
        %s282 = scalar_select %p281, %s15, 1
        %s283 = smul.addr %s282, 32
        %s284 = smul.addr %s283, 8
        %s285 = scalar_lea.vmem %s0, %s284
      $region52: #{tpu_custom_call.1} parent=47 // pred_fallthru
        _
    $region48: #{tpu_custom_call.1} parent=5 // pred_fallthru
      _
    %p286 = scmp.le.s32.totalorder 1, %s15
    %p287 = scmp.lt.s32.totalorder %s15, 3
    %p288 = pnand %p286, %p287
    %p289 = pneg %p288
    // Predicated region
    $region53: #{tpu_custom_call.1} parent=5 // pred_check
      _
    $region54: #{tpu_custom_call.1} parent=5 // pred_check_branch
      %291 = sbr.rel (%p288) target = $region56
    $region55: #{tpu_custom_call.1} parent=5 // pred_region
      %s292 = ssub.s32 %s15, 1
      %p293 = scmp.lt.s32.totalorder %s20, 1
      %s294 = scalar_select %p293, %s20, 1
      %s295 = smul.addr %s294, 32
      %s296 = smul.addr %s295, 8
      %s297 = scalar_lea.vmem %s0, %s296
      %p298 = pneg %p41
      %p299 = pneg %p38
      %p300 = pneg %p62
      %p301 = pneg %p59
      %p302 = pneg %p83
      %p303 = pneg %p80
      %p304 = pneg %p104
      %p305 = pneg %p101
      %p306 = pneg %p125
      %p307 = pneg %p122
      %p308 = pneg %p146
      %p309 = pneg %p143
      %p310 = pneg %p167
      %p311 = pneg %p164
      %p312 = pneg %p188
      %p313 = pneg %p185
      %p314 = pneg %p209
      %p315 = pneg %p206
      %p316 = pneg %p235
      %p317 = pneg %p232
      %p318 = scmp.lt.s32.totalorder %s20, 1
      %s319 = scalar_select %p318, %s20, 1
      %s320 = smul.addr %s319, 32
      %s321 = smul.addr %s320, 8
      %s322 = scalar_lea.vmem %s9, %s321
      %p323 = scmp.lt.s32.totalorder %s20, 1
      %s324 = scalar_select %p323, %s20, 1
      %s325 = smul.addr %s324, 32
      %s326 = smul.addr %s325, 8
      %s327 = scalar_lea.vmem %s0, %s326
      %p328 = scmp.lt.s32.totalorder %s20, 1
      %s329 = scalar_select %p328, %s20, 1
      %s330 = smul.addr %s329, 32
      %s331 = smul.addr %s330, 8
      %s332 = scalar_lea.vmem %s9, %s331
      %v333 = vld [vmem:[%s1] sm:$0xff]
      %v334 = vld [vmem:[%s1 + $0x8] sm:$0xff]
      %v335 = vld [vmem:[%s1 + $0x10] sm:$0xff]
      %v336 = vld [vmem:[%s1 + $0x18] sm:$0xff]
      %v337 = vld [vmem:[%s1 + $0x20] sm:$0xff]
      %v338 = vld [vmem:[%s1 + $0x28] sm:$0xff]
      %v339 = vld [vmem:[%s1 + $0x30] sm:$0xff]
      %v340 = vld [vmem:[%s1 + $0x38] sm:$0xff]
      %v341 = vld [vmem:[%s1 + $0x40] sm:$0xff]
      %v342 = vld [vmem:[%s1 + $0x48] sm:$0xff]
      %v343 = vld [vmem:[%s1 + $0x50] sm:$0xff]
      %v344 = vld [vmem:[%s1 + $0x58] sm:$0xff]
      %v345 = vld [vmem:[%s1 + $0x60] sm:$0xff]
      %v346 = vld [vmem:[%s1 + $0x68] sm:$0xff]
      %v347 = vld [vmem:[%s1 + $0x70] sm:$0xff]
      %v348 = vld [vmem:[%s1 + $0x78] sm:$0xff]
      %v349 = vld [vmem:[%s1 + $0x80] sm:$0xff]
      %v350 = vld [vmem:[%s1 + $0x88] sm:$0xff]
      %v351 = vld [vmem:[%s1 + $0x90] sm:$0xff]
      %v352 = vld [vmem:[%s1 + $0x98] sm:$0xff]
      %v353 = vld [vmem:[%s1 + $0xa0] sm:$0xff]
      %v354 = vld [vmem:[%s1 + $0xa8] sm:$0xff]
      %v355 = vld [vmem:[%s1 + $0xb0] sm:$0xff]
      %v356 = vld [vmem:[%s1 + $0xb8] sm:$0xff]
      %v357 = vld [vmem:[%s1 + $0xc0] sm:$0xff]
      %v358 = vld [vmem:[%s1 + $0xc8] sm:$0xff]
      %v359 = vld [vmem:[%s1 + $0xd0] sm:$0xff]
      %v360 = vld [vmem:[%s1 + $0xd8] sm:$0xff]
      %v361 = vld [vmem:[%s1 + $0xe0] sm:$0xff]
      %v362 = vld [vmem:[%s1 + $0xe8] sm:$0xff]
      %v363 = vld [vmem:[%s1 + $0xf0] sm:$0xff]
      %v364 = vld [vmem:[%s1 + $0xf8] sm:$0xff]
      %v365 = vld [vmem:[%s2] sm:$0xff]
      %v366 = vld [vmem:[%s2 + $0x8] sm:$0xff]
      %v367 = vld [vmem:[%s2 + $0x10] sm:$0xff]
      %v368 = vld [vmem:[%s2 + $0x18] sm:$0xff]
      %v369 = vld [vmem:[%s2 + $0x20] sm:$0xff]
      %v370 = vld [vmem:[%s2 + $0x28] sm:$0xff]
      %v371 = vld [vmem:[%s2 + $0x30] sm:$0xff]
      %v372 = vld [vmem:[%s2 + $0x38] sm:$0xff]
      %v373 = vld [vmem:[%s2 + $0x40] sm:$0xff]
      %v374 = vld [vmem:[%s2 + $0x48] sm:$0xff]
      %v375 = vld [vmem:[%s2 + $0x50] sm:$0xff]
      %v376 = vld [vmem:[%s2 + $0x58] sm:$0xff]
      %v377 = vld [vmem:[%s2 + $0x60] sm:$0xff]
      %v378 = vld [vmem:[%s2 + $0x68] sm:$0xff]
      %v379 = vld [vmem:[%s2 + $0x70] sm:$0xff]
      %v380 = vld [vmem:[%s2 + $0x78] sm:$0xff]
      %v381 = vld [vmem:[%s2 + $0x80] sm:$0xff]
      %v382 = vld [vmem:[%s2 + $0x88] sm:$0xff]
      %v383 = vld [vmem:[%s2 + $0x90] sm:$0xff]
      %v384 = vld [vmem:[%s2 + $0x98] sm:$0xff]
      %v385 = vld [vmem:[%s2 + $0xa0] sm:$0xff]
      %v386 = vld [vmem:[%s2 + $0xa8] sm:$0xff]
      %v387 = vld [vmem:[%s2 + $0xb0] sm:$0xff]
      %v388 = vld [vmem:[%s2 + $0xb8] sm:$0xff]
      %v389 = vld [vmem:[%s2 + $0xc0] sm:$0xff]
      %v390 = vld [vmem:[%s2 + $0xc8] sm:$0xff]
      %v391 = vld [vmem:[%s2 + $0xd0] sm:$0xff]
      %v392 = vld [vmem:[%s2 + $0xd8] sm:$0xff]
      %v393 = vld [vmem:[%s2 + $0xe0] sm:$0xff]
      %v394 = vld [vmem:[%s2 + $0xe8] sm:$0xff]
      %v395 = vld [vmem:[%s2 + $0xf0] sm:$0xff]
      %v396 = vld [vmem:[%s2 + $0xf8] sm:$0xff]
      %v397 = vld [vmem:[%s327] sm:$0xff]
      %v398 = vld [vmem:[%s327 + $0x8] sm:$0xff]
      %v399 = vld [vmem:[%s327 + $0x10] sm:$0xff]
      %v400 = vld [vmem:[%s327 + $0x18] sm:$0xff]
      %v401 = vld [vmem:[%s327 + $0x20] sm:$0xff]
      %v402 = vld [vmem:[%s327 + $0x28] sm:$0xff]
      %v403 = vld [vmem:[%s327 + $0x30] sm:$0xff]
      %v404 = vld [vmem:[%s327 + $0x38] sm:$0xff]
      %v405 = vld [vmem:[%s327 + $0x40] sm:$0xff]
      %v406 = vld [vmem:[%s327 + $0x48] sm:$0xff]
      %v407 = vld [vmem:[%s327 + $0x50] sm:$0xff]
      %v408 = vld [vmem:[%s327 + $0x58] sm:$0xff]
      %v409 = vld [vmem:[%s327 + $0x60] sm:$0xff]
      %v410 = vld [vmem:[%s327 + $0x68] sm:$0xff]
      %v411 = vld [vmem:[%s327 + $0x70] sm:$0xff]
      %v412 = vld [vmem:[%s327 + $0x78] sm:$0xff]
      %v413 = vld [vmem:[%s327 + $0x80] sm:$0xff]
      %v414 = vld [vmem:[%s327 + $0x88] sm:$0xff]
      %v415 = vld [vmem:[%s327 + $0x90] sm:$0xff]
      %v416 = vld [vmem:[%s327 + $0x98] sm:$0xff]
      %v417 = vld [vmem:[%s327 + $0xa0] sm:$0xff]
      %v418 = vld [vmem:[%s327 + $0xa8] sm:$0xff]
      %v419 = vld [vmem:[%s327 + $0xb0] sm:$0xff]
      %v420 = vld [vmem:[%s327 + $0xb8] sm:$0xff]
      %v421 = vld [vmem:[%s327 + $0xc0] sm:$0xff]
      %v422 = vld [vmem:[%s327 + $0xc8] sm:$0xff]
      %v423 = vld [vmem:[%s327 + $0xd0] sm:$0xff]
      %v424 = vld [vmem:[%s327 + $0xd8] sm:$0xff]
      %v425 = vld [vmem:[%s327 + $0xe0] sm:$0xff]
      %v426 = vld [vmem:[%s327 + $0xe8] sm:$0xff]
      %v427 = vld [vmem:[%s327 + $0xf0] sm:$0xff]
      %v428 = vld [vmem:[%s327 + $0xf8] sm:$0xff]
      %vm429 = vcmask 31744
      %430 = vst.msk [vmem:[#allocation2] sm:$0xff] %vm429, 0.0
      %431 = vst.msk [vmem:[#allocation2 + $0x8] sm:$0xff] %vm429, 0.0
      %432 = vst.msk [vmem:[#allocation2 + $0x10] sm:$0xff] %vm429, 0.0
      %433 = vst.msk [vmem:[#allocation2 + $0x118] sm:$0xff] %vm429, 0.0
      %434 = vst.msk [vmem:[#allocation2 + $0x120] sm:$0xff] %vm429, 0.0
      %435 = vst.msk [vmem:[#allocation2 + $0x128] sm:$0xff] %vm429, 0.0
      %436 = vst.msk [vmem:[#allocation2 + $0x18] sm:$0xff] %vm429, %v397
      %437 = vst.msk [vmem:[#allocation2 + $0x20] sm:$0xff] %vm429, %v398
      %438 = vst.msk [vmem:[#allocation2 + $0x28] sm:$0xff] %vm429, %v399
      %439 = vst.msk [vmem:[#allocation2 + $0x30] sm:$0xff] %vm429, %v400
      %440 = vst.msk [vmem:[#allocation2 + $0x38] sm:$0xff] %vm429, %v401
      %441 = vst.msk [vmem:[#allocation2 + $0x40] sm:$0xff] %vm429, %v402
      %442 = vst.msk [vmem:[#allocation2 + $0x48] sm:$0xff] %vm429, %v403
      %443 = vst.msk [vmem:[#allocation2 + $0x50] sm:$0xff] %vm429, %v404
      %444 = vst.msk [vmem:[#allocation2 + $0x58] sm:$0xff] %vm429, %v405
      %445 = vst.msk [vmem:[#allocation2 + $0x60] sm:$0xff] %vm429, %v406
      %446 = vst.msk [vmem:[#allocation2 + $0x68] sm:$0xff] %vm429, %v407
      %447 = vst.msk [vmem:[#allocation2 + $0x70] sm:$0xff] %vm429, %v408
      %448 = vst.msk [vmem:[#allocation2 + $0x78] sm:$0xff] %vm429, %v409
      %449 = vst.msk [vmem:[#allocation2 + $0x80] sm:$0xff] %vm429, %v410
      %450 = vst.msk [vmem:[#allocation2 + $0x88] sm:$0xff] %vm429, %v411
      %451 = vst.msk [vmem:[#allocation2 + $0x90] sm:$0xff] %vm429, %v412
      %452 = vst.msk [vmem:[#allocation2 + $0x98] sm:$0xff] %vm429, %v413
      %453 = vst.msk [vmem:[#allocation2 + $0xa0] sm:$0xff] %vm429, %v414
      %454 = vst.msk [vmem:[#allocation2 + $0xa8] sm:$0xff] %vm429, %v415
      %455 = vst.msk [vmem:[#allocation2 + $0xb0] sm:$0xff] %vm429, %v416
      %456 = vst.msk [vmem:[#allocation2 + $0xb8] sm:$0xff] %vm429, %v417
      %457 = vst.msk [vmem:[#allocation2 + $0xc0] sm:$0xff] %vm429, %v418
      %458 = vst.msk [vmem:[#allocation2 + $0xc8] sm:$0xff] %vm429, %v419
      %459 = vst.msk [vmem:[#allocation2 + $0xd0] sm:$0xff] %vm429, %v420
      %460 = vst.msk [vmem:[#allocation2 + $0xd8] sm:$0xff] %vm429, %v421
      %461 = vst.msk [vmem:[#allocation2 + $0xe0] sm:$0xff] %vm429, %v422
      %462 = vst.msk [vmem:[#allocation2 + $0xe8] sm:$0xff] %vm429, %v423
      %463 = vst.msk [vmem:[#allocation2 + $0xf0] sm:$0xff] %vm429, %v424
      %464 = vst.msk [vmem:[#allocation2 + $0xf8] sm:$0xff] %vm429, %v425
      %465 = vst.msk [vmem:[#allocation2 + $0x100] sm:$0xff] %vm429, %v426
      %466 = vst.msk [vmem:[#allocation2 + $0x108] sm:$0xff] %vm429, %v427
      %467 = vst.msk [vmem:[#allocation2 + $0x110] sm:$0xff] %vm429, %v428
      %v468 = vld [vmem:[#allocation2 + $0x7] sm:$0xff]
      %v469 = vld [vmem:[#allocation2 + $0xf] sm:$0xff]
      %v470 = vld [vmem:[#allocation2 + $0x17] sm:$0xff]
      %v471 = vld [vmem:[#allocation2 + $0x1f] sm:$0xff]
      %v472 = vld [vmem:[#allocation2 + $0x27] sm:$0xff]
      %v473 = vld [vmem:[#allocation2 + $0x2f] sm:$0xff]
      %v474 = vld [vmem:[#allocation2 + $0x37] sm:$0xff]
      %v475 = vld [vmem:[#allocation2 + $0x3f] sm:$0xff]
      %v476 = vld [vmem:[#allocation2 + $0x47] sm:$0xff]
      %v477 = vld [vmem:[#allocation2 + $0x4f] sm:$0xff]
      %v478 = vld [vmem:[#allocation2 + $0x57] sm:$0xff]
      %v479 = vld [vmem:[#allocation2 + $0x5f] sm:$0xff]
      %v480 = vld [vmem:[#allocation2 + $0x67] sm:$0xff]
      %v481 = vld [vmem:[#allocation2 + $0x6f] sm:$0xff]
      %v482 = vld [vmem:[#allocation2 + $0x77] sm:$0xff]
      %v483 = vld [vmem:[#allocation2 + $0x7f] sm:$0xff]
      %v484 = vld [vmem:[#allocation2 + $0x87] sm:$0xff]
      %v485 = vld [vmem:[#allocation2 + $0x8f] sm:$0xff]
      %v486 = vld [vmem:[#allocation2 + $0x97] sm:$0xff]
      %v487 = vld [vmem:[#allocation2 + $0x9f] sm:$0xff]
      %v488 = vld [vmem:[#allocation2 + $0xa7] sm:$0xff]
      %v489 = vld [vmem:[#allocation2 + $0xaf] sm:$0xff]
      %v490 = vld [vmem:[#allocation2 + $0xb7] sm:$0xff]
      %v491 = vld [vmem:[#allocation2 + $0xbf] sm:$0xff]
      %v492 = vld [vmem:[#allocation2 + $0xc7] sm:$0xff]
      %v493 = vld [vmem:[#allocation2 + $0xcf] sm:$0xff]
      %v494 = vld [vmem:[#allocation2 + $0xd7] sm:$0xff]
      %v495 = vld [vmem:[#allocation2 + $0xdf] sm:$0xff]
      %v496 = vld [vmem:[#allocation2 + $0xe7] sm:$0xff]
      %v497 = vld [vmem:[#allocation2 + $0xef] sm:$0xff]
      %v498 = vld [vmem:[#allocation2 + $0xf7] sm:$0xff]
      %v499 = vld [vmem:[#allocation2 + $0xff] sm:$0xff]
      %501 = vset.pattern.permute.xlu0 0
      %502 = vperm.xlu0 %501, %v333
      %v503 = vpop.permute.xlu0 %502
      %506 = vset.pattern.permute.xlu0 0
      %507 = vperm.xlu0 %506, %v334
      %v508 = vpop.permute.xlu0 %507
      %511 = vset.pattern.permute.xlu0 0
      %512 = vperm.xlu0 %511, %v335
      %v513 = vpop.permute.xlu0 %512
      %516 = vset.pattern.permute.xlu0 0
      %517 = vperm.xlu0 %516, %v336
      %v518 = vpop.permute.xlu0 %517
      %521 = vset.pattern.permute.xlu0 0
      %522 = vperm.xlu0 %521, %v337
      %v523 = vpop.permute.xlu0 %522
      %526 = vset.pattern.permute.xlu0 0
      %527 = vperm.xlu0 %526, %v338
      %v528 = vpop.permute.xlu0 %527
      %531 = vset.pattern.permute.xlu0 0
      %532 = vperm.xlu0 %531, %v339
      %v533 = vpop.permute.xlu0 %532
      %536 = vset.pattern.permute.xlu0 0
      %537 = vperm.xlu0 %536, %v340
      %v538 = vpop.permute.xlu0 %537
      %541 = vset.pattern.permute.xlu0 0
      %542 = vperm.xlu0 %541, %v341
      %v543 = vpop.permute.xlu0 %542
      %546 = vset.pattern.permute.xlu0 0
      %547 = vperm.xlu0 %546, %v342
      %v548 = vpop.permute.xlu0 %547
      %551 = vset.pattern.permute.xlu0 0
      %552 = vperm.xlu0 %551, %v343
      %v553 = vpop.permute.xlu0 %552
      %556 = vset.pattern.permute.xlu0 0
      %557 = vperm.xlu0 %556, %v344
      %v558 = vpop.permute.xlu0 %557
      %561 = vset.pattern.permute.xlu0 0
      %562 = vperm.xlu0 %561, %v345
      %v563 = vpop.permute.xlu0 %562
      %566 = vset.pattern.permute.xlu0 0
      %567 = vperm.xlu0 %566, %v346
      %v568 = vpop.permute.xlu0 %567
      %571 = vset.pattern.permute.xlu0 0
      %572 = vperm.xlu0 %571, %v347
      %v573 = vpop.permute.xlu0 %572
      %576 = vset.pattern.permute.xlu0 0
      %577 = vperm.xlu0 %576, %v348
      %v578 = vpop.permute.xlu0 %577
      %581 = vset.pattern.permute.xlu0 0
      %582 = vperm.xlu0 %581, %v349
      %v583 = vpop.permute.xlu0 %582
      %586 = vset.pattern.permute.xlu0 0
      %587 = vperm.xlu0 %586, %v350
      %v588 = vpop.permute.xlu0 %587
      %591 = vset.pattern.permute.xlu0 0
      %592 = vperm.xlu0 %591, %v351
      %v593 = vpop.permute.xlu0 %592
      %596 = vset.pattern.permute.xlu0 0
      %597 = vperm.xlu0 %596, %v352
      %v598 = vpop.permute.xlu0 %597
      %601 = vset.pattern.permute.xlu0 0
      %602 = vperm.xlu0 %601, %v353
      %v603 = vpop.permute.xlu0 %602
      %606 = vset.pattern.permute.xlu0 0
      %607 = vperm.xlu0 %606, %v354
      %v608 = vpop.permute.xlu0 %607
      %611 = vset.pattern.permute.xlu0 0
      %612 = vperm.xlu0 %611, %v355
      %v613 = vpop.permute.xlu0 %612
      %616 = vset.pattern.permute.xlu0 0
      %617 = vperm.xlu0 %616, %v356
      %v618 = vpop.permute.xlu0 %617
      %621 = vset.pattern.permute.xlu0 0
      %622 = vperm.xlu0 %621, %v357
      %v623 = vpop.permute.xlu0 %622
      %626 = vset.pattern.permute.xlu0 0
      %627 = vperm.xlu0 %626, %v358
      %v628 = vpop.permute.xlu0 %627
      %631 = vset.pattern.permute.xlu0 0
      %632 = vperm.xlu0 %631, %v359
      %v633 = vpop.permute.xlu0 %632
      %636 = vset.pattern.permute.xlu0 0
      %637 = vperm.xlu0 %636, %v360
      %v638 = vpop.permute.xlu0 %637
      %641 = vset.pattern.permute.xlu0 0
      %642 = vperm.xlu0 %641, %v361
      %v643 = vpop.permute.xlu0 %642
      %646 = vset.pattern.permute.xlu0 0
      %647 = vperm.xlu0 %646, %v362
      %v648 = vpop.permute.xlu0 %647
      %651 = vset.pattern.permute.xlu0 0
      %652 = vperm.xlu0 %651, %v363
      %v653 = vpop.permute.xlu0 %652
      %656 = vset.pattern.permute.xlu0 0
      %657 = vperm.xlu0 %656, %v364
      %v658 = vpop.permute.xlu0 %657
      %v660 = vmul.f32 %v468, %v503
      %v661 = vmul.f32 %v469, %v508
      %v662 = vmul.f32 %v470, %v513
      %v663 = vmul.f32 %v471, %v518
      %v664 = vmul.f32 %v472, %v523
      %v665 = vmul.f32 %v473, %v528
      %v666 = vmul.f32 %v474, %v533
      %v667 = vmul.f32 %v475, %v538
      %v668 = vmul.f32 %v476, %v543
      %v669 = vmul.f32 %v477, %v548
      %v670 = vmul.f32 %v478, %v553
      %v671 = vmul.f32 %v479, %v558
      %v672 = vmul.f32 %v480, %v563
      %v673 = vmul.f32 %v481, %v568
      %v674 = vmul.f32 %v482, %v573
      %v675 = vmul.f32 %v483, %v578
      %v676 = vmul.f32 %v484, %v583
      %v677 = vmul.f32 %v485, %v588
      %v678 = vmul.f32 %v486, %v593
      %v679 = vmul.f32 %v487, %v598
      %v680 = vmul.f32 %v488, %v603
      %v681 = vmul.f32 %v489, %v608
      %v682 = vmul.f32 %v490, %v613
      %v683 = vmul.f32 %v491, %v618
      %v684 = vmul.f32 %v492, %v623
      %v685 = vmul.f32 %v493, %v628
      %v686 = vmul.f32 %v494, %v633
      %v687 = vmul.f32 %v495, %v638
      %v688 = vmul.f32 %v496, %v643
      %v689 = vmul.f32 %v497, %v648
      %v690 = vmul.f32 %v498, %v653
      %v691 = vmul.f32 %v499, %v658
      %v692 = vld [vmem:[%s3] sm:$0xf]
      %v693 = vld [vmem:[#allocation2 + $0x8] sm:$0xff]
      %v694 = vld [vmem:[#allocation2 + $0x10] sm:$0xff]
      %v695 = vld [vmem:[#allocation2 + $0x18] sm:$0xff]
      %v696 = vld [vmem:[#allocation2 + $0x20] sm:$0xff]
      %v697 = vld [vmem:[#allocation2 + $0x28] sm:$0xff]
      %v698 = vld [vmem:[#allocation2 + $0x30] sm:$0xff]
      %v699 = vld [vmem:[#allocation2 + $0x38] sm:$0xff]
      %v700 = vld [vmem:[#allocation2 + $0x40] sm:$0xff]
      %v701 = vld [vmem:[#allocation2 + $0x48] sm:$0xff]
      %v702 = vld [vmem:[#allocation2 + $0x50] sm:$0xff]
      %v703 = vld [vmem:[#allocation2 + $0x58] sm:$0xff]
      %v704 = vld [vmem:[#allocation2 + $0x60] sm:$0xff]
      %v705 = vld [vmem:[#allocation2 + $0x68] sm:$0xff]
      %v706 = vld [vmem:[#allocation2 + $0x70] sm:$0xff]
      %v707 = vld [vmem:[#allocation2 + $0x78] sm:$0xff]
      %v708 = vld [vmem:[#allocation2 + $0x80] sm:$0xff]
      %v709 = vld [vmem:[#allocation2 + $0x88] sm:$0xff]
      %v710 = vld [vmem:[#allocation2 + $0x90] sm:$0xff]
      %v711 = vld [vmem:[#allocation2 + $0x98] sm:$0xff]
      %v712 = vld [vmem:[#allocation2 + $0xa0] sm:$0xff]
      %v713 = vld [vmem:[#allocation2 + $0xa8] sm:$0xff]
      %v714 = vld [vmem:[#allocation2 + $0xb0] sm:$0xff]
      %v715 = vld [vmem:[#allocation2 + $0xb8] sm:$0xff]
      %v716 = vld [vmem:[#allocation2 + $0xc0] sm:$0xff]
      %v717 = vld [vmem:[#allocation2 + $0xc8] sm:$0xff]
      %v718 = vld [vmem:[#allocation2 + $0xd0] sm:$0xff]
      %v719 = vld [vmem:[#allocation2 + $0xd8] sm:$0xff]
      %v720 = vld [vmem:[#allocation2 + $0xe0] sm:$0xff]
      %v721 = vld [vmem:[#allocation2 + $0xe8] sm:$0xff]
      %v722 = vld [vmem:[#allocation2 + $0xf0] sm:$0xff]
      %v723 = vld [vmem:[#allocation2 + $0xf8] sm:$0xff]
      %v724 = vld [vmem:[#allocation2 + $0x100] sm:$0xff]
      %s725 = scalar_lea.vmem %s3, 4
      %v726 = vld [vmem:[%s725] sm:$0xf]
      %v728 = vsel %vm429, %v693, 0
      %v731 = vsel %vm429, %v694, 0
      %v734 = vsel %vm429, %v695, 0
      %v737 = vsel %vm429, %v696, 0
      %v740 = vsel %vm429, %v697, 0
      %v743 = vsel %vm429, %v698, 0
      %v746 = vsel %vm429, %v699, 0
      %v749 = vsel %vm429, %v700, 0
      %v752 = vsel %vm429, %v701, 0
      %v755 = vsel %vm429, %v702, 0
      %v758 = vsel %vm429, %v703, 0
      %v761 = vsel %vm429, %v704, 0
      %v764 = vsel %vm429, %v705, 0
      %v767 = vsel %vm429, %v706, 0
      %v770 = vsel %vm429, %v707, 0
      %v773 = vsel %vm429, %v708, 0
      %v776 = vsel %vm429, %v709, 0
      %v779 = vsel %vm429, %v710, 0
      %v782 = vsel %vm429, %v711, 0
      %v785 = vsel %vm429, %v712, 0
      %v788 = vsel %vm429, %v713, 0
      %v791 = vsel %vm429, %v714, 0
      %v794 = vsel %vm429, %v715, 0
      %v797 = vsel %vm429, %v716, 0
      %v800 = vsel %vm429, %v717, 0
      %v803 = vsel %vm429, %v718, 0
      %v806 = vsel %vm429, %v719, 0
      %v809 = vsel %vm429, %v720, 0
      %v812 = vsel %vm429, %v721, 0
      %v815 = vsel %vm429, %v722, 0
      %v818 = vsel %vm429, %v723, 0
      %v821 = vsel %vm429, %v724, 0
      %vm823 = vcmask 1043456
      %v825 = vsel %vm823, %v726, 0
      %827 = vmatprep.subr.mxu0 0.0
      %828 = vmatpush1.msra.mxu0 %v825
      %829 = vmatprep.subr.mxu0 0.0
      %830 = vmatpush1.msra.mxu0 0.0
      %831 = vmatprep.subr.mxu0 0.0
      %832 = vmatpush1.msra.mxu0 0.0
      %833 = vmatprep.subr.mxu0 0.0
      %834 = vmatpush1.msra.mxu0 0.0
      %835 = vmatprep.subr.mxu0 0.0
      %836 = vmatpush1.msra.mxu0 0.0
      %837 = vmatprep.subr.mxu0 0.0
      %838 = vmatpush1.msra.mxu0 0.0
      %839 = vmatprep.subr.mxu0 0.0
      %840 = vmatpush1.msra.mxu0 0.0
      %841 = vmatprep.subr.mxu0 0.0
      %842 = vmatpush1.msra.mxu0 0.0
      %843 = vmatprep.subr.mxu0 0.0
      %844 = vmatpush1.msra.mxu0 0.0
      %845 = vmatprep.subr.mxu0 0.0
      %846 = vmatpush1.msra.mxu0 0.0
      %847 = vmatprep.subr.mxu0 0.0
      %848 = vmatpush1.msra.mxu0 0.0
      %849 = vmatprep.subr.mxu0 0.0
      %850 = vmatpush1.msra.mxu0 0.0
      %851 = vmatprep.subr.mxu0 0.0
      %852 = vmatpush1.msra.mxu0 0.0
      %853 = vmatprep.subr.mxu0 0.0
      %854 = vmatpush1.msra.mxu0 0.0
      %855 = vmatprep.subr.mxu0 0.0
      %856 = vmatpush1.msra.mxu0 0.0
      %857 = vmatprep.subr.mxu0 0.0
      %858 = vmatpush1.msra.mxu0 0.0
      %859 = vmatprep.subr.mxu0 0.0
      %860 = vmatpush1.msra.mxu0 0.0
      %861 = vmatprep.subr.mxu0 0.0
      %862 = vmatpush1.msra.mxu0 0.0
      %863 = vmatprep.subr.mxu0 0.0
      %864 = vmatpush1.msra.mxu0 0.0
      %865 = vmatprep.subr.mxu0 0.0
      %866 = vmatpush1.msra.mxu0 0.0
      %867 = vmatprep.subr.mxu0 0.0
      %868 = vmatpush1.msra.mxu0 0.0
      %869 = vmatprep.subr.mxu0 0.0
      %870 = vmatpush1.msra.mxu0 0.0
      %871 = vmatprep.subr.mxu0 0.0
      %872 = vmatpush1.msra.mxu0 0.0
      %873 = vmatprep.subr.mxu0 0.0
      %874 = vmatpush1.msra.mxu0 0.0
      %875 = vmatprep.subr.mxu0 0.0
      %876 = vmatpush1.msra.mxu0 0.0
      %877 = vmatprep.subr.mxu0 0.0
      %878 = vmatpush1.msra.mxu0 0.0
      %879 = vmatprep.subr.mxu0 0.0
      %880 = vmatpush1.msra.mxu0 0.0
      %881 = vmatprep.subr.mxu0 0.0
      %882 = vmatpush1.msra.mxu0 0.0
      %883 = vmatprep.subr.mxu0 0.0
      %884 = vmatpush1.msra.mxu0 0.0
      %885 = vmatprep.subr.mxu0 0.0
      %886 = vmatpush1.msra.mxu0 0.0
      %887 = vmatprep.subr.mxu0 0.0
      %888 = vmatpush1.msra.mxu0 0.0
      %889 = vmatprep.subr.mxu0 0.0
      %890 = vmatpush1.msra.mxu0 0.0
      %891 = vmatprep.mubr.f32.mxu0 0.0
      %892 = vmatmul.mubr.f32.gmra.mrb[0].mxu0 %v728
      %v893 = vpop.f32.mrb[0].mxu0
      %v894 = vadd.f32 0.0, %v893
      %v895 = vpop.f32.mrb[0].mxu0
      %896 = vmatprep.mubr.f32.mxu0 0.0
      %897 = vmatmul.mubr.f32.gmra.mrb[0].mxu0 %v731
      %v898 = vpop.f32.mrb[0].mxu0
      %v899 = vadd.f32 0.0, %v898
      %v900 = vpop.f32.mrb[0].mxu0
      %901 = vmatprep.mubr.f32.mxu0 0.0
      %902 = vmatmul.mubr.f32.gmra.mrb[0].mxu0 %v734
      %v903 = vpop.f32.mrb[0].mxu0
      %v904 = vadd.f32 0.0, %v903
      %v905 = vpop.f32.mrb[0].mxu0
      %906 = vmatprep.mubr.f32.mxu0 0.0
      %907 = vmatmul.mubr.f32.gmra.mrb[0].mxu0 %v737
      %v908 = vpop.f32.mrb[0].mxu0
      %v909 = vadd.f32 0.0, %v908
      %v910 = vpop.f32.mrb[0].mxu0
      %911 = vmatprep.mubr.f32.mxu0 0.0
      %912 = vmatmul.mubr.f32.gmra.mrb[0].mxu0 %v740
      %v913 = vpop.f32.mrb[0].mxu0
      %v914 = vadd.f32 0.0, %v913
      %v915 = vpop.f32.mrb[0].mxu0
      %916 = vmatprep.mubr.f32.mxu0 0.0
      %917 = vmatmul.mubr.f32.gmra.mrb[0].mxu0 %v743
      %v918 = vpop.f32.mrb[0].mxu0
      %v919 = vadd.f32 0.0, %v918
      %v920 = vpop.f32.mrb[0].mxu0
      %921 = vmatprep.mubr.f32.mxu0 0.0
      %922 = vmatmul.mubr.f32.gmra.mrb[0].mxu0 %v746
      %v923 = vpop.f32.mrb[0].mxu0
      %v924 = vadd.f32 0.0, %v923
      %v925 = vpop.f32.mrb[0].mxu0
      %926 = vmatprep.mubr.f32.mxu0 0.0
      %927 = vmatmul.mubr.f32.gmra.mrb[0].mxu0 %v749
      %v928 = vpop.f32.mrb[0].mxu0
      %v929 = vadd.f32 0.0, %v928
      %v930 = vpop.f32.mrb[0].mxu0
      %931 = vmatprep.mubr.f32.mxu0 0.0
      %932 = vmatmul.mubr.f32.gmra.mrb[0].mxu0 %v752
      %v933 = vpop.f32.mrb[0].mxu0
      %v934 = vadd.f32 0.0, %v933
      %v935 = vpop.f32.mrb[0].mxu0
      %936 = vmatprep.mubr.f32.mxu0 0.0
      %937 = vmatmul.mubr.f32.gmra.mrb[0].mxu0 %v755
      %v938 = vpop.f32.mrb[0].mxu0
      %v939 = vadd.f32 0.0, %v938
      %v940 = vpop.f32.mrb[0].mxu0
      %941 = vmatprep.mubr.f32.mxu0 0.0
      %942 = vmatmul.mubr.f32.gmra.mrb[0].mxu0 %v758
      %v943 = vpop.f32.mrb[0].mxu0
      %v944 = vadd.f32 0.0, %v943
      %v945 = vpop.f32.mrb[0].mxu0
      %946 = vmatprep.mubr.f32.mxu0 0.0
      %947 = vmatmul.mubr.f32.gmra.mrb[0].mxu0 %v761
      %v948 = vpop.f32.mrb[0].mxu0
      %v949 = vadd.f32 0.0, %v948
      %v950 = vpop.f32.mrb[0].mxu0
      %951 = vmatprep.mubr.f32.mxu0 0.0
      %952 = vmatmul.mubr.f32.gmra.mrb[0].mxu0 %v764
      %v953 = vpop.f32.mrb[0].mxu0
      %v954 = vadd.f32 0.0, %v953
      %v955 = vpop.f32.mrb[0].mxu0
      %956 = vmatprep.mubr.f32.mxu0 0.0
      %957 = vmatmul.mubr.f32.gmra.mrb[0].mxu0 %v767
      %v958 = vpop.f32.mrb[0].mxu0
      %v959 = vadd.f32 0.0, %v958
      %v960 = vpop.f32.mrb[0].mxu0
      %961 = vmatprep.mubr.f32.mxu0 0.0
      %962 = vmatmul.mubr.f32.gmra.mrb[0].mxu0 %v770
      %v963 = vpop.f32.mrb[0].mxu0
      %v964 = vadd.f32 0.0, %v963
      %v965 = vpop.f32.mrb[0].mxu0
      %966 = vmatprep.mubr.f32.mxu0 0.0
      %967 = vmatmul.mubr.f32.gmra.mrb[0].mxu0 %v773
      %v968 = vpop.f32.mrb[0].mxu0
      %v969 = vadd.f32 0.0, %v968
      %v970 = vpop.f32.mrb[0].mxu0
      %971 = vmatprep.mubr.f32.mxu0 0.0
      %972 = vmatmul.mubr.f32.gmra.mrb[0].mxu0 %v776
      %v973 = vpop.f32.mrb[0].mxu0
      %v974 = vadd.f32 0.0, %v973
      %v975 = vpop.f32.mrb[0].mxu0
      %976 = vmatprep.mubr.f32.mxu0 0.0
      %977 = vmatmul.mubr.f32.gmra.mrb[0].mxu0 %v779
      %v978 = vpop.f32.mrb[0].mxu0
      %v979 = vadd.f32 0.0, %v978
      %v980 = vpop.f32.mrb[0].mxu0
      %981 = vmatprep.mubr.f32.mxu0 0.0
      %982 = vmatmul.mubr.f32.gmra.mrb[0].mxu0 %v782
      %v983 = vpop.f32.mrb[0].mxu0
      %v984 = vadd.f32 0.0, %v983
      %v985 = vpop.f32.mrb[0].mxu0
      %986 = vmatprep.mubr.f32.mxu0 0.0
      %987 = vmatmul.mubr.f32.gmra.mrb[0].mxu0 %v785
      %v988 = vpop.f32.mrb[0].mxu0
      %v989 = vadd.f32 0.0, %v988
      %v990 = vpop.f32.mrb[0].mxu0
      %991 = vmatprep.mubr.f32.mxu0 0.0
      %992 = vmatmul.mubr.f32.gmra.mrb[0].mxu0 %v788
      %v993 = vpop.f32.mrb[0].mxu0
      %v994 = vadd.f32 0.0, %v993
      %v995 = vpop.f32.mrb[0].mxu0
      %996 = vmatprep.mubr.f32.mxu0 0.0
      %997 = vmatmul.mubr.f32.gmra.mrb[0].mxu0 %v791
      %v998 = vpop.f32.mrb[0].mxu0
      %v999 = vadd.f32 0.0, %v998
      %v1000 = vpop.f32.mrb[0].mxu0
      %1001 = vmatprep.mubr.f32.mxu0 0.0
      %1002 = vmatmul.mubr.f32.gmra.mrb[0].mxu0 %v794
      %v1003 = vpop.f32.mrb[0].mxu0
      %v1004 = vadd.f32 0.0, %v1003
      %v1005 = vpop.f32.mrb[0].mxu0
      %1006 = vmatprep.mubr.f32.mxu0 0.0
      %1007 = vmatmul.mubr.f32.gmra.mrb[0].mxu0 %v797
      %v1008 = vpop.f32.mrb[0].mxu0
      %v1009 = vadd.f32 0.0, %v1008
      %v1010 = vpop.f32.mrb[0].mxu0
      %1011 = vmatprep.mubr.f32.mxu0 0.0
      %1012 = vmatmul.mubr.f32.gmra.mrb[0].mxu0 %v800
      %v1013 = vpop.f32.mrb[0].mxu0
      %v1014 = vadd.f32 0.0, %v1013
      %v1015 = vpop.f32.mrb[0].mxu0
      %1016 = vmatprep.mubr.f32.mxu0 0.0
      %1017 = vmatmul.mubr.f32.gmra.mrb[0].mxu0 %v803
      %v1018 = vpop.f32.mrb[0].mxu0
      %v1019 = vadd.f32 0.0, %v1018
      %v1020 = vpop.f32.mrb[0].mxu0
      %1021 = vmatprep.mubr.f32.mxu0 0.0
      %1022 = vmatmul.mubr.f32.gmra.mrb[0].mxu0 %v806
      %v1023 = vpop.f32.mrb[0].mxu0
      %v1024 = vadd.f32 0.0, %v1023
      %v1025 = vpop.f32.mrb[0].mxu0
      %1026 = vmatprep.mubr.f32.mxu0 0.0
      %1027 = vmatmul.mubr.f32.gmra.mrb[0].mxu0 %v809
      %v1028 = vpop.f32.mrb[0].mxu0
      %v1029 = vadd.f32 0.0, %v1028
      %v1030 = vpop.f32.mrb[0].mxu0
      %1031 = vmatprep.mubr.f32.mxu0 0.0
      %1032 = vmatmul.mubr.f32.gmra.mrb[0].mxu0 %v812
      %v1033 = vpop.f32.mrb[0].mxu0
      %v1034 = vadd.f32 0.0, %v1033
      %v1035 = vpop.f32.mrb[0].mxu0
      %1036 = vmatprep.mubr.f32.mxu0 0.0
      %1037 = vmatmul.mubr.f32.gmra.mrb[0].mxu0 %v815
      %v1038 = vpop.f32.mrb[0].mxu0
      %v1039 = vadd.f32 0.0, %v1038
      %v1040 = vpop.f32.mrb[0].mxu0
      %1041 = vmatprep.mubr.f32.mxu0 0.0
      %1042 = vmatmul.mubr.f32.gmra.mrb[0].mxu0 %v818
      %v1043 = vpop.f32.mrb[0].mxu0
      %v1044 = vadd.f32 0.0, %v1043
      %v1045 = vpop.f32.mrb[0].mxu0
      %1046 = vmatprep.mubr.f32.mxu0 0.0
      %1047 = vmatmul.mubr.f32.gmra.mrb[0].mxu0 %v821
      %v1048 = vpop.f32.mrb[0].mxu0
      %v1049 = vadd.f32 0.0, %v1048
      %v1050 = vpop.f32.mrb[0].mxu0
      %1051 = vdwg.mxu0
      %v1053 = vsel %vm429, %v660, 0
      %v1056 = vsel %vm429, %v661, 0
      %v1059 = vsel %vm429, %v662, 0
      %v1062 = vsel %vm429, %v663, 0
      %v1065 = vsel %vm429, %v664, 0
      %v1068 = vsel %vm429, %v665, 0
      %v1071 = vsel %vm429, %v666, 0
      %v1074 = vsel %vm429, %v667, 0
      %v1077 = vsel %vm429, %v668, 0
      %v1080 = vsel %vm429, %v669, 0
      %v1083 = vsel %vm429, %v670, 0
      %v1086 = vsel %vm429, %v671, 0
      %v1089 = vsel %vm429, %v672, 0
      %v1092 = vsel %vm429, %v673, 0
      %v1095 = vsel %vm429, %v674, 0
      %v1098 = vsel %vm429, %v675, 0
      %v1101 = vsel %vm429, %v676, 0
      %v1104 = vsel %vm429, %v677, 0
      %v1107 = vsel %vm429, %v678, 0
      %v1110 = vsel %vm429, %v679, 0
      %v1113 = vsel %vm429, %v680, 0
      %v1116 = vsel %vm429, %v681, 0
      %v1119 = vsel %vm429, %v682, 0
      %v1122 = vsel %vm429, %v683, 0
      %v1125 = vsel %vm429, %v684, 0
      %v1128 = vsel %vm429, %v685, 0
      %v1131 = vsel %vm429, %v686, 0
      %v1134 = vsel %vm429, %v687, 0
      %v1137 = vsel %vm429, %v688, 0
      %v1140 = vsel %vm429, %v689, 0
      %v1143 = vsel %vm429, %v690, 0
      %v1146 = vsel %vm429, %v691, 0
      %v1149 = vsel %vm823, %v692, 0
      %1151 = vmatprep.subr.mxu0 0.0
      %1152 = vmatpush1.msra.mxu0 %v1149
      %1153 = vmatprep.subr.mxu0 0.0
      %1154 = vmatpush1.msra.mxu0 0.0
      %1155 = vmatprep.subr.mxu0 0.0
      %1156 = vmatpush1.msra.mxu0 0.0
      %1157 = vmatprep.subr.mxu0 0.0
      %1158 = vmatpush1.msra.mxu0 0.0
      %1159 = vmatprep.subr.mxu0 0.0
      %1160 = vmatpush1.msra.mxu0 0.0
      %1161 = vmatprep.subr.mxu0 0.0
      %1162 = vmatpush1.msra.mxu0 0.0
      %1163 = vmatprep.subr.mxu0 0.0
      %1164 = vmatpush1.msra.mxu0 0.0
      %1165 = vmatprep.subr.mxu0 0.0
      %1166 = vmatpush1.msra.mxu0 0.0
      %1167 = vmatprep.subr.mxu0 0.0
      %1168 = vmatpush1.msra.mxu0 0.0
      %1169 = vmatprep.subr.mxu0 0.0
      %1170 = vmatpush1.msra.mxu0 0.0
      %1171 = vmatprep.subr.mxu0 0.0
      %1172 = vmatpush1.msra.mxu0 0.0
      %1173 = vmatprep.subr.mxu0 0.0
      %1174 = vmatpush1.msra.mxu0 0.0
      %1175 = vmatprep.subr.mxu0 0.0
      %1176 = vmatpush1.msra.mxu0 0.0
      %1177 = vmatprep.subr.mxu0 0.0
      %1178 = vmatpush1.msra.mxu0 0.0
      %1179 = vmatprep.subr.mxu0 0.0
      %1180 = vmatpush1.msra.mxu0 0.0
      %1181 = vmatprep.subr.mxu0 0.0
      %1182 = vmatpush1.msra.mxu0 0.0
      %1183 = vmatprep.subr.mxu0 0.0
      %1184 = vmatpush1.msra.mxu0 0.0
      %1185 = vmatprep.subr.mxu0 0.0
      %1186 = vmatpush1.msra.mxu0 0.0
      %1187 = vmatprep.subr.mxu0 0.0
      %1188 = vmatpush1.msra.mxu0 0.0
      %1189 = vmatprep.subr.mxu0 0.0
      %1190 = vmatpush1.msra.mxu0 0.0
      %1191 = vmatprep.subr.mxu0 0.0
      %1192 = vmatpush1.msra.mxu0 0.0
      %1193 = vmatprep.subr.mxu0 0.0
      %1194 = vmatpush1.msra.mxu0 0.0
      %1195 = vmatprep.subr.mxu0 0.0
      %1196 = vmatpush1.msra.mxu0 0.0
      %1197 = vmatprep.subr.mxu0 0.0
      %1198 = vmatpush1.msra.mxu0 0.0
      %1199 = vmatprep.subr.mxu0 0.0
      %1200 = vmatpush1.msra.mxu0 0.0
      %1201 = vmatprep.subr.mxu0 0.0
      %1202 = vmatpush1.msra.mxu0 0.0
      %1203 = vmatprep.subr.mxu0 0.0
      %1204 = vmatpush1.msra.mxu0 0.0
      %1205 = vmatprep.subr.mxu0 0.0
      %1206 = vmatpush1.msra.mxu0 0.0
      %1207 = vmatprep.subr.mxu0 0.0
      %1208 = vmatpush1.msra.mxu0 0.0
      %1209 = vmatprep.subr.mxu0 0.0
      %1210 = vmatpush1.msra.mxu0 0.0
      %1211 = vmatprep.subr.mxu0 0.0
      %1212 = vmatpush1.msra.mxu0 0.0
      %1213 = vmatprep.subr.mxu0 0.0
      %1214 = vmatpush1.msra.mxu0 0.0
      %1215 = vmatprep.mubr.f32.mxu0 0.0
      %1216 = vmatmul.mubr.f32.gmra.mrb[0].mxu0 %v1053
      %v1217 = vpop.f32.mrb[0].mxu0
      %v1218 = vadd.f32 %v894, %v1217
      %v1219 = vpop.f32.mrb[0].mxu0
      %1220 = vmatprep.mubr.f32.mxu0 0.0
      %1221 = vmatmul.mubr.f32.gmra.mrb[0].mxu0 %v1056
      %v1222 = vpop.f32.mrb[0].mxu0
      %v1223 = vadd.f32 %v899, %v1222
      %v1224 = vpop.f32.mrb[0].mxu0
      %1225 = vmatprep.mubr.f32.mxu0 0.0
      %1226 = vmatmul.mubr.f32.gmra.mrb[0].mxu0 %v1059
      %v1227 = vpop.f32.mrb[0].mxu0
      %v1228 = vadd.f32 %v904, %v1227
      %v1229 = vpop.f32.mrb[0].mxu0
      %1230 = vmatprep.mubr.f32.mxu0 0.0
      %1231 = vmatmul.mubr.f32.gmra.mrb[0].mxu0 %v1062
      %v1232 = vpop.f32.mrb[0].mxu0
      %v1233 = vadd.f32 %v909, %v1232
      %v1234 = vpop.f32.mrb[0].mxu0
      %1235 = vmatprep.mubr.f32.mxu0 0.0
      %1236 = vmatmul.mubr.f32.gmra.mrb[0].mxu0 %v1065
      %v1237 = vpop.f32.mrb[0].mxu0
      %v1238 = vadd.f32 %v914, %v1237
      %v1239 = vpop.f32.mrb[0].mxu0
      %1240 = vmatprep.mubr.f32.mxu0 0.0
      %1241 = vmatmul.mubr.f32.gmra.mrb[0].mxu0 %v1068
      %v1242 = vpop.f32.mrb[0].mxu0
      %v1243 = vadd.f32 %v919, %v1242
      %v1244 = vpop.f32.mrb[0].mxu0
      %1245 = vmatprep.mubr.f32.mxu0 0.0
      %1246 = vmatmul.mubr.f32.gmra.mrb[0].mxu0 %v1071
      %v1247 = vpop.f32.mrb[0].mxu0
      %v1248 = vadd.f32 %v924, %v1247
      %v1249 = vpop.f32.mrb[0].mxu0
      %1250 = vmatprep.mubr.f32.mxu0 0.0
      %1251 = vmatmul.mubr.f32.gmra.mrb[0].mxu0 %v1074
      %v1252 = vpop.f32.mrb[0].mxu0
      %v1253 = vadd.f32 %v929, %v1252
      %v1254 = vpop.f32.mrb[0].mxu0
      %1255 = vmatprep.mubr.f32.mxu0 0.0
      %1256 = vmatmul.mubr.f32.gmra.mrb[0].mxu0 %v1077
      %v1257 = vpop.f32.mrb[0].mxu0
      %v1258 = vadd.f32 %v934, %v1257
      %v1259 = vpop.f32.mrb[0].mxu0
      %1260 = vmatprep.mubr.f32.mxu0 0.0
      %1261 = vmatmul.mubr.f32.gmra.mrb[0].mxu0 %v1080
      %v1262 = vpop.f32.mrb[0].mxu0
      %v1263 = vadd.f32 %v939, %v1262
      %v1264 = vpop.f32.mrb[0].mxu0
      %1265 = vmatprep.mubr.f32.mxu0 0.0
      %1266 = vmatmul.mubr.f32.gmra.mrb[0].mxu0 %v1083
      %v1267 = vpop.f32.mrb[0].mxu0
      %v1268 = vadd.f32 %v944, %v1267
      %v1269 = vpop.f32.mrb[0].mxu0
      %1270 = vmatprep.mubr.f32.mxu0 0.0
      %1271 = vmatmul.mubr.f32.gmra.mrb[0].mxu0 %v1086
      %v1272 = vpop.f32.mrb[0].mxu0
      %v1273 = vadd.f32 %v949, %v1272
      %v1274 = vpop.f32.mrb[0].mxu0
      %1275 = vmatprep.mubr.f32.mxu0 0.0
      %1276 = vmatmul.mubr.f32.gmra.mrb[0].mxu0 %v1089
      %v1277 = vpop.f32.mrb[0].mxu0
      %v1278 = vadd.f32 %v954, %v1277
      %v1279 = vpop.f32.mrb[0].mxu0
      %1280 = vmatprep.mubr.f32.mxu0 0.0
      %1281 = vmatmul.mubr.f32.gmra.mrb[0].mxu0 %v1092
      %v1282 = vpop.f32.mrb[0].mxu0
      %v1283 = vadd.f32 %v959, %v1282
      %v1284 = vpop.f32.mrb[0].mxu0
      %1285 = vmatprep.mubr.f32.mxu0 0.0
      %1286 = vmatmul.mubr.f32.gmra.mrb[0].mxu0 %v1095
      %v1287 = vpop.f32.mrb[0].mxu0
      %v1288 = vadd.f32 %v964, %v1287
      %v1289 = vpop.f32.mrb[0].mxu0
      %1290 = vmatprep.mubr.f32.mxu0 0.0
      %1291 = vmatmul.mubr.f32.gmra.mrb[0].mxu0 %v1098
      %v1292 = vpop.f32.mrb[0].mxu0
      %v1293 = vadd.f32 %v969, %v1292
      %v1294 = vpop.f32.mrb[0].mxu0
      %1295 = vmatprep.mubr.f32.mxu0 0.0
      %1296 = vmatmul.mubr.f32.gmra.mrb[0].mxu0 %v1101
      %v1297 = vpop.f32.mrb[0].mxu0
      %v1298 = vadd.f32 %v974, %v1297
      %v1299 = vpop.f32.mrb[0].mxu0
      %1300 = vmatprep.mubr.f32.mxu0 0.0
      %1301 = vmatmul.mubr.f32.gmra.mrb[0].mxu0 %v1104
      %v1302 = vpop.f32.mrb[0].mxu0
      %v1303 = vadd.f32 %v979, %v1302
      %v1304 = vpop.f32.mrb[0].mxu0
      %1305 = vmatprep.mubr.f32.mxu0 0.0
      %1306 = vmatmul.mubr.f32.gmra.mrb[0].mxu0 %v1107
      %v1307 = vpop.f32.mrb[0].mxu0
      %v1308 = vadd.f32 %v984, %v1307
      %v1309 = vpop.f32.mrb[0].mxu0
      %1310 = vmatprep.mubr.f32.mxu0 0.0
      %1311 = vmatmul.mubr.f32.gmra.mrb[0].mxu0 %v1110
      %v1312 = vpop.f32.mrb[0].mxu0
      %v1313 = vadd.f32 %v989, %v1312
      %v1314 = vpop.f32.mrb[0].mxu0
      %1315 = vmatprep.mubr.f32.mxu0 0.0
      %1316 = vmatmul.mubr.f32.gmra.mrb[0].mxu0 %v1113
      %v1317 = vpop.f32.mrb[0].mxu0
      %v1318 = vadd.f32 %v994, %v1317
      %v1319 = vpop.f32.mrb[0].mxu0
      %1320 = vmatprep.mubr.f32.mxu0 0.0
      %1321 = vmatmul.mubr.f32.gmra.mrb[0].mxu0 %v1116
      %v1322 = vpop.f32.mrb[0].mxu0
      %v1323 = vadd.f32 %v999, %v1322
      %v1324 = vpop.f32.mrb[0].mxu0
      %1325 = vmatprep.mubr.f32.mxu0 0.0
      %1326 = vmatmul.mubr.f32.gmra.mrb[0].mxu0 %v1119
      %v1327 = vpop.f32.mrb[0].mxu0
      %v1328 = vadd.f32 %v1004, %v1327
      %v1329 = vpop.f32.mrb[0].mxu0
      %1330 = vmatprep.mubr.f32.mxu0 0.0
      %1331 = vmatmul.mubr.f32.gmra.mrb[0].mxu0 %v1122
      %v1332 = vpop.f32.mrb[0].mxu0
      %v1333 = vadd.f32 %v1009, %v1332
      %v1334 = vpop.f32.mrb[0].mxu0
      %1335 = vmatprep.mubr.f32.mxu0 0.0
      %1336 = vmatmul.mubr.f32.gmra.mrb[0].mxu0 %v1125
      %v1337 = vpop.f32.mrb[0].mxu0
      %v1338 = vadd.f32 %v1014, %v1337
      %v1339 = vpop.f32.mrb[0].mxu0
      %1340 = vmatprep.mubr.f32.mxu0 0.0
      %1341 = vmatmul.mubr.f32.gmra.mrb[0].mxu0 %v1128
      %v1342 = vpop.f32.mrb[0].mxu0
      %v1343 = vadd.f32 %v1019, %v1342
      %v1344 = vpop.f32.mrb[0].mxu0
      %1345 = vmatprep.mubr.f32.mxu0 0.0
      %1346 = vmatmul.mubr.f32.gmra.mrb[0].mxu0 %v1131
      %v1347 = vpop.f32.mrb[0].mxu0
      %v1348 = vadd.f32 %v1024, %v1347
      %v1349 = vpop.f32.mrb[0].mxu0
      %1350 = vmatprep.mubr.f32.mxu0 0.0
      %1351 = vmatmul.mubr.f32.gmra.mrb[0].mxu0 %v1134
      %v1352 = vpop.f32.mrb[0].mxu0
      %v1353 = vadd.f32 %v1029, %v1352
      %v1354 = vpop.f32.mrb[0].mxu0
      %1355 = vmatprep.mubr.f32.mxu0 0.0
      %1356 = vmatmul.mubr.f32.gmra.mrb[0].mxu0 %v1137
      %v1357 = vpop.f32.mrb[0].mxu0
      %v1358 = vadd.f32 %v1034, %v1357
      %v1359 = vpop.f32.mrb[0].mxu0
      %1360 = vmatprep.mubr.f32.mxu0 0.0
      %1361 = vmatmul.mubr.f32.gmra.mrb[0].mxu0 %v1140
      %v1362 = vpop.f32.mrb[0].mxu0
      %v1363 = vadd.f32 %v1039, %v1362
      %v1364 = vpop.f32.mrb[0].mxu0
      %1365 = vmatprep.mubr.f32.mxu0 0.0
      %1366 = vmatmul.mubr.f32.gmra.mrb[0].mxu0 %v1143
      %v1367 = vpop.f32.mrb[0].mxu0
      %v1368 = vadd.f32 %v1044, %v1367
      %v1369 = vpop.f32.mrb[0].mxu0
      %1370 = vmatprep.mubr.f32.mxu0 0.0
      %1371 = vmatmul.mubr.f32.gmra.mrb[0].mxu0 %v1146
      %v1372 = vpop.f32.mrb[0].mxu0
      %v1373 = vadd.f32 %v1049, %v1372
      %v1374 = vpop.f32.mrb[0].mxu0
      %1375 = vdwg.mxu0
      %v1376 = vld [vmem:[#allocation2 + $0x9] sm:$0xff]
      %v1377 = vld [vmem:[#allocation2 + $0x11] sm:$0xff]
      %v1378 = vld [vmem:[#allocation2 + $0x19] sm:$0xff]
      %v1379 = vld [vmem:[#allocation2 + $0x21] sm:$0xff]
      %v1380 = vld [vmem:[#allocation2 + $0x29] sm:$0xff]
      %v1381 = vld [vmem:[#allocation2 + $0x31] sm:$0xff]
      %v1382 = vld [vmem:[#allocation2 + $0x39] sm:$0xff]
      %v1383 = vld [vmem:[#allocation2 + $0x41] sm:$0xff]
      %v1384 = vld [vmem:[#allocation2 + $0x49] sm:$0xff]
      %v1385 = vld [vmem:[#allocation2 + $0x51] sm:$0xff]
      %v1386 = vld [vmem:[#allocation2 + $0x59] sm:$0xff]
      %v1387 = vld [vmem:[#allocation2 + $0x61] sm:$0xff]
      %v1388 = vld [vmem:[#allocation2 + $0x69] sm:$0xff]
      %v1389 = vld [vmem:[#allocation2 + $0x71] sm:$0xff]
      %v1390 = vld [vmem:[#allocation2 + $0x79] sm:$0xff]
      %v1391 = vld [vmem:[#allocation2 + $0x81] sm:$0xff]
      %v1392 = vld [vmem:[#allocation2 + $0x89] sm:$0xff]
      %v1393 = vld [vmem:[#allocation2 + $0x91] sm:$0xff]
      %v1394 = vld [vmem:[#allocation2 + $0x99] sm:$0xff]
      %v1395 = vld [vmem:[#allocation2 + $0xa1] sm:$0xff]
      %v1396 = vld [vmem:[#allocation2 + $0xa9] sm:$0xff]
      %v1397 = vld [vmem:[#allocation2 + $0xb1] sm:$0xff]
      %v1398 = vld [vmem:[#allocation2 + $0xb9] sm:$0xff]
      %v1399 = vld [vmem:[#allocation2 + $0xc1] sm:$0xff]
      %v1400 = vld [vmem:[#allocation2 + $0xc9] sm:$0xff]
      %v1401 = vld [vmem:[#allocation2 + $0xd1] sm:$0xff]
      %v1402 = vld [vmem:[#allocation2 + $0xd9] sm:$0xff]
      %v1403 = vld [vmem:[#allocation2 + $0xe1] sm:$0xff]
      %v1404 = vld [vmem:[#allocation2 + $0xe9] sm:$0xff]
      %v1405 = vld [vmem:[#allocation2 + $0xf1] sm:$0xff]
      %v1406 = vld [vmem:[#allocation2 + $0xf9] sm:$0xff]
      %v1407 = vld [vmem:[#allocation2 + $0x101] sm:$0xff]
      %1409 = vset.pattern.permute.xlu0 0
      %1410 = vperm.xlu0 %1409, %v365
      %v1411 = vpop.permute.xlu0 %1410
      %1414 = vset.pattern.permute.xlu0 0
      %1415 = vperm.xlu0 %1414, %v366
      %v1416 = vpop.permute.xlu0 %1415
      %1419 = vset.pattern.permute.xlu0 0
      %1420 = vperm.xlu0 %1419, %v367
      %v1421 = vpop.permute.xlu0 %1420
      %1424 = vset.pattern.permute.xlu0 0
      %1425 = vperm.xlu0 %1424, %v368
      %v1426 = vpop.permute.xlu0 %1425
      %1429 = vset.pattern.permute.xlu0 0
      %1430 = vperm.xlu0 %1429, %v369
      %v1431 = vpop.permute.xlu0 %1430
      %1434 = vset.pattern.permute.xlu0 0
      %1435 = vperm.xlu0 %1434, %v370
      %v1436 = vpop.permute.xlu0 %1435
      %1439 = vset.pattern.permute.xlu0 0
      %1440 = vperm.xlu0 %1439, %v371
      %v1441 = vpop.permute.xlu0 %1440
      %1444 = vset.pattern.permute.xlu0 0
      %1445 = vperm.xlu0 %1444, %v372
      %v1446 = vpop.permute.xlu0 %1445
      %1449 = vset.pattern.permute.xlu0 0
      %1450 = vperm.xlu0 %1449, %v373
      %v1451 = vpop.permute.xlu0 %1450
      %1454 = vset.pattern.permute.xlu0 0
      %1455 = vperm.xlu0 %1454, %v374
      %v1456 = vpop.permute.xlu0 %1455
      %1459 = vset.pattern.permute.xlu0 0
      %1460 = vperm.xlu0 %1459, %v375
      %v1461 = vpop.permute.xlu0 %1460
      %1464 = vset.pattern.permute.xlu0 0
      %1465 = vperm.xlu0 %1464, %v376
      %v1466 = vpop.permute.xlu0 %1465
      %1469 = vset.pattern.permute.xlu0 0
      %1470 = vperm.xlu0 %1469, %v377
      %v1471 = vpop.permute.xlu0 %1470
      %1474 = vset.pattern.permute.xlu0 0
      %1475 = vperm.xlu0 %1474, %v378
      %v1476 = vpop.permute.xlu0 %1475
      %1479 = vset.pattern.permute.xlu0 0
      %1480 = vperm.xlu0 %1479, %v379
      %v1481 = vpop.permute.xlu0 %1480
      %1484 = vset.pattern.permute.xlu0 0
      %1485 = vperm.xlu0 %1484, %v380
      %v1486 = vpop.permute.xlu0 %1485
      %1489 = vset.pattern.permute.xlu0 0
      %1490 = vperm.xlu0 %1489, %v381
      %v1491 = vpop.permute.xlu0 %1490
      %1494 = vset.pattern.permute.xlu0 0
      %1495 = vperm.xlu0 %1494, %v382
      %v1496 = vpop.permute.xlu0 %1495
      %1499 = vset.pattern.permute.xlu0 0
      %1500 = vperm.xlu0 %1499, %v383
      %v1501 = vpop.permute.xlu0 %1500
      %1504 = vset.pattern.permute.xlu0 0
      %1505 = vperm.xlu0 %1504, %v384
      %v1506 = vpop.permute.xlu0 %1505
      %1509 = vset.pattern.permute.xlu0 0
      %1510 = vperm.xlu0 %1509, %v385
      %v1511 = vpop.permute.xlu0 %1510
      %1514 = vset.pattern.permute.xlu0 0
      %1515 = vperm.xlu0 %1514, %v386
      %v1516 = vpop.permute.xlu0 %1515
      %1519 = vset.pattern.permute.xlu0 0
      %1520 = vperm.xlu0 %1519, %v387
      %v1521 = vpop.permute.xlu0 %1520
      %1524 = vset.pattern.permute.xlu0 0
      %1525 = vperm.xlu0 %1524, %v388
      %v1526 = vpop.permute.xlu0 %1525
      %1529 = vset.pattern.permute.xlu0 0
      %1530 = vperm.xlu0 %1529, %v389
      %v1531 = vpop.permute.xlu0 %1530
      %1534 = vset.pattern.permute.xlu0 0
      %1535 = vperm.xlu0 %1534, %v390
      %v1536 = vpop.permute.xlu0 %1535
      %1539 = vset.pattern.permute.xlu0 0
      %1540 = vperm.xlu0 %1539, %v391
      %v1541 = vpop.permute.xlu0 %1540
      %1544 = vset.pattern.permute.xlu0 0
      %1545 = vperm.xlu0 %1544, %v392
      %v1546 = vpop.permute.xlu0 %1545
      %1549 = vset.pattern.permute.xlu0 0
      %1550 = vperm.xlu0 %1549, %v393
      %v1551 = vpop.permute.xlu0 %1550
      %1554 = vset.pattern.permute.xlu0 0
      %1555 = vperm.xlu0 %1554, %v394
      %v1556 = vpop.permute.xlu0 %1555
      %1559 = vset.pattern.permute.xlu0 0
      %1560 = vperm.xlu0 %1559, %v395
      %v1561 = vpop.permute.xlu0 %1560
      %1564 = vset.pattern.permute.xlu0 0
      %1565 = vperm.xlu0 %1564, %v396
      %v1566 = vpop.permute.xlu0 %1565
      %v1568 = vmul.f32 %v1376, %v1411
      %v1569 = vmul.f32 %v1377, %v1416
      %v1570 = vmul.f32 %v1378, %v1421
      %v1571 = vmul.f32 %v1379, %v1426
      %v1572 = vmul.f32 %v1380, %v1431
      %v1573 = vmul.f32 %v1381, %v1436
      %v1574 = vmul.f32 %v1382, %v1441
      %v1575 = vmul.f32 %v1383, %v1446
      %v1576 = vmul.f32 %v1384, %v1451
      %v1577 = vmul.f32 %v1385, %v1456
      %v1578 = vmul.f32 %v1386, %v1461
      %v1579 = vmul.f32 %v1387, %v1466
      %v1580 = vmul.f32 %v1388, %v1471
      %v1581 = vmul.f32 %v1389, %v1476
      %v1582 = vmul.f32 %v1390, %v1481
      %v1583 = vmul.f32 %v1391, %v1486
      %v1584 = vmul.f32 %v1392, %v1491
      %v1585 = vmul.f32 %v1393, %v1496
      %v1586 = vmul.f32 %v1394, %v1501
      %v1587 = vmul.f32 %v1395, %v1506
      %v1588 = vmul.f32 %v1396, %v1511
      %v1589 = vmul.f32 %v1397, %v1516
      %v1590 = vmul.f32 %v1398, %v1521
      %v1591 = vmul.f32 %v1399, %v1526
      %v1592 = vmul.f32 %v1400, %v1531
      %v1593 = vmul.f32 %v1401, %v1536
      %v1594 = vmul.f32 %v1402, %v1541
      %v1595 = vmul.f32 %v1403, %v1546
      %v1596 = vmul.f32 %v1404, %v1551
      %v1597 = vmul.f32 %v1405, %v1556
      %v1598 = vmul.f32 %v1406, %v1561
      %v1599 = vmul.f32 %v1407, %v1566
      %s1600 = scalar_lea.vmem %s3, 8
      %v1601 = vld [vmem:[%s1600] sm:$0xf]
      %v1603 = vsel %vm429, %v1568, 0
      %v1606 = vsel %vm429, %v1569, 0
      %v1609 = vsel %vm429, %v1570, 0
      %v1612 = vsel %vm429, %v1571, 0
      %v1615 = vsel %vm429, %v1572, 0
      %v1618 = vsel %vm429, %v1573, 0
      %v1621 = vsel %vm429, %v1574, 0
      %v1624 = vsel %vm429, %v1575, 0
      %v1627 = vsel %vm429, %v1576, 0
      %v1630 = vsel %vm429, %v1577, 0
      %v1633 = vsel %vm429, %v1578, 0
      %v1636 = vsel %vm429, %v1579, 0
      %v1639 = vsel %vm429, %v1580, 0
      %v1642 = vsel %vm429, %v1581, 0
      %v1645 = vsel %vm429, %v1582, 0
      %v1648 = vsel %vm429, %v1583, 0
      %v1651 = vsel %vm429, %v1584, 0
      %v1654 = vsel %vm429, %v1585, 0
      %v1657 = vsel %vm429, %v1586, 0
      %v1660 = vsel %vm429, %v1587, 0
      %v1663 = vsel %vm429, %v1588, 0
      %v1666 = vsel %vm429, %v1589, 0
      %v1669 = vsel %vm429, %v1590, 0
      %v1672 = vsel %vm429, %v1591, 0
      %v1675 = vsel %vm429, %v1592, 0
      %v1678 = vsel %vm429, %v1593, 0
      %v1681 = vsel %vm429, %v1594, 0
      %v1684 = vsel %vm429, %v1595, 0
      %v1687 = vsel %vm429, %v1596, 0
      %v1690 = vsel %vm429, %v1597, 0
      %v1693 = vsel %vm429, %v1598, 0
      %v1696 = vsel %vm429, %v1599, 0
      %v1699 = vsel %vm823, %v1601, 0
      %1701 = vmatprep.subr.mxu0 0.0
      %1702 = vmatpush1.msra.mxu0 %v1699
      %1703 = vmatprep.subr.mxu0 0.0
      %1704 = vmatpush1.msra.mxu0 0.0
      %1705 = vmatprep.subr.mxu0 0.0
      %1706 = vmatpush1.msra.mxu0 0.0
      %1707 = vmatprep.subr.mxu0 0.0
      %1708 = vmatpush1.msra.mxu0 0.0
      %1709 = vmatprep.subr.mxu0 0.0
      %1710 = vmatpush1.msra.mxu0 0.0
      %1711 = vmatprep.subr.mxu0 0.0
      %1712 = vmatpush1.msra.mxu0 0.0
      %1713 = vmatprep.subr.mxu0 0.0
      %1714 = vmatpush1.msra.mxu0 0.0
      %1715 = vmatprep.subr.mxu0 0.0
      %1716 = vmatpush1.msra.mxu0 0.0
      %1717 = vmatprep.subr.mxu0 0.0
      %1718 = vmatpush1.msra.mxu0 0.0
      %1719 = vmatprep.subr.mxu0 0.0
      %1720 = vmatpush1.msra.mxu0 0.0
      %1721 = vmatprep.subr.mxu0 0.0
      %1722 = vmatpush1.msra.mxu0 0.0
      %1723 = vmatprep.subr.mxu0 0.0
      %1724 = vmatpush1.msra.mxu0 0.0
      %1725 = vmatprep.subr.mxu0 0.0
      %1726 = vmatpush1.msra.mxu0 0.0
      %1727 = vmatprep.subr.mxu0 0.0
      %1728 = vmatpush1.msra.mxu0 0.0
      %1729 = vmatprep.subr.mxu0 0.0
      %1730 = vmatpush1.msra.mxu0 0.0
      %1731 = vmatprep.subr.mxu0 0.0
      %1732 = vmatpush1.msra.mxu0 0.0
      %1733 = vmatprep.subr.mxu0 0.0
      %1734 = vmatpush1.msra.mxu0 0.0
      %1735 = vmatprep.subr.mxu0 0.0
      %1736 = vmatpush1.msra.mxu0 0.0
      %1737 = vmatprep.subr.mxu0 0.0
      %1738 = vmatpush1.msra.mxu0 0.0
      %1739 = vmatprep.subr.mxu0 0.0
      %1740 = vmatpush1.msra.mxu0 0.0
      %1741 = vmatprep.subr.mxu0 0.0
      %1742 = vmatpush1.msra.mxu0 0.0
      %1743 = vmatprep.subr.mxu0 0.0
      %1744 = vmatpush1.msra.mxu0 0.0
      %1745 = vmatprep.subr.mxu0 0.0
      %1746 = vmatpush1.msra.mxu0 0.0
      %1747 = vmatprep.subr.mxu0 0.0
      %1748 = vmatpush1.msra.mxu0 0.0
      %1749 = vmatprep.subr.mxu0 0.0
      %1750 = vmatpush1.msra.mxu0 0.0
      %1751 = vmatprep.subr.mxu0 0.0
      %1752 = vmatpush1.msra.mxu0 0.0
      %1753 = vmatprep.subr.mxu0 0.0
      %1754 = vmatpush1.msra.mxu0 0.0
      %1755 = vmatprep.subr.mxu0 0.0
      %1756 = vmatpush1.msra.mxu0 0.0
      %1757 = vmatprep.subr.mxu0 0.0
      %1758 = vmatpush1.msra.mxu0 0.0
      %1759 = vmatprep.subr.mxu0 0.0
      %1760 = vmatpush1.msra.mxu0 0.0
      %1761 = vmatprep.subr.mxu0 0.0
      %1762 = vmatpush1.msra.mxu0 0.0
      %1763 = vmatprep.subr.mxu0 0.0
      %1764 = vmatpush1.msra.mxu0 0.0
      %1765 = vmatprep.mubr.f32.mxu0 0.0
      %1766 = vmatmul.mubr.f32.gmra.mrb[0].mxu0 %v1603
      %v1767 = vpop.f32.mrb[0].mxu0
      %v1768 = vadd.f32 0.0, %v1767
      %v1769 = vpop.f32.mrb[0].mxu0
      %1770 = vmatprep.mubr.f32.mxu0 0.0
      %1771 = vmatmul.mubr.f32.gmra.mrb[0].mxu0 %v1606
      %v1772 = vpop.f32.mrb[0].mxu0
      %v1773 = vadd.f32 0.0, %v1772
      %v1774 = vpop.f32.mrb[0].mxu0
      %1775 = vmatprep.mubr.f32.mxu0 0.0
      %1776 = vmatmul.mubr.f32.gmra.mrb[0].mxu0 %v1609
      %v1777 = vpop.f32.mrb[0].mxu0
      %v1778 = vadd.f32 0.0, %v1777
      %v1779 = vpop.f32.mrb[0].mxu0
      %1780 = vmatprep.mubr.f32.mxu0 0.0
      %1781 = vmatmul.mubr.f32.gmra.mrb[0].mxu0 %v1612
      %v1782 = vpop.f32.mrb[0].mxu0
      %v1783 = vadd.f32 0.0, %v1782
      %v1784 = vpop.f32.mrb[0].mxu0
      %1785 = vmatprep.mubr.f32.mxu0 0.0
      %1786 = vmatmul.mubr.f32.gmra.mrb[0].mxu0 %v1615
      %v1787 = vpop.f32.mrb[0].mxu0
      %v1788 = vadd.f32 0.0, %v1787
      %v1789 = vpop.f32.mrb[0].mxu0
      %1790 = vmatprep.mubr.f32.mxu0 0.0
      %1791 = vmatmul.mubr.f32.gmra.mrb[0].mxu0 %v1618
      %v1792 = vpop.f32.mrb[0].mxu0
      %v1793 = vadd.f32 0.0, %v1792
      %v1794 = vpop.f32.mrb[0].mxu0
      %1795 = vmatprep.mubr.f32.mxu0 0.0
      %1796 = vmatmul.mubr.f32.gmra.mrb[0].mxu0 %v1621
      %v1797 = vpop.f32.mrb[0].mxu0
      %v1798 = vadd.f32 0.0, %v1797
      %v1799 = vpop.f32.mrb[0].mxu0
      %1800 = vmatprep.mubr.f32.mxu0 0.0
      %1801 = vmatmul.mubr.f32.gmra.mrb[0].mxu0 %v1624
      %v1802 = vpop.f32.mrb[0].mxu0
      %v1803 = vadd.f32 0.0, %v1802
      %v1804 = vpop.f32.mrb[0].mxu0
      %1805 = vmatprep.mubr.f32.mxu0 0.0
      %1806 = vmatmul.mubr.f32.gmra.mrb[0].mxu0 %v1627
      %v1807 = vpop.f32.mrb[0].mxu0
      %v1808 = vadd.f32 0.0, %v1807
      %v1809 = vpop.f32.mrb[0].mxu0
      %1810 = vmatprep.mubr.f32.mxu0 0.0
      %1811 = vmatmul.mubr.f32.gmra.mrb[0].mxu0 %v1630
      %v1812 = vpop.f32.mrb[0].mxu0
      %v1813 = vadd.f32 0.0, %v1812
      %v1814 = vpop.f32.mrb[0].mxu0
      %1815 = vmatprep.mubr.f32.mxu0 0.0
      %1816 = vmatmul.mubr.f32.gmra.mrb[0].mxu0 %v1633
      %v1817 = vpop.f32.mrb[0].mxu0
      %v1818 = vadd.f32 0.0, %v1817
      %v1819 = vpop.f32.mrb[0].mxu0
      %1820 = vmatprep.mubr.f32.mxu0 0.0
      %1821 = vmatmul.mubr.f32.gmra.mrb[0].mxu0 %v1636
      %v1822 = vpop.f32.mrb[0].mxu0
      %v1823 = vadd.f32 0.0, %v1822
      %v1824 = vpop.f32.mrb[0].mxu0
      %1825 = vmatprep.mubr.f32.mxu0 0.0
      %1826 = vmatmul.mubr.f32.gmra.mrb[0].mxu0 %v1639
      %v1827 = vpop.f32.mrb[0].mxu0
      %v1828 = vadd.f32 0.0, %v1827
      %v1829 = vpop.f32.mrb[0].mxu0
      %1830 = vmatprep.mubr.f32.mxu0 0.0
      %1831 = vmatmul.mubr.f32.gmra.mrb[0].mxu0 %v1642
      %v1832 = vpop.f32.mrb[0].mxu0
      %v1833 = vadd.f32 0.0, %v1832
      %v1834 = vpop.f32.mrb[0].mxu0
      %1835 = vmatprep.mubr.f32.mxu0 0.0
      %1836 = vmatmul.mubr.f32.gmra.mrb[0].mxu0 %v1645
      %v1837 = vpop.f32.mrb[0].mxu0
      %v1838 = vadd.f32 0.0, %v1837
      %v1839 = vpop.f32.mrb[0].mxu0
      %1840 = vmatprep.mubr.f32.mxu0 0.0
      %1841 = vmatmul.mubr.f32.gmra.mrb[0].mxu0 %v1648
      %v1842 = vpop.f32.mrb[0].mxu0
      %v1843 = vadd.f32 0.0, %v1842
      %v1844 = vpop.f32.mrb[0].mxu0
      %1845 = vmatprep.mubr.f32.mxu0 0.0
      %1846 = vmatmul.mubr.f32.gmra.mrb[0].mxu0 %v1651
      %v1847 = vpop.f32.mrb[0].mxu0
      %v1848 = vadd.f32 0.0, %v1847
      %v1849 = vpop.f32.mrb[0].mxu0
      %1850 = vmatprep.mubr.f32.mxu0 0.0
      %1851 = vmatmul.mubr.f32.gmra.mrb[0].mxu0 %v1654
      %v1852 = vpop.f32.mrb[0].mxu0
      %v1853 = vadd.f32 0.0, %v1852
      %v1854 = vpop.f32.mrb[0].mxu0
      %1855 = vmatprep.mubr.f32.mxu0 0.0
      %1856 = vmatmul.mubr.f32.gmra.mrb[0].mxu0 %v1657
      %v1857 = vpop.f32.mrb[0].mxu0
      %v1858 = vadd.f32 0.0, %v1857
      %v1859 = vpop.f32.mrb[0].mxu0
      %1860 = vmatprep.mubr.f32.mxu0 0.0
      %1861 = vmatmul.mubr.f32.gmra.mrb[0].mxu0 %v1660
      %v1862 = vpop.f32.mrb[0].mxu0
      %v1863 = vadd.f32 0.0, %v1862
      %v1864 = vpop.f32.mrb[0].mxu0
      %1865 = vmatprep.mubr.f32.mxu0 0.0
      %1866 = vmatmul.mubr.f32.gmra.mrb[0].mxu0 %v1663
      %v1867 = vpop.f32.mrb[0].mxu0
      %v1868 = vadd.f32 0.0, %v1867
      %v1869 = vpop.f32.mrb[0].mxu0
      %1870 = vmatprep.mubr.f32.mxu0 0.0
      %1871 = vmatmul.mubr.f32.gmra.mrb[0].mxu0 %v1666
      %v1872 = vpop.f32.mrb[0].mxu0
      %v1873 = vadd.f32 0.0, %v1872
      %v1874 = vpop.f32.mrb[0].mxu0
      %1875 = vmatprep.mubr.f32.mxu0 0.0
      %1876 = vmatmul.mubr.f32.gmra.mrb[0].mxu0 %v1669
      %v1877 = vpop.f32.mrb[0].mxu0
      %v1878 = vadd.f32 0.0, %v1877
      %v1879 = vpop.f32.mrb[0].mxu0
      %1880 = vmatprep.mubr.f32.mxu0 0.0
      %1881 = vmatmul.mubr.f32.gmra.mrb[0].mxu0 %v1672
      %v1882 = vpop.f32.mrb[0].mxu0
      %v1883 = vadd.f32 0.0, %v1882
      %v1884 = vpop.f32.mrb[0].mxu0
      %1885 = vmatprep.mubr.f32.mxu0 0.0
      %1886 = vmatmul.mubr.f32.gmra.mrb[0].mxu0 %v1675
      %v1887 = vpop.f32.mrb[0].mxu0
      %v1888 = vadd.f32 0.0, %v1887
      %v1889 = vpop.f32.mrb[0].mxu0
      %1890 = vmatprep.mubr.f32.mxu0 0.0
      %1891 = vmatmul.mubr.f32.gmra.mrb[0].mxu0 %v1678
      %v1892 = vpop.f32.mrb[0].mxu0
      %v1893 = vadd.f32 0.0, %v1892
      %v1894 = vpop.f32.mrb[0].mxu0
      %1895 = vmatprep.mubr.f32.mxu0 0.0
      %1896 = vmatmul.mubr.f32.gmra.mrb[0].mxu0 %v1681
      %v1897 = vpop.f32.mrb[0].mxu0
      %v1898 = vadd.f32 0.0, %v1897
      %v1899 = vpop.f32.mrb[0].mxu0
      %1900 = vmatprep.mubr.f32.mxu0 0.0
      %1901 = vmatmul.mubr.f32.gmra.mrb[0].mxu0 %v1684
      %v1902 = vpop.f32.mrb[0].mxu0
      %v1903 = vadd.f32 0.0, %v1902
      %v1904 = vpop.f32.mrb[0].mxu0
      %1905 = vmatprep.mubr.f32.mxu0 0.0
      %1906 = vmatmul.mubr.f32.gmra.mrb[0].mxu0 %v1687
      %v1907 = vpop.f32.mrb[0].mxu0
      %v1908 = vadd.f32 0.0, %v1907
      %v1909 = vpop.f32.mrb[0].mxu0
      %1910 = vmatprep.mubr.f32.mxu0 0.0
      %1911 = vmatmul.mubr.f32.gmra.mrb[0].mxu0 %v1690
      %v1912 = vpop.f32.mrb[0].mxu0
      %v1913 = vadd.f32 0.0, %v1912
      %v1914 = vpop.f32.mrb[0].mxu0
      %1915 = vmatprep.mubr.f32.mxu0 0.0
      %1916 = vmatmul.mubr.f32.gmra.mrb[0].mxu0 %v1693
      %v1917 = vpop.f32.mrb[0].mxu0
      %v1918 = vadd.f32 0.0, %v1917
      %v1919 = vpop.f32.mrb[0].mxu0
      %1920 = vmatprep.mubr.f32.mxu0 0.0
      %1921 = vmatmul.mubr.f32.gmra.mrb[0].mxu0 %v1696
      %v1922 = vpop.f32.mrb[0].mxu0
      %v1923 = vadd.f32 0.0, %v1922
      %v1924 = vpop.f32.mrb[0].mxu0
      %1925 = vdwg.mxu0
      %v1926 = vadd.f32 %v1218, %v1768
      %v1927 = vadd.f32 %v1223, %v1773
      %v1928 = vadd.f32 %v1228, %v1778
      %v1929 = vadd.f32 %v1233, %v1783
      %v1930 = vadd.f32 %v1238, %v1788
      %v1931 = vadd.f32 %v1243, %v1793
      %v1932 = vadd.f32 %v1248, %v1798
      %v1933 = vadd.f32 %v1253, %v1803
      %v1934 = vadd.f32 %v1258, %v1808
      %v1935 = vadd.f32 %v1263, %v1813
      %v1936 = vadd.f32 %v1268, %v1818
      %v1937 = vadd.f32 %v1273, %v1823
      %v1938 = vadd.f32 %v1278, %v1828
      %v1939 = vadd.f32 %v1283, %v1833
      %v1940 = vadd.f32 %v1288, %v1838
      %v1941 = vadd.f32 %v1293, %v1843
      %v1942 = vadd.f32 %v1298, %v1848
      %v1943 = vadd.f32 %v1303, %v1853
      %v1944 = vadd.f32 %v1308, %v1858
      %v1945 = vadd.f32 %v1313, %v1863
      %v1946 = vadd.f32 %v1318, %v1868
      %v1947 = vadd.f32 %v1323, %v1873
      %v1948 = vadd.f32 %v1328, %v1878
      %v1949 = vadd.f32 %v1333, %v1883
      %v1950 = vadd.f32 %v1338, %v1888
      %v1951 = vadd.f32 %v1343, %v1893
      %v1952 = vadd.f32 %v1348, %v1898
      %v1953 = vadd.f32 %v1353, %v1903
      %v1954 = vadd.f32 %v1358, %v1908
      %v1955 = vadd.f32 %v1363, %v1913
      %v1956 = vadd.f32 %v1368, %v1918
      %v1957 = vadd.f32 %v1373, %v1923
      %v1958 = vld [vmem:[#allocation2 + $0x17] sm:$0xff]
      %v1959 = vld [vmem:[#allocation2 + $0x1f] sm:$0xff]
      %v1960 = vld [vmem:[#allocation2 + $0x27] sm:$0xff]
      %v1961 = vld [vmem:[#allocation2 + $0x2f] sm:$0xff]
      %v1962 = vld [vmem:[#allocation2 + $0x37] sm:$0xff]
      %v1963 = vld [vmem:[#allocation2 + $0x3f] sm:$0xff]
      %v1964 = vld [vmem:[#allocation2 + $0x47] sm:$0xff]
      %v1965 = vld [vmem:[#allocation2 + $0x4f] sm:$0xff]
      %v1966 = vld [vmem:[#allocation2 + $0x57] sm:$0xff]
      %v1967 = vld [vmem:[#allocation2 + $0x5f] sm:$0xff]
      %v1968 = vld [vmem:[#allocation2 + $0x67] sm:$0xff]
      %v1969 = vld [vmem:[#allocation2 + $0x6f] sm:$0xff]
      %v1970 = vld [vmem:[#allocation2 + $0x77] sm:$0xff]
      %v1971 = vld [vmem:[#allocation2 + $0x7f] sm:$0xff]
      %v1972 = vld [vmem:[#allocation2 + $0x87] sm:$0xff]
      %v1973 = vld [vmem:[#allocation2 + $0x8f] sm:$0xff]
      %v1974 = vld [vmem:[#allocation2 + $0x97] sm:$0xff]
      %v1975 = vld [vmem:[#allocation2 + $0x9f] sm:$0xff]
      %v1976 = vld [vmem:[#allocation2 + $0xa7] sm:$0xff]
      %v1977 = vld [vmem:[#allocation2 + $0xaf] sm:$0xff]
      %v1978 = vld [vmem:[#allocation2 + $0xb7] sm:$0xff]
      %v1979 = vld [vmem:[#allocation2 + $0xbf] sm:$0xff]
      %v1980 = vld [vmem:[#allocation2 + $0xc7] sm:$0xff]
      %v1981 = vld [vmem:[#allocation2 + $0xcf] sm:$0xff]
      %v1982 = vld [vmem:[#allocation2 + $0xd7] sm:$0xff]
      %v1983 = vld [vmem:[#allocation2 + $0xdf] sm:$0xff]
      %v1984 = vld [vmem:[#allocation2 + $0xe7] sm:$0xff]
      %v1985 = vld [vmem:[#allocation2 + $0xef] sm:$0xff]
      %v1986 = vld [vmem:[#allocation2 + $0xf7] sm:$0xff]
      %v1987 = vld [vmem:[#allocation2 + $0xff] sm:$0xff]
      %v1988 = vld [vmem:[#allocation2 + $0x107] sm:$0xff]
      %v1989 = vld [vmem:[#allocation2 + $0x10f] sm:$0xff]
      %v1990 = vmul.f32 %v1958, %v503
      %v1991 = vmul.f32 %v1959, %v508
      %v1992 = vmul.f32 %v1960, %v513
      %v1993 = vmul.f32 %v1961, %v518
      %v1994 = vmul.f32 %v1962, %v523
      %v1995 = vmul.f32 %v1963, %v528
      %v1996 = vmul.f32 %v1964, %v533
      %v1997 = vmul.f32 %v1965, %v538
      %v1998 = vmul.f32 %v1966, %v543
      %v1999 = vmul.f32 %v1967, %v548
      %v2000 = vmul.f32 %v1968, %v553
      %v2001 = vmul.f32 %v1969, %v558
      %v2002 = vmul.f32 %v1970, %v563
      %v2003 = vmul.f32 %v1971, %v568
      %v2004 = vmul.f32 %v1972, %v573
      %v2005 = vmul.f32 %v1973, %v578
      %v2006 = vmul.f32 %v1974, %v583
      %v2007 = vmul.f32 %v1975, %v588
      %v2008 = vmul.f32 %v1976, %v593
      %v2009 = vmul.f32 %v1977, %v598
      %v2010 = vmul.f32 %v1978, %v603
      %v2011 = vmul.f32 %v1979, %v608
      %v2012 = vmul.f32 %v1980, %v613
      %v2013 = vmul.f32 %v1981, %v618
      %v2014 = vmul.f32 %v1982, %v623
      %v2015 = vmul.f32 %v1983, %v628
      %v2016 = vmul.f32 %v1984, %v633
      %v2017 = vmul.f32 %v1985, %v638
      %v2018 = vmul.f32 %v1986, %v643
      %v2019 = vmul.f32 %v1987, %v648
      %v2020 = vmul.f32 %v1988, %v653
      %v2021 = vmul.f32 %v1989, %v658
      %s2022 = scalar_lea.vmem %s3, 12
      %v2023 = vld [vmem:[%s2022] sm:$0xf]
      %v2025 = vsel %vm429, %v1990, 0
      %v2028 = vsel %vm429, %v1991, 0
      %v2031 = vsel %vm429, %v1992, 0
      %v2034 = vsel %vm429, %v1993, 0
      %v2037 = vsel %vm429, %v1994, 0
      %v2040 = vsel %vm429, %v1995, 0
      %v2043 = vsel %vm429, %v1996, 0
      %v2046 = vsel %vm429, %v1997, 0
      %v2049 = vsel %vm429, %v1998, 0
      %v2052 = vsel %vm429, %v1999, 0
      %v2055 = vsel %vm429, %v2000, 0
      %v2058 = vsel %vm429, %v2001, 0
      %v2061 = vsel %vm429, %v2002, 0
      %v2064 = vsel %vm429, %v2003, 0
      %v2067 = vsel %vm429, %v2004, 0
      %v2070 = vsel %vm429, %v2005, 0
      %v2073 = vsel %vm429, %v2006, 0
      %v2076 = vsel %vm429, %v2007, 0
      %v2079 = vsel %vm429, %v2008, 0
      %v2082 = vsel %vm429, %v2009, 0
      %v2085 = vsel %vm429, %v2010, 0
      %v2088 = vsel %vm429, %v2011, 0
      %v2091 = vsel %vm429, %v2012, 0
      %v2094 = vsel %vm429, %v2013, 0
      %v2097 = vsel %vm429, %v2014, 0
      %v2100 = vsel %vm429, %v2015, 0
      %v2103 = vsel %vm429, %v2016, 0
      %v2106 = vsel %vm429, %v2017, 0
      %v2109 = vsel %vm429, %v2018, 0
      %v2112 = vsel %vm429, %v2019, 0
      %v2115 = vsel %vm429, %v2020, 0
      %v2118 = vsel %vm429, %v2021, 0
      %v2121 = vsel %vm823, %v2023, 0
      %2123 = vmatprep.subr.mxu0 0.0
      %2124 = vmatpush1.msra.mxu0 %v2121
      %2125 = vmatprep.subr.mxu0 0.0
      %2126 = vmatpush1.msra.mxu0 0.0
      %2127 = vmatprep.subr.mxu0 0.0
      %2128 = vmatpush1.msra.mxu0 0.0
      %2129 = vmatprep.subr.mxu0 0.0
      %2130 = vmatpush1.msra.mxu0 0.0
      %2131 = vmatprep.subr.mxu0 0.0
      %2132 = vmatpush1.msra.mxu0 0.0
      %2133 = vmatprep.subr.mxu0 0.0
      %2134 = vmatpush1.msra.mxu0 0.0
      %2135 = vmatprep.subr.mxu0 0.0
      %2136 = vmatpush1.msra.mxu0 0.0
      %2137 = vmatprep.subr.mxu0 0.0
      %2138 = vmatpush1.msra.mxu0 0.0
      %2139 = vmatprep.subr.mxu0 0.0
      %2140 = vmatpush1.msra.mxu0 0.0
      %2141 = vmatprep.subr.mxu0 0.0
      %2142 = vmatpush1.msra.mxu0 0.0
      %2143 = vmatprep.subr.mxu0 0.0
      %2144 = vmatpush1.msra.mxu0 0.0
      %2145 = vmatprep.subr.mxu0 0.0
      %2146 = vmatpush1.msra.mxu0 0.0
      %2147 = vmatprep.subr.mxu0 0.0
      %2148 = vmatpush1.msra.mxu0 0.0
      %2149 = vmatprep.subr.mxu0 0.0
      %2150 = vmatpush1.msra.mxu0 0.0
      %2151 = vmatprep.subr.mxu0 0.0
      %2152 = vmatpush1.msra.mxu0 0.0
      %2153 = vmatprep.subr.mxu0 0.0
      %2154 = vmatpush1.msra.mxu0 0.0
      %2155 = vmatprep.subr.mxu0 0.0
      %2156 = vmatpush1.msra.mxu0 0.0
      %2157 = vmatprep.subr.mxu0 0.0
      %2158 = vmatpush1.msra.mxu0 0.0
      %2159 = vmatprep.subr.mxu0 0.0
      %2160 = vmatpush1.msra.mxu0 0.0
      %2161 = vmatprep.subr.mxu0 0.0
      %2162 = vmatpush1.msra.mxu0 0.0
      %2163 = vmatprep.subr.mxu0 0.0
      %2164 = vmatpush1.msra.mxu0 0.0
      %2165 = vmatprep.subr.mxu0 0.0
      %2166 = vmatpush1.msra.mxu0 0.0
      %2167 = vmatprep.subr.mxu0 0.0
      %2168 = vmatpush1.msra.mxu0 0.0
      %2169 = vmatprep.subr.mxu0 0.0
      %2170 = vmatpush1.msra.mxu0 0.0
      %2171 = vmatprep.subr.mxu0 0.0
      %2172 = vmatpush1.msra.mxu0 0.0
      %2173 = vmatprep.subr.mxu0 0.0
      %2174 = vmatpush1.msra.mxu0 0.0
      %2175 = vmatprep.subr.mxu0 0.0
      %2176 = vmatpush1.msra.mxu0 0.0
      %2177 = vmatprep.subr.mxu0 0.0
      %2178 = vmatpush1.msra.mxu0 0.0
      %2179 = vmatprep.subr.mxu0 0.0
      %2180 = vmatpush1.msra.mxu0 0.0
      %2181 = vmatprep.subr.mxu0 0.0
      %2182 = vmatpush1.msra.mxu0 0.0
      %2183 = vmatprep.subr.mxu0 0.0
      %2184 = vmatpush1.msra.mxu0 0.0
      %2185 = vmatprep.subr.mxu0 0.0
      %2186 = vmatpush1.msra.mxu0 0.0
      %2187 = vmatprep.mubr.f32.mxu0 0.0
      %2188 = vmatmul.mubr.f32.gmra.mrb[0].mxu0 %v2025
      %v2189 = vpop.f32.mrb[0].mxu0
      %v2190 = vadd.f32 0.0, %v2189
      %v2191 = vpop.f32.mrb[0].mxu0
      %2192 = vmatprep.mubr.f32.mxu0 0.0
      %2193 = vmatmul.mubr.f32.gmra.mrb[0].mxu0 %v2028
      %v2194 = vpop.f32.mrb[0].mxu0
      %v2195 = vadd.f32 0.0, %v2194
      %v2196 = vpop.f32.mrb[0].mxu0
      %2197 = vmatprep.mubr.f32.mxu0 0.0
      %2198 = vmatmul.mubr.f32.gmra.mrb[0].mxu0 %v2031
      %v2199 = vpop.f32.mrb[0].mxu0
      %v2200 = vadd.f32 0.0, %v2199
      %v2201 = vpop.f32.mrb[0].mxu0
      %2202 = vmatprep.mubr.f32.mxu0 0.0
      %2203 = vmatmul.mubr.f32.gmra.mrb[0].mxu0 %v2034
      %v2204 = vpop.f32.mrb[0].mxu0
      %v2205 = vadd.f32 0.0, %v2204
      %v2206 = vpop.f32.mrb[0].mxu0
      %2207 = vmatprep.mubr.f32.mxu0 0.0
      %2208 = vmatmul.mubr.f32.gmra.mrb[0].mxu0 %v2037
      %v2209 = vpop.f32.mrb[0].mxu0
      %v2210 = vadd.f32 0.0, %v2209
      %v2211 = vpop.f32.mrb[0].mxu0
      %2212 = vmatprep.mubr.f32.mxu0 0.0
      %2213 = vmatmul.mubr.f32.gmra.mrb[0].mxu0 %v2040
      %v2214 = vpop.f32.mrb[0].mxu0
      %v2215 = vadd.f32 0.0, %v2214
      %v2216 = vpop.f32.mrb[0].mxu0
      %2217 = vmatprep.mubr.f32.mxu0 0.0
      %2218 = vmatmul.mubr.f32.gmra.mrb[0].mxu0 %v2043
      %v2219 = vpop.f32.mrb[0].mxu0
      %v2220 = vadd.f32 0.0, %v2219
      %v2221 = vpop.f32.mrb[0].mxu0
      %2222 = vmatprep.mubr.f32.mxu0 0.0
      %2223 = vmatmul.mubr.f32.gmra.mrb[0].mxu0 %v2046
      %v2224 = vpop.f32.mrb[0].mxu0
      %v2225 = vadd.f32 0.0, %v2224
      %v2226 = vpop.f32.mrb[0].mxu0
      %2227 = vmatprep.mubr.f32.mxu0 0.0
      %2228 = vmatmul.mubr.f32.gmra.mrb[0].mxu0 %v2049
      %v2229 = vpop.f32.mrb[0].mxu0
      %v2230 = vadd.f32 0.0, %v2229
      %v2231 = vpop.f32.mrb[0].mxu0
      %2232 = vmatprep.mubr.f32.mxu0 0.0
      %2233 = vmatmul.mubr.f32.gmra.mrb[0].mxu0 %v2052
      %v2234 = vpop.f32.mrb[0].mxu0
      %v2235 = vadd.f32 0.0, %v2234
      %v2236 = vpop.f32.mrb[0].mxu0
      %2237 = vmatprep.mubr.f32.mxu0 0.0
      %2238 = vmatmul.mubr.f32.gmra.mrb[0].mxu0 %v2055
      %v2239 = vpop.f32.mrb[0].mxu0
      %v2240 = vadd.f32 0.0, %v2239
      %v2241 = vpop.f32.mrb[0].mxu0
      %2242 = vmatprep.mubr.f32.mxu0 0.0
      %2243 = vmatmul.mubr.f32.gmra.mrb[0].mxu0 %v2058
      %v2244 = vpop.f32.mrb[0].mxu0
      %v2245 = vadd.f32 0.0, %v2244
      %v2246 = vpop.f32.mrb[0].mxu0
      %2247 = vmatprep.mubr.f32.mxu0 0.0
      %2248 = vmatmul.mubr.f32.gmra.mrb[0].mxu0 %v2061
      %v2249 = vpop.f32.mrb[0].mxu0
      %v2250 = vadd.f32 0.0, %v2249
      %v2251 = vpop.f32.mrb[0].mxu0
      %2252 = vmatprep.mubr.f32.mxu0 0.0
      %2253 = vmatmul.mubr.f32.gmra.mrb[0].mxu0 %v2064
      %v2254 = vpop.f32.mrb[0].mxu0
      %v2255 = vadd.f32 0.0, %v2254
      %v2256 = vpop.f32.mrb[0].mxu0
      %2257 = vmatprep.mubr.f32.mxu0 0.0
      %2258 = vmatmul.mubr.f32.gmra.mrb[0].mxu0 %v2067
      %v2259 = vpop.f32.mrb[0].mxu0
      %v2260 = vadd.f32 0.0, %v2259
      %v2261 = vpop.f32.mrb[0].mxu0
      %2262 = vmatprep.mubr.f32.mxu0 0.0
      %2263 = vmatmul.mubr.f32.gmra.mrb[0].mxu0 %v2070
      %v2264 = vpop.f32.mrb[0].mxu0
      %v2265 = vadd.f32 0.0, %v2264
      %v2266 = vpop.f32.mrb[0].mxu0
      %2267 = vmatprep.mubr.f32.mxu0 0.0
      %2268 = vmatmul.mubr.f32.gmra.mrb[0].mxu0 %v2073
      %v2269 = vpop.f32.mrb[0].mxu0
      %v2270 = vadd.f32 0.0, %v2269
      %v2271 = vpop.f32.mrb[0].mxu0
      %2272 = vmatprep.mubr.f32.mxu0 0.0
      %2273 = vmatmul.mubr.f32.gmra.mrb[0].mxu0 %v2076
      %v2274 = vpop.f32.mrb[0].mxu0
      %v2275 = vadd.f32 0.0, %v2274
      %v2276 = vpop.f32.mrb[0].mxu0
      %2277 = vmatprep.mubr.f32.mxu0 0.0
      %2278 = vmatmul.mubr.f32.gmra.mrb[0].mxu0 %v2079
      %v2279 = vpop.f32.mrb[0].mxu0
      %v2280 = vadd.f32 0.0, %v2279
      %v2281 = vpop.f32.mrb[0].mxu0
      %2282 = vmatprep.mubr.f32.mxu0 0.0
      %2283 = vmatmul.mubr.f32.gmra.mrb[0].mxu0 %v2082
      %v2284 = vpop.f32.mrb[0].mxu0
      %v2285 = vadd.f32 0.0, %v2284
      %v2286 = vpop.f32.mrb[0].mxu0
      %2287 = vmatprep.mubr.f32.mxu0 0.0
      %2288 = vmatmul.mubr.f32.gmra.mrb[0].mxu0 %v2085
      %v2289 = vpop.f32.mrb[0].mxu0
      %v2290 = vadd.f32 0.0, %v2289
      %v2291 = vpop.f32.mrb[0].mxu0
      %2292 = vmatprep.mubr.f32.mxu0 0.0
      %2293 = vmatmul.mubr.f32.gmra.mrb[0].mxu0 %v2088
      %v2294 = vpop.f32.mrb[0].mxu0
      %v2295 = vadd.f32 0.0, %v2294
      %v2296 = vpop.f32.mrb[0].mxu0
      %2297 = vmatprep.mubr.f32.mxu0 0.0
      %2298 = vmatmul.mubr.f32.gmra.mrb[0].mxu0 %v2091
      %v2299 = vpop.f32.mrb[0].mxu0
      %v2300 = vadd.f32 0.0, %v2299
      %v2301 = vpop.f32.mrb[0].mxu0
      %2302 = vmatprep.mubr.f32.mxu0 0.0
      %2303 = vmatmul.mubr.f32.gmra.mrb[0].mxu0 %v2094
      %v2304 = vpop.f32.mrb[0].mxu0
      %v2305 = vadd.f32 0.0, %v2304
      %v2306 = vpop.f32.mrb[0].mxu0
      %2307 = vmatprep.mubr.f32.mxu0 0.0
      %2308 = vmatmul.mubr.f32.gmra.mrb[0].mxu0 %v2097
      %v2309 = vpop.f32.mrb[0].mxu0
      %v2310 = vadd.f32 0.0, %v2309
      %v2311 = vpop.f32.mrb[0].mxu0
      %2312 = vmatprep.mubr.f32.mxu0 0.0
      %2313 = vmatmul.mubr.f32.gmra.mrb[0].mxu0 %v2100
      %v2314 = vpop.f32.mrb[0].mxu0
      %v2315 = vadd.f32 0.0, %v2314
      %v2316 = vpop.f32.mrb[0].mxu0
      %2317 = vmatprep.mubr.f32.mxu0 0.0
      %2318 = vmatmul.mubr.f32.gmra.mrb[0].mxu0 %v2103
      %v2319 = vpop.f32.mrb[0].mxu0
      %v2320 = vadd.f32 0.0, %v2319
      %v2321 = vpop.f32.mrb[0].mxu0
      %2322 = vmatprep.mubr.f32.mxu0 0.0
      %2323 = vmatmul.mubr.f32.gmra.mrb[0].mxu0 %v2106
      %v2324 = vpop.f32.mrb[0].mxu0
      %v2325 = vadd.f32 0.0, %v2324
      %v2326 = vpop.f32.mrb[0].mxu0
      %2327 = vmatprep.mubr.f32.mxu0 0.0
      %2328 = vmatmul.mubr.f32.gmra.mrb[0].mxu0 %v2109
      %v2329 = vpop.f32.mrb[0].mxu0
      %v2330 = vadd.f32 0.0, %v2329
      %v2331 = vpop.f32.mrb[0].mxu0
      %2332 = vmatprep.mubr.f32.mxu0 0.0
      %2333 = vmatmul.mubr.f32.gmra.mrb[0].mxu0 %v2112
      %v2334 = vpop.f32.mrb[0].mxu0
      %v2335 = vadd.f32 0.0, %v2334
      %v2336 = vpop.f32.mrb[0].mxu0
      %2337 = vmatprep.mubr.f32.mxu0 0.0
      %2338 = vmatmul.mubr.f32.gmra.mrb[0].mxu0 %v2115
      %v2339 = vpop.f32.mrb[0].mxu0
      %v2340 = vadd.f32 0.0, %v2339
      %v2341 = vpop.f32.mrb[0].mxu0
      %2342 = vmatprep.mubr.f32.mxu0 0.0
      %2343 = vmatmul.mubr.f32.gmra.mrb[0].mxu0 %v2118
      %v2344 = vpop.f32.mrb[0].mxu0
      %v2345 = vadd.f32 0.0, %v2344
      %v2346 = vpop.f32.mrb[0].mxu0
      %2347 = vdwg.mxu0
      %v2348 = vadd.f32 %v1926, %v2190
      %v2349 = vadd.f32 %v1927, %v2195
      %v2350 = vadd.f32 %v1928, %v2200
      %v2351 = vadd.f32 %v1929, %v2205
      %v2352 = vadd.f32 %v1930, %v2210
      %v2353 = vadd.f32 %v1931, %v2215
      %v2354 = vadd.f32 %v1932, %v2220
      %v2355 = vadd.f32 %v1933, %v2225
      %v2356 = vadd.f32 %v1934, %v2230
      %v2357 = vadd.f32 %v1935, %v2235
      %v2358 = vadd.f32 %v1936, %v2240
      %v2359 = vadd.f32 %v1937, %v2245
      %v2360 = vadd.f32 %v1938, %v2250
      %v2361 = vadd.f32 %v1939, %v2255
      %v2362 = vadd.f32 %v1940, %v2260
      %v2363 = vadd.f32 %v1941, %v2265
      %v2364 = vadd.f32 %v1942, %v2270
      %v2365 = vadd.f32 %v1943, %v2275
      %v2366 = vadd.f32 %v1944, %v2280
      %v2367 = vadd.f32 %v1945, %v2285
      %v2368 = vadd.f32 %v1946, %v2290
      %v2369 = vadd.f32 %v1947, %v2295
      %v2370 = vadd.f32 %v1948, %v2300
      %v2371 = vadd.f32 %v1949, %v2305
      %v2372 = vadd.f32 %v1950, %v2310
      %v2373 = vadd.f32 %v1951, %v2315
      %v2374 = vadd.f32 %v1952, %v2320
      %v2375 = vadd.f32 %v1953, %v2325
      %v2376 = vadd.f32 %v1954, %v2330
      %v2377 = vadd.f32 %v1955, %v2335
      %v2378 = vadd.f32 %v1956, %v2340
      %v2379 = vadd.f32 %v1957, %v2345
      %v2380 = vld [vmem:[#allocation2 + $0x18] sm:$0xff]
      %v2381 = vld [vmem:[#allocation2 + $0x20] sm:$0xff]
      %v2382 = vld [vmem:[#allocation2 + $0x28] sm:$0xff]
      %v2383 = vld [vmem:[#allocation2 + $0x30] sm:$0xff]
      %v2384 = vld [vmem:[#allocation2 + $0x38] sm:$0xff]
      %v2385 = vld [vmem:[#allocation2 + $0x40] sm:$0xff]
      %v2386 = vld [vmem:[#allocation2 + $0x48] sm:$0xff]
      %v2387 = vld [vmem:[#allocation2 + $0x50] sm:$0xff]
      %v2388 = vld [vmem:[#allocation2 + $0x58] sm:$0xff]
      %v2389 = vld [vmem:[#allocation2 + $0x60] sm:$0xff]
      %v2390 = vld [vmem:[#allocation2 + $0x68] sm:$0xff]
      %v2391 = vld [vmem:[#allocation2 + $0x70] sm:$0xff]
      %v2392 = vld [vmem:[#allocation2 + $0x78] sm:$0xff]
      %v2393 = vld [vmem:[#allocation2 + $0x80] sm:$0xff]
      %v2394 = vld [vmem:[#allocation2 + $0x88] sm:$0xff]
      %v2395 = vld [vmem:[#allocation2 + $0x90] sm:$0xff]
      %v2396 = vld [vmem:[#allocation2 + $0x98] sm:$0xff]
      %v2397 = vld [vmem:[#allocation2 + $0xa0] sm:$0xff]
      %v2398 = vld [vmem:[#allocation2 + $0xa8] sm:$0xff]
      %v2399 = vld [vmem:[#allocation2 + $0xb0] sm:$0xff]
      %v2400 = vld [vmem:[#allocation2 + $0xb8] sm:$0xff]
      %v2401 = vld [vmem:[#allocation2 + $0xc0] sm:$0xff]
      %v2402 = vld [vmem:[#allocation2 + $0xc8] sm:$0xff]
      %v2403 = vld [vmem:[#allocation2 + $0xd0] sm:$0xff]
      %v2404 = vld [vmem:[#allocation2 + $0xd8] sm:$0xff]
      %v2405 = vld [vmem:[#allocation2 + $0xe0] sm:$0xff]
      %v2406 = vld [vmem:[#allocation2 + $0xe8] sm:$0xff]
      %v2407 = vld [vmem:[#allocation2 + $0xf0] sm:$0xff]
      %v2408 = vld [vmem:[#allocation2 + $0xf8] sm:$0xff]
      %v2409 = vld [vmem:[#allocation2 + $0x100] sm:$0xff]
      %v2410 = vld [vmem:[#allocation2 + $0x108] sm:$0xff]
      %v2411 = vld [vmem:[#allocation2 + $0x110] sm:$0xff]
      %s2412 = scalar_lea.vmem %s3, 16
      %v2413 = vld [vmem:[%s2412] sm:$0xf]
      %v2415 = vsel %vm429, %v2380, 0
      %v2418 = vsel %vm429, %v2381, 0
      %v2421 = vsel %vm429, %v2382, 0
      %v2424 = vsel %vm429, %v2383, 0
      %v2427 = vsel %vm429, %v2384, 0
      %v2430 = vsel %vm429, %v2385, 0
      %v2433 = vsel %vm429, %v2386, 0
      %v2436 = vsel %vm429, %v2387, 0
      %v2439 = vsel %vm429, %v2388, 0
      %v2442 = vsel %vm429, %v2389, 0
      %v2445 = vsel %vm429, %v2390, 0
      %v2448 = vsel %vm429, %v2391, 0
      %v2451 = vsel %vm429, %v2392, 0
      %v2454 = vsel %vm429, %v2393, 0
      %v2457 = vsel %vm429, %v2394, 0
      %v2460 = vsel %vm429, %v2395, 0
      %v2463 = vsel %vm429, %v2396, 0
      %v2466 = vsel %vm429, %v2397, 0
      %v2469 = vsel %vm429, %v2398, 0
      %v2472 = vsel %vm429, %v2399, 0
      %v2475 = vsel %vm429, %v2400, 0
      %v2478 = vsel %vm429, %v2401, 0
      %v2481 = vsel %vm429, %v2402, 0
      %v2484 = vsel %vm429, %v2403, 0
      %v2487 = vsel %vm429, %v2404, 0
      %v2490 = vsel %vm429, %v2405, 0
      %v2493 = vsel %vm429, %v2406, 0
      %v2496 = vsel %vm429, %v2407, 0
      %v2499 = vsel %vm429, %v2408, 0
      %v2502 = vsel %vm429, %v2409, 0
      %v2505 = vsel %vm429, %v2410, 0
      %v2508 = vsel %vm429, %v2411, 0
      %v2511 = vsel %vm823, %v2413, 0
      %2513 = vmatprep.subr.mxu0 0.0
      %2514 = vmatpush1.msra.mxu0 %v2511
      %2515 = vmatprep.subr.mxu0 0.0
      %2516 = vmatpush1.msra.mxu0 0.0
      %2517 = vmatprep.subr.mxu0 0.0
      %2518 = vmatpush1.msra.mxu0 0.0
      %2519 = vmatprep.subr.mxu0 0.0
      %2520 = vmatpush1.msra.mxu0 0.0
      %2521 = vmatprep.subr.mxu0 0.0
      %2522 = vmatpush1.msra.mxu0 0.0
      %2523 = vmatprep.subr.mxu0 0.0
      %2524 = vmatpush1.msra.mxu0 0.0
      %2525 = vmatprep.subr.mxu0 0.0
      %2526 = vmatpush1.msra.mxu0 0.0
      %2527 = vmatprep.subr.mxu0 0.0
      %2528 = vmatpush1.msra.mxu0 0.0
      %2529 = vmatprep.subr.mxu0 0.0
      %2530 = vmatpush1.msra.mxu0 0.0
      %2531 = vmatprep.subr.mxu0 0.0
      %2532 = vmatpush1.msra.mxu0 0.0
      %2533 = vmatprep.subr.mxu0 0.0
      %2534 = vmatpush1.msra.mxu0 0.0
      %2535 = vmatprep.subr.mxu0 0.0
      %2536 = vmatpush1.msra.mxu0 0.0
      %2537 = vmatprep.subr.mxu0 0.0
      %2538 = vmatpush1.msra.mxu0 0.0
      %2539 = vmatprep.subr.mxu0 0.0
      %2540 = vmatpush1.msra.mxu0 0.0
      %2541 = vmatprep.subr.mxu0 0.0
      %2542 = vmatpush1.msra.mxu0 0.0
      %2543 = vmatprep.subr.mxu0 0.0
      %2544 = vmatpush1.msra.mxu0 0.0
      %2545 = vmatprep.subr.mxu0 0.0
      %2546 = vmatpush1.msra.mxu0 0.0
      %2547 = vmatprep.subr.mxu0 0.0
      %2548 = vmatpush1.msra.mxu0 0.0
      %2549 = vmatprep.subr.mxu0 0.0
      %2550 = vmatpush1.msra.mxu0 0.0
      %2551 = vmatprep.subr.mxu0 0.0
      %2552 = vmatpush1.msra.mxu0 0.0
      %2553 = vmatprep.subr.mxu0 0.0
      %2554 = vmatpush1.msra.mxu0 0.0
      %2555 = vmatprep.subr.mxu0 0.0
      %2556 = vmatpush1.msra.mxu0 0.0
      %2557 = vmatprep.subr.mxu0 0.0
      %2558 = vmatpush1.msra.mxu0 0.0
      %2559 = vmatprep.subr.mxu0 0.0
      %2560 = vmatpush1.msra.mxu0 0.0
      %2561 = vmatprep.subr.mxu0 0.0
      %2562 = vmatpush1.msra.mxu0 0.0
      %2563 = vmatprep.subr.mxu0 0.0
      %2564 = vmatpush1.msra.mxu0 0.0
      %2565 = vmatprep.subr.mxu0 0.0
      %2566 = vmatpush1.msra.mxu0 0.0
      %2567 = vmatprep.subr.mxu0 0.0
      %2568 = vmatpush1.msra.mxu0 0.0
      %2569 = vmatprep.subr.mxu0 0.0
      %2570 = vmatpush1.msra.mxu0 0.0
      %2571 = vmatprep.subr.mxu0 0.0
      %2572 = vmatpush1.msra.mxu0 0.0
      %2573 = vmatprep.subr.mxu0 0.0
      %2574 = vmatpush1.msra.mxu0 0.0
      %2575 = vmatprep.subr.mxu0 0.0
      %2576 = vmatpush1.msra.mxu0 0.0
      %2577 = vmatprep.mubr.f32.mxu0 0.0
      %2578 = vmatmul.mubr.f32.gmra.mrb[0].mxu0 %v2415
      %v2579 = vpop.f32.mrb[0].mxu0
      %v2580 = vadd.f32 0.0, %v2579
      %v2581 = vpop.f32.mrb[0].mxu0
      %2582 = vmatprep.mubr.f32.mxu0 0.0
      %2583 = vmatmul.mubr.f32.gmra.mrb[0].mxu0 %v2418
      %v2584 = vpop.f32.mrb[0].mxu0
      %v2585 = vadd.f32 0.0, %v2584
      %v2586 = vpop.f32.mrb[0].mxu0
      %2587 = vmatprep.mubr.f32.mxu0 0.0
      %2588 = vmatmul.mubr.f32.gmra.mrb[0].mxu0 %v2421
      %v2589 = vpop.f32.mrb[0].mxu0
      %v2590 = vadd.f32 0.0, %v2589
      %v2591 = vpop.f32.mrb[0].mxu0
      %2592 = vmatprep.mubr.f32.mxu0 0.0
      %2593 = vmatmul.mubr.f32.gmra.mrb[0].mxu0 %v2424
      %v2594 = vpop.f32.mrb[0].mxu0
      %v2595 = vadd.f32 0.0, %v2594
      %v2596 = vpop.f32.mrb[0].mxu0
      %2597 = vmatprep.mubr.f32.mxu0 0.0
      %2598 = vmatmul.mubr.f32.gmra.mrb[0].mxu0 %v2427
      %v2599 = vpop.f32.mrb[0].mxu0
      %v2600 = vadd.f32 0.0, %v2599
      %v2601 = vpop.f32.mrb[0].mxu0
      %2602 = vmatprep.mubr.f32.mxu0 0.0
      %2603 = vmatmul.mubr.f32.gmra.mrb[0].mxu0 %v2430
      %v2604 = vpop.f32.mrb[0].mxu0
      %v2605 = vadd.f32 0.0, %v2604
      %v2606 = vpop.f32.mrb[0].mxu0
      %2607 = vmatprep.mubr.f32.mxu0 0.0
      %2608 = vmatmul.mubr.f32.gmra.mrb[0].mxu0 %v2433
      %v2609 = vpop.f32.mrb[0].mxu0
      %v2610 = vadd.f32 0.0, %v2609
      %v2611 = vpop.f32.mrb[0].mxu0
      %2612 = vmatprep.mubr.f32.mxu0 0.0
      %2613 = vmatmul.mubr.f32.gmra.mrb[0].mxu0 %v2436
      %v2614 = vpop.f32.mrb[0].mxu0
      %v2615 = vadd.f32 0.0, %v2614
      %v2616 = vpop.f32.mrb[0].mxu0
      %2617 = vmatprep.mubr.f32.mxu0 0.0
      %2618 = vmatmul.mubr.f32.gmra.mrb[0].mxu0 %v2439
      %v2619 = vpop.f32.mrb[0].mxu0
      %v2620 = vadd.f32 0.0, %v2619
      %v2621 = vpop.f32.mrb[0].mxu0
      %2622 = vmatprep.mubr.f32.mxu0 0.0
      %2623 = vmatmul.mubr.f32.gmra.mrb[0].mxu0 %v2442
      %v2624 = vpop.f32.mrb[0].mxu0
      %v2625 = vadd.f32 0.0, %v2624
      %v2626 = vpop.f32.mrb[0].mxu0
      %2627 = vmatprep.mubr.f32.mxu0 0.0
      %2628 = vmatmul.mubr.f32.gmra.mrb[0].mxu0 %v2445
      %v2629 = vpop.f32.mrb[0].mxu0
      %v2630 = vadd.f32 0.0, %v2629
      %v2631 = vpop.f32.mrb[0].mxu0
      %2632 = vmatprep.mubr.f32.mxu0 0.0
      %2633 = vmatmul.mubr.f32.gmra.mrb[0].mxu0 %v2448
      %v2634 = vpop.f32.mrb[0].mxu0
      %v2635 = vadd.f32 0.0, %v2634
      %v2636 = vpop.f32.mrb[0].mxu0
      %2637 = vmatprep.mubr.f32.mxu0 0.0
      %2638 = vmatmul.mubr.f32.gmra.mrb[0].mxu0 %v2451
      %v2639 = vpop.f32.mrb[0].mxu0
      %v2640 = vadd.f32 0.0, %v2639
      %v2641 = vpop.f32.mrb[0].mxu0
      %2642 = vmatprep.mubr.f32.mxu0 0.0
      %2643 = vmatmul.mubr.f32.gmra.mrb[0].mxu0 %v2454
      %v2644 = vpop.f32.mrb[0].mxu0
      %v2645 = vadd.f32 0.0, %v2644
      %v2646 = vpop.f32.mrb[0].mxu0
      %2647 = vmatprep.mubr.f32.mxu0 0.0
      %2648 = vmatmul.mubr.f32.gmra.mrb[0].mxu0 %v2457
      %v2649 = vpop.f32.mrb[0].mxu0
      %v2650 = vadd.f32 0.0, %v2649
      %v2651 = vpop.f32.mrb[0].mxu0
      %2652 = vmatprep.mubr.f32.mxu0 0.0
      %2653 = vmatmul.mubr.f32.gmra.mrb[0].mxu0 %v2460
      %v2654 = vpop.f32.mrb[0].mxu0
      %v2655 = vadd.f32 0.0, %v2654
      %v2656 = vpop.f32.mrb[0].mxu0
      %2657 = vmatprep.mubr.f32.mxu0 0.0
      %2658 = vmatmul.mubr.f32.gmra.mrb[0].mxu0 %v2463
      %v2659 = vpop.f32.mrb[0].mxu0
      %v2660 = vadd.f32 0.0, %v2659
      %v2661 = vpop.f32.mrb[0].mxu0
      %2662 = vmatprep.mubr.f32.mxu0 0.0
      %2663 = vmatmul.mubr.f32.gmra.mrb[0].mxu0 %v2466
      %v2664 = vpop.f32.mrb[0].mxu0
      %v2665 = vadd.f32 0.0, %v2664
      %v2666 = vpop.f32.mrb[0].mxu0
      %2667 = vmatprep.mubr.f32.mxu0 0.0
      %2668 = vmatmul.mubr.f32.gmra.mrb[0].mxu0 %v2469
      %v2669 = vpop.f32.mrb[0].mxu0
      %v2670 = vadd.f32 0.0, %v2669
      %v2671 = vpop.f32.mrb[0].mxu0
      %2672 = vmatprep.mubr.f32.mxu0 0.0
      %2673 = vmatmul.mubr.f32.gmra.mrb[0].mxu0 %v2472
      %v2674 = vpop.f32.mrb[0].mxu0
      %v2675 = vadd.f32 0.0, %v2674
      %v2676 = vpop.f32.mrb[0].mxu0
      %2677 = vmatprep.mubr.f32.mxu0 0.0
      %2678 = vmatmul.mubr.f32.gmra.mrb[0].mxu0 %v2475
      %v2679 = vpop.f32.mrb[0].mxu0
      %v2680 = vadd.f32 0.0, %v2679
      %v2681 = vpop.f32.mrb[0].mxu0
      %2682 = vmatprep.mubr.f32.mxu0 0.0
      %2683 = vmatmul.mubr.f32.gmra.mrb[0].mxu0 %v2478
      %v2684 = vpop.f32.mrb[0].mxu0
      %v2685 = vadd.f32 0.0, %v2684
      %v2686 = vpop.f32.mrb[0].mxu0
      %2687 = vmatprep.mubr.f32.mxu0 0.0
      %2688 = vmatmul.mubr.f32.gmra.mrb[0].mxu0 %v2481
      %v2689 = vpop.f32.mrb[0].mxu0
      %v2690 = vadd.f32 0.0, %v2689
      %v2691 = vpop.f32.mrb[0].mxu0
      %2692 = vmatprep.mubr.f32.mxu0 0.0
      %2693 = vmatmul.mubr.f32.gmra.mrb[0].mxu0 %v2484
      %v2694 = vpop.f32.mrb[0].mxu0
      %v2695 = vadd.f32 0.0, %v2694
      %v2696 = vpop.f32.mrb[0].mxu0
      %2697 = vmatprep.mubr.f32.mxu0 0.0
      %2698 = vmatmul.mubr.f32.gmra.mrb[0].mxu0 %v2487
      %v2699 = vpop.f32.mrb[0].mxu0
      %v2700 = vadd.f32 0.0, %v2699
      %v2701 = vpop.f32.mrb[0].mxu0
      %2702 = vmatprep.mubr.f32.mxu0 0.0
      %2703 = vmatmul.mubr.f32.gmra.mrb[0].mxu0 %v2490
      %v2704 = vpop.f32.mrb[0].mxu0
      %v2705 = vadd.f32 0.0, %v2704
      %v2706 = vpop.f32.mrb[0].mxu0
      %2707 = vmatprep.mubr.f32.mxu0 0.0
      %2708 = vmatmul.mubr.f32.gmra.mrb[0].mxu0 %v2493
      %v2709 = vpop.f32.mrb[0].mxu0
      %v2710 = vadd.f32 0.0, %v2709
      %v2711 = vpop.f32.mrb[0].mxu0
      %2712 = vmatprep.mubr.f32.mxu0 0.0
      %2713 = vmatmul.mubr.f32.gmra.mrb[0].mxu0 %v2496
      %v2714 = vpop.f32.mrb[0].mxu0
      %v2715 = vadd.f32 0.0, %v2714
      %v2716 = vpop.f32.mrb[0].mxu0
      %2717 = vmatprep.mubr.f32.mxu0 0.0
      %2718 = vmatmul.mubr.f32.gmra.mrb[0].mxu0 %v2499
      %v2719 = vpop.f32.mrb[0].mxu0
      %v2720 = vadd.f32 0.0, %v2719
      %v2721 = vpop.f32.mrb[0].mxu0
      %2722 = vmatprep.mubr.f32.mxu0 0.0
      %2723 = vmatmul.mubr.f32.gmra.mrb[0].mxu0 %v2502
      %v2724 = vpop.f32.mrb[0].mxu0
      %v2725 = vadd.f32 0.0, %v2724
      %v2726 = vpop.f32.mrb[0].mxu0
      %2727 = vmatprep.mubr.f32.mxu0 0.0
      %2728 = vmatmul.mubr.f32.gmra.mrb[0].mxu0 %v2505
      %v2729 = vpop.f32.mrb[0].mxu0
      %v2730 = vadd.f32 0.0, %v2729
      %v2731 = vpop.f32.mrb[0].mxu0
      %2732 = vmatprep.mubr.f32.mxu0 0.0
      %2733 = vmatmul.mubr.f32.gmra.mrb[0].mxu0 %v2508
      %v2734 = vpop.f32.mrb[0].mxu0
      %v2735 = vadd.f32 0.0, %v2734
      %v2736 = vpop.f32.mrb[0].mxu0
      %2737 = vdwg.mxu0
      %v2738 = vadd.f32 %v2348, %v2580
      %v2739 = vadd.f32 %v2349, %v2585
      %v2740 = vadd.f32 %v2350, %v2590
      %v2741 = vadd.f32 %v2351, %v2595
      %v2742 = vadd.f32 %v2352, %v2600
      %v2743 = vadd.f32 %v2353, %v2605
      %v2744 = vadd.f32 %v2354, %v2610
      %v2745 = vadd.f32 %v2355, %v2615
      %v2746 = vadd.f32 %v2356, %v2620
      %v2747 = vadd.f32 %v2357, %v2625
      %v2748 = vadd.f32 %v2358, %v2630
      %v2749 = vadd.f32 %v2359, %v2635
      %v2750 = vadd.f32 %v2360, %v2640
      %v2751 = vadd.f32 %v2361, %v2645
      %v2752 = vadd.f32 %v2362, %v2650
      %v2753 = vadd.f32 %v2363, %v2655
      %v2754 = vadd.f32 %v2364, %v2660
      %v2755 = vadd.f32 %v2365, %v2665
      %v2756 = vadd.f32 %v2366, %v2670
      %v2757 = vadd.f32 %v2367, %v2675
      %v2758 = vadd.f32 %v2368, %v2680
      %v2759 = vadd.f32 %v2369, %v2685
      %v2760 = vadd.f32 %v2370, %v2690
      %v2761 = vadd.f32 %v2371, %v2695
      %v2762 = vadd.f32 %v2372, %v2700
      %v2763 = vadd.f32 %v2373, %v2705
      %v2764 = vadd.f32 %v2374, %v2710
      %v2765 = vadd.f32 %v2375, %v2715
      %v2766 = vadd.f32 %v2376, %v2720
      %v2767 = vadd.f32 %v2377, %v2725
      %v2768 = vadd.f32 %v2378, %v2730
      %v2769 = vadd.f32 %v2379, %v2735
      %v2770 = vld [vmem:[#allocation2 + $0x19] sm:$0xff]
      %v2771 = vld [vmem:[#allocation2 + $0x21] sm:$0xff]
      %v2772 = vld [vmem:[#allocation2 + $0x29] sm:$0xff]
      %v2773 = vld [vmem:[#allocation2 + $0x31] sm:$0xff]
      %v2774 = vld [vmem:[#allocation2 + $0x39] sm:$0xff]
      %v2775 = vld [vmem:[#allocation2 + $0x41] sm:$0xff]
      %v2776 = vld [vmem:[#allocation2 + $0x49] sm:$0xff]
      %v2777 = vld [vmem:[#allocation2 + $0x51] sm:$0xff]
      %v2778 = vld [vmem:[#allocation2 + $0x59] sm:$0xff]
      %v2779 = vld [vmem:[#allocation2 + $0x61] sm:$0xff]
      %v2780 = vld [vmem:[#allocation2 + $0x69] sm:$0xff]
      %v2781 = vld [vmem:[#allocation2 + $0x71] sm:$0xff]
      %v2782 = vld [vmem:[#allocation2 + $0x79] sm:$0xff]
      %v2783 = vld [vmem:[#allocation2 + $0x81] sm:$0xff]
      %v2784 = vld [vmem:[#allocation2 + $0x89] sm:$0xff]
      %v2785 = vld [vmem:[#allocation2 + $0x91] sm:$0xff]
      %v2786 = vld [vmem:[#allocation2 + $0x99] sm:$0xff]
      %v2787 = vld [vmem:[#allocation2 + $0xa1] sm:$0xff]
      %v2788 = vld [vmem:[#allocation2 + $0xa9] sm:$0xff]
      %v2789 = vld [vmem:[#allocation2 + $0xb1] sm:$0xff]
      %v2790 = vld [vmem:[#allocation2 + $0xb9] sm:$0xff]
      %v2791 = vld [vmem:[#allocation2 + $0xc1] sm:$0xff]
      %v2792 = vld [vmem:[#allocation2 + $0xc9] sm:$0xff]
      %v2793 = vld [vmem:[#allocation2 + $0xd1] sm:$0xff]
      %v2794 = vld [vmem:[#allocation2 + $0xd9] sm:$0xff]
      %v2795 = vld [vmem:[#allocation2 + $0xe1] sm:$0xff]
      %v2796 = vld [vmem:[#allocation2 + $0xe9] sm:$0xff]
      %v2797 = vld [vmem:[#allocation2 + $0xf1] sm:$0xff]
      %v2798 = vld [vmem:[#allocation2 + $0xf9] sm:$0xff]
      %v2799 = vld [vmem:[#allocation2 + $0x101] sm:$0xff]
      %v2800 = vld [vmem:[#allocation2 + $0x109] sm:$0xff]
      %v2801 = vld [vmem:[#allocation2 + $0x111] sm:$0xff]
      %v2802 = vmul.f32 %v2770, %v1411
      %v2803 = vmul.f32 %v2771, %v1416
      %v2804 = vmul.f32 %v2772, %v1421
      %v2805 = vmul.f32 %v2773, %v1426
      %v2806 = vmul.f32 %v2774, %v1431
      %v2807 = vmul.f32 %v2775, %v1436
      %v2808 = vmul.f32 %v2776, %v1441
      %v2809 = vmul.f32 %v2777, %v1446
      %v2810 = vmul.f32 %v2778, %v1451
      %v2811 = vmul.f32 %v2779, %v1456
      %v2812 = vmul.f32 %v2780, %v1461
      %v2813 = vmul.f32 %v2781, %v1466
      %v2814 = vmul.f32 %v2782, %v1471
      %v2815 = vmul.f32 %v2783, %v1476
      %v2816 = vmul.f32 %v2784, %v1481
      %v2817 = vmul.f32 %v2785, %v1486
      %v2818 = vmul.f32 %v2786, %v1491
      %v2819 = vmul.f32 %v2787, %v1496
      %v2820 = vmul.f32 %v2788, %v1501
      %v2821 = vmul.f32 %v2789, %v1506
      %v2822 = vmul.f32 %v2790, %v1511
      %v2823 = vmul.f32 %v2791, %v1516
      %v2824 = vmul.f32 %v2792, %v1521
      %v2825 = vmul.f32 %v2793, %v1526
      %v2826 = vmul.f32 %v2794, %v1531
      %v2827 = vmul.f32 %v2795, %v1536
      %v2828 = vmul.f32 %v2796, %v1541
      %v2829 = vmul.f32 %v2797, %v1546
      %v2830 = vmul.f32 %v2798, %v1551
      %v2831 = vmul.f32 %v2799, %v1556
      %v2832 = vmul.f32 %v2800, %v1561
      %v2833 = vmul.f32 %v2801, %v1566
      %s2834 = scalar_lea.vmem %s3, 20
      %v2835 = vld [vmem:[%s2834] sm:$0xf]
      %v2837 = vsel %vm429, %v2802, 0
      %v2840 = vsel %vm429, %v2803, 0
      %v2843 = vsel %vm429, %v2804, 0
      %v2846 = vsel %vm429, %v2805, 0
      %v2849 = vsel %vm429, %v2806, 0
      %v2852 = vsel %vm429, %v2807, 0
      %v2855 = vsel %vm429, %v2808, 0
      %v2858 = vsel %vm429, %v2809, 0
      %v2861 = vsel %vm429, %v2810, 0
      %v2864 = vsel %vm429, %v2811, 0
      %v2867 = vsel %vm429, %v2812, 0
      %v2870 = vsel %vm429, %v2813, 0
      %v2873 = vsel %vm429, %v2814, 0
      %v2876 = vsel %vm429, %v2815, 0
      %v2879 = vsel %vm429, %v2816, 0
      %v2882 = vsel %vm429, %v2817, 0
      %v2885 = vsel %vm429, %v2818, 0
      %v2888 = vsel %vm429, %v2819, 0
      %v2891 = vsel %vm429, %v2820, 0
      %v2894 = vsel %vm429, %v2821, 0
      %v2897 = vsel %vm429, %v2822, 0
      %v2900 = vsel %vm429, %v2823, 0
      %v2903 = vsel %vm429, %v2824, 0
      %v2906 = vsel %vm429, %v2825, 0
      %v2909 = vsel %vm429, %v2826, 0
      %v2912 = vsel %vm429, %v2827, 0
      %v2915 = vsel %vm429, %v2828, 0
      %v2918 = vsel %vm429, %v2829, 0
      %v2921 = vsel %vm429, %v2830, 0
      %v2924 = vsel %vm429, %v2831, 0
      %v2927 = vsel %vm429, %v2832, 0
      %v2930 = vsel %vm429, %v2833, 0
      %v2933 = vsel %vm823, %v2835, 0
      %2935 = vmatprep.subr.mxu0 0.0
      %2936 = vmatpush1.msra.mxu0 %v2933
      %2937 = vmatprep.subr.mxu0 0.0
      %2938 = vmatpush1.msra.mxu0 0.0
      %2939 = vmatprep.subr.mxu0 0.0
      %2940 = vmatpush1.msra.mxu0 0.0
      %2941 = vmatprep.subr.mxu0 0.0
      %2942 = vmatpush1.msra.mxu0 0.0
      %2943 = vmatprep.subr.mxu0 0.0
      %2944 = vmatpush1.msra.mxu0 0.0
      %2945 = vmatprep.subr.mxu0 0.0
      %2946 = vmatpush1.msra.mxu0 0.0
      %2947 = vmatprep.subr.mxu0 0.0
      %2948 = vmatpush1.msra.mxu0 0.0
      %2949 = vmatprep.subr.mxu0 0.0
      %2950 = vmatpush1.msra.mxu0 0.0
      %2951 = vmatprep.subr.mxu0 0.0
      %2952 = vmatpush1.msra.mxu0 0.0
      %2953 = vmatprep.subr.mxu0 0.0
      %2954 = vmatpush1.msra.mxu0 0.0
      %2955 = vmatprep.subr.mxu0 0.0
      %2956 = vmatpush1.msra.mxu0 0.0
      %2957 = vmatprep.subr.mxu0 0.0
      %2958 = vmatpush1.msra.mxu0 0.0
      %2959 = vmatprep.subr.mxu0 0.0
      %2960 = vmatpush1.msra.mxu0 0.0
      %2961 = vmatprep.subr.mxu0 0.0
      %2962 = vmatpush1.msra.mxu0 0.0
      %2963 = vmatprep.subr.mxu0 0.0
      %2964 = vmatpush1.msra.mxu0 0.0
      %2965 = vmatprep.subr.mxu0 0.0
      %2966 = vmatpush1.msra.mxu0 0.0
      %2967 = vmatprep.subr.mxu0 0.0
      %2968 = vmatpush1.msra.mxu0 0.0
      %2969 = vmatprep.subr.mxu0 0.0
      %2970 = vmatpush1.msra.mxu0 0.0
      %2971 = vmatprep.subr.mxu0 0.0
      %2972 = vmatpush1.msra.mxu0 0.0
      %2973 = vmatprep.subr.mxu0 0.0
      %2974 = vmatpush1.msra.mxu0 0.0
      %2975 = vmatprep.subr.mxu0 0.0
      %2976 = vmatpush1.msra.mxu0 0.0
      %2977 = vmatprep.subr.mxu0 0.0
      %2978 = vmatpush1.msra.mxu0 0.0
      %2979 = vmatprep.subr.mxu0 0.0
      %2980 = vmatpush1.msra.mxu0 0.0
      %2981 = vmatprep.subr.mxu0 0.0
      %2982 = vmatpush1.msra.mxu0 0.0
      %2983 = vmatprep.subr.mxu0 0.0
      %2984 = vmatpush1.msra.mxu0 0.0
      %2985 = vmatprep.subr.mxu0 0.0
      %2986 = vmatpush1.msra.mxu0 0.0
      %2987 = vmatprep.subr.mxu0 0.0
      %2988 = vmatpush1.msra.mxu0 0.0
      %2989 = vmatprep.subr.mxu0 0.0
      %2990 = vmatpush1.msra.mxu0 0.0
      %2991 = vmatprep.subr.mxu0 0.0
      %2992 = vmatpush1.msra.mxu0 0.0
      %2993 = vmatprep.subr.mxu0 0.0
      %2994 = vmatpush1.msra.mxu0 0.0
      %2995 = vmatprep.subr.mxu0 0.0
      %2996 = vmatpush1.msra.mxu0 0.0
      %2997 = vmatprep.subr.mxu0 0.0
      %2998 = vmatpush1.msra.mxu0 0.0
      %2999 = vmatprep.mubr.f32.mxu0 0.0
      %3000 = vmatmul.mubr.f32.gmra.mrb[0].mxu0 %v2837
      %v3001 = vpop.f32.mrb[0].mxu0
      %v3002 = vadd.f32 0.0, %v3001
      %v3003 = vpop.f32.mrb[0].mxu0
      %3004 = vmatprep.mubr.f32.mxu0 0.0
      %3005 = vmatmul.mubr.f32.gmra.mrb[0].mxu0 %v2840
      %v3006 = vpop.f32.mrb[0].mxu0
      %v3007 = vadd.f32 0.0, %v3006
      %v3008 = vpop.f32.mrb[0].mxu0
      %3009 = vmatprep.mubr.f32.mxu0 0.0
      %3010 = vmatmul.mubr.f32.gmra.mrb[0].mxu0 %v2843
      %v3011 = vpop.f32.mrb[0].mxu0
      %v3012 = vadd.f32 0.0, %v3011
      %v3013 = vpop.f32.mrb[0].mxu0
      %3014 = vmatprep.mubr.f32.mxu0 0.0
      %3015 = vmatmul.mubr.f32.gmra.mrb[0].mxu0 %v2846
      %v3016 = vpop.f32.mrb[0].mxu0
      %v3017 = vadd.f32 0.0, %v3016
      %v3018 = vpop.f32.mrb[0].mxu0
      %3019 = vmatprep.mubr.f32.mxu0 0.0
      %3020 = vmatmul.mubr.f32.gmra.mrb[0].mxu0 %v2849
      %v3021 = vpop.f32.mrb[0].mxu0
      %v3022 = vadd.f32 0.0, %v3021
      %v3023 = vpop.f32.mrb[0].mxu0
      %3024 = vmatprep.mubr.f32.mxu0 0.0
      %3025 = vmatmul.mubr.f32.gmra.mrb[0].mxu0 %v2852
      %v3026 = vpop.f32.mrb[0].mxu0
      %v3027 = vadd.f32 0.0, %v3026
      %v3028 = vpop.f32.mrb[0].mxu0
      %3029 = vmatprep.mubr.f32.mxu0 0.0
      %3030 = vmatmul.mubr.f32.gmra.mrb[0].mxu0 %v2855
      %v3031 = vpop.f32.mrb[0].mxu0
      %v3032 = vadd.f32 0.0, %v3031
      %v3033 = vpop.f32.mrb[0].mxu0
      %3034 = vmatprep.mubr.f32.mxu0 0.0
      %3035 = vmatmul.mubr.f32.gmra.mrb[0].mxu0 %v2858
      %v3036 = vpop.f32.mrb[0].mxu0
      %v3037 = vadd.f32 0.0, %v3036
      %v3038 = vpop.f32.mrb[0].mxu0
      %3039 = vmatprep.mubr.f32.mxu0 0.0
      %3040 = vmatmul.mubr.f32.gmra.mrb[0].mxu0 %v2861
      %v3041 = vpop.f32.mrb[0].mxu0
      %v3042 = vadd.f32 0.0, %v3041
      %v3043 = vpop.f32.mrb[0].mxu0
      %3044 = vmatprep.mubr.f32.mxu0 0.0
      %3045 = vmatmul.mubr.f32.gmra.mrb[0].mxu0 %v2864
      %v3046 = vpop.f32.mrb[0].mxu0
      %v3047 = vadd.f32 0.0, %v3046
      %v3048 = vpop.f32.mrb[0].mxu0
      %3049 = vmatprep.mubr.f32.mxu0 0.0
      %3050 = vmatmul.mubr.f32.gmra.mrb[0].mxu0 %v2867
      %v3051 = vpop.f32.mrb[0].mxu0
      %v3052 = vadd.f32 0.0, %v3051
      %v3053 = vpop.f32.mrb[0].mxu0
      %3054 = vmatprep.mubr.f32.mxu0 0.0
      %3055 = vmatmul.mubr.f32.gmra.mrb[0].mxu0 %v2870
      %v3056 = vpop.f32.mrb[0].mxu0
      %v3057 = vadd.f32 0.0, %v3056
      %v3058 = vpop.f32.mrb[0].mxu0
      %3059 = vmatprep.mubr.f32.mxu0 0.0
      %3060 = vmatmul.mubr.f32.gmra.mrb[0].mxu0 %v2873
      %v3061 = vpop.f32.mrb[0].mxu0
      %v3062 = vadd.f32 0.0, %v3061
      %v3063 = vpop.f32.mrb[0].mxu0
      %3064 = vmatprep.mubr.f32.mxu0 0.0
      %3065 = vmatmul.mubr.f32.gmra.mrb[0].mxu0 %v2876
      %v3066 = vpop.f32.mrb[0].mxu0
      %v3067 = vadd.f32 0.0, %v3066
      %v3068 = vpop.f32.mrb[0].mxu0
      %3069 = vmatprep.mubr.f32.mxu0 0.0
      %3070 = vmatmul.mubr.f32.gmra.mrb[0].mxu0 %v2879
      %v3071 = vpop.f32.mrb[0].mxu0
      %v3072 = vadd.f32 0.0, %v3071
      %v3073 = vpop.f32.mrb[0].mxu0
      %3074 = vmatprep.mubr.f32.mxu0 0.0
      %3075 = vmatmul.mubr.f32.gmra.mrb[0].mxu0 %v2882
      %v3076 = vpop.f32.mrb[0].mxu0
      %v3077 = vadd.f32 0.0, %v3076
      %v3078 = vpop.f32.mrb[0].mxu0
      %3079 = vmatprep.mubr.f32.mxu0 0.0
      %3080 = vmatmul.mubr.f32.gmra.mrb[0].mxu0 %v2885
      %v3081 = vpop.f32.mrb[0].mxu0
      %v3082 = vadd.f32 0.0, %v3081
      %v3083 = vpop.f32.mrb[0].mxu0
      %3084 = vmatprep.mubr.f32.mxu0 0.0
      %3085 = vmatmul.mubr.f32.gmra.mrb[0].mxu0 %v2888
      %v3086 = vpop.f32.mrb[0].mxu0
      %v3087 = vadd.f32 0.0, %v3086
      %v3088 = vpop.f32.mrb[0].mxu0
      %3089 = vmatprep.mubr.f32.mxu0 0.0
      %3090 = vmatmul.mubr.f32.gmra.mrb[0].mxu0 %v2891
      %v3091 = vpop.f32.mrb[0].mxu0
      %v3092 = vadd.f32 0.0, %v3091
      %v3093 = vpop.f32.mrb[0].mxu0
      %3094 = vmatprep.mubr.f32.mxu0 0.0
      %3095 = vmatmul.mubr.f32.gmra.mrb[0].mxu0 %v2894
      %v3096 = vpop.f32.mrb[0].mxu0
      %v3097 = vadd.f32 0.0, %v3096
      %v3098 = vpop.f32.mrb[0].mxu0
      %3099 = vmatprep.mubr.f32.mxu0 0.0
      %3100 = vmatmul.mubr.f32.gmra.mrb[0].mxu0 %v2897
      %v3101 = vpop.f32.mrb[0].mxu0
      %v3102 = vadd.f32 0.0, %v3101
      %v3103 = vpop.f32.mrb[0].mxu0
      %3104 = vmatprep.mubr.f32.mxu0 0.0
      %3105 = vmatmul.mubr.f32.gmra.mrb[0].mxu0 %v2900
      %v3106 = vpop.f32.mrb[0].mxu0
      %v3107 = vadd.f32 0.0, %v3106
      %v3108 = vpop.f32.mrb[0].mxu0
      %3109 = vmatprep.mubr.f32.mxu0 0.0
      %3110 = vmatmul.mubr.f32.gmra.mrb[0].mxu0 %v2903
      %v3111 = vpop.f32.mrb[0].mxu0
      %v3112 = vadd.f32 0.0, %v3111
      %v3113 = vpop.f32.mrb[0].mxu0
      %3114 = vmatprep.mubr.f32.mxu0 0.0
      %3115 = vmatmul.mubr.f32.gmra.mrb[0].mxu0 %v2906
      %v3116 = vpop.f32.mrb[0].mxu0
      %v3117 = vadd.f32 0.0, %v3116
      %v3118 = vpop.f32.mrb[0].mxu0
      %3119 = vmatprep.mubr.f32.mxu0 0.0
      %3120 = vmatmul.mubr.f32.gmra.mrb[0].mxu0 %v2909
      %v3121 = vpop.f32.mrb[0].mxu0
      %v3122 = vadd.f32 0.0, %v3121
      %v3123 = vpop.f32.mrb[0].mxu0
      %3124 = vmatprep.mubr.f32.mxu0 0.0
      %3125 = vmatmul.mubr.f32.gmra.mrb[0].mxu0 %v2912
      %v3126 = vpop.f32.mrb[0].mxu0
      %v3127 = vadd.f32 0.0, %v3126
      %v3128 = vpop.f32.mrb[0].mxu0
      %3129 = vmatprep.mubr.f32.mxu0 0.0
      %3130 = vmatmul.mubr.f32.gmra.mrb[0].mxu0 %v2915
      %v3131 = vpop.f32.mrb[0].mxu0
      %v3132 = vadd.f32 0.0, %v3131
      %v3133 = vpop.f32.mrb[0].mxu0
      %3134 = vmatprep.mubr.f32.mxu0 0.0
      %3135 = vmatmul.mubr.f32.gmra.mrb[0].mxu0 %v2918
      %v3136 = vpop.f32.mrb[0].mxu0
      %v3137 = vadd.f32 0.0, %v3136
      %v3138 = vpop.f32.mrb[0].mxu0
      %3139 = vmatprep.mubr.f32.mxu0 0.0
      %3140 = vmatmul.mubr.f32.gmra.mrb[0].mxu0 %v2921
      %v3141 = vpop.f32.mrb[0].mxu0
      %v3142 = vadd.f32 0.0, %v3141
      %v3143 = vpop.f32.mrb[0].mxu0
      %3144 = vmatprep.mubr.f32.mxu0 0.0
      %3145 = vmatmul.mubr.f32.gmra.mrb[0].mxu0 %v2924
      %v3146 = vpop.f32.mrb[0].mxu0
      %v3147 = vadd.f32 0.0, %v3146
      %v3148 = vpop.f32.mrb[0].mxu0
      %3149 = vmatprep.mubr.f32.mxu0 0.0
      %3150 = vmatmul.mubr.f32.gmra.mrb[0].mxu0 %v2927
      %v3151 = vpop.f32.mrb[0].mxu0
      %v3152 = vadd.f32 0.0, %v3151
      %v3153 = vpop.f32.mrb[0].mxu0
      %3154 = vmatprep.mubr.f32.mxu0 0.0
      %3155 = vmatmul.mubr.f32.gmra.mrb[0].mxu0 %v2930
      %v3156 = vpop.f32.mrb[0].mxu0
      %v3157 = vadd.f32 0.0, %v3156
      %v3158 = vpop.f32.mrb[0].mxu0
      %3159 = vdwg.mxu0
      %v3160 = vadd.f32 %v2738, %v3002
      %v3161 = vadd.f32 %v2739, %v3007
      %v3162 = vadd.f32 %v2740, %v3012
      %v3163 = vadd.f32 %v2741, %v3017
      %v3164 = vadd.f32 %v2742, %v3022
      %v3165 = vadd.f32 %v2743, %v3027
      %v3166 = vadd.f32 %v2744, %v3032
      %v3167 = vadd.f32 %v2745, %v3037
      %v3168 = vadd.f32 %v2746, %v3042
      %v3169 = vadd.f32 %v2747, %v3047
      %v3170 = vadd.f32 %v2748, %v3052
      %v3171 = vadd.f32 %v2749, %v3057
      %v3172 = vadd.f32 %v2750, %v3062
      %v3173 = vadd.f32 %v2751, %v3067
      %v3174 = vadd.f32 %v2752, %v3072
      %v3175 = vadd.f32 %v2753, %v3077
      %v3176 = vadd.f32 %v2754, %v3082
      %v3177 = vadd.f32 %v2755, %v3087
      %v3178 = vadd.f32 %v2756, %v3092
      %v3179 = vadd.f32 %v2757, %v3097
      %v3180 = vadd.f32 %v2758, %v3102
      %v3181 = vadd.f32 %v2759, %v3107
      %v3182 = vadd.f32 %v2760, %v3112
      %v3183 = vadd.f32 %v2761, %v3117
      %v3184 = vadd.f32 %v2762, %v3122
      %v3185 = vadd.f32 %v2763, %v3127
      %v3186 = vadd.f32 %v2764, %v3132
      %v3187 = vadd.f32 %v2765, %v3137
      %v3188 = vadd.f32 %v2766, %v3142
      %v3189 = vadd.f32 %v2767, %v3147
      %v3190 = vadd.f32 %v2768, %v3152
      %v3191 = vadd.f32 %v2769, %v3157
      %v3192 = vld [vmem:[#allocation2 + $0x27] sm:$0xff]
      %v3193 = vld [vmem:[#allocation2 + $0x2f] sm:$0xff]
      %v3194 = vld [vmem:[#allocation2 + $0x37] sm:$0xff]
      %v3195 = vld [vmem:[#allocation2 + $0x3f] sm:$0xff]
      %v3196 = vld [vmem:[#allocation2 + $0x47] sm:$0xff]
      %v3197 = vld [vmem:[#allocation2 + $0x4f] sm:$0xff]
      %v3198 = vld [vmem:[#allocation2 + $0x57] sm:$0xff]
      %v3199 = vld [vmem:[#allocation2 + $0x5f] sm:$0xff]
      %v3200 = vld [vmem:[#allocation2 + $0x67] sm:$0xff]
      %v3201 = vld [vmem:[#allocation2 + $0x6f] sm:$0xff]
      %v3202 = vld [vmem:[#allocation2 + $0x77] sm:$0xff]
      %v3203 = vld [vmem:[#allocation2 + $0x7f] sm:$0xff]
      %v3204 = vld [vmem:[#allocation2 + $0x87] sm:$0xff]
      %v3205 = vld [vmem:[#allocation2 + $0x8f] sm:$0xff]
      %v3206 = vld [vmem:[#allocation2 + $0x97] sm:$0xff]
      %v3207 = vld [vmem:[#allocation2 + $0x9f] sm:$0xff]
      %v3208 = vld [vmem:[#allocation2 + $0xa7] sm:$0xff]
      %v3209 = vld [vmem:[#allocation2 + $0xaf] sm:$0xff]
      %v3210 = vld [vmem:[#allocation2 + $0xb7] sm:$0xff]
      %v3211 = vld [vmem:[#allocation2 + $0xbf] sm:$0xff]
      %v3212 = vld [vmem:[#allocation2 + $0xc7] sm:$0xff]
      %v3213 = vld [vmem:[#allocation2 + $0xcf] sm:$0xff]
      %v3214 = vld [vmem:[#allocation2 + $0xd7] sm:$0xff]
      %v3215 = vld [vmem:[#allocation2 + $0xdf] sm:$0xff]
      %v3216 = vld [vmem:[#allocation2 + $0xe7] sm:$0xff]
      %v3217 = vld [vmem:[#allocation2 + $0xef] sm:$0xff]
      %v3218 = vld [vmem:[#allocation2 + $0xf7] sm:$0xff]
      %v3219 = vld [vmem:[#allocation2 + $0xff] sm:$0xff]
      %v3220 = vld [vmem:[#allocation2 + $0x107] sm:$0xff]
      %v3221 = vld [vmem:[#allocation2 + $0x10f] sm:$0xff]
      %v3222 = vld [vmem:[#allocation2 + $0x117] sm:$0xff]
      %v3223 = vld [vmem:[#allocation2 + $0x11f] sm:$0xff]
      %v3224 = vmul.f32 %v3192, %v503
      %v3225 = vmul.f32 %v3193, %v508
      %v3226 = vmul.f32 %v3194, %v513
      %v3227 = vmul.f32 %v3195, %v518
      %v3228 = vmul.f32 %v3196, %v523
      %v3229 = vmul.f32 %v3197, %v528
      %v3230 = vmul.f32 %v3198, %v533
      %v3231 = vmul.f32 %v3199, %v538
      %v3232 = vmul.f32 %v3200, %v543
      %v3233 = vmul.f32 %v3201, %v548
      %v3234 = vmul.f32 %v3202, %v553
      %v3235 = vmul.f32 %v3203, %v558
      %v3236 = vmul.f32 %v3204, %v563
      %v3237 = vmul.f32 %v3205, %v568
      %v3238 = vmul.f32 %v3206, %v573
      %v3239 = vmul.f32 %v3207, %v578
      %v3240 = vmul.f32 %v3208, %v583
      %v3241 = vmul.f32 %v3209, %v588
      %v3242 = vmul.f32 %v3210, %v593
      %v3243 = vmul.f32 %v3211, %v598
      %v3244 = vmul.f32 %v3212, %v603
      %v3245 = vmul.f32 %v3213, %v608
      %v3246 = vmul.f32 %v3214, %v613
      %v3247 = vmul.f32 %v3215, %v618
      %v3248 = vmul.f32 %v3216, %v623
      %v3249 = vmul.f32 %v3217, %v628
      %v3250 = vmul.f32 %v3218, %v633
      %v3251 = vmul.f32 %v3219, %v638
      %v3252 = vmul.f32 %v3220, %v643
      %v3253 = vmul.f32 %v3221, %v648
      %v3254 = vmul.f32 %v3222, %v653
      %v3255 = vmul.f32 %v3223, %v658
      %s3256 = scalar_lea.vmem %s3, 24
      %v3257 = vld [vmem:[%s3256] sm:$0xf]
      %v3259 = vsel %vm429, %v3224, 0
      %v3262 = vsel %vm429, %v3225, 0
      %v3265 = vsel %vm429, %v3226, 0
      %v3268 = vsel %vm429, %v3227, 0
      %v3271 = vsel %vm429, %v3228, 0
      %v3274 = vsel %vm429, %v3229, 0
      %v3277 = vsel %vm429, %v3230, 0
      %v3280 = vsel %vm429, %v3231, 0
      %v3283 = vsel %vm429, %v3232, 0
      %v3286 = vsel %vm429, %v3233, 0
      %v3289 = vsel %vm429, %v3234, 0
      %v3292 = vsel %vm429, %v3235, 0
      %v3295 = vsel %vm429, %v3236, 0
      %v3298 = vsel %vm429, %v3237, 0
      %v3301 = vsel %vm429, %v3238, 0
      %v3304 = vsel %vm429, %v3239, 0
      %v3307 = vsel %vm429, %v3240, 0
      %v3310 = vsel %vm429, %v3241, 0
      %v3313 = vsel %vm429, %v3242, 0
      %v3316 = vsel %vm429, %v3243, 0
      %v3319 = vsel %vm429, %v3244, 0
      %v3322 = vsel %vm429, %v3245, 0
      %v3325 = vsel %vm429, %v3246, 0
      %v3328 = vsel %vm429, %v3247, 0
      %v3331 = vsel %vm429, %v3248, 0
      %v3334 = vsel %vm429, %v3249, 0
      %v3337 = vsel %vm429, %v3250, 0
      %v3340 = vsel %vm429, %v3251, 0
      %v3343 = vsel %vm429, %v3252, 0
      %v3346 = vsel %vm429, %v3253, 0
      %v3349 = vsel %vm429, %v3254, 0
      %v3352 = vsel %vm429, %v3255, 0
      %v3355 = vsel %vm823, %v3257, 0
      %3357 = vmatprep.subr.mxu0 0.0
      %3358 = vmatpush1.msra.mxu0 %v3355
      %3359 = vmatprep.subr.mxu0 0.0
      %3360 = vmatpush1.msra.mxu0 0.0
      %3361 = vmatprep.subr.mxu0 0.0
      %3362 = vmatpush1.msra.mxu0 0.0
      %3363 = vmatprep.subr.mxu0 0.0
      %3364 = vmatpush1.msra.mxu0 0.0
      %3365 = vmatprep.subr.mxu0 0.0
      %3366 = vmatpush1.msra.mxu0 0.0
      %3367 = vmatprep.subr.mxu0 0.0
      %3368 = vmatpush1.msra.mxu0 0.0
      %3369 = vmatprep.subr.mxu0 0.0
      %3370 = vmatpush1.msra.mxu0 0.0
      %3371 = vmatprep.subr.mxu0 0.0
      %3372 = vmatpush1.msra.mxu0 0.0
      %3373 = vmatprep.subr.mxu0 0.0
      %3374 = vmatpush1.msra.mxu0 0.0
      %3375 = vmatprep.subr.mxu0 0.0
      %3376 = vmatpush1.msra.mxu0 0.0
      %3377 = vmatprep.subr.mxu0 0.0
      %3378 = vmatpush1.msra.mxu0 0.0
      %3379 = vmatprep.subr.mxu0 0.0
      %3380 = vmatpush1.msra.mxu0 0.0
      %3381 = vmatprep.subr.mxu0 0.0
      %3382 = vmatpush1.msra.mxu0 0.0
      %3383 = vmatprep.subr.mxu0 0.0
      %3384 = vmatpush1.msra.mxu0 0.0
      %3385 = vmatprep.subr.mxu0 0.0
      %3386 = vmatpush1.msra.mxu0 0.0
      %3387 = vmatprep.subr.mxu0 0.0
      %3388 = vmatpush1.msra.mxu0 0.0
      %3389 = vmatprep.subr.mxu0 0.0
      %3390 = vmatpush1.msra.mxu0 0.0
      %3391 = vmatprep.subr.mxu0 0.0
      %3392 = vmatpush1.msra.mxu0 0.0
      %3393 = vmatprep.subr.mxu0 0.0
      %3394 = vmatpush1.msra.mxu0 0.0
      %3395 = vmatprep.subr.mxu0 0.0
      %3396 = vmatpush1.msra.mxu0 0.0
      %3397 = vmatprep.subr.mxu0 0.0
      %3398 = vmatpush1.msra.mxu0 0.0
      %3399 = vmatprep.subr.mxu0 0.0
      %3400 = vmatpush1.msra.mxu0 0.0
      %3401 = vmatprep.subr.mxu0 0.0
      %3402 = vmatpush1.msra.mxu0 0.0
      %3403 = vmatprep.subr.mxu0 0.0
      %3404 = vmatpush1.msra.mxu0 0.0
      %3405 = vmatprep.subr.mxu0 0.0
      %3406 = vmatpush1.msra.mxu0 0.0
      %3407 = vmatprep.subr.mxu0 0.0
      %3408 = vmatpush1.msra.mxu0 0.0
      %3409 = vmatprep.subr.mxu0 0.0
      %3410 = vmatpush1.msra.mxu0 0.0
      %3411 = vmatprep.subr.mxu0 0.0
      %3412 = vmatpush1.msra.mxu0 0.0
      %3413 = vmatprep.subr.mxu0 0.0
      %3414 = vmatpush1.msra.mxu0 0.0
      %3415 = vmatprep.subr.mxu0 0.0
      %3416 = vmatpush1.msra.mxu0 0.0
      %3417 = vmatprep.subr.mxu0 0.0
      %3418 = vmatpush1.msra.mxu0 0.0
      %3419 = vmatprep.subr.mxu0 0.0
      %3420 = vmatpush1.msra.mxu0 0.0
      %3421 = vmatprep.mubr.f32.mxu0 0.0
      %3422 = vmatmul.mubr.f32.gmra.mrb[0].mxu0 %v3259
      %v3423 = vpop.f32.mrb[0].mxu0
      %v3424 = vadd.f32 0.0, %v3423
      %v3425 = vpop.f32.mrb[0].mxu0
      %3426 = vmatprep.mubr.f32.mxu0 0.0
      %3427 = vmatmul.mubr.f32.gmra.mrb[0].mxu0 %v3262
      %v3428 = vpop.f32.mrb[0].mxu0
      %v3429 = vadd.f32 0.0, %v3428
      %v3430 = vpop.f32.mrb[0].mxu0
      %3431 = vmatprep.mubr.f32.mxu0 0.0
      %3432 = vmatmul.mubr.f32.gmra.mrb[0].mxu0 %v3265
      %v3433 = vpop.f32.mrb[0].mxu0
      %v3434 = vadd.f32 0.0, %v3433
      %v3435 = vpop.f32.mrb[0].mxu0
      %3436 = vmatprep.mubr.f32.mxu0 0.0
      %3437 = vmatmul.mubr.f32.gmra.mrb[0].mxu0 %v3268
      %v3438 = vpop.f32.mrb[0].mxu0
      %v3439 = vadd.f32 0.0, %v3438
      %v3440 = vpop.f32.mrb[0].mxu0
      %3441 = vmatprep.mubr.f32.mxu0 0.0
      %3442 = vmatmul.mubr.f32.gmra.mrb[0].mxu0 %v3271
      %v3443 = vpop.f32.mrb[0].mxu0
      %v3444 = vadd.f32 0.0, %v3443
      %v3445 = vpop.f32.mrb[0].mxu0
      %3446 = vmatprep.mubr.f32.mxu0 0.0
      %3447 = vmatmul.mubr.f32.gmra.mrb[0].mxu0 %v3274
      %v3448 = vpop.f32.mrb[0].mxu0
      %v3449 = vadd.f32 0.0, %v3448
      %v3450 = vpop.f32.mrb[0].mxu0
      %3451 = vmatprep.mubr.f32.mxu0 0.0
      %3452 = vmatmul.mubr.f32.gmra.mrb[0].mxu0 %v3277
      %v3453 = vpop.f32.mrb[0].mxu0
      %v3454 = vadd.f32 0.0, %v3453
      %v3455 = vpop.f32.mrb[0].mxu0
      %3456 = vmatprep.mubr.f32.mxu0 0.0
      %3457 = vmatmul.mubr.f32.gmra.mrb[0].mxu0 %v3280
      %v3458 = vpop.f32.mrb[0].mxu0
      %v3459 = vadd.f32 0.0, %v3458
      %v3460 = vpop.f32.mrb[0].mxu0
      %3461 = vmatprep.mubr.f32.mxu0 0.0
      %3462 = vmatmul.mubr.f32.gmra.mrb[0].mxu0 %v3283
      %v3463 = vpop.f32.mrb[0].mxu0
      %v3464 = vadd.f32 0.0, %v3463
      %v3465 = vpop.f32.mrb[0].mxu0
      %3466 = vmatprep.mubr.f32.mxu0 0.0
      %3467 = vmatmul.mubr.f32.gmra.mrb[0].mxu0 %v3286
      %v3468 = vpop.f32.mrb[0].mxu0
      %v3469 = vadd.f32 0.0, %v3468
      %v3470 = vpop.f32.mrb[0].mxu0
      %3471 = vmatprep.mubr.f32.mxu0 0.0
      %3472 = vmatmul.mubr.f32.gmra.mrb[0].mxu0 %v3289
      %v3473 = vpop.f32.mrb[0].mxu0
      %v3474 = vadd.f32 0.0, %v3473
      %v3475 = vpop.f32.mrb[0].mxu0
      %3476 = vmatprep.mubr.f32.mxu0 0.0
      %3477 = vmatmul.mubr.f32.gmra.mrb[0].mxu0 %v3292
      %v3478 = vpop.f32.mrb[0].mxu0
      %v3479 = vadd.f32 0.0, %v3478
      %v3480 = vpop.f32.mrb[0].mxu0
      %3481 = vmatprep.mubr.f32.mxu0 0.0
      %3482 = vmatmul.mubr.f32.gmra.mrb[0].mxu0 %v3295
      %v3483 = vpop.f32.mrb[0].mxu0
      %v3484 = vadd.f32 0.0, %v3483
      %v3485 = vpop.f32.mrb[0].mxu0
      %3486 = vmatprep.mubr.f32.mxu0 0.0
      %3487 = vmatmul.mubr.f32.gmra.mrb[0].mxu0 %v3298
      %v3488 = vpop.f32.mrb[0].mxu0
      %v3489 = vadd.f32 0.0, %v3488
      %v3490 = vpop.f32.mrb[0].mxu0
      %3491 = vmatprep.mubr.f32.mxu0 0.0
      %3492 = vmatmul.mubr.f32.gmra.mrb[0].mxu0 %v3301
      %v3493 = vpop.f32.mrb[0].mxu0
      %v3494 = vadd.f32 0.0, %v3493
      %v3495 = vpop.f32.mrb[0].mxu0
      %3496 = vmatprep.mubr.f32.mxu0 0.0
      %3497 = vmatmul.mubr.f32.gmra.mrb[0].mxu0 %v3304
      %v3498 = vpop.f32.mrb[0].mxu0
      %v3499 = vadd.f32 0.0, %v3498
      %v3500 = vpop.f32.mrb[0].mxu0
      %3501 = vmatprep.mubr.f32.mxu0 0.0
      %3502 = vmatmul.mubr.f32.gmra.mrb[0].mxu0 %v3307
      %v3503 = vpop.f32.mrb[0].mxu0
      %v3504 = vadd.f32 0.0, %v3503
      %v3505 = vpop.f32.mrb[0].mxu0
      %3506 = vmatprep.mubr.f32.mxu0 0.0
      %3507 = vmatmul.mubr.f32.gmra.mrb[0].mxu0 %v3310
      %v3508 = vpop.f32.mrb[0].mxu0
      %v3509 = vadd.f32 0.0, %v3508
      %v3510 = vpop.f32.mrb[0].mxu0
      %3511 = vmatprep.mubr.f32.mxu0 0.0
      %3512 = vmatmul.mubr.f32.gmra.mrb[0].mxu0 %v3313
      %v3513 = vpop.f32.mrb[0].mxu0
      %v3514 = vadd.f32 0.0, %v3513
      %v3515 = vpop.f32.mrb[0].mxu0
      %3516 = vmatprep.mubr.f32.mxu0 0.0
      %3517 = vmatmul.mubr.f32.gmra.mrb[0].mxu0 %v3316
      %v3518 = vpop.f32.mrb[0].mxu0
      %v3519 = vadd.f32 0.0, %v3518
      %v3520 = vpop.f32.mrb[0].mxu0
      %3521 = vmatprep.mubr.f32.mxu0 0.0
      %3522 = vmatmul.mubr.f32.gmra.mrb[0].mxu0 %v3319
      %v3523 = vpop.f32.mrb[0].mxu0
      %v3524 = vadd.f32 0.0, %v3523
      %v3525 = vpop.f32.mrb[0].mxu0
      %3526 = vmatprep.mubr.f32.mxu0 0.0
      %3527 = vmatmul.mubr.f32.gmra.mrb[0].mxu0 %v3322
      %v3528 = vpop.f32.mrb[0].mxu0
      %v3529 = vadd.f32 0.0, %v3528
      %v3530 = vpop.f32.mrb[0].mxu0
      %3531 = vmatprep.mubr.f32.mxu0 0.0
      %3532 = vmatmul.mubr.f32.gmra.mrb[0].mxu0 %v3325
      %v3533 = vpop.f32.mrb[0].mxu0
      %v3534 = vadd.f32 0.0, %v3533
      %v3535 = vpop.f32.mrb[0].mxu0
      %3536 = vmatprep.mubr.f32.mxu0 0.0
      %3537 = vmatmul.mubr.f32.gmra.mrb[0].mxu0 %v3328
      %v3538 = vpop.f32.mrb[0].mxu0
      %v3539 = vadd.f32 0.0, %v3538
      %v3540 = vpop.f32.mrb[0].mxu0
      %3541 = vmatprep.mubr.f32.mxu0 0.0
      %3542 = vmatmul.mubr.f32.gmra.mrb[0].mxu0 %v3331
      %v3543 = vpop.f32.mrb[0].mxu0
      %v3544 = vadd.f32 0.0, %v3543
      %v3545 = vpop.f32.mrb[0].mxu0
      %3546 = vmatprep.mubr.f32.mxu0 0.0
      %3547 = vmatmul.mubr.f32.gmra.mrb[0].mxu0 %v3334
      %v3548 = vpop.f32.mrb[0].mxu0
      %v3549 = vadd.f32 0.0, %v3548
      %v3550 = vpop.f32.mrb[0].mxu0
      %3551 = vmatprep.mubr.f32.mxu0 0.0
      %3552 = vmatmul.mubr.f32.gmra.mrb[0].mxu0 %v3337
      %v3553 = vpop.f32.mrb[0].mxu0
      %v3554 = vadd.f32 0.0, %v3553
      %v3555 = vpop.f32.mrb[0].mxu0
      %3556 = vmatprep.mubr.f32.mxu0 0.0
      %3557 = vmatmul.mubr.f32.gmra.mrb[0].mxu0 %v3340
      %v3558 = vpop.f32.mrb[0].mxu0
      %v3559 = vadd.f32 0.0, %v3558
      %v3560 = vpop.f32.mrb[0].mxu0
      %3561 = vmatprep.mubr.f32.mxu0 0.0
      %3562 = vmatmul.mubr.f32.gmra.mrb[0].mxu0 %v3343
      %v3563 = vpop.f32.mrb[0].mxu0
      %v3564 = vadd.f32 0.0, %v3563
      %v3565 = vpop.f32.mrb[0].mxu0
      %3566 = vmatprep.mubr.f32.mxu0 0.0
      %3567 = vmatmul.mubr.f32.gmra.mrb[0].mxu0 %v3346
      %v3568 = vpop.f32.mrb[0].mxu0
      %v3569 = vadd.f32 0.0, %v3568
      %v3570 = vpop.f32.mrb[0].mxu0
      %3571 = vmatprep.mubr.f32.mxu0 0.0
      %3572 = vmatmul.mubr.f32.gmra.mrb[0].mxu0 %v3349
      %v3573 = vpop.f32.mrb[0].mxu0
      %v3574 = vadd.f32 0.0, %v3573
      %v3575 = vpop.f32.mrb[0].mxu0
      %3576 = vmatprep.mubr.f32.mxu0 0.0
      %3577 = vmatmul.mubr.f32.gmra.mrb[0].mxu0 %v3352
      %v3578 = vpop.f32.mrb[0].mxu0
      %v3579 = vadd.f32 0.0, %v3578
      %v3580 = vpop.f32.mrb[0].mxu0
      %3581 = vdwg.mxu0
      %v3582 = vadd.f32 %v3160, %v3424
      %v3583 = vadd.f32 %v3161, %v3429
      %v3584 = vadd.f32 %v3162, %v3434
      %v3585 = vadd.f32 %v3163, %v3439
      %v3586 = vadd.f32 %v3164, %v3444
      %v3587 = vadd.f32 %v3165, %v3449
      %v3588 = vadd.f32 %v3166, %v3454
      %v3589 = vadd.f32 %v3167, %v3459
      %v3590 = vadd.f32 %v3168, %v3464
      %v3591 = vadd.f32 %v3169, %v3469
      %v3592 = vadd.f32 %v3170, %v3474
      %v3593 = vadd.f32 %v3171, %v3479
      %v3594 = vadd.f32 %v3172, %v3484
      %v3595 = vadd.f32 %v3173, %v3489
      %v3596 = vadd.f32 %v3174, %v3494
      %v3597 = vadd.f32 %v3175, %v3499
      %v3598 = vadd.f32 %v3176, %v3504
      %v3599 = vadd.f32 %v3177, %v3509
      %v3600 = vadd.f32 %v3178, %v3514
      %v3601 = vadd.f32 %v3179, %v3519
      %v3602 = vadd.f32 %v3180, %v3524
      %v3603 = vadd.f32 %v3181, %v3529
      %v3604 = vadd.f32 %v3182, %v3534
      %v3605 = vadd.f32 %v3183, %v3539
      %v3606 = vadd.f32 %v3184, %v3544
      %v3607 = vadd.f32 %v3185, %v3549
      %v3608 = vadd.f32 %v3186, %v3554
      %v3609 = vadd.f32 %v3187, %v3559
      %v3610 = vadd.f32 %v3188, %v3564
      %v3611 = vadd.f32 %v3189, %v3569
      %v3612 = vadd.f32 %v3190, %v3574
      %v3613 = vadd.f32 %v3191, %v3579
      %v3614 = vld [vmem:[#allocation2 + $0x28] sm:$0xff]
      %v3615 = vld [vmem:[#allocation2 + $0x30] sm:$0xff]
      %v3616 = vld [vmem:[#allocation2 + $0x38] sm:$0xff]
      %v3617 = vld [vmem:[#allocation2 + $0x40] sm:$0xff]
      %v3618 = vld [vmem:[#allocation2 + $0x48] sm:$0xff]
      %v3619 = vld [vmem:[#allocation2 + $0x50] sm:$0xff]
      %v3620 = vld [vmem:[#allocation2 + $0x58] sm:$0xff]
      %v3621 = vld [vmem:[#allocation2 + $0x60] sm:$0xff]
      %v3622 = vld [vmem:[#allocation2 + $0x68] sm:$0xff]
      %v3623 = vld [vmem:[#allocation2 + $0x70] sm:$0xff]
      %v3624 = vld [vmem:[#allocation2 + $0x78] sm:$0xff]
      %v3625 = vld [vmem:[#allocation2 + $0x80] sm:$0xff]
      %v3626 = vld [vmem:[#allocation2 + $0x88] sm:$0xff]
      %v3627 = vld [vmem:[#allocation2 + $0x90] sm:$0xff]
      %v3628 = vld [vmem:[#allocation2 + $0x98] sm:$0xff]
      %v3629 = vld [vmem:[#allocation2 + $0xa0] sm:$0xff]
      %v3630 = vld [vmem:[#allocation2 + $0xa8] sm:$0xff]
      %v3631 = vld [vmem:[#allocation2 + $0xb0] sm:$0xff]
      %v3632 = vld [vmem:[#allocation2 + $0xb8] sm:$0xff]
      %v3633 = vld [vmem:[#allocation2 + $0xc0] sm:$0xff]
      %v3634 = vld [vmem:[#allocation2 + $0xc8] sm:$0xff]
      %v3635 = vld [vmem:[#allocation2 + $0xd0] sm:$0xff]
      %v3636 = vld [vmem:[#allocation2 + $0xd8] sm:$0xff]
      %v3637 = vld [vmem:[#allocation2 + $0xe0] sm:$0xff]
      %v3638 = vld [vmem:[#allocation2 + $0xe8] sm:$0xff]
      %v3639 = vld [vmem:[#allocation2 + $0xf0] sm:$0xff]
      %v3640 = vld [vmem:[#allocation2 + $0xf8] sm:$0xff]
      %v3641 = vld [vmem:[#allocation2 + $0x100] sm:$0xff]
      %v3642 = vld [vmem:[#allocation2 + $0x108] sm:$0xff]
      %v3643 = vld [vmem:[#allocation2 + $0x110] sm:$0xff]
      %v3644 = vld [vmem:[#allocation2 + $0x118] sm:$0xff]
      %v3645 = vld [vmem:[#allocation2 + $0x120] sm:$0xff]
      %s3646 = scalar_lea.vmem %s3, 28
      %v3647 = vld [vmem:[%s3646] sm:$0xf]
      %v3649 = vsel %vm429, %v3614, 0
      %v3652 = vsel %vm429, %v3615, 0
      %v3655 = vsel %vm429, %v3616, 0
      %v3658 = vsel %vm429, %v3617, 0
      %v3661 = vsel %vm429, %v3618, 0
      %v3664 = vsel %vm429, %v3619, 0
      %v3667 = vsel %vm429, %v3620, 0
      %v3670 = vsel %vm429, %v3621, 0
      %v3673 = vsel %vm429, %v3622, 0
      %v3676 = vsel %vm429, %v3623, 0
      %v3679 = vsel %vm429, %v3624, 0
      %v3682 = vsel %vm429, %v3625, 0
      %v3685 = vsel %vm429, %v3626, 0
      %v3688 = vsel %vm429, %v3627, 0
      %v3691 = vsel %vm429, %v3628, 0
      %v3694 = vsel %vm429, %v3629, 0
      %v3697 = vsel %vm429, %v3630, 0
      %v3700 = vsel %vm429, %v3631, 0
      %v3703 = vsel %vm429, %v3632, 0
      %v3706 = vsel %vm429, %v3633, 0
      %v3709 = vsel %vm429, %v3634, 0
      %v3712 = vsel %vm429, %v3635, 0
      %v3715 = vsel %vm429, %v3636, 0
      %v3718 = vsel %vm429, %v3637, 0
      %v3721 = vsel %vm429, %v3638, 0
      %v3724 = vsel %vm429, %v3639, 0
      %v3727 = vsel %vm429, %v3640, 0
      %v3730 = vsel %vm429, %v3641, 0
      %v3733 = vsel %vm429, %v3642, 0
      %v3736 = vsel %vm429, %v3643, 0
      %v3739 = vsel %vm429, %v3644, 0
      %v3742 = vsel %vm429, %v3645, 0
      %v3745 = vsel %vm823, %v3647, 0
      %3747 = vmatprep.subr.mxu0 0.0
      %3748 = vmatpush1.msra.mxu0 %v3745
      %3749 = vmatprep.subr.mxu0 0.0
      %3750 = vmatpush1.msra.mxu0 0.0
      %3751 = vmatprep.subr.mxu0 0.0
      %3752 = vmatpush1.msra.mxu0 0.0
      %3753 = vmatprep.subr.mxu0 0.0
      %3754 = vmatpush1.msra.mxu0 0.0
      %3755 = vmatprep.subr.mxu0 0.0
      %3756 = vmatpush1.msra.mxu0 0.0
      %3757 = vmatprep.subr.mxu0 0.0
      %3758 = vmatpush1.msra.mxu0 0.0
      %3759 = vmatprep.subr.mxu0 0.0
      %3760 = vmatpush1.msra.mxu0 0.0
      %3761 = vmatprep.subr.mxu0 0.0
      %3762 = vmatpush1.msra.mxu0 0.0
      %3763 = vmatprep.subr.mxu0 0.0
      %3764 = vmatpush1.msra.mxu0 0.0
      %3765 = vmatprep.subr.mxu0 0.0
      %3766 = vmatpush1.msra.mxu0 0.0
      %3767 = vmatprep.subr.mxu0 0.0
      %3768 = vmatpush1.msra.mxu0 0.0
      %3769 = vmatprep.subr.mxu0 0.0
      %3770 = vmatpush1.msra.mxu0 0.0
      %3771 = vmatprep.subr.mxu0 0.0
      %3772 = vmatpush1.msra.mxu0 0.0
      %3773 = vmatprep.subr.mxu0 0.0
      %3774 = vmatpush1.msra.mxu0 0.0
      %3775 = vmatprep.subr.mxu0 0.0
      %3776 = vmatpush1.msra.mxu0 0.0
      %3777 = vmatprep.subr.mxu0 0.0
      %3778 = vmatpush1.msra.mxu0 0.0
      %3779 = vmatprep.subr.mxu0 0.0
      %3780 = vmatpush1.msra.mxu0 0.0
      %3781 = vmatprep.subr.mxu0 0.0
      %3782 = vmatpush1.msra.mxu0 0.0
      %3783 = vmatprep.subr.mxu0 0.0
      %3784 = vmatpush1.msra.mxu0 0.0
      %3785 = vmatprep.subr.mxu0 0.0
      %3786 = vmatpush1.msra.mxu0 0.0
      %3787 = vmatprep.subr.mxu0 0.0
      %3788 = vmatpush1.msra.mxu0 0.0
      %3789 = vmatprep.subr.mxu0 0.0
      %3790 = vmatpush1.msra.mxu0 0.0
      %3791 = vmatprep.subr.mxu0 0.0
      %3792 = vmatpush1.msra.mxu0 0.0
      %3793 = vmatprep.subr.mxu0 0.0
      %3794 = vmatpush1.msra.mxu0 0.0
      %3795 = vmatprep.subr.mxu0 0.0
      %3796 = vmatpush1.msra.mxu0 0.0
      %3797 = vmatprep.subr.mxu0 0.0
      %3798 = vmatpush1.msra.mxu0 0.0
      %3799 = vmatprep.subr.mxu0 0.0
      %3800 = vmatpush1.msra.mxu0 0.0
      %3801 = vmatprep.subr.mxu0 0.0
      %3802 = vmatpush1.msra.mxu0 0.0
      %3803 = vmatprep.subr.mxu0 0.0
      %3804 = vmatpush1.msra.mxu0 0.0
      %3805 = vmatprep.subr.mxu0 0.0
      %3806 = vmatpush1.msra.mxu0 0.0
      %3807 = vmatprep.subr.mxu0 0.0
      %3808 = vmatpush1.msra.mxu0 0.0
      %3809 = vmatprep.subr.mxu0 0.0
      %3810 = vmatpush1.msra.mxu0 0.0
      %3811 = vmatprep.mubr.f32.mxu0 0.0
      %3812 = vmatmul.mubr.f32.gmra.mrb[0].mxu0 %v3649
      %v3813 = vpop.f32.mrb[0].mxu0
      %v3814 = vadd.f32 0.0, %v3813
      %v3815 = vpop.f32.mrb[0].mxu0
      %3816 = vmatprep.mubr.f32.mxu0 0.0
      %3817 = vmatmul.mubr.f32.gmra.mrb[0].mxu0 %v3652
      %v3818 = vpop.f32.mrb[0].mxu0
      %v3819 = vadd.f32 0.0, %v3818
      %v3820 = vpop.f32.mrb[0].mxu0
      %3821 = vmatprep.mubr.f32.mxu0 0.0
      %3822 = vmatmul.mubr.f32.gmra.mrb[0].mxu0 %v3655
      %v3823 = vpop.f32.mrb[0].mxu0
      %v3824 = vadd.f32 0.0, %v3823
      %v3825 = vpop.f32.mrb[0].mxu0
      %3826 = vmatprep.mubr.f32.mxu0 0.0
      %3827 = vmatmul.mubr.f32.gmra.mrb[0].mxu0 %v3658
      %v3828 = vpop.f32.mrb[0].mxu0
      %v3829 = vadd.f32 0.0, %v3828
      %v3830 = vpop.f32.mrb[0].mxu0
      %3831 = vmatprep.mubr.f32.mxu0 0.0
      %3832 = vmatmul.mubr.f32.gmra.mrb[0].mxu0 %v3661
      %v3833 = vpop.f32.mrb[0].mxu0
      %v3834 = vadd.f32 0.0, %v3833
      %v3835 = vpop.f32.mrb[0].mxu0
      %3836 = vmatprep.mubr.f32.mxu0 0.0
      %3837 = vmatmul.mubr.f32.gmra.mrb[0].mxu0 %v3664
      %v3838 = vpop.f32.mrb[0].mxu0
      %v3839 = vadd.f32 0.0, %v3838
      %v3840 = vpop.f32.mrb[0].mxu0
      %3841 = vmatprep.mubr.f32.mxu0 0.0
      %3842 = vmatmul.mubr.f32.gmra.mrb[0].mxu0 %v3667
      %v3843 = vpop.f32.mrb[0].mxu0
      %v3844 = vadd.f32 0.0, %v3843
      %v3845 = vpop.f32.mrb[0].mxu0
      %3846 = vmatprep.mubr.f32.mxu0 0.0
      %3847 = vmatmul.mubr.f32.gmra.mrb[0].mxu0 %v3670
      %v3848 = vpop.f32.mrb[0].mxu0
      %v3849 = vadd.f32 0.0, %v3848
      %v3850 = vpop.f32.mrb[0].mxu0
      %3851 = vmatprep.mubr.f32.mxu0 0.0
      %3852 = vmatmul.mubr.f32.gmra.mrb[0].mxu0 %v3673
      %v3853 = vpop.f32.mrb[0].mxu0
      %v3854 = vadd.f32 0.0, %v3853
      %v3855 = vpop.f32.mrb[0].mxu0
      %3856 = vmatprep.mubr.f32.mxu0 0.0
      %3857 = vmatmul.mubr.f32.gmra.mrb[0].mxu0 %v3676
      %v3858 = vpop.f32.mrb[0].mxu0
      %v3859 = vadd.f32 0.0, %v3858
      %v3860 = vpop.f32.mrb[0].mxu0
      %3861 = vmatprep.mubr.f32.mxu0 0.0
      %3862 = vmatmul.mubr.f32.gmra.mrb[0].mxu0 %v3679
      %v3863 = vpop.f32.mrb[0].mxu0
      %v3864 = vadd.f32 0.0, %v3863
      %v3865 = vpop.f32.mrb[0].mxu0
      %3866 = vmatprep.mubr.f32.mxu0 0.0
      %3867 = vmatmul.mubr.f32.gmra.mrb[0].mxu0 %v3682
      %v3868 = vpop.f32.mrb[0].mxu0
      %v3869 = vadd.f32 0.0, %v3868
      %v3870 = vpop.f32.mrb[0].mxu0
      %3871 = vmatprep.mubr.f32.mxu0 0.0
      %3872 = vmatmul.mubr.f32.gmra.mrb[0].mxu0 %v3685
      %v3873 = vpop.f32.mrb[0].mxu0
      %v3874 = vadd.f32 0.0, %v3873
      %v3875 = vpop.f32.mrb[0].mxu0
      %3876 = vmatprep.mubr.f32.mxu0 0.0
      %3877 = vmatmul.mubr.f32.gmra.mrb[0].mxu0 %v3688
      %v3878 = vpop.f32.mrb[0].mxu0
      %v3879 = vadd.f32 0.0, %v3878
      %v3880 = vpop.f32.mrb[0].mxu0
      %3881 = vmatprep.mubr.f32.mxu0 0.0
      %3882 = vmatmul.mubr.f32.gmra.mrb[0].mxu0 %v3691
      %v3883 = vpop.f32.mrb[0].mxu0
      %v3884 = vadd.f32 0.0, %v3883
      %v3885 = vpop.f32.mrb[0].mxu0
      %3886 = vmatprep.mubr.f32.mxu0 0.0
      %3887 = vmatmul.mubr.f32.gmra.mrb[0].mxu0 %v3694
      %v3888 = vpop.f32.mrb[0].mxu0
      %v3889 = vadd.f32 0.0, %v3888
      %v3890 = vpop.f32.mrb[0].mxu0
      %3891 = vmatprep.mubr.f32.mxu0 0.0
      %3892 = vmatmul.mubr.f32.gmra.mrb[0].mxu0 %v3697
      %v3893 = vpop.f32.mrb[0].mxu0
      %v3894 = vadd.f32 0.0, %v3893
      %v3895 = vpop.f32.mrb[0].mxu0
      %3896 = vmatprep.mubr.f32.mxu0 0.0
      %3897 = vmatmul.mubr.f32.gmra.mrb[0].mxu0 %v3700
      %v3898 = vpop.f32.mrb[0].mxu0
      %v3899 = vadd.f32 0.0, %v3898
      %v3900 = vpop.f32.mrb[0].mxu0
      %3901 = vmatprep.mubr.f32.mxu0 0.0
      %3902 = vmatmul.mubr.f32.gmra.mrb[0].mxu0 %v3703
      %v3903 = vpop.f32.mrb[0].mxu0
      %v3904 = vadd.f32 0.0, %v3903
      %v3905 = vpop.f32.mrb[0].mxu0
      %3906 = vmatprep.mubr.f32.mxu0 0.0
      %3907 = vmatmul.mubr.f32.gmra.mrb[0].mxu0 %v3706
      %v3908 = vpop.f32.mrb[0].mxu0
      %v3909 = vadd.f32 0.0, %v3908
      %v3910 = vpop.f32.mrb[0].mxu0
      %3911 = vmatprep.mubr.f32.mxu0 0.0
      %3912 = vmatmul.mubr.f32.gmra.mrb[0].mxu0 %v3709
      %v3913 = vpop.f32.mrb[0].mxu0
      %v3914 = vadd.f32 0.0, %v3913
      %v3915 = vpop.f32.mrb[0].mxu0
      %3916 = vmatprep.mubr.f32.mxu0 0.0
      %3917 = vmatmul.mubr.f32.gmra.mrb[0].mxu0 %v3712
      %v3918 = vpop.f32.mrb[0].mxu0
      %v3919 = vadd.f32 0.0, %v3918
      %v3920 = vpop.f32.mrb[0].mxu0
      %3921 = vmatprep.mubr.f32.mxu0 0.0
      %3922 = vmatmul.mubr.f32.gmra.mrb[0].mxu0 %v3715
      %v3923 = vpop.f32.mrb[0].mxu0
      %v3924 = vadd.f32 0.0, %v3923
      %v3925 = vpop.f32.mrb[0].mxu0
      %3926 = vmatprep.mubr.f32.mxu0 0.0
      %3927 = vmatmul.mubr.f32.gmra.mrb[0].mxu0 %v3718
      %v3928 = vpop.f32.mrb[0].mxu0
      %v3929 = vadd.f32 0.0, %v3928
      %v3930 = vpop.f32.mrb[0].mxu0
      %3931 = vmatprep.mubr.f32.mxu0 0.0
      %3932 = vmatmul.mubr.f32.gmra.mrb[0].mxu0 %v3721
      %v3933 = vpop.f32.mrb[0].mxu0
      %v3934 = vadd.f32 0.0, %v3933
      %v3935 = vpop.f32.mrb[0].mxu0
      %3936 = vmatprep.mubr.f32.mxu0 0.0
      %3937 = vmatmul.mubr.f32.gmra.mrb[0].mxu0 %v3724
      %v3938 = vpop.f32.mrb[0].mxu0
      %v3939 = vadd.f32 0.0, %v3938
      %v3940 = vpop.f32.mrb[0].mxu0
      %3941 = vmatprep.mubr.f32.mxu0 0.0
      %3942 = vmatmul.mubr.f32.gmra.mrb[0].mxu0 %v3727
      %v3943 = vpop.f32.mrb[0].mxu0
      %v3944 = vadd.f32 0.0, %v3943
      %v3945 = vpop.f32.mrb[0].mxu0
      %3946 = vmatprep.mubr.f32.mxu0 0.0
      %3947 = vmatmul.mubr.f32.gmra.mrb[0].mxu0 %v3730
      %v3948 = vpop.f32.mrb[0].mxu0
      %v3949 = vadd.f32 0.0, %v3948
      %v3950 = vpop.f32.mrb[0].mxu0
      %3951 = vmatprep.mubr.f32.mxu0 0.0
      %3952 = vmatmul.mubr.f32.gmra.mrb[0].mxu0 %v3733
      %v3953 = vpop.f32.mrb[0].mxu0
      %v3954 = vadd.f32 0.0, %v3953
      %v3955 = vpop.f32.mrb[0].mxu0
      %3956 = vmatprep.mubr.f32.mxu0 0.0
      %3957 = vmatmul.mubr.f32.gmra.mrb[0].mxu0 %v3736
      %v3958 = vpop.f32.mrb[0].mxu0
      %v3959 = vadd.f32 0.0, %v3958
      %v3960 = vpop.f32.mrb[0].mxu0
      %3961 = vmatprep.mubr.f32.mxu0 0.0
      %3962 = vmatmul.mubr.f32.gmra.mrb[0].mxu0 %v3739
      %v3963 = vpop.f32.mrb[0].mxu0
      %v3964 = vadd.f32 0.0, %v3963
      %v3965 = vpop.f32.mrb[0].mxu0
      %3966 = vmatprep.mubr.f32.mxu0 0.0
      %3967 = vmatmul.mubr.f32.gmra.mrb[0].mxu0 %v3742
      %v3968 = vpop.f32.mrb[0].mxu0
      %v3969 = vadd.f32 0.0, %v3968
      %v3970 = vpop.f32.mrb[0].mxu0
      %3971 = vdwg.mxu0
      %v3972 = vadd.f32 %v3582, %v3814
      %v3973 = vadd.f32 %v3583, %v3819
      %v3974 = vadd.f32 %v3584, %v3824
      %v3975 = vadd.f32 %v3585, %v3829
      %v3976 = vadd.f32 %v3586, %v3834
      %v3977 = vadd.f32 %v3587, %v3839
      %v3978 = vadd.f32 %v3588, %v3844
      %v3979 = vadd.f32 %v3589, %v3849
      %v3980 = vadd.f32 %v3590, %v3854
      %v3981 = vadd.f32 %v3591, %v3859
      %v3982 = vadd.f32 %v3592, %v3864
      %v3983 = vadd.f32 %v3593, %v3869
      %v3984 = vadd.f32 %v3594, %v3874
      %v3985 = vadd.f32 %v3595, %v3879
      %v3986 = vadd.f32 %v3596, %v3884
      %v3987 = vadd.f32 %v3597, %v3889
      %v3988 = vadd.f32 %v3598, %v3894
      %v3989 = vadd.f32 %v3599, %v3899
      %v3990 = vadd.f32 %v3600, %v3904
      %v3991 = vadd.f32 %v3601, %v3909
      %v3992 = vadd.f32 %v3602, %v3914
      %v3993 = vadd.f32 %v3603, %v3919
      %v3994 = vadd.f32 %v3604, %v3924
      %v3995 = vadd.f32 %v3605, %v3929
      %v3996 = vadd.f32 %v3606, %v3934
      %v3997 = vadd.f32 %v3607, %v3939
      %v3998 = vadd.f32 %v3608, %v3944
      %v3999 = vadd.f32 %v3609, %v3949
      %v4000 = vadd.f32 %v3610, %v3954
      %v4001 = vadd.f32 %v3611, %v3959
      %v4002 = vadd.f32 %v3612, %v3964
      %v4003 = vadd.f32 %v3613, %v3969
      %v4004 = vld [vmem:[#allocation2 + $0x29] sm:$0xff]
      %v4005 = vld [vmem:[#allocation2 + $0x31] sm:$0xff]
      %v4006 = vld [vmem:[#allocation2 + $0x39] sm:$0xff]
      %v4007 = vld [vmem:[#allocation2 + $0x41] sm:$0xff]
      %v4008 = vld [vmem:[#allocation2 + $0x49] sm:$0xff]
      %v4009 = vld [vmem:[#allocation2 + $0x51] sm:$0xff]
      %v4010 = vld [vmem:[#allocation2 + $0x59] sm:$0xff]
      %v4011 = vld [vmem:[#allocation2 + $0x61] sm:$0xff]
      %v4012 = vld [vmem:[#allocation2 + $0x69] sm:$0xff]
      %v4013 = vld [vmem:[#allocation2 + $0x71] sm:$0xff]
      %v4014 = vld [vmem:[#allocation2 + $0x79] sm:$0xff]
      %v4015 = vld [vmem:[#allocation2 + $0x81] sm:$0xff]
      %v4016 = vld [vmem:[#allocation2 + $0x89] sm:$0xff]
      %v4017 = vld [vmem:[#allocation2 + $0x91] sm:$0xff]
      %v4018 = vld [vmem:[#allocation2 + $0x99] sm:$0xff]
      %v4019 = vld [vmem:[#allocation2 + $0xa1] sm:$0xff]
      %v4020 = vld [vmem:[#allocation2 + $0xa9] sm:$0xff]
      %v4021 = vld [vmem:[#allocation2 + $0xb1] sm:$0xff]
      %v4022 = vld [vmem:[#allocation2 + $0xb9] sm:$0xff]
      %v4023 = vld [vmem:[#allocation2 + $0xc1] sm:$0xff]
      %v4024 = vld [vmem:[#allocation2 + $0xc9] sm:$0xff]
      %v4025 = vld [vmem:[#allocation2 + $0xd1] sm:$0xff]
      %v4026 = vld [vmem:[#allocation2 + $0xd9] sm:$0xff]
      %v4027 = vld [vmem:[#allocation2 + $0xe1] sm:$0xff]
      %v4028 = vld [vmem:[#allocation2 + $0xe9] sm:$0xff]
      %v4029 = vld [vmem:[#allocation2 + $0xf1] sm:$0xff]
      %v4030 = vld [vmem:[#allocation2 + $0xf9] sm:$0xff]
      %v4031 = vld [vmem:[#allocation2 + $0x101] sm:$0xff]
      %v4032 = vld [vmem:[#allocation2 + $0x109] sm:$0xff]
      %v4033 = vld [vmem:[#allocation2 + $0x111] sm:$0xff]
      %v4034 = vld [vmem:[#allocation2 + $0x119] sm:$0xff]
      %v4035 = vld [vmem:[#allocation2 + $0x121] sm:$0xff]
      %v4036 = vmul.f32 %v4004, %v1411
      %v4037 = vmul.f32 %v4005, %v1416
      %v4038 = vmul.f32 %v4006, %v1421
      %v4039 = vmul.f32 %v4007, %v1426
      %v4040 = vmul.f32 %v4008, %v1431
      %v4041 = vmul.f32 %v4009, %v1436
      %v4042 = vmul.f32 %v4010, %v1441
      %v4043 = vmul.f32 %v4011, %v1446
      %v4044 = vmul.f32 %v4012, %v1451
      %v4045 = vmul.f32 %v4013, %v1456
      %v4046 = vmul.f32 %v4014, %v1461
      %v4047 = vmul.f32 %v4015, %v1466
      %v4048 = vmul.f32 %v4016, %v1471
      %v4049 = vmul.f32 %v4017, %v1476
      %v4050 = vmul.f32 %v4018, %v1481
      %v4051 = vmul.f32 %v4019, %v1486
      %v4052 = vmul.f32 %v4020, %v1491
      %v4053 = vmul.f32 %v4021, %v1496
      %v4054 = vmul.f32 %v4022, %v1501
      %v4055 = vmul.f32 %v4023, %v1506
      %v4056 = vmul.f32 %v4024, %v1511
      %v4057 = vmul.f32 %v4025, %v1516
      %v4058 = vmul.f32 %v4026, %v1521
      %v4059 = vmul.f32 %v4027, %v1526
      %v4060 = vmul.f32 %v4028, %v1531
      %v4061 = vmul.f32 %v4029, %v1536
      %v4062 = vmul.f32 %v4030, %v1541
      %v4063 = vmul.f32 %v4031, %v1546
      %v4064 = vmul.f32 %v4032, %v1551
      %v4065 = vmul.f32 %v4033, %v1556
      %v4066 = vmul.f32 %v4034, %v1561
      %v4067 = vmul.f32 %v4035, %v1566
      %s4068 = scalar_lea.vmem %s3, 32
      %v4069 = vld [vmem:[%s4068] sm:$0xf]
      %v4071 = vsel %vm429, %v4036, 0
      %v4074 = vsel %vm429, %v4037, 0
      %v4077 = vsel %vm429, %v4038, 0
      %v4080 = vsel %vm429, %v4039, 0
      %v4083 = vsel %vm429, %v4040, 0
      %v4086 = vsel %vm429, %v4041, 0
      %v4089 = vsel %vm429, %v4042, 0
      %v4092 = vsel %vm429, %v4043, 0
      %v4095 = vsel %vm429, %v4044, 0
      %v4098 = vsel %vm429, %v4045, 0
      %v4101 = vsel %vm429, %v4046, 0
      %v4104 = vsel %vm429, %v4047, 0
      %v4107 = vsel %vm429, %v4048, 0
      %v4110 = vsel %vm429, %v4049, 0
      %v4113 = vsel %vm429, %v4050, 0
      %v4116 = vsel %vm429, %v4051, 0
      %v4119 = vsel %vm429, %v4052, 0
      %v4122 = vsel %vm429, %v4053, 0
      %v4125 = vsel %vm429, %v4054, 0
      %v4128 = vsel %vm429, %v4055, 0
      %v4131 = vsel %vm429, %v4056, 0
      %v4134 = vsel %vm429, %v4057, 0
      %v4137 = vsel %vm429, %v4058, 0
      %v4140 = vsel %vm429, %v4059, 0
      %v4143 = vsel %vm429, %v4060, 0
      %v4146 = vsel %vm429, %v4061, 0
      %v4149 = vsel %vm429, %v4062, 0
      %v4152 = vsel %vm429, %v4063, 0
      %v4155 = vsel %vm429, %v4064, 0
      %v4158 = vsel %vm429, %v4065, 0
      %v4161 = vsel %vm429, %v4066, 0
      %v4164 = vsel %vm429, %v4067, 0
      %v4167 = vsel %vm823, %v4069, 0
      %4169 = vmatprep.subr.mxu0 0.0
      %4170 = vmatpush1.msra.mxu0 %v4167
      %4171 = vmatprep.subr.mxu0 0.0
      %4172 = vmatpush1.msra.mxu0 0.0
      %4173 = vmatprep.subr.mxu0 0.0
      %4174 = vmatpush1.msra.mxu0 0.0
      %4175 = vmatprep.subr.mxu0 0.0
      %4176 = vmatpush1.msra.mxu0 0.0
      %4177 = vmatprep.subr.mxu0 0.0
      %4178 = vmatpush1.msra.mxu0 0.0
      %4179 = vmatprep.subr.mxu0 0.0
      %4180 = vmatpush1.msra.mxu0 0.0
      %4181 = vmatprep.subr.mxu0 0.0
      %4182 = vmatpush1.msra.mxu0 0.0
      %4183 = vmatprep.subr.mxu0 0.0
      %4184 = vmatpush1.msra.mxu0 0.0
      %4185 = vmatprep.subr.mxu0 0.0
      %4186 = vmatpush1.msra.mxu0 0.0
      %4187 = vmatprep.subr.mxu0 0.0
      %4188 = vmatpush1.msra.mxu0 0.0
      %4189 = vmatprep.subr.mxu0 0.0
      %4190 = vmatpush1.msra.mxu0 0.0
      %4191 = vmatprep.subr.mxu0 0.0
      %4192 = vmatpush1.msra.mxu0 0.0
      %4193 = vmatprep.subr.mxu0 0.0
      %4194 = vmatpush1.msra.mxu0 0.0
      %4195 = vmatprep.subr.mxu0 0.0
      %4196 = vmatpush1.msra.mxu0 0.0
      %4197 = vmatprep.subr.mxu0 0.0
      %4198 = vmatpush1.msra.mxu0 0.0
      %4199 = vmatprep.subr.mxu0 0.0
      %4200 = vmatpush1.msra.mxu0 0.0
      %4201 = vmatprep.subr.mxu0 0.0
      %4202 = vmatpush1.msra.mxu0 0.0
      %4203 = vmatprep.subr.mxu0 0.0
      %4204 = vmatpush1.msra.mxu0 0.0
      %4205 = vmatprep.subr.mxu0 0.0
      %4206 = vmatpush1.msra.mxu0 0.0
      %4207 = vmatprep.subr.mxu0 0.0
      %4208 = vmatpush1.msra.mxu0 0.0
      %4209 = vmatprep.subr.mxu0 0.0
      %4210 = vmatpush1.msra.mxu0 0.0
      %4211 = vmatprep.subr.mxu0 0.0
      %4212 = vmatpush1.msra.mxu0 0.0
      %4213 = vmatprep.subr.mxu0 0.0
      %4214 = vmatpush1.msra.mxu0 0.0
      %4215 = vmatprep.subr.mxu0 0.0
      %4216 = vmatpush1.msra.mxu0 0.0
      %4217 = vmatprep.subr.mxu0 0.0
      %4218 = vmatpush1.msra.mxu0 0.0
      %4219 = vmatprep.subr.mxu0 0.0
      %4220 = vmatpush1.msra.mxu0 0.0
      %4221 = vmatprep.subr.mxu0 0.0
      %4222 = vmatpush1.msra.mxu0 0.0
      %4223 = vmatprep.subr.mxu0 0.0
      %4224 = vmatpush1.msra.mxu0 0.0
      %4225 = vmatprep.subr.mxu0 0.0
      %4226 = vmatpush1.msra.mxu0 0.0
      %4227 = vmatprep.subr.mxu0 0.0
      %4228 = vmatpush1.msra.mxu0 0.0
      %4229 = vmatprep.subr.mxu0 0.0
      %4230 = vmatpush1.msra.mxu0 0.0
      %4231 = vmatprep.subr.mxu0 0.0
      %4232 = vmatpush1.msra.mxu0 0.0
      %4233 = vmatprep.mubr.f32.mxu0 0.0
      %4234 = vmatmul.mubr.f32.gmra.mrb[0].mxu0 %v4071
      %v4235 = vpop.f32.mrb[0].mxu0
      %v4236 = vadd.f32 0.0, %v4235
      %v4237 = vpop.f32.mrb[0].mxu0
      %4238 = vmatprep.mubr.f32.mxu0 0.0
      %4239 = vmatmul.mubr.f32.gmra.mrb[0].mxu0 %v4074
      %v4240 = vpop.f32.mrb[0].mxu0
      %v4241 = vadd.f32 0.0, %v4240
      %v4242 = vpop.f32.mrb[0].mxu0
      %4243 = vmatprep.mubr.f32.mxu0 0.0
      %4244 = vmatmul.mubr.f32.gmra.mrb[0].mxu0 %v4077
      %v4245 = vpop.f32.mrb[0].mxu0
      %v4246 = vadd.f32 0.0, %v4245
      %v4247 = vpop.f32.mrb[0].mxu0
      %4248 = vmatprep.mubr.f32.mxu0 0.0
      %4249 = vmatmul.mubr.f32.gmra.mrb[0].mxu0 %v4080
      %v4250 = vpop.f32.mrb[0].mxu0
      %v4251 = vadd.f32 0.0, %v4250
      %v4252 = vpop.f32.mrb[0].mxu0
      %4253 = vmatprep.mubr.f32.mxu0 0.0
      %4254 = vmatmul.mubr.f32.gmra.mrb[0].mxu0 %v4083
      %v4255 = vpop.f32.mrb[0].mxu0
      %v4256 = vadd.f32 0.0, %v4255
      %v4257 = vpop.f32.mrb[0].mxu0
      %4258 = vmatprep.mubr.f32.mxu0 0.0
      %4259 = vmatmul.mubr.f32.gmra.mrb[0].mxu0 %v4086
      %v4260 = vpop.f32.mrb[0].mxu0
      %v4261 = vadd.f32 0.0, %v4260
      %v4262 = vpop.f32.mrb[0].mxu0
      %4263 = vmatprep.mubr.f32.mxu0 0.0
      %4264 = vmatmul.mubr.f32.gmra.mrb[0].mxu0 %v4089
      %v4265 = vpop.f32.mrb[0].mxu0
      %v4266 = vadd.f32 0.0, %v4265
      %v4267 = vpop.f32.mrb[0].mxu0
      %4268 = vmatprep.mubr.f32.mxu0 0.0
      %4269 = vmatmul.mubr.f32.gmra.mrb[0].mxu0 %v4092
      %v4270 = vpop.f32.mrb[0].mxu0
      %v4271 = vadd.f32 0.0, %v4270
      %v4272 = vpop.f32.mrb[0].mxu0
      %4273 = vmatprep.mubr.f32.mxu0 0.0
      %4274 = vmatmul.mubr.f32.gmra.mrb[0].mxu0 %v4095
      %v4275 = vpop.f32.mrb[0].mxu0
      %v4276 = vadd.f32 0.0, %v4275
      %v4277 = vpop.f32.mrb[0].mxu0
      %4278 = vmatprep.mubr.f32.mxu0 0.0
      %4279 = vmatmul.mubr.f32.gmra.mrb[0].mxu0 %v4098
      %v4280 = vpop.f32.mrb[0].mxu0
      %v4281 = vadd.f32 0.0, %v4280
      %v4282 = vpop.f32.mrb[0].mxu0
      %4283 = vmatprep.mubr.f32.mxu0 0.0
      %4284 = vmatmul.mubr.f32.gmra.mrb[0].mxu0 %v4101
      %v4285 = vpop.f32.mrb[0].mxu0
      %v4286 = vadd.f32 0.0, %v4285
      %v4287 = vpop.f32.mrb[0].mxu0
      %4288 = vmatprep.mubr.f32.mxu0 0.0
      %4289 = vmatmul.mubr.f32.gmra.mrb[0].mxu0 %v4104
      %v4290 = vpop.f32.mrb[0].mxu0
      %v4291 = vadd.f32 0.0, %v4290
      %v4292 = vpop.f32.mrb[0].mxu0
      %4293 = vmatprep.mubr.f32.mxu0 0.0
      %4294 = vmatmul.mubr.f32.gmra.mrb[0].mxu0 %v4107
      %v4295 = vpop.f32.mrb[0].mxu0
      %v4296 = vadd.f32 0.0, %v4295
      %v4297 = vpop.f32.mrb[0].mxu0
      %4298 = vmatprep.mubr.f32.mxu0 0.0
      %4299 = vmatmul.mubr.f32.gmra.mrb[0].mxu0 %v4110
      %v4300 = vpop.f32.mrb[0].mxu0
      %v4301 = vadd.f32 0.0, %v4300
      %v4302 = vpop.f32.mrb[0].mxu0
      %4303 = vmatprep.mubr.f32.mxu0 0.0
      %4304 = vmatmul.mubr.f32.gmra.mrb[0].mxu0 %v4113
      %v4305 = vpop.f32.mrb[0].mxu0
      %v4306 = vadd.f32 0.0, %v4305
      %v4307 = vpop.f32.mrb[0].mxu0
      %4308 = vmatprep.mubr.f32.mxu0 0.0
      %4309 = vmatmul.mubr.f32.gmra.mrb[0].mxu0 %v4116
      %v4310 = vpop.f32.mrb[0].mxu0
      %v4311 = vadd.f32 0.0, %v4310
      %v4312 = vpop.f32.mrb[0].mxu0
      %4313 = vmatprep.mubr.f32.mxu0 0.0
      %4314 = vmatmul.mubr.f32.gmra.mrb[0].mxu0 %v4119
      %v4315 = vpop.f32.mrb[0].mxu0
      %v4316 = vadd.f32 0.0, %v4315
      %v4317 = vpop.f32.mrb[0].mxu0
      %4318 = vmatprep.mubr.f32.mxu0 0.0
      %4319 = vmatmul.mubr.f32.gmra.mrb[0].mxu0 %v4122
      %v4320 = vpop.f32.mrb[0].mxu0
      %v4321 = vadd.f32 0.0, %v4320
      %v4322 = vpop.f32.mrb[0].mxu0
      %4323 = vmatprep.mubr.f32.mxu0 0.0
      %4324 = vmatmul.mubr.f32.gmra.mrb[0].mxu0 %v4125
      %v4325 = vpop.f32.mrb[0].mxu0
      %v4326 = vadd.f32 0.0, %v4325
      %v4327 = vpop.f32.mrb[0].mxu0
      %4328 = vmatprep.mubr.f32.mxu0 0.0
      %4329 = vmatmul.mubr.f32.gmra.mrb[0].mxu0 %v4128
      %v4330 = vpop.f32.mrb[0].mxu0
      %v4331 = vadd.f32 0.0, %v4330
      %v4332 = vpop.f32.mrb[0].mxu0
      %4333 = vmatprep.mubr.f32.mxu0 0.0
      %4334 = vmatmul.mubr.f32.gmra.mrb[0].mxu0 %v4131
      %v4335 = vpop.f32.mrb[0].mxu0
      %v4336 = vadd.f32 0.0, %v4335
      %v4337 = vpop.f32.mrb[0].mxu0
      %4338 = vmatprep.mubr.f32.mxu0 0.0
      %4339 = vmatmul.mubr.f32.gmra.mrb[0].mxu0 %v4134
      %v4340 = vpop.f32.mrb[0].mxu0
      %v4341 = vadd.f32 0.0, %v4340
      %v4342 = vpop.f32.mrb[0].mxu0
      %4343 = vmatprep.mubr.f32.mxu0 0.0
      %4344 = vmatmul.mubr.f32.gmra.mrb[0].mxu0 %v4137
      %v4345 = vpop.f32.mrb[0].mxu0
      %v4346 = vadd.f32 0.0, %v4345
      %v4347 = vpop.f32.mrb[0].mxu0
      %4348 = vmatprep.mubr.f32.mxu0 0.0
      %4349 = vmatmul.mubr.f32.gmra.mrb[0].mxu0 %v4140
      %v4350 = vpop.f32.mrb[0].mxu0
      %v4351 = vadd.f32 0.0, %v4350
      %v4352 = vpop.f32.mrb[0].mxu0
      %4353 = vmatprep.mubr.f32.mxu0 0.0
      %4354 = vmatmul.mubr.f32.gmra.mrb[0].mxu0 %v4143
      %v4355 = vpop.f32.mrb[0].mxu0
      %v4356 = vadd.f32 0.0, %v4355
      %v4357 = vpop.f32.mrb[0].mxu0
      %4358 = vmatprep.mubr.f32.mxu0 0.0
      %4359 = vmatmul.mubr.f32.gmra.mrb[0].mxu0 %v4146
      %v4360 = vpop.f32.mrb[0].mxu0
      %v4361 = vadd.f32 0.0, %v4360
      %v4362 = vpop.f32.mrb[0].mxu0
      %4363 = vmatprep.mubr.f32.mxu0 0.0
      %4364 = vmatmul.mubr.f32.gmra.mrb[0].mxu0 %v4149
      %v4365 = vpop.f32.mrb[0].mxu0
      %v4366 = vadd.f32 0.0, %v4365
      %v4367 = vpop.f32.mrb[0].mxu0
      %4368 = vmatprep.mubr.f32.mxu0 0.0
      %4369 = vmatmul.mubr.f32.gmra.mrb[0].mxu0 %v4152
      %v4370 = vpop.f32.mrb[0].mxu0
      %v4371 = vadd.f32 0.0, %v4370
      %v4372 = vpop.f32.mrb[0].mxu0
      %4373 = vmatprep.mubr.f32.mxu0 0.0
      %4374 = vmatmul.mubr.f32.gmra.mrb[0].mxu0 %v4155
      %v4375 = vpop.f32.mrb[0].mxu0
      %v4376 = vadd.f32 0.0, %v4375
      %v4377 = vpop.f32.mrb[0].mxu0
      %4378 = vmatprep.mubr.f32.mxu0 0.0
      %4379 = vmatmul.mubr.f32.gmra.mrb[0].mxu0 %v4158
      %v4380 = vpop.f32.mrb[0].mxu0
      %v4381 = vadd.f32 0.0, %v4380
      %v4382 = vpop.f32.mrb[0].mxu0
      %4383 = vmatprep.mubr.f32.mxu0 0.0
      %4384 = vmatmul.mubr.f32.gmra.mrb[0].mxu0 %v4161
      %v4385 = vpop.f32.mrb[0].mxu0
      %v4386 = vadd.f32 0.0, %v4385
      %v4387 = vpop.f32.mrb[0].mxu0
      %4388 = vmatprep.mubr.f32.mxu0 0.0
      %4389 = vmatmul.mubr.f32.gmra.mrb[0].mxu0 %v4164
      %v4390 = vpop.f32.mrb[0].mxu0
      %v4391 = vadd.f32 0.0, %v4390
      %v4392 = vpop.f32.mrb[0].mxu0
      %4393 = vdwg.mxu0
      %v4394 = vadd.f32 %v3972, %v4236
      %v4395 = vadd.f32 %v3973, %v4241
      %v4396 = vadd.f32 %v3974, %v4246
      %v4397 = vadd.f32 %v3975, %v4251
      %v4398 = vadd.f32 %v3976, %v4256
      %v4399 = vadd.f32 %v3977, %v4261
      %v4400 = vadd.f32 %v3978, %v4266
      %v4401 = vadd.f32 %v3979, %v4271
      %v4402 = vadd.f32 %v3980, %v4276
      %v4403 = vadd.f32 %v3981, %v4281
      %v4404 = vadd.f32 %v3982, %v4286
      %v4405 = vadd.f32 %v3983, %v4291
      %v4406 = vadd.f32 %v3984, %v4296
      %v4407 = vadd.f32 %v3985, %v4301
      %v4408 = vadd.f32 %v3986, %v4306
      %v4409 = vadd.f32 %v3987, %v4311
      %v4410 = vadd.f32 %v3988, %v4316
      %v4411 = vadd.f32 %v3989, %v4321
      %v4412 = vadd.f32 %v3990, %v4326
      %v4413 = vadd.f32 %v3991, %v4331
      %v4414 = vadd.f32 %v3992, %v4336
      %v4415 = vadd.f32 %v3993, %v4341
      %v4416 = vadd.f32 %v3994, %v4346
      %v4417 = vadd.f32 %v3995, %v4351
      %v4418 = vadd.f32 %v3996, %v4356
      %v4419 = vadd.f32 %v3997, %v4361
      %v4420 = vadd.f32 %v3998, %v4366
      %v4421 = vadd.f32 %v3999, %v4371
      %v4422 = vadd.f32 %v4000, %v4376
      %v4423 = vadd.f32 %v4001, %v4381
      %v4424 = vadd.f32 %v4002, %v4386
      %v4425 = vadd.f32 %v4003, %v4391
      %v4426 = vld [vmem:[%s4] sm:$0x1]
      %v4428 = vlaneseq
      %v4429 = vshrl.u32 %v4428, 7
      %v4430 = vsub.s32 0, %v4429
      %v4431 = vrot.slane %v4426, %v4430
      %v4433 = vadd.f32 %v4394, %v4431
      %v4434 = vadd.f32 %v4395, %v4431
      %v4435 = vadd.f32 %v4396, %v4431
      %v4436 = vadd.f32 %v4397, %v4431
      %v4437 = vadd.f32 %v4398, %v4431
      %v4438 = vadd.f32 %v4399, %v4431
      %v4439 = vadd.f32 %v4400, %v4431
      %v4440 = vadd.f32 %v4401, %v4431
      %v4441 = vadd.f32 %v4402, %v4431
      %v4442 = vadd.f32 %v4403, %v4431
      %v4443 = vadd.f32 %v4404, %v4431
      %v4444 = vadd.f32 %v4405, %v4431
      %v4445 = vadd.f32 %v4406, %v4431
      %v4446 = vadd.f32 %v4407, %v4431
      %v4447 = vadd.f32 %v4408, %v4431
      %v4448 = vadd.f32 %v4409, %v4431
      %v4449 = vadd.f32 %v4410, %v4431
      %v4450 = vadd.f32 %v4411, %v4431
      %v4451 = vadd.f32 %v4412, %v4431
      %v4452 = vadd.f32 %v4413, %v4431
      %v4453 = vadd.f32 %v4414, %v4431
      %v4454 = vadd.f32 %v4415, %v4431
      %v4455 = vadd.f32 %v4416, %v4431
      %v4456 = vadd.f32 %v4417, %v4431
      %v4457 = vadd.f32 %v4418, %v4431
      %v4458 = vadd.f32 %v4419, %v4431
      %v4459 = vadd.f32 %v4420, %v4431
      %v4460 = vadd.f32 %v4421, %v4431
      %v4461 = vadd.f32 %v4422, %v4431
      %v4462 = vadd.f32 %v4423, %v4431
      %v4463 = vadd.f32 %v4424, %v4431
      %v4464 = vadd.f32 %v4425, %v4431
      %v4465 = vmax.f32 %v4433, 0.0
      %v4466 = vmax.f32 %v4434, 0.0
      %v4467 = vmax.f32 %v4435, 0.0
      %v4468 = vmax.f32 %v4436, 0.0
      %v4469 = vmax.f32 %v4437, 0.0
      %v4470 = vmax.f32 %v4438, 0.0
      %v4471 = vmax.f32 %v4439, 0.0
      %v4472 = vmax.f32 %v4440, 0.0
      %v4473 = vmax.f32 %v4441, 0.0
      %v4474 = vmax.f32 %v4442, 0.0
      %v4475 = vmax.f32 %v4443, 0.0
      %v4476 = vmax.f32 %v4444, 0.0
      %v4477 = vmax.f32 %v4445, 0.0
      %v4478 = vmax.f32 %v4446, 0.0
      %v4479 = vmax.f32 %v4447, 0.0
      %v4480 = vmax.f32 %v4448, 0.0
      %v4481 = vmax.f32 %v4449, 0.0
      %v4482 = vmax.f32 %v4450, 0.0
      %v4483 = vmax.f32 %v4451, 0.0
      %v4484 = vmax.f32 %v4452, 0.0
      %v4485 = vmax.f32 %v4453, 0.0
      %v4486 = vmax.f32 %v4454, 0.0
      %v4487 = vmax.f32 %v4455, 0.0
      %v4488 = vmax.f32 %v4456, 0.0
      %v4489 = vmax.f32 %v4457, 0.0
      %v4490 = vmax.f32 %v4458, 0.0
      %v4491 = vmax.f32 %v4459, 0.0
      %v4492 = vmax.f32 %v4460, 0.0
      %v4493 = vmax.f32 %v4461, 0.0
      %v4494 = vmax.f32 %v4462, 0.0
      %v4495 = vmax.f32 %v4463, 0.0
      %v4496 = vmax.f32 %v4464, 0.0
      %vm4497 = vcmask 64512
      %4498 = vst.msk [vmem:[#allocation3] sm:$0xff] %vm4497, 0.0
      %4499 = vst.msk [vmem:[#allocation3 + $0x8] sm:$0xff] %vm4497, 0.0
      %4500 = vst.msk [vmem:[#allocation3 + $0x10] sm:$0xff] %vm4497, 0.0
      %4501 = vst.msk [vmem:[#allocation3 + $0x118] sm:$0xff] %vm4497, 0.0
      %4502 = vst.msk [vmem:[#allocation3 + $0x120] sm:$0xff] %vm4497, 0.0
      %4503 = vst.msk [vmem:[#allocation3 + $0x128] sm:$0xff] %vm4497, 0.0
      %4504 = vst.msk [vmem:[#allocation3 + $0x18] sm:$0xff] %vm4497, %v4465
      %4505 = vst.msk [vmem:[#allocation3 + $0x20] sm:$0xff] %vm4497, %v4466
      %4506 = vst.msk [vmem:[#allocation3 + $0x28] sm:$0xff] %vm4497, %v4467
      %4507 = vst.msk [vmem:[#allocation3 + $0x30] sm:$0xff] %vm4497, %v4468
      %4508 = vst.msk [vmem:[#allocation3 + $0x38] sm:$0xff] %vm4497, %v4469
      %4509 = vst.msk [vmem:[#allocation3 + $0x40] sm:$0xff] %vm4497, %v4470
      %4510 = vst.msk [vmem:[#allocation3 + $0x48] sm:$0xff] %vm4497, %v4471
      %4511 = vst.msk [vmem:[#allocation3 + $0x50] sm:$0xff] %vm4497, %v4472
      %4512 = vst.msk [vmem:[#allocation3 + $0x58] sm:$0xff] %vm4497, %v4473
      %4513 = vst.msk [vmem:[#allocation3 + $0x60] sm:$0xff] %vm4497, %v4474
      %4514 = vst.msk [vmem:[#allocation3 + $0x68] sm:$0xff] %vm4497, %v4475
      %4515 = vst.msk [vmem:[#allocation3 + $0x70] sm:$0xff] %vm4497, %v4476
      %4516 = vst.msk [vmem:[#allocation3 + $0x78] sm:$0xff] %vm4497, %v4477
      %4517 = vst.msk [vmem:[#allocation3 + $0x80] sm:$0xff] %vm4497, %v4478
      %4518 = vst.msk [vmem:[#allocation3 + $0x88] sm:$0xff] %vm4497, %v4479
      %4519 = vst.msk [vmem:[#allocation3 + $0x90] sm:$0xff] %vm4497, %v4480
      %4520 = vst.msk [vmem:[#allocation3 + $0x98] sm:$0xff] %vm4497, %v4481
      %4521 = vst.msk [vmem:[#allocation3 + $0xa0] sm:$0xff] %vm4497, %v4482
      %4522 = vst.msk [vmem:[#allocation3 + $0xa8] sm:$0xff] %vm4497, %v4483
      %4523 = vst.msk [vmem:[#allocation3 + $0xb0] sm:$0xff] %vm4497, %v4484
      %4524 = vst.msk [vmem:[#allocation3 + $0xb8] sm:$0xff] %vm4497, %v4485
      %4525 = vst.msk [vmem:[#allocation3 + $0xc0] sm:$0xff] %vm4497, %v4486
      %4526 = vst.msk [vmem:[#allocation3 + $0xc8] sm:$0xff] %vm4497, %v4487
      %4527 = vst.msk [vmem:[#allocation3 + $0xd0] sm:$0xff] %vm4497, %v4488
      %4528 = vst.msk [vmem:[#allocation3 + $0xd8] sm:$0xff] %vm4497, %v4489
      %4529 = vst.msk [vmem:[#allocation3 + $0xe0] sm:$0xff] %vm4497, %v4490
      %4530 = vst.msk [vmem:[#allocation3 + $0xe8] sm:$0xff] %vm4497, %v4491
      %4531 = vst.msk [vmem:[#allocation3 + $0xf0] sm:$0xff] %vm4497, %v4492
      %4532 = vst.msk [vmem:[#allocation3 + $0xf8] sm:$0xff] %vm4497, %v4493
      %4533 = vst.msk [vmem:[#allocation3 + $0x100] sm:$0xff] %vm4497, %v4494
      %4534 = vst.msk [vmem:[#allocation3 + $0x108] sm:$0xff] %vm4497, %v4495
      %4535 = vst.msk [vmem:[#allocation3 + $0x110] sm:$0xff] %vm4497, %v4496
      %v4536 = vld [vmem:[#allocation3 + $0x7] sm:$0xff]
      %v4537 = vld [vmem:[#allocation3 + $0xf] sm:$0xff]
      %v4538 = vld [vmem:[#allocation3 + $0x17] sm:$0xff]
      %v4539 = vld [vmem:[#allocation3 + $0x1f] sm:$0xff]
      %v4540 = vld [vmem:[#allocation3 + $0x27] sm:$0xff]
      %v4541 = vld [vmem:[#allocation3 + $0x2f] sm:$0xff]
      %v4542 = vld [vmem:[#allocation3 + $0x37] sm:$0xff]
      %v4543 = vld [vmem:[#allocation3 + $0x3f] sm:$0xff]
      %v4544 = vld [vmem:[#allocation3 + $0x47] sm:$0xff]
      %v4545 = vld [vmem:[#allocation3 + $0x4f] sm:$0xff]
      %v4546 = vld [vmem:[#allocation3 + $0x57] sm:$0xff]
      %v4547 = vld [vmem:[#allocation3 + $0x5f] sm:$0xff]
      %v4548 = vld [vmem:[#allocation3 + $0x67] sm:$0xff]
      %v4549 = vld [vmem:[#allocation3 + $0x6f] sm:$0xff]
      %v4550 = vld [vmem:[#allocation3 + $0x77] sm:$0xff]
      %v4551 = vld [vmem:[#allocation3 + $0x7f] sm:$0xff]
      %v4552 = vld [vmem:[#allocation3 + $0x87] sm:$0xff]
      %v4553 = vld [vmem:[#allocation3 + $0x8f] sm:$0xff]
      %v4554 = vld [vmem:[#allocation3 + $0x97] sm:$0xff]
      %v4555 = vld [vmem:[#allocation3 + $0x9f] sm:$0xff]
      %v4556 = vld [vmem:[#allocation3 + $0xa7] sm:$0xff]
      %v4557 = vld [vmem:[#allocation3 + $0xaf] sm:$0xff]
      %v4558 = vld [vmem:[#allocation3 + $0xb7] sm:$0xff]
      %v4559 = vld [vmem:[#allocation3 + $0xbf] sm:$0xff]
      %v4560 = vld [vmem:[#allocation3 + $0xc7] sm:$0xff]
      %v4561 = vld [vmem:[#allocation3 + $0xcf] sm:$0xff]
      %v4562 = vld [vmem:[#allocation3 + $0xd7] sm:$0xff]
      %v4563 = vld [vmem:[#allocation3 + $0xdf] sm:$0xff]
      %v4564 = vld [vmem:[#allocation3 + $0xe7] sm:$0xff]
      %v4565 = vld [vmem:[#allocation3 + $0xef] sm:$0xff]
      %v4566 = vld [vmem:[#allocation3 + $0xf7] sm:$0xff]
      %v4567 = vld [vmem:[#allocation3 + $0xff] sm:$0xff]
      %v4568 = vmul.f32 %v4536, %v503
      %v4569 = vmul.f32 %v4537, %v508
      %v4570 = vmul.f32 %v4538, %v513
      %v4571 = vmul.f32 %v4539, %v518
      %v4572 = vmul.f32 %v4540, %v523
      %v4573 = vmul.f32 %v4541, %v528
      %v4574 = vmul.f32 %v4542, %v533
      %v4575 = vmul.f32 %v4543, %v538
      %v4576 = vmul.f32 %v4544, %v543
      %v4577 = vmul.f32 %v4545, %v548
      %v4578 = vmul.f32 %v4546, %v553
      %v4579 = vmul.f32 %v4547, %v558
      %v4580 = vmul.f32 %v4548, %v563
      %v4581 = vmul.f32 %v4549, %v568
      %v4582 = vmul.f32 %v4550, %v573
      %v4583 = vmul.f32 %v4551, %v578
      %v4584 = vmul.f32 %v4552, %v583
      %v4585 = vmul.f32 %v4553, %v588
      %v4586 = vmul.f32 %v4554, %v593
      %v4587 = vmul.f32 %v4555, %v598
      %v4588 = vmul.f32 %v4556, %v603
      %v4589 = vmul.f32 %v4557, %v608
      %v4590 = vmul.f32 %v4558, %v613
      %v4591 = vmul.f32 %v4559, %v618
      %v4592 = vmul.f32 %v4560, %v623
      %v4593 = vmul.f32 %v4561, %v628
      %v4594 = vmul.f32 %v4562, %v633
      %v4595 = vmul.f32 %v4563, %v638
      %v4596 = vmul.f32 %v4564, %v643
      %v4597 = vmul.f32 %v4565, %v648
      %v4598 = vmul.f32 %v4566, %v653
      %v4599 = vmul.f32 %v4567, %v658
      %v4600 = vld [vmem:[%s5] sm:$0xff]
      %v4601 = vld [vmem:[#allocation3 + $0x8] sm:$0xff]
      %v4602 = vld [vmem:[#allocation3 + $0x10] sm:$0xff]
      %v4603 = vld [vmem:[#allocation3 + $0x18] sm:$0xff]
      %v4604 = vld [vmem:[#allocation3 + $0x20] sm:$0xff]
      %v4605 = vld [vmem:[#allocation3 + $0x28] sm:$0xff]
      %v4606 = vld [vmem:[#allocation3 + $0x30] sm:$0xff]
      %v4607 = vld [vmem:[#allocation3 + $0x38] sm:$0xff]
      %v4608 = vld [vmem:[#allocation3 + $0x40] sm:$0xff]
      %v4609 = vld [vmem:[#allocation3 + $0x48] sm:$0xff]
      %v4610 = vld [vmem:[#allocation3 + $0x50] sm:$0xff]
      %v4611 = vld [vmem:[#allocation3 + $0x58] sm:$0xff]
      %v4612 = vld [vmem:[#allocation3 + $0x60] sm:$0xff]
      %v4613 = vld [vmem:[#allocation3 + $0x68] sm:$0xff]
      %v4614 = vld [vmem:[#allocation3 + $0x70] sm:$0xff]
      %v4615 = vld [vmem:[#allocation3 + $0x78] sm:$0xff]
      %v4616 = vld [vmem:[#allocation3 + $0x80] sm:$0xff]
      %v4617 = vld [vmem:[#allocation3 + $0x88] sm:$0xff]
      %v4618 = vld [vmem:[#allocation3 + $0x90] sm:$0xff]
      %v4619 = vld [vmem:[#allocation3 + $0x98] sm:$0xff]
      %v4620 = vld [vmem:[#allocation3 + $0xa0] sm:$0xff]
      %v4621 = vld [vmem:[#allocation3 + $0xa8] sm:$0xff]
      %v4622 = vld [vmem:[#allocation3 + $0xb0] sm:$0xff]
      %v4623 = vld [vmem:[#allocation3 + $0xb8] sm:$0xff]
      %v4624 = vld [vmem:[#allocation3 + $0xc0] sm:$0xff]
      %v4625 = vld [vmem:[#allocation3 + $0xc8] sm:$0xff]
      %v4626 = vld [vmem:[#allocation3 + $0xd0] sm:$0xff]
      %v4627 = vld [vmem:[#allocation3 + $0xd8] sm:$0xff]
      %v4628 = vld [vmem:[#allocation3 + $0xe0] sm:$0xff]
      %v4629 = vld [vmem:[#allocation3 + $0xe8] sm:$0xff]
      %v4630 = vld [vmem:[#allocation3 + $0xf0] sm:$0xff]
      %v4631 = vld [vmem:[#allocation3 + $0xf8] sm:$0xff]
      %v4632 = vld [vmem:[#allocation3 + $0x100] sm:$0xff]
      %s4633 = scalar_lea.vmem %s5, 8
      %v4634 = vld [vmem:[%s4633] sm:$0xff]
      %v4636 = vsel %vm4497, %v4601, 0
      %v4639 = vsel %vm4497, %v4602, 0
      %v4642 = vsel %vm4497, %v4603, 0
      %v4645 = vsel %vm4497, %v4604, 0
      %v4648 = vsel %vm4497, %v4605, 0
      %v4651 = vsel %vm4497, %v4606, 0
      %v4654 = vsel %vm4497, %v4607, 0
      %v4657 = vsel %vm4497, %v4608, 0
      %v4660 = vsel %vm4497, %v4609, 0
      %v4663 = vsel %vm4497, %v4610, 0
      %v4666 = vsel %vm4497, %v4611, 0
      %v4669 = vsel %vm4497, %v4612, 0
      %v4672 = vsel %vm4497, %v4613, 0
      %v4675 = vsel %vm4497, %v4614, 0
      %v4678 = vsel %vm4497, %v4615, 0
      %v4681 = vsel %vm4497, %v4616, 0
      %v4684 = vsel %vm4497, %v4617, 0
      %v4687 = vsel %vm4497, %v4618, 0
      %v4690 = vsel %vm4497, %v4619, 0
      %v4693 = vsel %vm4497, %v4620, 0
      %v4696 = vsel %vm4497, %v4621, 0
      %v4699 = vsel %vm4497, %v4622, 0
      %v4702 = vsel %vm4497, %v4623, 0
      %v4705 = vsel %vm4497, %v4624, 0
      %v4708 = vsel %vm4497, %v4625, 0
      %v4711 = vsel %vm4497, %v4626, 0
      %v4714 = vsel %vm4497, %v4627, 0
      %v4717 = vsel %vm4497, %v4628, 0
      %v4720 = vsel %vm4497, %v4629, 0
      %v4723 = vsel %vm4497, %v4630, 0
      %v4726 = vsel %vm4497, %v4631, 0
      %v4729 = vsel %vm4497, %v4632, 0
      %4731 = vmatprep.subr.mxu0 0.0
      %4732 = vmatpush1.msra.mxu0 %v4634
      %4733 = vmatprep.subr.mxu0 0.0
      %4734 = vmatpush1.msra.mxu0 0.0
      %4735 = vmatprep.subr.mxu0 0.0
      %4736 = vmatpush1.msra.mxu0 0.0
      %4737 = vmatprep.subr.mxu0 0.0
      %4738 = vmatpush1.msra.mxu0 0.0
      %4739 = vmatprep.subr.mxu0 0.0
      %4740 = vmatpush1.msra.mxu0 0.0
      %4741 = vmatprep.subr.mxu0 0.0
      %4742 = vmatpush1.msra.mxu0 0.0
      %4743 = vmatprep.subr.mxu0 0.0
      %4744 = vmatpush1.msra.mxu0 0.0
      %4745 = vmatprep.subr.mxu0 0.0
      %4746 = vmatpush1.msra.mxu0 0.0
      %4747 = vmatprep.subr.mxu0 0.0
      %4748 = vmatpush1.msra.mxu0 0.0
      %4749 = vmatprep.subr.mxu0 0.0
      %4750 = vmatpush1.msra.mxu0 0.0
      %4751 = vmatprep.subr.mxu0 0.0
      %4752 = vmatpush1.msra.mxu0 0.0
      %4753 = vmatprep.subr.mxu0 0.0
      %4754 = vmatpush1.msra.mxu0 0.0
      %4755 = vmatprep.subr.mxu0 0.0
      %4756 = vmatpush1.msra.mxu0 0.0
      %4757 = vmatprep.subr.mxu0 0.0
      %4758 = vmatpush1.msra.mxu0 0.0
      %4759 = vmatprep.subr.mxu0 0.0
      %4760 = vmatpush1.msra.mxu0 0.0
      %4761 = vmatprep.subr.mxu0 0.0
      %4762 = vmatpush1.msra.mxu0 0.0
      %4763 = vmatprep.subr.mxu0 0.0
      %4764 = vmatpush1.msra.mxu0 0.0
      %4765 = vmatprep.subr.mxu0 0.0
      %4766 = vmatpush1.msra.mxu0 0.0
      %4767 = vmatprep.subr.mxu0 0.0
      %4768 = vmatpush1.msra.mxu0 0.0
      %4769 = vmatprep.subr.mxu0 0.0
      %4770 = vmatpush1.msra.mxu0 0.0
      %4771 = vmatprep.subr.mxu0 0.0
      %4772 = vmatpush1.msra.mxu0 0.0
      %4773 = vmatprep.subr.mxu0 0.0
      %4774 = vmatpush1.msra.mxu0 0.0
      %4775 = vmatprep.subr.mxu0 0.0
      %4776 = vmatpush1.msra.mxu0 0.0
      %4777 = vmatprep.subr.mxu0 0.0
      %4778 = vmatpush1.msra.mxu0 0.0
      %4779 = vmatprep.subr.mxu0 0.0
      %4780 = vmatpush1.msra.mxu0 0.0
      %4781 = vmatprep.subr.mxu0 0.0
      %4782 = vmatpush1.msra.mxu0 0.0
      %4783 = vmatprep.subr.mxu0 0.0
      %4784 = vmatpush1.msra.mxu0 0.0
      %4785 = vmatprep.subr.mxu0 0.0
      %4786 = vmatpush1.msra.mxu0 0.0
      %4787 = vmatprep.subr.mxu0 0.0
      %4788 = vmatpush1.msra.mxu0 0.0
      %4789 = vmatprep.subr.mxu0 0.0
      %4790 = vmatpush1.msra.mxu0 0.0
      %4791 = vmatprep.subr.mxu0 0.0
      %4792 = vmatpush1.msra.mxu0 0.0
      %4793 = vmatprep.subr.mxu0 0.0
      %4794 = vmatpush1.msra.mxu0 0.0
      %4795 = vmatprep.mubr.f32.mxu0 0.0
      %4796 = vmatmul.mubr.f32.gmra.mrb[0].mxu0 %v4636
      %v4797 = vpop.f32.mrb[0].mxu0
      %v4798 = vadd.f32 0.0, %v4797
      %v4799 = vpop.f32.mrb[0].mxu0
      %4800 = vmatprep.mubr.f32.mxu0 0.0
      %4801 = vmatmul.mubr.f32.gmra.mrb[0].mxu0 %v4639
      %v4802 = vpop.f32.mrb[0].mxu0
      %v4803 = vadd.f32 0.0, %v4802
      %v4804 = vpop.f32.mrb[0].mxu0
      %4805 = vmatprep.mubr.f32.mxu0 0.0
      %4806 = vmatmul.mubr.f32.gmra.mrb[0].mxu0 %v4642
      %v4807 = vpop.f32.mrb[0].mxu0
      %v4808 = vadd.f32 0.0, %v4807
      %v4809 = vpop.f32.mrb[0].mxu0
      %4810 = vmatprep.mubr.f32.mxu0 0.0
      %4811 = vmatmul.mubr.f32.gmra.mrb[0].mxu0 %v4645
      %v4812 = vpop.f32.mrb[0].mxu0
      %v4813 = vadd.f32 0.0, %v4812
      %v4814 = vpop.f32.mrb[0].mxu0
      %4815 = vmatprep.mubr.f32.mxu0 0.0
      %4816 = vmatmul.mubr.f32.gmra.mrb[0].mxu0 %v4648
      %v4817 = vpop.f32.mrb[0].mxu0
      %v4818 = vadd.f32 0.0, %v4817
      %v4819 = vpop.f32.mrb[0].mxu0
      %4820 = vmatprep.mubr.f32.mxu0 0.0
      %4821 = vmatmul.mubr.f32.gmra.mrb[0].mxu0 %v4651
      %v4822 = vpop.f32.mrb[0].mxu0
      %v4823 = vadd.f32 0.0, %v4822
      %v4824 = vpop.f32.mrb[0].mxu0
      %4825 = vmatprep.mubr.f32.mxu0 0.0
      %4826 = vmatmul.mubr.f32.gmra.mrb[0].mxu0 %v4654
      %v4827 = vpop.f32.mrb[0].mxu0
      %v4828 = vadd.f32 0.0, %v4827
      %v4829 = vpop.f32.mrb[0].mxu0
      %4830 = vmatprep.mubr.f32.mxu0 0.0
      %4831 = vmatmul.mubr.f32.gmra.mrb[0].mxu0 %v4657
      %v4832 = vpop.f32.mrb[0].mxu0
      %v4833 = vadd.f32 0.0, %v4832
      %v4834 = vpop.f32.mrb[0].mxu0
      %4835 = vmatprep.mubr.f32.mxu0 0.0
      %4836 = vmatmul.mubr.f32.gmra.mrb[0].mxu0 %v4660
      %v4837 = vpop.f32.mrb[0].mxu0
      %v4838 = vadd.f32 0.0, %v4837
      %v4839 = vpop.f32.mrb[0].mxu0
      %4840 = vmatprep.mubr.f32.mxu0 0.0
      %4841 = vmatmul.mubr.f32.gmra.mrb[0].mxu0 %v4663
      %v4842 = vpop.f32.mrb[0].mxu0
      %v4843 = vadd.f32 0.0, %v4842
      %v4844 = vpop.f32.mrb[0].mxu0
      %4845 = vmatprep.mubr.f32.mxu0 0.0
      %4846 = vmatmul.mubr.f32.gmra.mrb[0].mxu0 %v4666
      %v4847 = vpop.f32.mrb[0].mxu0
      %v4848 = vadd.f32 0.0, %v4847
      %v4849 = vpop.f32.mrb[0].mxu0
      %4850 = vmatprep.mubr.f32.mxu0 0.0
      %4851 = vmatmul.mubr.f32.gmra.mrb[0].mxu0 %v4669
      %v4852 = vpop.f32.mrb[0].mxu0
      %v4853 = vadd.f32 0.0, %v4852
      %v4854 = vpop.f32.mrb[0].mxu0
      %4855 = vmatprep.mubr.f32.mxu0 0.0
      %4856 = vmatmul.mubr.f32.gmra.mrb[0].mxu0 %v4672
      %v4857 = vpop.f32.mrb[0].mxu0
      %v4858 = vadd.f32 0.0, %v4857
      %v4859 = vpop.f32.mrb[0].mxu0
      %4860 = vmatprep.mubr.f32.mxu0 0.0
      %4861 = vmatmul.mubr.f32.gmra.mrb[0].mxu0 %v4675
      %v4862 = vpop.f32.mrb[0].mxu0
      %v4863 = vadd.f32 0.0, %v4862
      %v4864 = vpop.f32.mrb[0].mxu0
      %4865 = vmatprep.mubr.f32.mxu0 0.0
      %4866 = vmatmul.mubr.f32.gmra.mrb[0].mxu0 %v4678
      %v4867 = vpop.f32.mrb[0].mxu0
      %v4868 = vadd.f32 0.0, %v4867
      %v4869 = vpop.f32.mrb[0].mxu0
      %4870 = vmatprep.mubr.f32.mxu0 0.0
      %4871 = vmatmul.mubr.f32.gmra.mrb[0].mxu0 %v4681
      %v4872 = vpop.f32.mrb[0].mxu0
      %v4873 = vadd.f32 0.0, %v4872
      %v4874 = vpop.f32.mrb[0].mxu0
      %4875 = vmatprep.mubr.f32.mxu0 0.0
      %4876 = vmatmul.mubr.f32.gmra.mrb[0].mxu0 %v4684
      %v4877 = vpop.f32.mrb[0].mxu0
      %v4878 = vadd.f32 0.0, %v4877
      %v4879 = vpop.f32.mrb[0].mxu0
      %4880 = vmatprep.mubr.f32.mxu0 0.0
      %4881 = vmatmul.mubr.f32.gmra.mrb[0].mxu0 %v4687
      %v4882 = vpop.f32.mrb[0].mxu0
      %v4883 = vadd.f32 0.0, %v4882
      %v4884 = vpop.f32.mrb[0].mxu0
      %4885 = vmatprep.mubr.f32.mxu0 0.0
      %4886 = vmatmul.mubr.f32.gmra.mrb[0].mxu0 %v4690
      %v4887 = vpop.f32.mrb[0].mxu0
      %v4888 = vadd.f32 0.0, %v4887
      %v4889 = vpop.f32.mrb[0].mxu0
      %4890 = vmatprep.mubr.f32.mxu0 0.0
      %4891 = vmatmul.mubr.f32.gmra.mrb[0].mxu0 %v4693
      %v4892 = vpop.f32.mrb[0].mxu0
      %v4893 = vadd.f32 0.0, %v4892
      %v4894 = vpop.f32.mrb[0].mxu0
      %4895 = vmatprep.mubr.f32.mxu0 0.0
      %4896 = vmatmul.mubr.f32.gmra.mrb[0].mxu0 %v4696
      %v4897 = vpop.f32.mrb[0].mxu0
      %v4898 = vadd.f32 0.0, %v4897
      %v4899 = vpop.f32.mrb[0].mxu0
      %4900 = vmatprep.mubr.f32.mxu0 0.0
      %4901 = vmatmul.mubr.f32.gmra.mrb[0].mxu0 %v4699
      %v4902 = vpop.f32.mrb[0].mxu0
      %v4903 = vadd.f32 0.0, %v4902
      %v4904 = vpop.f32.mrb[0].mxu0
      %4905 = vmatprep.mubr.f32.mxu0 0.0
      %4906 = vmatmul.mubr.f32.gmra.mrb[0].mxu0 %v4702
      %v4907 = vpop.f32.mrb[0].mxu0
      %v4908 = vadd.f32 0.0, %v4907
      %v4909 = vpop.f32.mrb[0].mxu0
      %4910 = vmatprep.mubr.f32.mxu0 0.0
      %4911 = vmatmul.mubr.f32.gmra.mrb[0].mxu0 %v4705
      %v4912 = vpop.f32.mrb[0].mxu0
      %v4913 = vadd.f32 0.0, %v4912
      %v4914 = vpop.f32.mrb[0].mxu0
      %4915 = vmatprep.mubr.f32.mxu0 0.0
      %4916 = vmatmul.mubr.f32.gmra.mrb[0].mxu0 %v4708
      %v4917 = vpop.f32.mrb[0].mxu0
      %v4918 = vadd.f32 0.0, %v4917
      %v4919 = vpop.f32.mrb[0].mxu0
      %4920 = vmatprep.mubr.f32.mxu0 0.0
      %4921 = vmatmul.mubr.f32.gmra.mrb[0].mxu0 %v4711
      %v4922 = vpop.f32.mrb[0].mxu0
      %v4923 = vadd.f32 0.0, %v4922
      %v4924 = vpop.f32.mrb[0].mxu0
      %4925 = vmatprep.mubr.f32.mxu0 0.0
      %4926 = vmatmul.mubr.f32.gmra.mrb[0].mxu0 %v4714
      %v4927 = vpop.f32.mrb[0].mxu0
      %v4928 = vadd.f32 0.0, %v4927
      %v4929 = vpop.f32.mrb[0].mxu0
      %4930 = vmatprep.mubr.f32.mxu0 0.0
      %4931 = vmatmul.mubr.f32.gmra.mrb[0].mxu0 %v4717
      %v4932 = vpop.f32.mrb[0].mxu0
      %v4933 = vadd.f32 0.0, %v4932
      %v4934 = vpop.f32.mrb[0].mxu0
      %4935 = vmatprep.mubr.f32.mxu0 0.0
      %4936 = vmatmul.mubr.f32.gmra.mrb[0].mxu0 %v4720
      %v4937 = vpop.f32.mrb[0].mxu0
      %v4938 = vadd.f32 0.0, %v4937
      %v4939 = vpop.f32.mrb[0].mxu0
      %4940 = vmatprep.mubr.f32.mxu0 0.0
      %4941 = vmatmul.mubr.f32.gmra.mrb[0].mxu0 %v4723
      %v4942 = vpop.f32.mrb[0].mxu0
      %v4943 = vadd.f32 0.0, %v4942
      %v4944 = vpop.f32.mrb[0].mxu0
      %4945 = vmatprep.mubr.f32.mxu0 0.0
      %4946 = vmatmul.mubr.f32.gmra.mrb[0].mxu0 %v4726
      %v4947 = vpop.f32.mrb[0].mxu0
      %v4948 = vadd.f32 0.0, %v4947
      %v4949 = vpop.f32.mrb[0].mxu0
      %4950 = vmatprep.mubr.f32.mxu0 0.0
      %4951 = vmatmul.mubr.f32.gmra.mrb[0].mxu0 %v4729
      %v4952 = vpop.f32.mrb[0].mxu0
      %v4953 = vadd.f32 0.0, %v4952
      %v4954 = vpop.f32.mrb[0].mxu0
      %4955 = vdwg.mxu0
      %v4957 = vsel %vm4497, %v4568, 0
      %v4960 = vsel %vm4497, %v4569, 0
      %v4963 = vsel %vm4497, %v4570, 0
      %v4966 = vsel %vm4497, %v4571, 0
      %v4969 = vsel %vm4497, %v4572, 0
      %v4972 = vsel %vm4497, %v4573, 0
      %v4975 = vsel %vm4497, %v4574, 0
      %v4978 = vsel %vm4497, %v4575, 0
      %v4981 = vsel %vm4497, %v4576, 0
      %v4984 = vsel %vm4497, %v4577, 0
      %v4987 = vsel %vm4497, %v4578, 0
      %v4990 = vsel %vm4497, %v4579, 0
      %v4993 = vsel %vm4497, %v4580, 0
      %v4996 = vsel %vm4497, %v4581, 0
      %v4999 = vsel %vm4497, %v4582, 0
      %v5002 = vsel %vm4497, %v4583, 0
      %v5005 = vsel %vm4497, %v4584, 0
      %v5008 = vsel %vm4497, %v4585, 0
      %v5011 = vsel %vm4497, %v4586, 0
      %v5014 = vsel %vm4497, %v4587, 0
      %v5017 = vsel %vm4497, %v4588, 0
      %v5020 = vsel %vm4497, %v4589, 0
      %v5023 = vsel %vm4497, %v4590, 0
      %v5026 = vsel %vm4497, %v4591, 0
      %v5029 = vsel %vm4497, %v4592, 0
      %v5032 = vsel %vm4497, %v4593, 0
      %v5035 = vsel %vm4497, %v4594, 0
      %v5038 = vsel %vm4497, %v4595, 0
      %v5041 = vsel %vm4497, %v4596, 0
      %v5044 = vsel %vm4497, %v4597, 0
      %v5047 = vsel %vm4497, %v4598, 0
      %v5050 = vsel %vm4497, %v4599, 0
      %5052 = vmatprep.subr.mxu0 0.0
      %5053 = vmatpush1.msra.mxu0 %v4600
      %5054 = vmatprep.subr.mxu0 0.0
      %5055 = vmatpush1.msra.mxu0 0.0
      %5056 = vmatprep.subr.mxu0 0.0
      %5057 = vmatpush1.msra.mxu0 0.0
      %5058 = vmatprep.subr.mxu0 0.0
      %5059 = vmatpush1.msra.mxu0 0.0
      %5060 = vmatprep.subr.mxu0 0.0
      %5061 = vmatpush1.msra.mxu0 0.0
      %5062 = vmatprep.subr.mxu0 0.0
      %5063 = vmatpush1.msra.mxu0 0.0
      %5064 = vmatprep.subr.mxu0 0.0
      %5065 = vmatpush1.msra.mxu0 0.0
      %5066 = vmatprep.subr.mxu0 0.0
      %5067 = vmatpush1.msra.mxu0 0.0
      %5068 = vmatprep.subr.mxu0 0.0
      %5069 = vmatpush1.msra.mxu0 0.0
      %5070 = vmatprep.subr.mxu0 0.0
      %5071 = vmatpush1.msra.mxu0 0.0
      %5072 = vmatprep.subr.mxu0 0.0
      %5073 = vmatpush1.msra.mxu0 0.0
      %5074 = vmatprep.subr.mxu0 0.0
      %5075 = vmatpush1.msra.mxu0 0.0
      %5076 = vmatprep.subr.mxu0 0.0
      %5077 = vmatpush1.msra.mxu0 0.0
      %5078 = vmatprep.subr.mxu0 0.0
      %5079 = vmatpush1.msra.mxu0 0.0
      %5080 = vmatprep.subr.mxu0 0.0
      %5081 = vmatpush1.msra.mxu0 0.0
      %5082 = vmatprep.subr.mxu0 0.0
      %5083 = vmatpush1.msra.mxu0 0.0
      %5084 = vmatprep.subr.mxu0 0.0
      %5085 = vmatpush1.msra.mxu0 0.0
      %5086 = vmatprep.subr.mxu0 0.0
      %5087 = vmatpush1.msra.mxu0 0.0
      %5088 = vmatprep.subr.mxu0 0.0
      %5089 = vmatpush1.msra.mxu0 0.0
      %5090 = vmatprep.subr.mxu0 0.0
      %5091 = vmatpush1.msra.mxu0 0.0
      %5092 = vmatprep.subr.mxu0 0.0
      %5093 = vmatpush1.msra.mxu0 0.0
      %5094 = vmatprep.subr.mxu0 0.0
      %5095 = vmatpush1.msra.mxu0 0.0
      %5096 = vmatprep.subr.mxu0 0.0
      %5097 = vmatpush1.msra.mxu0 0.0
      %5098 = vmatprep.subr.mxu0 0.0
      %5099 = vmatpush1.msra.mxu0 0.0
      %5100 = vmatprep.subr.mxu0 0.0
      %5101 = vmatpush1.msra.mxu0 0.0
      %5102 = vmatprep.subr.mxu0 0.0
      %5103 = vmatpush1.msra.mxu0 0.0
      %5104 = vmatprep.subr.mxu0 0.0
      %5105 = vmatpush1.msra.mxu0 0.0
      %5106 = vmatprep.subr.mxu0 0.0
      %5107 = vmatpush1.msra.mxu0 0.0
      %5108 = vmatprep.subr.mxu0 0.0
      %5109 = vmatpush1.msra.mxu0 0.0
      %5110 = vmatprep.subr.mxu0 0.0
      %5111 = vmatpush1.msra.mxu0 0.0
      %5112 = vmatprep.subr.mxu0 0.0
      %5113 = vmatpush1.msra.mxu0 0.0
      %5114 = vmatprep.subr.mxu0 0.0
      %5115 = vmatpush1.msra.mxu0 0.0
      %5116 = vmatprep.mubr.f32.mxu0 0.0
      %5117 = vmatmul.mubr.f32.gmra.mrb[0].mxu0 %v4957
      %v5118 = vpop.f32.mrb[0].mxu0
      %v5119 = vadd.f32 %v4798, %v5118
      %v5120 = vpop.f32.mrb[0].mxu0
      %5121 = vmatprep.mubr.f32.mxu0 0.0
      %5122 = vmatmul.mubr.f32.gmra.mrb[0].mxu0 %v4960
      %v5123 = vpop.f32.mrb[0].mxu0
      %v5124 = vadd.f32 %v4803, %v5123
      %v5125 = vpop.f32.mrb[0].mxu0
      %5126 = vmatprep.mubr.f32.mxu0 0.0
      %5127 = vmatmul.mubr.f32.gmra.mrb[0].mxu0 %v4963
      %v5128 = vpop.f32.mrb[0].mxu0
      %v5129 = vadd.f32 %v4808, %v5128
      %v5130 = vpop.f32.mrb[0].mxu0
      %5131 = vmatprep.mubr.f32.mxu0 0.0
      %5132 = vmatmul.mubr.f32.gmra.mrb[0].mxu0 %v4966
      %v5133 = vpop.f32.mrb[0].mxu0
      %v5134 = vadd.f32 %v4813, %v5133
      %v5135 = vpop.f32.mrb[0].mxu0
      %5136 = vmatprep.mubr.f32.mxu0 0.0
      %5137 = vmatmul.mubr.f32.gmra.mrb[0].mxu0 %v4969
      %v5138 = vpop.f32.mrb[0].mxu0
      %v5139 = vadd.f32 %v4818, %v5138
      %v5140 = vpop.f32.mrb[0].mxu0
      %5141 = vmatprep.mubr.f32.mxu0 0.0
      %5142 = vmatmul.mubr.f32.gmra.mrb[0].mxu0 %v4972
      %v5143 = vpop.f32.mrb[0].mxu0
      %v5144 = vadd.f32 %v4823, %v5143
      %v5145 = vpop.f32.mrb[0].mxu0
      %5146 = vmatprep.mubr.f32.mxu0 0.0
      %5147 = vmatmul.mubr.f32.gmra.mrb[0].mxu0 %v4975
      %v5148 = vpop.f32.mrb[0].mxu0
      %v5149 = vadd.f32 %v4828, %v5148
      %v5150 = vpop.f32.mrb[0].mxu0
      %5151 = vmatprep.mubr.f32.mxu0 0.0
      %5152 = vmatmul.mubr.f32.gmra.mrb[0].mxu0 %v4978
      %v5153 = vpop.f32.mrb[0].mxu0
      %v5154 = vadd.f32 %v4833, %v5153
      %v5155 = vpop.f32.mrb[0].mxu0
      %5156 = vmatprep.mubr.f32.mxu0 0.0
      %5157 = vmatmul.mubr.f32.gmra.mrb[0].mxu0 %v4981
      %v5158 = vpop.f32.mrb[0].mxu0
      %v5159 = vadd.f32 %v4838, %v5158
      %v5160 = vpop.f32.mrb[0].mxu0
      %5161 = vmatprep.mubr.f32.mxu0 0.0
      %5162 = vmatmul.mubr.f32.gmra.mrb[0].mxu0 %v4984
      %v5163 = vpop.f32.mrb[0].mxu0
      %v5164 = vadd.f32 %v4843, %v5163
      %v5165 = vpop.f32.mrb[0].mxu0
      %5166 = vmatprep.mubr.f32.mxu0 0.0
      %5167 = vmatmul.mubr.f32.gmra.mrb[0].mxu0 %v4987
      %v5168 = vpop.f32.mrb[0].mxu0
      %v5169 = vadd.f32 %v4848, %v5168
      %v5170 = vpop.f32.mrb[0].mxu0
      %5171 = vmatprep.mubr.f32.mxu0 0.0
      %5172 = vmatmul.mubr.f32.gmra.mrb[0].mxu0 %v4990
      %v5173 = vpop.f32.mrb[0].mxu0
      %v5174 = vadd.f32 %v4853, %v5173
      %v5175 = vpop.f32.mrb[0].mxu0
      %5176 = vmatprep.mubr.f32.mxu0 0.0
      %5177 = vmatmul.mubr.f32.gmra.mrb[0].mxu0 %v4993
      %v5178 = vpop.f32.mrb[0].mxu0
      %v5179 = vadd.f32 %v4858, %v5178
      %v5180 = vpop.f32.mrb[0].mxu0
      %5181 = vmatprep.mubr.f32.mxu0 0.0
      %5182 = vmatmul.mubr.f32.gmra.mrb[0].mxu0 %v4996
      %v5183 = vpop.f32.mrb[0].mxu0
      %v5184 = vadd.f32 %v4863, %v5183
      %v5185 = vpop.f32.mrb[0].mxu0
      %5186 = vmatprep.mubr.f32.mxu0 0.0
      %5187 = vmatmul.mubr.f32.gmra.mrb[0].mxu0 %v4999
      %v5188 = vpop.f32.mrb[0].mxu0
      %v5189 = vadd.f32 %v4868, %v5188
      %v5190 = vpop.f32.mrb[0].mxu0
      %5191 = vmatprep.mubr.f32.mxu0 0.0
      %5192 = vmatmul.mubr.f32.gmra.mrb[0].mxu0 %v5002
      %v5193 = vpop.f32.mrb[0].mxu0
      %v5194 = vadd.f32 %v4873, %v5193
      %v5195 = vpop.f32.mrb[0].mxu0
      %5196 = vmatprep.mubr.f32.mxu0 0.0
      %5197 = vmatmul.mubr.f32.gmra.mrb[0].mxu0 %v5005
      %v5198 = vpop.f32.mrb[0].mxu0
      %v5199 = vadd.f32 %v4878, %v5198
      %v5200 = vpop.f32.mrb[0].mxu0
      %5201 = vmatprep.mubr.f32.mxu0 0.0
      %5202 = vmatmul.mubr.f32.gmra.mrb[0].mxu0 %v5008
      %v5203 = vpop.f32.mrb[0].mxu0
      %v5204 = vadd.f32 %v4883, %v5203
      %v5205 = vpop.f32.mrb[0].mxu0
      %5206 = vmatprep.mubr.f32.mxu0 0.0
      %5207 = vmatmul.mubr.f32.gmra.mrb[0].mxu0 %v5011
      %v5208 = vpop.f32.mrb[0].mxu0
      %v5209 = vadd.f32 %v4888, %v5208
      %v5210 = vpop.f32.mrb[0].mxu0
      %5211 = vmatprep.mubr.f32.mxu0 0.0
      %5212 = vmatmul.mubr.f32.gmra.mrb[0].mxu0 %v5014
      %v5213 = vpop.f32.mrb[0].mxu0
      %v5214 = vadd.f32 %v4893, %v5213
      %v5215 = vpop.f32.mrb[0].mxu0
      %5216 = vmatprep.mubr.f32.mxu0 0.0
      %5217 = vmatmul.mubr.f32.gmra.mrb[0].mxu0 %v5017
      %v5218 = vpop.f32.mrb[0].mxu0
      %v5219 = vadd.f32 %v4898, %v5218
      %v5220 = vpop.f32.mrb[0].mxu0
      %5221 = vmatprep.mubr.f32.mxu0 0.0
      %5222 = vmatmul.mubr.f32.gmra.mrb[0].mxu0 %v5020
      %v5223 = vpop.f32.mrb[0].mxu0
      %v5224 = vadd.f32 %v4903, %v5223
      %v5225 = vpop.f32.mrb[0].mxu0
      %5226 = vmatprep.mubr.f32.mxu0 0.0
      %5227 = vmatmul.mubr.f32.gmra.mrb[0].mxu0 %v5023
      %v5228 = vpop.f32.mrb[0].mxu0
      %v5229 = vadd.f32 %v4908, %v5228
      %v5230 = vpop.f32.mrb[0].mxu0
      %5231 = vmatprep.mubr.f32.mxu0 0.0
      %5232 = vmatmul.mubr.f32.gmra.mrb[0].mxu0 %v5026
      %v5233 = vpop.f32.mrb[0].mxu0
      %v5234 = vadd.f32 %v4913, %v5233
      %v5235 = vpop.f32.mrb[0].mxu0
      %5236 = vmatprep.mubr.f32.mxu0 0.0
      %5237 = vmatmul.mubr.f32.gmra.mrb[0].mxu0 %v5029
      %v5238 = vpop.f32.mrb[0].mxu0
      %v5239 = vadd.f32 %v4918, %v5238
      %v5240 = vpop.f32.mrb[0].mxu0
      %5241 = vmatprep.mubr.f32.mxu0 0.0
      %5242 = vmatmul.mubr.f32.gmra.mrb[0].mxu0 %v5032
      %v5243 = vpop.f32.mrb[0].mxu0
      %v5244 = vadd.f32 %v4923, %v5243
      %v5245 = vpop.f32.mrb[0].mxu0
      %5246 = vmatprep.mubr.f32.mxu0 0.0
      %5247 = vmatmul.mubr.f32.gmra.mrb[0].mxu0 %v5035
      %v5248 = vpop.f32.mrb[0].mxu0
      %v5249 = vadd.f32 %v4928, %v5248
      %v5250 = vpop.f32.mrb[0].mxu0
      %5251 = vmatprep.mubr.f32.mxu0 0.0
      %5252 = vmatmul.mubr.f32.gmra.mrb[0].mxu0 %v5038
      %v5253 = vpop.f32.mrb[0].mxu0
      %v5254 = vadd.f32 %v4933, %v5253
      %v5255 = vpop.f32.mrb[0].mxu0
      %5256 = vmatprep.mubr.f32.mxu0 0.0
      %5257 = vmatmul.mubr.f32.gmra.mrb[0].mxu0 %v5041
      %v5258 = vpop.f32.mrb[0].mxu0
      %v5259 = vadd.f32 %v4938, %v5258
      %v5260 = vpop.f32.mrb[0].mxu0
      %5261 = vmatprep.mubr.f32.mxu0 0.0
      %5262 = vmatmul.mubr.f32.gmra.mrb[0].mxu0 %v5044
      %v5263 = vpop.f32.mrb[0].mxu0
      %v5264 = vadd.f32 %v4943, %v5263
      %v5265 = vpop.f32.mrb[0].mxu0
      %5266 = vmatprep.mubr.f32.mxu0 0.0
      %5267 = vmatmul.mubr.f32.gmra.mrb[0].mxu0 %v5047
      %v5268 = vpop.f32.mrb[0].mxu0
      %v5269 = vadd.f32 %v4948, %v5268
      %v5270 = vpop.f32.mrb[0].mxu0
      %5271 = vmatprep.mubr.f32.mxu0 0.0
      %5272 = vmatmul.mubr.f32.gmra.mrb[0].mxu0 %v5050
      %v5273 = vpop.f32.mrb[0].mxu0
      %v5274 = vadd.f32 %v4953, %v5273
      %v5275 = vpop.f32.mrb[0].mxu0
      %5276 = vdwg.mxu0
      %v5277 = vld [vmem:[#allocation3 + $0x9] sm:$0xff]
      %v5278 = vld [vmem:[#allocation3 + $0x11] sm:$0xff]
      %v5279 = vld [vmem:[#allocation3 + $0x19] sm:$0xff]
      %v5280 = vld [vmem:[#allocation3 + $0x21] sm:$0xff]
      %v5281 = vld [vmem:[#allocation3 + $0x29] sm:$0xff]
      %v5282 = vld [vmem:[#allocation3 + $0x31] sm:$0xff]
      %v5283 = vld [vmem:[#allocation3 + $0x39] sm:$0xff]
      %v5284 = vld [vmem:[#allocation3 + $0x41] sm:$0xff]
      %v5285 = vld [vmem:[#allocation3 + $0x49] sm:$0xff]
      %v5286 = vld [vmem:[#allocation3 + $0x51] sm:$0xff]
      %v5287 = vld [vmem:[#allocation3 + $0x59] sm:$0xff]
      %v5288 = vld [vmem:[#allocation3 + $0x61] sm:$0xff]
      %v5289 = vld [vmem:[#allocation3 + $0x69] sm:$0xff]
      %v5290 = vld [vmem:[#allocation3 + $0x71] sm:$0xff]
      %v5291 = vld [vmem:[#allocation3 + $0x79] sm:$0xff]
      %v5292 = vld [vmem:[#allocation3 + $0x81] sm:$0xff]
      %v5293 = vld [vmem:[#allocation3 + $0x89] sm:$0xff]
      %v5294 = vld [vmem:[#allocation3 + $0x91] sm:$0xff]
      %v5295 = vld [vmem:[#allocation3 + $0x99] sm:$0xff]
      %v5296 = vld [vmem:[#allocation3 + $0xa1] sm:$0xff]
      %v5297 = vld [vmem:[#allocation3 + $0xa9] sm:$0xff]
      %v5298 = vld [vmem:[#allocation3 + $0xb1] sm:$0xff]
      %v5299 = vld [vmem:[#allocation3 + $0xb9] sm:$0xff]
      %v5300 = vld [vmem:[#allocation3 + $0xc1] sm:$0xff]
      %v5301 = vld [vmem:[#allocation3 + $0xc9] sm:$0xff]
      %v5302 = vld [vmem:[#allocation3 + $0xd1] sm:$0xff]
      %v5303 = vld [vmem:[#allocation3 + $0xd9] sm:$0xff]
      %v5304 = vld [vmem:[#allocation3 + $0xe1] sm:$0xff]
      %v5305 = vld [vmem:[#allocation3 + $0xe9] sm:$0xff]
      %v5306 = vld [vmem:[#allocation3 + $0xf1] sm:$0xff]
      %v5307 = vld [vmem:[#allocation3 + $0xf9] sm:$0xff]
      %v5308 = vld [vmem:[#allocation3 + $0x101] sm:$0xff]
      %v5309 = vmul.f32 %v5277, %v1411
      %v5310 = vmul.f32 %v5278, %v1416
      %v5311 = vmul.f32 %v5279, %v1421
      %v5312 = vmul.f32 %v5280, %v1426
      %v5313 = vmul.f32 %v5281, %v1431
      %v5314 = vmul.f32 %v5282, %v1436
      %v5315 = vmul.f32 %v5283, %v1441
      %v5316 = vmul.f32 %v5284, %v1446
      %v5317 = vmul.f32 %v5285, %v1451
      %v5318 = vmul.f32 %v5286, %v1456
      %v5319 = vmul.f32 %v5287, %v1461
      %v5320 = vmul.f32 %v5288, %v1466
      %v5321 = vmul.f32 %v5289, %v1471
      %v5322 = vmul.f32 %v5290, %v1476
      %v5323 = vmul.f32 %v5291, %v1481
      %v5324 = vmul.f32 %v5292, %v1486
      %v5325 = vmul.f32 %v5293, %v1491
      %v5326 = vmul.f32 %v5294, %v1496
      %v5327 = vmul.f32 %v5295, %v1501
      %v5328 = vmul.f32 %v5296, %v1506
      %v5329 = vmul.f32 %v5297, %v1511
      %v5330 = vmul.f32 %v5298, %v1516
      %v5331 = vmul.f32 %v5299, %v1521
      %v5332 = vmul.f32 %v5300, %v1526
      %v5333 = vmul.f32 %v5301, %v1531
      %v5334 = vmul.f32 %v5302, %v1536
      %v5335 = vmul.f32 %v5303, %v1541
      %v5336 = vmul.f32 %v5304, %v1546
      %v5337 = vmul.f32 %v5305, %v1551
      %v5338 = vmul.f32 %v5306, %v1556
      %v5339 = vmul.f32 %v5307, %v1561
      %v5340 = vmul.f32 %v5308, %v1566
      %s5341 = scalar_lea.vmem %s5, 16
      %v5342 = vld [vmem:[%s5341] sm:$0xff]
      %v5344 = vsel %vm4497, %v5309, 0
      %v5347 = vsel %vm4497, %v5310, 0
      %v5350 = vsel %vm4497, %v5311, 0
      %v5353 = vsel %vm4497, %v5312, 0
      %v5356 = vsel %vm4497, %v5313, 0
      %v5359 = vsel %vm4497, %v5314, 0
      %v5362 = vsel %vm4497, %v5315, 0
      %v5365 = vsel %vm4497, %v5316, 0
      %v5368 = vsel %vm4497, %v5317, 0
      %v5371 = vsel %vm4497, %v5318, 0
      %v5374 = vsel %vm4497, %v5319, 0
      %v5377 = vsel %vm4497, %v5320, 0
      %v5380 = vsel %vm4497, %v5321, 0
      %v5383 = vsel %vm4497, %v5322, 0
      %v5386 = vsel %vm4497, %v5323, 0
      %v5389 = vsel %vm4497, %v5324, 0
      %v5392 = vsel %vm4497, %v5325, 0
      %v5395 = vsel %vm4497, %v5326, 0
      %v5398 = vsel %vm4497, %v5327, 0
      %v5401 = vsel %vm4497, %v5328, 0
      %v5404 = vsel %vm4497, %v5329, 0
      %v5407 = vsel %vm4497, %v5330, 0
      %v5410 = vsel %vm4497, %v5331, 0
      %v5413 = vsel %vm4497, %v5332, 0
      %v5416 = vsel %vm4497, %v5333, 0
      %v5419 = vsel %vm4497, %v5334, 0
      %v5422 = vsel %vm4497, %v5335, 0
      %v5425 = vsel %vm4497, %v5336, 0
      %v5428 = vsel %vm4497, %v5337, 0
      %v5431 = vsel %vm4497, %v5338, 0
      %v5434 = vsel %vm4497, %v5339, 0
      %v5437 = vsel %vm4497, %v5340, 0
      %5439 = vmatprep.subr.mxu0 0.0
      %5440 = vmatpush1.msra.mxu0 %v5342
      %5441 = vmatprep.subr.mxu0 0.0
      %5442 = vmatpush1.msra.mxu0 0.0
      %5443 = vmatprep.subr.mxu0 0.0
      %5444 = vmatpush1.msra.mxu0 0.0
      %5445 = vmatprep.subr.mxu0 0.0
      %5446 = vmatpush1.msra.mxu0 0.0
      %5447 = vmatprep.subr.mxu0 0.0
      %5448 = vmatpush1.msra.mxu0 0.0
      %5449 = vmatprep.subr.mxu0 0.0
      %5450 = vmatpush1.msra.mxu0 0.0
      %5451 = vmatprep.subr.mxu0 0.0
      %5452 = vmatpush1.msra.mxu0 0.0
      %5453 = vmatprep.subr.mxu0 0.0
      %5454 = vmatpush1.msra.mxu0 0.0
      %5455 = vmatprep.subr.mxu0 0.0
      %5456 = vmatpush1.msra.mxu0 0.0
      %5457 = vmatprep.subr.mxu0 0.0
      %5458 = vmatpush1.msra.mxu0 0.0
      %5459 = vmatprep.subr.mxu0 0.0
      %5460 = vmatpush1.msra.mxu0 0.0
      %5461 = vmatprep.subr.mxu0 0.0
      %5462 = vmatpush1.msra.mxu0 0.0
      %5463 = vmatprep.subr.mxu0 0.0
      %5464 = vmatpush1.msra.mxu0 0.0
      %5465 = vmatprep.subr.mxu0 0.0
      %5466 = vmatpush1.msra.mxu0 0.0
      %5467 = vmatprep.subr.mxu0 0.0
      %5468 = vmatpush1.msra.mxu0 0.0
      %5469 = vmatprep.subr.mxu0 0.0
      %5470 = vmatpush1.msra.mxu0 0.0
      %5471 = vmatprep.subr.mxu0 0.0
      %5472 = vmatpush1.msra.mxu0 0.0
      %5473 = vmatprep.subr.mxu0 0.0
      %5474 = vmatpush1.msra.mxu0 0.0
      %5475 = vmatprep.subr.mxu0 0.0
      %5476 = vmatpush1.msra.mxu0 0.0
      %5477 = vmatprep.subr.mxu0 0.0
      %5478 = vmatpush1.msra.mxu0 0.0
      %5479 = vmatprep.subr.mxu0 0.0
      %5480 = vmatpush1.msra.mxu0 0.0
      %5481 = vmatprep.subr.mxu0 0.0
      %5482 = vmatpush1.msra.mxu0 0.0
      %5483 = vmatprep.subr.mxu0 0.0
      %5484 = vmatpush1.msra.mxu0 0.0
      %5485 = vmatprep.subr.mxu0 0.0
      %5486 = vmatpush1.msra.mxu0 0.0
      %5487 = vmatprep.subr.mxu0 0.0
      %5488 = vmatpush1.msra.mxu0 0.0
      %5489 = vmatprep.subr.mxu0 0.0
      %5490 = vmatpush1.msra.mxu0 0.0
      %5491 = vmatprep.subr.mxu0 0.0
      %5492 = vmatpush1.msra.mxu0 0.0
      %5493 = vmatprep.subr.mxu0 0.0
      %5494 = vmatpush1.msra.mxu0 0.0
      %5495 = vmatprep.subr.mxu0 0.0
      %5496 = vmatpush1.msra.mxu0 0.0
      %5497 = vmatprep.subr.mxu0 0.0
      %5498 = vmatpush1.msra.mxu0 0.0
      %5499 = vmatprep.subr.mxu0 0.0
      %5500 = vmatpush1.msra.mxu0 0.0
      %5501 = vmatprep.subr.mxu0 0.0
      %5502 = vmatpush1.msra.mxu0 0.0
      %5503 = vmatprep.mubr.f32.mxu0 0.0
      %5504 = vmatmul.mubr.f32.gmra.mrb[0].mxu0 %v5344
      %v5505 = vpop.f32.mrb[0].mxu0
      %v5506 = vadd.f32 0.0, %v5505
      %v5507 = vpop.f32.mrb[0].mxu0
      %5508 = vmatprep.mubr.f32.mxu0 0.0
      %5509 = vmatmul.mubr.f32.gmra.mrb[0].mxu0 %v5347
      %v5510 = vpop.f32.mrb[0].mxu0
      %v5511 = vadd.f32 0.0, %v5510
      %v5512 = vpop.f32.mrb[0].mxu0
      %5513 = vmatprep.mubr.f32.mxu0 0.0
      %5514 = vmatmul.mubr.f32.gmra.mrb[0].mxu0 %v5350
      %v5515 = vpop.f32.mrb[0].mxu0
      %v5516 = vadd.f32 0.0, %v5515
      %v5517 = vpop.f32.mrb[0].mxu0
      %5518 = vmatprep.mubr.f32.mxu0 0.0
      %5519 = vmatmul.mubr.f32.gmra.mrb[0].mxu0 %v5353
      %v5520 = vpop.f32.mrb[0].mxu0
      %v5521 = vadd.f32 0.0, %v5520
      %v5522 = vpop.f32.mrb[0].mxu0
      %5523 = vmatprep.mubr.f32.mxu0 0.0
      %5524 = vmatmul.mubr.f32.gmra.mrb[0].mxu0 %v5356
      %v5525 = vpop.f32.mrb[0].mxu0
      %v5526 = vadd.f32 0.0, %v5525
      %v5527 = vpop.f32.mrb[0].mxu0
      %5528 = vmatprep.mubr.f32.mxu0 0.0
      %5529 = vmatmul.mubr.f32.gmra.mrb[0].mxu0 %v5359
      %v5530 = vpop.f32.mrb[0].mxu0
      %v5531 = vadd.f32 0.0, %v5530
      %v5532 = vpop.f32.mrb[0].mxu0
      %5533 = vmatprep.mubr.f32.mxu0 0.0
      %5534 = vmatmul.mubr.f32.gmra.mrb[0].mxu0 %v5362
      %v5535 = vpop.f32.mrb[0].mxu0
      %v5536 = vadd.f32 0.0, %v5535
      %v5537 = vpop.f32.mrb[0].mxu0
      %5538 = vmatprep.mubr.f32.mxu0 0.0
      %5539 = vmatmul.mubr.f32.gmra.mrb[0].mxu0 %v5365
      %v5540 = vpop.f32.mrb[0].mxu0
      %v5541 = vadd.f32 0.0, %v5540
      %v5542 = vpop.f32.mrb[0].mxu0
      %5543 = vmatprep.mubr.f32.mxu0 0.0
      %5544 = vmatmul.mubr.f32.gmra.mrb[0].mxu0 %v5368
      %v5545 = vpop.f32.mrb[0].mxu0
      %v5546 = vadd.f32 0.0, %v5545
      %v5547 = vpop.f32.mrb[0].mxu0
      %5548 = vmatprep.mubr.f32.mxu0 0.0
      %5549 = vmatmul.mubr.f32.gmra.mrb[0].mxu0 %v5371
      %v5550 = vpop.f32.mrb[0].mxu0
      %v5551 = vadd.f32 0.0, %v5550
      %v5552 = vpop.f32.mrb[0].mxu0
      %5553 = vmatprep.mubr.f32.mxu0 0.0
      %5554 = vmatmul.mubr.f32.gmra.mrb[0].mxu0 %v5374
      %v5555 = vpop.f32.mrb[0].mxu0
      %v5556 = vadd.f32 0.0, %v5555
      %v5557 = vpop.f32.mrb[0].mxu0
      %5558 = vmatprep.mubr.f32.mxu0 0.0
      %5559 = vmatmul.mubr.f32.gmra.mrb[0].mxu0 %v5377
      %v5560 = vpop.f32.mrb[0].mxu0
      %v5561 = vadd.f32 0.0, %v5560
      %v5562 = vpop.f32.mrb[0].mxu0
      %5563 = vmatprep.mubr.f32.mxu0 0.0
      %5564 = vmatmul.mubr.f32.gmra.mrb[0].mxu0 %v5380
      %v5565 = vpop.f32.mrb[0].mxu0
      %v5566 = vadd.f32 0.0, %v5565
      %v5567 = vpop.f32.mrb[0].mxu0
      %5568 = vmatprep.mubr.f32.mxu0 0.0
      %5569 = vmatmul.mubr.f32.gmra.mrb[0].mxu0 %v5383
      %v5570 = vpop.f32.mrb[0].mxu0
      %v5571 = vadd.f32 0.0, %v5570
      %v5572 = vpop.f32.mrb[0].mxu0
      %5573 = vmatprep.mubr.f32.mxu0 0.0
      %5574 = vmatmul.mubr.f32.gmra.mrb[0].mxu0 %v5386
      %v5575 = vpop.f32.mrb[0].mxu0
      %v5576 = vadd.f32 0.0, %v5575
      %v5577 = vpop.f32.mrb[0].mxu0
      %5578 = vmatprep.mubr.f32.mxu0 0.0
      %5579 = vmatmul.mubr.f32.gmra.mrb[0].mxu0 %v5389
      %v5580 = vpop.f32.mrb[0].mxu0
      %v5581 = vadd.f32 0.0, %v5580
      %v5582 = vpop.f32.mrb[0].mxu0
      %5583 = vmatprep.mubr.f32.mxu0 0.0
      %5584 = vmatmul.mubr.f32.gmra.mrb[0].mxu0 %v5392
      %v5585 = vpop.f32.mrb[0].mxu0
      %v5586 = vadd.f32 0.0, %v5585
      %v5587 = vpop.f32.mrb[0].mxu0
      %5588 = vmatprep.mubr.f32.mxu0 0.0
      %5589 = vmatmul.mubr.f32.gmra.mrb[0].mxu0 %v5395
      %v5590 = vpop.f32.mrb[0].mxu0
      %v5591 = vadd.f32 0.0, %v5590
      %v5592 = vpop.f32.mrb[0].mxu0
      %5593 = vmatprep.mubr.f32.mxu0 0.0
      %5594 = vmatmul.mubr.f32.gmra.mrb[0].mxu0 %v5398
      %v5595 = vpop.f32.mrb[0].mxu0
      %v5596 = vadd.f32 0.0, %v5595
      %v5597 = vpop.f32.mrb[0].mxu0
      %5598 = vmatprep.mubr.f32.mxu0 0.0
      %5599 = vmatmul.mubr.f32.gmra.mrb[0].mxu0 %v5401
      %v5600 = vpop.f32.mrb[0].mxu0
      %v5601 = vadd.f32 0.0, %v5600
      %v5602 = vpop.f32.mrb[0].mxu0
      %5603 = vmatprep.mubr.f32.mxu0 0.0
      %5604 = vmatmul.mubr.f32.gmra.mrb[0].mxu0 %v5404
      %v5605 = vpop.f32.mrb[0].mxu0
      %v5606 = vadd.f32 0.0, %v5605
      %v5607 = vpop.f32.mrb[0].mxu0
      %5608 = vmatprep.mubr.f32.mxu0 0.0
      %5609 = vmatmul.mubr.f32.gmra.mrb[0].mxu0 %v5407
      %v5610 = vpop.f32.mrb[0].mxu0
      %v5611 = vadd.f32 0.0, %v5610
      %v5612 = vpop.f32.mrb[0].mxu0
      %5613 = vmatprep.mubr.f32.mxu0 0.0
      %5614 = vmatmul.mubr.f32.gmra.mrb[0].mxu0 %v5410
      %v5615 = vpop.f32.mrb[0].mxu0
      %v5616 = vadd.f32 0.0, %v5615
      %v5617 = vpop.f32.mrb[0].mxu0
      %5618 = vmatprep.mubr.f32.mxu0 0.0
      %5619 = vmatmul.mubr.f32.gmra.mrb[0].mxu0 %v5413
      %v5620 = vpop.f32.mrb[0].mxu0
      %v5621 = vadd.f32 0.0, %v5620
      %v5622 = vpop.f32.mrb[0].mxu0
      %5623 = vmatprep.mubr.f32.mxu0 0.0
      %5624 = vmatmul.mubr.f32.gmra.mrb[0].mxu0 %v5416
      %v5625 = vpop.f32.mrb[0].mxu0
      %v5626 = vadd.f32 0.0, %v5625
      %v5627 = vpop.f32.mrb[0].mxu0
      %5628 = vmatprep.mubr.f32.mxu0 0.0
      %5629 = vmatmul.mubr.f32.gmra.mrb[0].mxu0 %v5419
      %v5630 = vpop.f32.mrb[0].mxu0
      %v5631 = vadd.f32 0.0, %v5630
      %v5632 = vpop.f32.mrb[0].mxu0
      %5633 = vmatprep.mubr.f32.mxu0 0.0
      %5634 = vmatmul.mubr.f32.gmra.mrb[0].mxu0 %v5422
      %v5635 = vpop.f32.mrb[0].mxu0
      %v5636 = vadd.f32 0.0, %v5635
      %v5637 = vpop.f32.mrb[0].mxu0
      %5638 = vmatprep.mubr.f32.mxu0 0.0
      %5639 = vmatmul.mubr.f32.gmra.mrb[0].mxu0 %v5425
      %v5640 = vpop.f32.mrb[0].mxu0
      %v5641 = vadd.f32 0.0, %v5640
      %v5642 = vpop.f32.mrb[0].mxu0
      %5643 = vmatprep.mubr.f32.mxu0 0.0
      %5644 = vmatmul.mubr.f32.gmra.mrb[0].mxu0 %v5428
      %v5645 = vpop.f32.mrb[0].mxu0
      %v5646 = vadd.f32 0.0, %v5645
      %v5647 = vpop.f32.mrb[0].mxu0
      %5648 = vmatprep.mubr.f32.mxu0 0.0
      %5649 = vmatmul.mubr.f32.gmra.mrb[0].mxu0 %v5431
      %v5650 = vpop.f32.mrb[0].mxu0
      %v5651 = vadd.f32 0.0, %v5650
      %v5652 = vpop.f32.mrb[0].mxu0
      %5653 = vmatprep.mubr.f32.mxu0 0.0
      %5654 = vmatmul.mubr.f32.gmra.mrb[0].mxu0 %v5434
      %v5655 = vpop.f32.mrb[0].mxu0
      %v5656 = vadd.f32 0.0, %v5655
      %v5657 = vpop.f32.mrb[0].mxu0
      %5658 = vmatprep.mubr.f32.mxu0 0.0
      %5659 = vmatmul.mubr.f32.gmra.mrb[0].mxu0 %v5437
      %v5660 = vpop.f32.mrb[0].mxu0
      %v5661 = vadd.f32 0.0, %v5660
      %v5662 = vpop.f32.mrb[0].mxu0
      %5663 = vdwg.mxu0
      %v5664 = vadd.f32 %v5119, %v5506
      %v5665 = vadd.f32 %v5124, %v5511
      %v5666 = vadd.f32 %v5129, %v5516
      %v5667 = vadd.f32 %v5134, %v5521
      %v5668 = vadd.f32 %v5139, %v5526
      %v5669 = vadd.f32 %v5144, %v5531
      %v5670 = vadd.f32 %v5149, %v5536
      %v5671 = vadd.f32 %v5154, %v5541
      %v5672 = vadd.f32 %v5159, %v5546
      %v5673 = vadd.f32 %v5164, %v5551
      %v5674 = vadd.f32 %v5169, %v5556
      %v5675 = vadd.f32 %v5174, %v5561
      %v5676 = vadd.f32 %v5179, %v5566
      %v5677 = vadd.f32 %v5184, %v5571
      %v5678 = vadd.f32 %v5189, %v5576
      %v5679 = vadd.f32 %v5194, %v5581
      %v5680 = vadd.f32 %v5199, %v5586
      %v5681 = vadd.f32 %v5204, %v5591
      %v5682 = vadd.f32 %v5209, %v5596
      %v5683 = vadd.f32 %v5214, %v5601
      %v5684 = vadd.f32 %v5219, %v5606
      %v5685 = vadd.f32 %v5224, %v5611
      %v5686 = vadd.f32 %v5229, %v5616
      %v5687 = vadd.f32 %v5234, %v5621
      %v5688 = vadd.f32 %v5239, %v5626
      %v5689 = vadd.f32 %v5244, %v5631
      %v5690 = vadd.f32 %v5249, %v5636
      %v5691 = vadd.f32 %v5254, %v5641
      %v5692 = vadd.f32 %v5259, %v5646
      %v5693 = vadd.f32 %v5264, %v5651
      %v5694 = vadd.f32 %v5269, %v5656
      %v5695 = vadd.f32 %v5274, %v5661
      %v5696 = vld [vmem:[#allocation3 + $0x17] sm:$0xff]
      %v5697 = vld [vmem:[#allocation3 + $0x1f] sm:$0xff]
      %v5698 = vld [vmem:[#allocation3 + $0x27] sm:$0xff]
      %v5699 = vld [vmem:[#allocation3 + $0x2f] sm:$0xff]
      %v5700 = vld [vmem:[#allocation3 + $0x37] sm:$0xff]
      %v5701 = vld [vmem:[#allocation3 + $0x3f] sm:$0xff]
      %v5702 = vld [vmem:[#allocation3 + $0x47] sm:$0xff]
      %v5703 = vld [vmem:[#allocation3 + $0x4f] sm:$0xff]
      %v5704 = vld [vmem:[#allocation3 + $0x57] sm:$0xff]
      %v5705 = vld [vmem:[#allocation3 + $0x5f] sm:$0xff]
      %v5706 = vld [vmem:[#allocation3 + $0x67] sm:$0xff]
      %v5707 = vld [vmem:[#allocation3 + $0x6f] sm:$0xff]
      %v5708 = vld [vmem:[#allocation3 + $0x77] sm:$0xff]
      %v5709 = vld [vmem:[#allocation3 + $0x7f] sm:$0xff]
      %v5710 = vld [vmem:[#allocation3 + $0x87] sm:$0xff]
      %v5711 = vld [vmem:[#allocation3 + $0x8f] sm:$0xff]
      %v5712 = vld [vmem:[#allocation3 + $0x97] sm:$0xff]
      %v5713 = vld [vmem:[#allocation3 + $0x9f] sm:$0xff]
      %v5714 = vld [vmem:[#allocation3 + $0xa7] sm:$0xff]
      %v5715 = vld [vmem:[#allocation3 + $0xaf] sm:$0xff]
      %v5716 = vld [vmem:[#allocation3 + $0xb7] sm:$0xff]
      %v5717 = vld [vmem:[#allocation3 + $0xbf] sm:$0xff]
      %v5718 = vld [vmem:[#allocation3 + $0xc7] sm:$0xff]
      %v5719 = vld [vmem:[#allocation3 + $0xcf] sm:$0xff]
      %v5720 = vld [vmem:[#allocation3 + $0xd7] sm:$0xff]
      %v5721 = vld [vmem:[#allocation3 + $0xdf] sm:$0xff]
      %v5722 = vld [vmem:[#allocation3 + $0xe7] sm:$0xff]
      %v5723 = vld [vmem:[#allocation3 + $0xef] sm:$0xff]
      %v5724 = vld [vmem:[#allocation3 + $0xf7] sm:$0xff]
      %v5725 = vld [vmem:[#allocation3 + $0xff] sm:$0xff]
      %v5726 = vld [vmem:[#allocation3 + $0x107] sm:$0xff]
      %v5727 = vld [vmem:[#allocation3 + $0x10f] sm:$0xff]
      %v5728 = vmul.f32 %v5696, %v503
      %v5729 = vmul.f32 %v5697, %v508
      %v5730 = vmul.f32 %v5698, %v513
      %v5731 = vmul.f32 %v5699, %v518
      %v5732 = vmul.f32 %v5700, %v523
      %v5733 = vmul.f32 %v5701, %v528
      %v5734 = vmul.f32 %v5702, %v533
      %v5735 = vmul.f32 %v5703, %v538
      %v5736 = vmul.f32 %v5704, %v543
      %v5737 = vmul.f32 %v5705, %v548
      %v5738 = vmul.f32 %v5706, %v553
      %v5739 = vmul.f32 %v5707, %v558
      %v5740 = vmul.f32 %v5708, %v563
      %v5741 = vmul.f32 %v5709, %v568
      %v5742 = vmul.f32 %v5710, %v573
      %v5743 = vmul.f32 %v5711, %v578
      %v5744 = vmul.f32 %v5712, %v583
      %v5745 = vmul.f32 %v5713, %v588
      %v5746 = vmul.f32 %v5714, %v593
      %v5747 = vmul.f32 %v5715, %v598
      %v5748 = vmul.f32 %v5716, %v603
      %v5749 = vmul.f32 %v5717, %v608
      %v5750 = vmul.f32 %v5718, %v613
      %v5751 = vmul.f32 %v5719, %v618
      %v5752 = vmul.f32 %v5720, %v623
      %v5753 = vmul.f32 %v5721, %v628
      %v5754 = vmul.f32 %v5722, %v633
      %v5755 = vmul.f32 %v5723, %v638
      %v5756 = vmul.f32 %v5724, %v643
      %v5757 = vmul.f32 %v5725, %v648
      %v5758 = vmul.f32 %v5726, %v653
      %v5759 = vmul.f32 %v5727, %v658
      %s5760 = scalar_lea.vmem %s5, 24
      %v5761 = vld [vmem:[%s5760] sm:$0xff]
      %v5763 = vsel %vm4497, %v5728, 0
      %v5766 = vsel %vm4497, %v5729, 0
      %v5769 = vsel %vm4497, %v5730, 0
      %v5772 = vsel %vm4497, %v5731, 0
      %v5775 = vsel %vm4497, %v5732, 0
      %v5778 = vsel %vm4497, %v5733, 0
      %v5781 = vsel %vm4497, %v5734, 0
      %v5784 = vsel %vm4497, %v5735, 0
      %v5787 = vsel %vm4497, %v5736, 0
      %v5790 = vsel %vm4497, %v5737, 0
      %v5793 = vsel %vm4497, %v5738, 0
      %v5796 = vsel %vm4497, %v5739, 0
      %v5799 = vsel %vm4497, %v5740, 0
      %v5802 = vsel %vm4497, %v5741, 0
      %v5805 = vsel %vm4497, %v5742, 0
      %v5808 = vsel %vm4497, %v5743, 0
      %v5811 = vsel %vm4497, %v5744, 0
      %v5814 = vsel %vm4497, %v5745, 0
      %v5817 = vsel %vm4497, %v5746, 0
      %v5820 = vsel %vm4497, %v5747, 0
      %v5823 = vsel %vm4497, %v5748, 0
      %v5826 = vsel %vm4497, %v5749, 0
      %v5829 = vsel %vm4497, %v5750, 0
      %v5832 = vsel %vm4497, %v5751, 0
      %v5835 = vsel %vm4497, %v5752, 0
      %v5838 = vsel %vm4497, %v5753, 0
      %v5841 = vsel %vm4497, %v5754, 0
      %v5844 = vsel %vm4497, %v5755, 0
      %v5847 = vsel %vm4497, %v5756, 0
      %v5850 = vsel %vm4497, %v5757, 0
      %v5853 = vsel %vm4497, %v5758, 0
      %v5856 = vsel %vm4497, %v5759, 0
      %5858 = vmatprep.subr.mxu0 0.0
      %5859 = vmatpush1.msra.mxu0 %v5761
      %5860 = vmatprep.subr.mxu0 0.0
      %5861 = vmatpush1.msra.mxu0 0.0
      %5862 = vmatprep.subr.mxu0 0.0
      %5863 = vmatpush1.msra.mxu0 0.0
      %5864 = vmatprep.subr.mxu0 0.0
      %5865 = vmatpush1.msra.mxu0 0.0
      %5866 = vmatprep.subr.mxu0 0.0
      %5867 = vmatpush1.msra.mxu0 0.0
      %5868 = vmatprep.subr.mxu0 0.0
      %5869 = vmatpush1.msra.mxu0 0.0
      %5870 = vmatprep.subr.mxu0 0.0
      %5871 = vmatpush1.msra.mxu0 0.0
      %5872 = vmatprep.subr.mxu0 0.0
      %5873 = vmatpush1.msra.mxu0 0.0
      %5874 = vmatprep.subr.mxu0 0.0
      %5875 = vmatpush1.msra.mxu0 0.0
      %5876 = vmatprep.subr.mxu0 0.0
      %5877 = vmatpush1.msra.mxu0 0.0
      %5878 = vmatprep.subr.mxu0 0.0
      %5879 = vmatpush1.msra.mxu0 0.0
      %5880 = vmatprep.subr.mxu0 0.0
      %5881 = vmatpush1.msra.mxu0 0.0
      %5882 = vmatprep.subr.mxu0 0.0
      %5883 = vmatpush1.msra.mxu0 0.0
      %5884 = vmatprep.subr.mxu0 0.0
      %5885 = vmatpush1.msra.mxu0 0.0
      %5886 = vmatprep.subr.mxu0 0.0
      %5887 = vmatpush1.msra.mxu0 0.0
      %5888 = vmatprep.subr.mxu0 0.0
      %5889 = vmatpush1.msra.mxu0 0.0
      %5890 = vmatprep.subr.mxu0 0.0
      %5891 = vmatpush1.msra.mxu0 0.0
      %5892 = vmatprep.subr.mxu0 0.0
      %5893 = vmatpush1.msra.mxu0 0.0
      %5894 = vmatprep.subr.mxu0 0.0
      %5895 = vmatpush1.msra.mxu0 0.0
      %5896 = vmatprep.subr.mxu0 0.0
      %5897 = vmatpush1.msra.mxu0 0.0
      %5898 = vmatprep.subr.mxu0 0.0
      %5899 = vmatpush1.msra.mxu0 0.0
      %5900 = vmatprep.subr.mxu0 0.0
      %5901 = vmatpush1.msra.mxu0 0.0
      %5902 = vmatprep.subr.mxu0 0.0
      %5903 = vmatpush1.msra.mxu0 0.0
      %5904 = vmatprep.subr.mxu0 0.0
      %5905 = vmatpush1.msra.mxu0 0.0
      %5906 = vmatprep.subr.mxu0 0.0
      %5907 = vmatpush1.msra.mxu0 0.0
      %5908 = vmatprep.subr.mxu0 0.0
      %5909 = vmatpush1.msra.mxu0 0.0
      %5910 = vmatprep.subr.mxu0 0.0
      %5911 = vmatpush1.msra.mxu0 0.0
      %5912 = vmatprep.subr.mxu0 0.0
      %5913 = vmatpush1.msra.mxu0 0.0
      %5914 = vmatprep.subr.mxu0 0.0
      %5915 = vmatpush1.msra.mxu0 0.0
      %5916 = vmatprep.subr.mxu0 0.0
      %5917 = vmatpush1.msra.mxu0 0.0
      %5918 = vmatprep.subr.mxu0 0.0
      %5919 = vmatpush1.msra.mxu0 0.0
      %5920 = vmatprep.subr.mxu0 0.0
      %5921 = vmatpush1.msra.mxu0 0.0
      %5922 = vmatprep.mubr.f32.mxu0 0.0
      %5923 = vmatmul.mubr.f32.gmra.mrb[0].mxu0 %v5763
      %v5924 = vpop.f32.mrb[0].mxu0
      %v5925 = vadd.f32 0.0, %v5924
      %v5926 = vpop.f32.mrb[0].mxu0
      %5927 = vmatprep.mubr.f32.mxu0 0.0
      %5928 = vmatmul.mubr.f32.gmra.mrb[0].mxu0 %v5766
      %v5929 = vpop.f32.mrb[0].mxu0
      %v5930 = vadd.f32 0.0, %v5929
      %v5931 = vpop.f32.mrb[0].mxu0
      %5932 = vmatprep.mubr.f32.mxu0 0.0
      %5933 = vmatmul.mubr.f32.gmra.mrb[0].mxu0 %v5769
      %v5934 = vpop.f32.mrb[0].mxu0
      %v5935 = vadd.f32 0.0, %v5934
      %v5936 = vpop.f32.mrb[0].mxu0
      %5937 = vmatprep.mubr.f32.mxu0 0.0
      %5938 = vmatmul.mubr.f32.gmra.mrb[0].mxu0 %v5772
      %v5939 = vpop.f32.mrb[0].mxu0
      %v5940 = vadd.f32 0.0, %v5939
      %v5941 = vpop.f32.mrb[0].mxu0
      %5942 = vmatprep.mubr.f32.mxu0 0.0
      %5943 = vmatmul.mubr.f32.gmra.mrb[0].mxu0 %v5775
      %v5944 = vpop.f32.mrb[0].mxu0
      %v5945 = vadd.f32 0.0, %v5944
      %v5946 = vpop.f32.mrb[0].mxu0
      %5947 = vmatprep.mubr.f32.mxu0 0.0
      %5948 = vmatmul.mubr.f32.gmra.mrb[0].mxu0 %v5778
      %v5949 = vpop.f32.mrb[0].mxu0
      %v5950 = vadd.f32 0.0, %v5949
      %v5951 = vpop.f32.mrb[0].mxu0
      %5952 = vmatprep.mubr.f32.mxu0 0.0
      %5953 = vmatmul.mubr.f32.gmra.mrb[0].mxu0 %v5781
      %v5954 = vpop.f32.mrb[0].mxu0
      %v5955 = vadd.f32 0.0, %v5954
      %v5956 = vpop.f32.mrb[0].mxu0
      %5957 = vmatprep.mubr.f32.mxu0 0.0
      %5958 = vmatmul.mubr.f32.gmra.mrb[0].mxu0 %v5784
      %v5959 = vpop.f32.mrb[0].mxu0
      %v5960 = vadd.f32 0.0, %v5959
      %v5961 = vpop.f32.mrb[0].mxu0
      %5962 = vmatprep.mubr.f32.mxu0 0.0
      %5963 = vmatmul.mubr.f32.gmra.mrb[0].mxu0 %v5787
      %v5964 = vpop.f32.mrb[0].mxu0
      %v5965 = vadd.f32 0.0, %v5964
      %v5966 = vpop.f32.mrb[0].mxu0
      %5967 = vmatprep.mubr.f32.mxu0 0.0
      %5968 = vmatmul.mubr.f32.gmra.mrb[0].mxu0 %v5790
      %v5969 = vpop.f32.mrb[0].mxu0
      %v5970 = vadd.f32 0.0, %v5969
      %v5971 = vpop.f32.mrb[0].mxu0
      %5972 = vmatprep.mubr.f32.mxu0 0.0
      %5973 = vmatmul.mubr.f32.gmra.mrb[0].mxu0 %v5793
      %v5974 = vpop.f32.mrb[0].mxu0
      %v5975 = vadd.f32 0.0, %v5974
      %v5976 = vpop.f32.mrb[0].mxu0
      %5977 = vmatprep.mubr.f32.mxu0 0.0
      %5978 = vmatmul.mubr.f32.gmra.mrb[0].mxu0 %v5796
      %v5979 = vpop.f32.mrb[0].mxu0
      %v5980 = vadd.f32 0.0, %v5979
      %v5981 = vpop.f32.mrb[0].mxu0
      %5982 = vmatprep.mubr.f32.mxu0 0.0
      %5983 = vmatmul.mubr.f32.gmra.mrb[0].mxu0 %v5799
      %v5984 = vpop.f32.mrb[0].mxu0
      %v5985 = vadd.f32 0.0, %v5984
      %v5986 = vpop.f32.mrb[0].mxu0
      %5987 = vmatprep.mubr.f32.mxu0 0.0
      %5988 = vmatmul.mubr.f32.gmra.mrb[0].mxu0 %v5802
      %v5989 = vpop.f32.mrb[0].mxu0
      %v5990 = vadd.f32 0.0, %v5989
      %v5991 = vpop.f32.mrb[0].mxu0
      %5992 = vmatprep.mubr.f32.mxu0 0.0
      %5993 = vmatmul.mubr.f32.gmra.mrb[0].mxu0 %v5805
      %v5994 = vpop.f32.mrb[0].mxu0
      %v5995 = vadd.f32 0.0, %v5994
      %v5996 = vpop.f32.mrb[0].mxu0
      %5997 = vmatprep.mubr.f32.mxu0 0.0
      %5998 = vmatmul.mubr.f32.gmra.mrb[0].mxu0 %v5808
      %v5999 = vpop.f32.mrb[0].mxu0
      %v6000 = vadd.f32 0.0, %v5999
      %v6001 = vpop.f32.mrb[0].mxu0
      %6002 = vmatprep.mubr.f32.mxu0 0.0
      %6003 = vmatmul.mubr.f32.gmra.mrb[0].mxu0 %v5811
      %v6004 = vpop.f32.mrb[0].mxu0
      %v6005 = vadd.f32 0.0, %v6004
      %v6006 = vpop.f32.mrb[0].mxu0
      %6007 = vmatprep.mubr.f32.mxu0 0.0
      %6008 = vmatmul.mubr.f32.gmra.mrb[0].mxu0 %v5814
      %v6009 = vpop.f32.mrb[0].mxu0
      %v6010 = vadd.f32 0.0, %v6009
      %v6011 = vpop.f32.mrb[0].mxu0
      %6012 = vmatprep.mubr.f32.mxu0 0.0
      %6013 = vmatmul.mubr.f32.gmra.mrb[0].mxu0 %v5817
      %v6014 = vpop.f32.mrb[0].mxu0
      %v6015 = vadd.f32 0.0, %v6014
      %v6016 = vpop.f32.mrb[0].mxu0
      %6017 = vmatprep.mubr.f32.mxu0 0.0
      %6018 = vmatmul.mubr.f32.gmra.mrb[0].mxu0 %v5820
      %v6019 = vpop.f32.mrb[0].mxu0
      %v6020 = vadd.f32 0.0, %v6019
      %v6021 = vpop.f32.mrb[0].mxu0
      %6022 = vmatprep.mubr.f32.mxu0 0.0
      %6023 = vmatmul.mubr.f32.gmra.mrb[0].mxu0 %v5823
      %v6024 = vpop.f32.mrb[0].mxu0
      %v6025 = vadd.f32 0.0, %v6024
      %v6026 = vpop.f32.mrb[0].mxu0
      %6027 = vmatprep.mubr.f32.mxu0 0.0
      %6028 = vmatmul.mubr.f32.gmra.mrb[0].mxu0 %v5826
      %v6029 = vpop.f32.mrb[0].mxu0
      %v6030 = vadd.f32 0.0, %v6029
      %v6031 = vpop.f32.mrb[0].mxu0
      %6032 = vmatprep.mubr.f32.mxu0 0.0
      %6033 = vmatmul.mubr.f32.gmra.mrb[0].mxu0 %v5829
      %v6034 = vpop.f32.mrb[0].mxu0
      %v6035 = vadd.f32 0.0, %v6034
      %v6036 = vpop.f32.mrb[0].mxu0
      %6037 = vmatprep.mubr.f32.mxu0 0.0
      %6038 = vmatmul.mubr.f32.gmra.mrb[0].mxu0 %v5832
      %v6039 = vpop.f32.mrb[0].mxu0
      %v6040 = vadd.f32 0.0, %v6039
      %v6041 = vpop.f32.mrb[0].mxu0
      %6042 = vmatprep.mubr.f32.mxu0 0.0
      %6043 = vmatmul.mubr.f32.gmra.mrb[0].mxu0 %v5835
      %v6044 = vpop.f32.mrb[0].mxu0
      %v6045 = vadd.f32 0.0, %v6044
      %v6046 = vpop.f32.mrb[0].mxu0
      %6047 = vmatprep.mubr.f32.mxu0 0.0
      %6048 = vmatmul.mubr.f32.gmra.mrb[0].mxu0 %v5838
      %v6049 = vpop.f32.mrb[0].mxu0
      %v6050 = vadd.f32 0.0, %v6049
      %v6051 = vpop.f32.mrb[0].mxu0
      %6052 = vmatprep.mubr.f32.mxu0 0.0
      %6053 = vmatmul.mubr.f32.gmra.mrb[0].mxu0 %v5841
      %v6054 = vpop.f32.mrb[0].mxu0
      %v6055 = vadd.f32 0.0, %v6054
      %v6056 = vpop.f32.mrb[0].mxu0
      %6057 = vmatprep.mubr.f32.mxu0 0.0
      %6058 = vmatmul.mubr.f32.gmra.mrb[0].mxu0 %v5844
      %v6059 = vpop.f32.mrb[0].mxu0
      %v6060 = vadd.f32 0.0, %v6059
      %v6061 = vpop.f32.mrb[0].mxu0
      %6062 = vmatprep.mubr.f32.mxu0 0.0
      %6063 = vmatmul.mubr.f32.gmra.mrb[0].mxu0 %v5847
      %v6064 = vpop.f32.mrb[0].mxu0
      %v6065 = vadd.f32 0.0, %v6064
      %v6066 = vpop.f32.mrb[0].mxu0
      %6067 = vmatprep.mubr.f32.mxu0 0.0
      %6068 = vmatmul.mubr.f32.gmra.mrb[0].mxu0 %v5850
      %v6069 = vpop.f32.mrb[0].mxu0
      %v6070 = vadd.f32 0.0, %v6069
      %v6071 = vpop.f32.mrb[0].mxu0
      %6072 = vmatprep.mubr.f32.mxu0 0.0
      %6073 = vmatmul.mubr.f32.gmra.mrb[0].mxu0 %v5853
      %v6074 = vpop.f32.mrb[0].mxu0
      %v6075 = vadd.f32 0.0, %v6074
      %v6076 = vpop.f32.mrb[0].mxu0
      %6077 = vmatprep.mubr.f32.mxu0 0.0
      %6078 = vmatmul.mubr.f32.gmra.mrb[0].mxu0 %v5856
      %v6079 = vpop.f32.mrb[0].mxu0
      %v6080 = vadd.f32 0.0, %v6079
      %v6081 = vpop.f32.mrb[0].mxu0
      %6082 = vdwg.mxu0
      %v6083 = vadd.f32 %v5664, %v5925
      %v6084 = vadd.f32 %v5665, %v5930
      %v6085 = vadd.f32 %v5666, %v5935
      %v6086 = vadd.f32 %v5667, %v5940
      %v6087 = vadd.f32 %v5668, %v5945
      %v6088 = vadd.f32 %v5669, %v5950
      %v6089 = vadd.f32 %v5670, %v5955
      %v6090 = vadd.f32 %v5671, %v5960
      %v6091 = vadd.f32 %v5672, %v5965
      %v6092 = vadd.f32 %v5673, %v5970
      %v6093 = vadd.f32 %v5674, %v5975
      %v6094 = vadd.f32 %v5675, %v5980
      %v6095 = vadd.f32 %v5676, %v5985
      %v6096 = vadd.f32 %v5677, %v5990
      %v6097 = vadd.f32 %v5678, %v5995
      %v6098 = vadd.f32 %v5679, %v6000
      %v6099 = vadd.f32 %v5680, %v6005
      %v6100 = vadd.f32 %v5681, %v6010
      %v6101 = vadd.f32 %v5682, %v6015
      %v6102 = vadd.f32 %v5683, %v6020
      %v6103 = vadd.f32 %v5684, %v6025
      %v6104 = vadd.f32 %v5685, %v6030
      %v6105 = vadd.f32 %v5686, %v6035
      %v6106 = vadd.f32 %v5687, %v6040
      %v6107 = vadd.f32 %v5688, %v6045
      %v6108 = vadd.f32 %v5689, %v6050
      %v6109 = vadd.f32 %v5690, %v6055
      %v6110 = vadd.f32 %v5691, %v6060
      %v6111 = vadd.f32 %v5692, %v6065
      %v6112 = vadd.f32 %v5693, %v6070
      %v6113 = vadd.f32 %v5694, %v6075
      %v6114 = vadd.f32 %v5695, %v6080
      %v6115 = vld [vmem:[#allocation3 + $0x18] sm:$0xff]
      %v6116 = vld [vmem:[#allocation3 + $0x20] sm:$0xff]
      %v6117 = vld [vmem:[#allocation3 + $0x28] sm:$0xff]
      %v6118 = vld [vmem:[#allocation3 + $0x30] sm:$0xff]
      %v6119 = vld [vmem:[#allocation3 + $0x38] sm:$0xff]
      %v6120 = vld [vmem:[#allocation3 + $0x40] sm:$0xff]
      %v6121 = vld [vmem:[#allocation3 + $0x48] sm:$0xff]
      %v6122 = vld [vmem:[#allocation3 + $0x50] sm:$0xff]
      %v6123 = vld [vmem:[#allocation3 + $0x58] sm:$0xff]
      %v6124 = vld [vmem:[#allocation3 + $0x60] sm:$0xff]
      %v6125 = vld [vmem:[#allocation3 + $0x68] sm:$0xff]
      %v6126 = vld [vmem:[#allocation3 + $0x70] sm:$0xff]
      %v6127 = vld [vmem:[#allocation3 + $0x78] sm:$0xff]
      %v6128 = vld [vmem:[#allocation3 + $0x80] sm:$0xff]
      %v6129 = vld [vmem:[#allocation3 + $0x88] sm:$0xff]
      %v6130 = vld [vmem:[#allocation3 + $0x90] sm:$0xff]
      %v6131 = vld [vmem:[#allocation3 + $0x98] sm:$0xff]
      %v6132 = vld [vmem:[#allocation3 + $0xa0] sm:$0xff]
      %v6133 = vld [vmem:[#allocation3 + $0xa8] sm:$0xff]
      %v6134 = vld [vmem:[#allocation3 + $0xb0] sm:$0xff]
      %v6135 = vld [vmem:[#allocation3 + $0xb8] sm:$0xff]
      %v6136 = vld [vmem:[#allocation3 + $0xc0] sm:$0xff]
      %v6137 = vld [vmem:[#allocation3 + $0xc8] sm:$0xff]
      %v6138 = vld [vmem:[#allocation3 + $0xd0] sm:$0xff]
      %v6139 = vld [vmem:[#allocation3 + $0xd8] sm:$0xff]
      %v6140 = vld [vmem:[#allocation3 + $0xe0] sm:$0xff]
      %v6141 = vld [vmem:[#allocation3 + $0xe8] sm:$0xff]
      %v6142 = vld [vmem:[#allocation3 + $0xf0] sm:$0xff]
      %v6143 = vld [vmem:[#allocation3 + $0xf8] sm:$0xff]
      %v6144 = vld [vmem:[#allocation3 + $0x100] sm:$0xff]
      %v6145 = vld [vmem:[#allocation3 + $0x108] sm:$0xff]
      %v6146 = vld [vmem:[#allocation3 + $0x110] sm:$0xff]
      %s6147 = scalar_lea.vmem %s5, 32
      %v6148 = vld [vmem:[%s6147] sm:$0xff]
      %v6150 = vsel %vm4497, %v6115, 0
      %v6153 = vsel %vm4497, %v6116, 0
      %v6156 = vsel %vm4497, %v6117, 0
      %v6159 = vsel %vm4497, %v6118, 0
      %v6162 = vsel %vm4497, %v6119, 0
      %v6165 = vsel %vm4497, %v6120, 0
      %v6168 = vsel %vm4497, %v6121, 0
      %v6171 = vsel %vm4497, %v6122, 0
      %v6174 = vsel %vm4497, %v6123, 0
      %v6177 = vsel %vm4497, %v6124, 0
      %v6180 = vsel %vm4497, %v6125, 0
      %v6183 = vsel %vm4497, %v6126, 0
      %v6186 = vsel %vm4497, %v6127, 0
      %v6189 = vsel %vm4497, %v6128, 0
      %v6192 = vsel %vm4497, %v6129, 0
      %v6195 = vsel %vm4497, %v6130, 0
      %v6198 = vsel %vm4497, %v6131, 0
      %v6201 = vsel %vm4497, %v6132, 0
      %v6204 = vsel %vm4497, %v6133, 0
      %v6207 = vsel %vm4497, %v6134, 0
      %v6210 = vsel %vm4497, %v6135, 0
      %v6213 = vsel %vm4497, %v6136, 0
      %v6216 = vsel %vm4497, %v6137, 0
      %v6219 = vsel %vm4497, %v6138, 0
      %v6222 = vsel %vm4497, %v6139, 0
      %v6225 = vsel %vm4497, %v6140, 0
      %v6228 = vsel %vm4497, %v6141, 0
      %v6231 = vsel %vm4497, %v6142, 0
      %v6234 = vsel %vm4497, %v6143, 0
      %v6237 = vsel %vm4497, %v6144, 0
      %v6240 = vsel %vm4497, %v6145, 0
      %v6243 = vsel %vm4497, %v6146, 0
      %6245 = vmatprep.subr.mxu0 0.0
      %6246 = vmatpush1.msra.mxu0 %v6148
      %6247 = vmatprep.subr.mxu0 0.0
      %6248 = vmatpush1.msra.mxu0 0.0
      %6249 = vmatprep.subr.mxu0 0.0
      %6250 = vmatpush1.msra.mxu0 0.0
      %6251 = vmatprep.subr.mxu0 0.0
      %6252 = vmatpush1.msra.mxu0 0.0
      %6253 = vmatprep.subr.mxu0 0.0
      %6254 = vmatpush1.msra.mxu0 0.0
      %6255 = vmatprep.subr.mxu0 0.0
      %6256 = vmatpush1.msra.mxu0 0.0
      %6257 = vmatprep.subr.mxu0 0.0
      %6258 = vmatpush1.msra.mxu0 0.0
      %6259 = vmatprep.subr.mxu0 0.0
      %6260 = vmatpush1.msra.mxu0 0.0
      %6261 = vmatprep.subr.mxu0 0.0
      %6262 = vmatpush1.msra.mxu0 0.0
      %6263 = vmatprep.subr.mxu0 0.0
      %6264 = vmatpush1.msra.mxu0 0.0
      %6265 = vmatprep.subr.mxu0 0.0
      %6266 = vmatpush1.msra.mxu0 0.0
      %6267 = vmatprep.subr.mxu0 0.0
      %6268 = vmatpush1.msra.mxu0 0.0
      %6269 = vmatprep.subr.mxu0 0.0
      %6270 = vmatpush1.msra.mxu0 0.0
      %6271 = vmatprep.subr.mxu0 0.0
      %6272 = vmatpush1.msra.mxu0 0.0
      %6273 = vmatprep.subr.mxu0 0.0
      %6274 = vmatpush1.msra.mxu0 0.0
      %6275 = vmatprep.subr.mxu0 0.0
      %6276 = vmatpush1.msra.mxu0 0.0
      %6277 = vmatprep.subr.mxu0 0.0
      %6278 = vmatpush1.msra.mxu0 0.0
      %6279 = vmatprep.subr.mxu0 0.0
      %6280 = vmatpush1.msra.mxu0 0.0
      %6281 = vmatprep.subr.mxu0 0.0
      %6282 = vmatpush1.msra.mxu0 0.0
      %6283 = vmatprep.subr.mxu0 0.0
      %6284 = vmatpush1.msra.mxu0 0.0
      %6285 = vmatprep.subr.mxu0 0.0
      %6286 = vmatpush1.msra.mxu0 0.0
      %6287 = vmatprep.subr.mxu0 0.0
      %6288 = vmatpush1.msra.mxu0 0.0
      %6289 = vmatprep.subr.mxu0 0.0
      %6290 = vmatpush1.msra.mxu0 0.0
      %6291 = vmatprep.subr.mxu0 0.0
      %6292 = vmatpush1.msra.mxu0 0.0
      %6293 = vmatprep.subr.mxu0 0.0
      %6294 = vmatpush1.msra.mxu0 0.0
      %6295 = vmatprep.subr.mxu0 0.0
      %6296 = vmatpush1.msra.mxu0 0.0
      %6297 = vmatprep.subr.mxu0 0.0
      %6298 = vmatpush1.msra.mxu0 0.0
      %6299 = vmatprep.subr.mxu0 0.0
      %6300 = vmatpush1.msra.mxu0 0.0
      %6301 = vmatprep.subr.mxu0 0.0
      %6302 = vmatpush1.msra.mxu0 0.0
      %6303 = vmatprep.subr.mxu0 0.0
      %6304 = vmatpush1.msra.mxu0 0.0
      %6305 = vmatprep.subr.mxu0 0.0
      %6306 = vmatpush1.msra.mxu0 0.0
      %6307 = vmatprep.subr.mxu0 0.0
      %6308 = vmatpush1.msra.mxu0 0.0
      %6309 = vmatprep.mubr.f32.mxu0 0.0
      %6310 = vmatmul.mubr.f32.gmra.mrb[0].mxu0 %v6150
      %v6311 = vpop.f32.mrb[0].mxu0
      %v6312 = vadd.f32 0.0, %v6311
      %v6313 = vpop.f32.mrb[0].mxu0
      %6314 = vmatprep.mubr.f32.mxu0 0.0
      %6315 = vmatmul.mubr.f32.gmra.mrb[0].mxu0 %v6153
      %v6316 = vpop.f32.mrb[0].mxu0
      %v6317 = vadd.f32 0.0, %v6316
      %v6318 = vpop.f32.mrb[0].mxu0
      %6319 = vmatprep.mubr.f32.mxu0 0.0
      %6320 = vmatmul.mubr.f32.gmra.mrb[0].mxu0 %v6156
      %v6321 = vpop.f32.mrb[0].mxu0
      %v6322 = vadd.f32 0.0, %v6321
      %v6323 = vpop.f32.mrb[0].mxu0
      %6324 = vmatprep.mubr.f32.mxu0 0.0
      %6325 = vmatmul.mubr.f32.gmra.mrb[0].mxu0 %v6159
      %v6326 = vpop.f32.mrb[0].mxu0
      %v6327 = vadd.f32 0.0, %v6326
      %v6328 = vpop.f32.mrb[0].mxu0
      %6329 = vmatprep.mubr.f32.mxu0 0.0
      %6330 = vmatmul.mubr.f32.gmra.mrb[0].mxu0 %v6162
      %v6331 = vpop.f32.mrb[0].mxu0
      %v6332 = vadd.f32 0.0, %v6331
      %v6333 = vpop.f32.mrb[0].mxu0
      %6334 = vmatprep.mubr.f32.mxu0 0.0
      %6335 = vmatmul.mubr.f32.gmra.mrb[0].mxu0 %v6165
      %v6336 = vpop.f32.mrb[0].mxu0
      %v6337 = vadd.f32 0.0, %v6336
      %v6338 = vpop.f32.mrb[0].mxu0
      %6339 = vmatprep.mubr.f32.mxu0 0.0
      %6340 = vmatmul.mubr.f32.gmra.mrb[0].mxu0 %v6168
      %v6341 = vpop.f32.mrb[0].mxu0
      %v6342 = vadd.f32 0.0, %v6341
      %v6343 = vpop.f32.mrb[0].mxu0
      %6344 = vmatprep.mubr.f32.mxu0 0.0
      %6345 = vmatmul.mubr.f32.gmra.mrb[0].mxu0 %v6171
      %v6346 = vpop.f32.mrb[0].mxu0
      %v6347 = vadd.f32 0.0, %v6346
      %v6348 = vpop.f32.mrb[0].mxu0
      %6349 = vmatprep.mubr.f32.mxu0 0.0
      %6350 = vmatmul.mubr.f32.gmra.mrb[0].mxu0 %v6174
      %v6351 = vpop.f32.mrb[0].mxu0
      %v6352 = vadd.f32 0.0, %v6351
      %v6353 = vpop.f32.mrb[0].mxu0
      %6354 = vmatprep.mubr.f32.mxu0 0.0
      %6355 = vmatmul.mubr.f32.gmra.mrb[0].mxu0 %v6177
      %v6356 = vpop.f32.mrb[0].mxu0
      %v6357 = vadd.f32 0.0, %v6356
      %v6358 = vpop.f32.mrb[0].mxu0
      %6359 = vmatprep.mubr.f32.mxu0 0.0
      %6360 = vmatmul.mubr.f32.gmra.mrb[0].mxu0 %v6180
      %v6361 = vpop.f32.mrb[0].mxu0
      %v6362 = vadd.f32 0.0, %v6361
      %v6363 = vpop.f32.mrb[0].mxu0
      %6364 = vmatprep.mubr.f32.mxu0 0.0
      %6365 = vmatmul.mubr.f32.gmra.mrb[0].mxu0 %v6183
      %v6366 = vpop.f32.mrb[0].mxu0
      %v6367 = vadd.f32 0.0, %v6366
      %v6368 = vpop.f32.mrb[0].mxu0
      %6369 = vmatprep.mubr.f32.mxu0 0.0
      %6370 = vmatmul.mubr.f32.gmra.mrb[0].mxu0 %v6186
      %v6371 = vpop.f32.mrb[0].mxu0
      %v6372 = vadd.f32 0.0, %v6371
      %v6373 = vpop.f32.mrb[0].mxu0
      %6374 = vmatprep.mubr.f32.mxu0 0.0
      %6375 = vmatmul.mubr.f32.gmra.mrb[0].mxu0 %v6189
      %v6376 = vpop.f32.mrb[0].mxu0
      %v6377 = vadd.f32 0.0, %v6376
      %v6378 = vpop.f32.mrb[0].mxu0
      %6379 = vmatprep.mubr.f32.mxu0 0.0
      %6380 = vmatmul.mubr.f32.gmra.mrb[0].mxu0 %v6192
      %v6381 = vpop.f32.mrb[0].mxu0
      %v6382 = vadd.f32 0.0, %v6381
      %v6383 = vpop.f32.mrb[0].mxu0
      %6384 = vmatprep.mubr.f32.mxu0 0.0
      %6385 = vmatmul.mubr.f32.gmra.mrb[0].mxu0 %v6195
      %v6386 = vpop.f32.mrb[0].mxu0
      %v6387 = vadd.f32 0.0, %v6386
      %v6388 = vpop.f32.mrb[0].mxu0
      %6389 = vmatprep.mubr.f32.mxu0 0.0
      %6390 = vmatmul.mubr.f32.gmra.mrb[0].mxu0 %v6198
      %v6391 = vpop.f32.mrb[0].mxu0
      %v6392 = vadd.f32 0.0, %v6391
      %v6393 = vpop.f32.mrb[0].mxu0
      %6394 = vmatprep.mubr.f32.mxu0 0.0
      %6395 = vmatmul.mubr.f32.gmra.mrb[0].mxu0 %v6201
      %v6396 = vpop.f32.mrb[0].mxu0
      %v6397 = vadd.f32 0.0, %v6396
      %v6398 = vpop.f32.mrb[0].mxu0
      %6399 = vmatprep.mubr.f32.mxu0 0.0
      %6400 = vmatmul.mubr.f32.gmra.mrb[0].mxu0 %v6204
      %v6401 = vpop.f32.mrb[0].mxu0
      %v6402 = vadd.f32 0.0, %v6401
      %v6403 = vpop.f32.mrb[0].mxu0
      %6404 = vmatprep.mubr.f32.mxu0 0.0
      %6405 = vmatmul.mubr.f32.gmra.mrb[0].mxu0 %v6207
      %v6406 = vpop.f32.mrb[0].mxu0
      %v6407 = vadd.f32 0.0, %v6406
      %v6408 = vpop.f32.mrb[0].mxu0
      %6409 = vmatprep.mubr.f32.mxu0 0.0
      %6410 = vmatmul.mubr.f32.gmra.mrb[0].mxu0 %v6210
      %v6411 = vpop.f32.mrb[0].mxu0
      %v6412 = vadd.f32 0.0, %v6411
      %v6413 = vpop.f32.mrb[0].mxu0
      %6414 = vmatprep.mubr.f32.mxu0 0.0
      %6415 = vmatmul.mubr.f32.gmra.mrb[0].mxu0 %v6213
      %v6416 = vpop.f32.mrb[0].mxu0
      %v6417 = vadd.f32 0.0, %v6416
      %v6418 = vpop.f32.mrb[0].mxu0
      %6419 = vmatprep.mubr.f32.mxu0 0.0
      %6420 = vmatmul.mubr.f32.gmra.mrb[0].mxu0 %v6216
      %v6421 = vpop.f32.mrb[0].mxu0
      %v6422 = vadd.f32 0.0, %v6421
      %v6423 = vpop.f32.mrb[0].mxu0
      %6424 = vmatprep.mubr.f32.mxu0 0.0
      %6425 = vmatmul.mubr.f32.gmra.mrb[0].mxu0 %v6219
      %v6426 = vpop.f32.mrb[0].mxu0
      %v6427 = vadd.f32 0.0, %v6426
      %v6428 = vpop.f32.mrb[0].mxu0
      %6429 = vmatprep.mubr.f32.mxu0 0.0
      %6430 = vmatmul.mubr.f32.gmra.mrb[0].mxu0 %v6222
      %v6431 = vpop.f32.mrb[0].mxu0
      %v6432 = vadd.f32 0.0, %v6431
      %v6433 = vpop.f32.mrb[0].mxu0
      %6434 = vmatprep.mubr.f32.mxu0 0.0
      %6435 = vmatmul.mubr.f32.gmra.mrb[0].mxu0 %v6225
      %v6436 = vpop.f32.mrb[0].mxu0
      %v6437 = vadd.f32 0.0, %v6436
      %v6438 = vpop.f32.mrb[0].mxu0
      %6439 = vmatprep.mubr.f32.mxu0 0.0
      %6440 = vmatmul.mubr.f32.gmra.mrb[0].mxu0 %v6228
      %v6441 = vpop.f32.mrb[0].mxu0
      %v6442 = vadd.f32 0.0, %v6441
      %v6443 = vpop.f32.mrb[0].mxu0
      %6444 = vmatprep.mubr.f32.mxu0 0.0
      %6445 = vmatmul.mubr.f32.gmra.mrb[0].mxu0 %v6231
      %v6446 = vpop.f32.mrb[0].mxu0
      %v6447 = vadd.f32 0.0, %v6446
      %v6448 = vpop.f32.mrb[0].mxu0
      %6449 = vmatprep.mubr.f32.mxu0 0.0
      %6450 = vmatmul.mubr.f32.gmra.mrb[0].mxu0 %v6234
      %v6451 = vpop.f32.mrb[0].mxu0
      %v6452 = vadd.f32 0.0, %v6451
      %v6453 = vpop.f32.mrb[0].mxu0
      %6454 = vmatprep.mubr.f32.mxu0 0.0
      %6455 = vmatmul.mubr.f32.gmra.mrb[0].mxu0 %v6237
      %v6456 = vpop.f32.mrb[0].mxu0
      %v6457 = vadd.f32 0.0, %v6456
      %v6458 = vpop.f32.mrb[0].mxu0
      %6459 = vmatprep.mubr.f32.mxu0 0.0
      %6460 = vmatmul.mubr.f32.gmra.mrb[0].mxu0 %v6240
      %v6461 = vpop.f32.mrb[0].mxu0
      %v6462 = vadd.f32 0.0, %v6461
      %v6463 = vpop.f32.mrb[0].mxu0
      %6464 = vmatprep.mubr.f32.mxu0 0.0
      %6465 = vmatmul.mubr.f32.gmra.mrb[0].mxu0 %v6243
      %v6466 = vpop.f32.mrb[0].mxu0
      %v6467 = vadd.f32 0.0, %v6466
      %v6468 = vpop.f32.mrb[0].mxu0
      %6469 = vdwg.mxu0
      %v6470 = vadd.f32 %v6083, %v6312
      %v6471 = vadd.f32 %v6084, %v6317
      %v6472 = vadd.f32 %v6085, %v6322
      %v6473 = vadd.f32 %v6086, %v6327
      %v6474 = vadd.f32 %v6087, %v6332
      %v6475 = vadd.f32 %v6088, %v6337
      %v6476 = vadd.f32 %v6089, %v6342
      %v6477 = vadd.f32 %v6090, %v6347
      %v6478 = vadd.f32 %v6091, %v6352
      %v6479 = vadd.f32 %v6092, %v6357
      %v6480 = vadd.f32 %v6093, %v6362
      %v6481 = vadd.f32 %v6094, %v6367
      %v6482 = vadd.f32 %v6095, %v6372
      %v6483 = vadd.f32 %v6096, %v6377
      %v6484 = vadd.f32 %v6097, %v6382
      %v6485 = vadd.f32 %v6098, %v6387
      %v6486 = vadd.f32 %v6099, %v6392
      %v6487 = vadd.f32 %v6100, %v6397
      %v6488 = vadd.f32 %v6101, %v6402
      %v6489 = vadd.f32 %v6102, %v6407
      %v6490 = vadd.f32 %v6103, %v6412
      %v6491 = vadd.f32 %v6104, %v6417
      %v6492 = vadd.f32 %v6105, %v6422
      %v6493 = vadd.f32 %v6106, %v6427
      %v6494 = vadd.f32 %v6107, %v6432
      %v6495 = vadd.f32 %v6108, %v6437
      %v6496 = vadd.f32 %v6109, %v6442
      %v6497 = vadd.f32 %v6110, %v6447
      %v6498 = vadd.f32 %v6111, %v6452
      %v6499 = vadd.f32 %v6112, %v6457
      %v6500 = vadd.f32 %v6113, %v6462
      %v6501 = vadd.f32 %v6114, %v6467
      %v6502 = vld [vmem:[#allocation3 + $0x19] sm:$0xff]
      %v6503 = vld [vmem:[#allocation3 + $0x21] sm:$0xff]
      %v6504 = vld [vmem:[#allocation3 + $0x29] sm:$0xff]
      %v6505 = vld [vmem:[#allocation3 + $0x31] sm:$0xff]
      %v6506 = vld [vmem:[#allocation3 + $0x39] sm:$0xff]
      %v6507 = vld [vmem:[#allocation3 + $0x41] sm:$0xff]
      %v6508 = vld [vmem:[#allocation3 + $0x49] sm:$0xff]
      %v6509 = vld [vmem:[#allocation3 + $0x51] sm:$0xff]
      %v6510 = vld [vmem:[#allocation3 + $0x59] sm:$0xff]
      %v6511 = vld [vmem:[#allocation3 + $0x61] sm:$0xff]
      %v6512 = vld [vmem:[#allocation3 + $0x69] sm:$0xff]
      %v6513 = vld [vmem:[#allocation3 + $0x71] sm:$0xff]
      %v6514 = vld [vmem:[#allocation3 + $0x79] sm:$0xff]
      %v6515 = vld [vmem:[#allocation3 + $0x81] sm:$0xff]
      %v6516 = vld [vmem:[#allocation3 + $0x89] sm:$0xff]
      %v6517 = vld [vmem:[#allocation3 + $0x91] sm:$0xff]
      %v6518 = vld [vmem:[#allocation3 + $0x99] sm:$0xff]
      %v6519 = vld [vmem:[#allocation3 + $0xa1] sm:$0xff]
      %v6520 = vld [vmem:[#allocation3 + $0xa9] sm:$0xff]
      %v6521 = vld [vmem:[#allocation3 + $0xb1] sm:$0xff]
      %v6522 = vld [vmem:[#allocation3 + $0xb9] sm:$0xff]
      %v6523 = vld [vmem:[#allocation3 + $0xc1] sm:$0xff]
      %v6524 = vld [vmem:[#allocation3 + $0xc9] sm:$0xff]
      %v6525 = vld [vmem:[#allocation3 + $0xd1] sm:$0xff]
      %v6526 = vld [vmem:[#allocation3 + $0xd9] sm:$0xff]
      %v6527 = vld [vmem:[#allocation3 + $0xe1] sm:$0xff]
      %v6528 = vld [vmem:[#allocation3 + $0xe9] sm:$0xff]
      %v6529 = vld [vmem:[#allocation3 + $0xf1] sm:$0xff]
      %v6530 = vld [vmem:[#allocation3 + $0xf9] sm:$0xff]
      %v6531 = vld [vmem:[#allocation3 + $0x101] sm:$0xff]
      %v6532 = vld [vmem:[#allocation3 + $0x109] sm:$0xff]
      %v6533 = vld [vmem:[#allocation3 + $0x111] sm:$0xff]
      %v6534 = vmul.f32 %v6502, %v1411
      %v6535 = vmul.f32 %v6503, %v1416
      %v6536 = vmul.f32 %v6504, %v1421
      %v6537 = vmul.f32 %v6505, %v1426
      %v6538 = vmul.f32 %v6506, %v1431
      %v6539 = vmul.f32 %v6507, %v1436
      %v6540 = vmul.f32 %v6508, %v1441
      %v6541 = vmul.f32 %v6509, %v1446
      %v6542 = vmul.f32 %v6510, %v1451
      %v6543 = vmul.f32 %v6511, %v1456
      %v6544 = vmul.f32 %v6512, %v1461
      %v6545 = vmul.f32 %v6513, %v1466
      %v6546 = vmul.f32 %v6514, %v1471
      %v6547 = vmul.f32 %v6515, %v1476
      %v6548 = vmul.f32 %v6516, %v1481
      %v6549 = vmul.f32 %v6517, %v1486
      %v6550 = vmul.f32 %v6518, %v1491
      %v6551 = vmul.f32 %v6519, %v1496
      %v6552 = vmul.f32 %v6520, %v1501
      %v6553 = vmul.f32 %v6521, %v1506
      %v6554 = vmul.f32 %v6522, %v1511
      %v6555 = vmul.f32 %v6523, %v1516
      %v6556 = vmul.f32 %v6524, %v1521
      %v6557 = vmul.f32 %v6525, %v1526
      %v6558 = vmul.f32 %v6526, %v1531
      %v6559 = vmul.f32 %v6527, %v1536
      %v6560 = vmul.f32 %v6528, %v1541
      %v6561 = vmul.f32 %v6529, %v1546
      %v6562 = vmul.f32 %v6530, %v1551
      %v6563 = vmul.f32 %v6531, %v1556
      %v6564 = vmul.f32 %v6532, %v1561
      %v6565 = vmul.f32 %v6533, %v1566
      %s6566 = scalar_lea.vmem %s5, 40
      %v6567 = vld [vmem:[%s6566] sm:$0xff]
      %v6569 = vsel %vm4497, %v6534, 0
      %v6572 = vsel %vm4497, %v6535, 0
      %v6575 = vsel %vm4497, %v6536, 0
      %v6578 = vsel %vm4497, %v6537, 0
      %v6581 = vsel %vm4497, %v6538, 0
      %v6584 = vsel %vm4497, %v6539, 0
      %v6587 = vsel %vm4497, %v6540, 0
      %v6590 = vsel %vm4497, %v6541, 0
      %v6593 = vsel %vm4497, %v6542, 0
      %v6596 = vsel %vm4497, %v6543, 0
      %v6599 = vsel %vm4497, %v6544, 0
      %v6602 = vsel %vm4497, %v6545, 0
      %v6605 = vsel %vm4497, %v6546, 0
      %v6608 = vsel %vm4497, %v6547, 0
      %v6611 = vsel %vm4497, %v6548, 0
      %v6614 = vsel %vm4497, %v6549, 0
      %v6617 = vsel %vm4497, %v6550, 0
      %v6620 = vsel %vm4497, %v6551, 0
      %v6623 = vsel %vm4497, %v6552, 0
      %v6626 = vsel %vm4497, %v6553, 0
      %v6629 = vsel %vm4497, %v6554, 0
      %v6632 = vsel %vm4497, %v6555, 0
      %v6635 = vsel %vm4497, %v6556, 0
      %v6638 = vsel %vm4497, %v6557, 0
      %v6641 = vsel %vm4497, %v6558, 0
      %v6644 = vsel %vm4497, %v6559, 0
      %v6647 = vsel %vm4497, %v6560, 0
      %v6650 = vsel %vm4497, %v6561, 0
      %v6653 = vsel %vm4497, %v6562, 0
      %v6656 = vsel %vm4497, %v6563, 0
      %v6659 = vsel %vm4497, %v6564, 0
      %v6662 = vsel %vm4497, %v6565, 0
      %6664 = vmatprep.subr.mxu0 0.0
      %6665 = vmatpush1.msra.mxu0 %v6567
      %6666 = vmatprep.subr.mxu0 0.0
      %6667 = vmatpush1.msra.mxu0 0.0
      %6668 = vmatprep.subr.mxu0 0.0
      %6669 = vmatpush1.msra.mxu0 0.0
      %6670 = vmatprep.subr.mxu0 0.0
      %6671 = vmatpush1.msra.mxu0 0.0
      %6672 = vmatprep.subr.mxu0 0.0
      %6673 = vmatpush1.msra.mxu0 0.0
      %6674 = vmatprep.subr.mxu0 0.0
      %6675 = vmatpush1.msra.mxu0 0.0
      %6676 = vmatprep.subr.mxu0 0.0
      %6677 = vmatpush1.msra.mxu0 0.0
      %6678 = vmatprep.subr.mxu0 0.0
      %6679 = vmatpush1.msra.mxu0 0.0
      %6680 = vmatprep.subr.mxu0 0.0
      %6681 = vmatpush1.msra.mxu0 0.0
      %6682 = vmatprep.subr.mxu0 0.0
      %6683 = vmatpush1.msra.mxu0 0.0
      %6684 = vmatprep.subr.mxu0 0.0
      %6685 = vmatpush1.msra.mxu0 0.0
      %6686 = vmatprep.subr.mxu0 0.0
      %6687 = vmatpush1.msra.mxu0 0.0
      %6688 = vmatprep.subr.mxu0 0.0
      %6689 = vmatpush1.msra.mxu0 0.0
      %6690 = vmatprep.subr.mxu0 0.0
      %6691 = vmatpush1.msra.mxu0 0.0
      %6692 = vmatprep.subr.mxu0 0.0
      %6693 = vmatpush1.msra.mxu0 0.0
      %6694 = vmatprep.subr.mxu0 0.0
      %6695 = vmatpush1.msra.mxu0 0.0
      %6696 = vmatprep.subr.mxu0 0.0
      %6697 = vmatpush1.msra.mxu0 0.0
      %6698 = vmatprep.subr.mxu0 0.0
      %6699 = vmatpush1.msra.mxu0 0.0
      %6700 = vmatprep.subr.mxu0 0.0
      %6701 = vmatpush1.msra.mxu0 0.0
      %6702 = vmatprep.subr.mxu0 0.0
      %6703 = vmatpush1.msra.mxu0 0.0
      %6704 = vmatprep.subr.mxu0 0.0
      %6705 = vmatpush1.msra.mxu0 0.0
      %6706 = vmatprep.subr.mxu0 0.0
      %6707 = vmatpush1.msra.mxu0 0.0
      %6708 = vmatprep.subr.mxu0 0.0
      %6709 = vmatpush1.msra.mxu0 0.0
      %6710 = vmatprep.subr.mxu0 0.0
      %6711 = vmatpush1.msra.mxu0 0.0
      %6712 = vmatprep.subr.mxu0 0.0
      %6713 = vmatpush1.msra.mxu0 0.0
      %6714 = vmatprep.subr.mxu0 0.0
      %6715 = vmatpush1.msra.mxu0 0.0
      %6716 = vmatprep.subr.mxu0 0.0
      %6717 = vmatpush1.msra.mxu0 0.0
      %6718 = vmatprep.subr.mxu0 0.0
      %6719 = vmatpush1.msra.mxu0 0.0
      %6720 = vmatprep.subr.mxu0 0.0
      %6721 = vmatpush1.msra.mxu0 0.0
      %6722 = vmatprep.subr.mxu0 0.0
      %6723 = vmatpush1.msra.mxu0 0.0
      %6724 = vmatprep.subr.mxu0 0.0
      %6725 = vmatpush1.msra.mxu0 0.0
      %6726 = vmatprep.subr.mxu0 0.0
      %6727 = vmatpush1.msra.mxu0 0.0
      %6728 = vmatprep.mubr.f32.mxu0 0.0
      %6729 = vmatmul.mubr.f32.gmra.mrb[0].mxu0 %v6569
      %v6730 = vpop.f32.mrb[0].mxu0
      %v6731 = vadd.f32 0.0, %v6730
      %v6732 = vpop.f32.mrb[0].mxu0
      %6733 = vmatprep.mubr.f32.mxu0 0.0
      %6734 = vmatmul.mubr.f32.gmra.mrb[0].mxu0 %v6572
      %v6735 = vpop.f32.mrb[0].mxu0
      %v6736 = vadd.f32 0.0, %v6735
      %v6737 = vpop.f32.mrb[0].mxu0
      %6738 = vmatprep.mubr.f32.mxu0 0.0
      %6739 = vmatmul.mubr.f32.gmra.mrb[0].mxu0 %v6575
      %v6740 = vpop.f32.mrb[0].mxu0
      %v6741 = vadd.f32 0.0, %v6740
      %v6742 = vpop.f32.mrb[0].mxu0
      %6743 = vmatprep.mubr.f32.mxu0 0.0
      %6744 = vmatmul.mubr.f32.gmra.mrb[0].mxu0 %v6578
      %v6745 = vpop.f32.mrb[0].mxu0
      %v6746 = vadd.f32 0.0, %v6745
      %v6747 = vpop.f32.mrb[0].mxu0
      %6748 = vmatprep.mubr.f32.mxu0 0.0
      %6749 = vmatmul.mubr.f32.gmra.mrb[0].mxu0 %v6581
      %v6750 = vpop.f32.mrb[0].mxu0
      %v6751 = vadd.f32 0.0, %v6750
      %v6752 = vpop.f32.mrb[0].mxu0
      %6753 = vmatprep.mubr.f32.mxu0 0.0
      %6754 = vmatmul.mubr.f32.gmra.mrb[0].mxu0 %v6584
      %v6755 = vpop.f32.mrb[0].mxu0
      %v6756 = vadd.f32 0.0, %v6755
      %v6757 = vpop.f32.mrb[0].mxu0
      %6758 = vmatprep.mubr.f32.mxu0 0.0
      %6759 = vmatmul.mubr.f32.gmra.mrb[0].mxu0 %v6587
      %v6760 = vpop.f32.mrb[0].mxu0
      %v6761 = vadd.f32 0.0, %v6760
      %v6762 = vpop.f32.mrb[0].mxu0
      %6763 = vmatprep.mubr.f32.mxu0 0.0
      %6764 = vmatmul.mubr.f32.gmra.mrb[0].mxu0 %v6590
      %v6765 = vpop.f32.mrb[0].mxu0
      %v6766 = vadd.f32 0.0, %v6765
      %v6767 = vpop.f32.mrb[0].mxu0
      %6768 = vmatprep.mubr.f32.mxu0 0.0
      %6769 = vmatmul.mubr.f32.gmra.mrb[0].mxu0 %v6593
      %v6770 = vpop.f32.mrb[0].mxu0
      %v6771 = vadd.f32 0.0, %v6770
      %v6772 = vpop.f32.mrb[0].mxu0
      %6773 = vmatprep.mubr.f32.mxu0 0.0
      %6774 = vmatmul.mubr.f32.gmra.mrb[0].mxu0 %v6596
      %v6775 = vpop.f32.mrb[0].mxu0
      %v6776 = vadd.f32 0.0, %v6775
      %v6777 = vpop.f32.mrb[0].mxu0
      %6778 = vmatprep.mubr.f32.mxu0 0.0
      %6779 = vmatmul.mubr.f32.gmra.mrb[0].mxu0 %v6599
      %v6780 = vpop.f32.mrb[0].mxu0
      %v6781 = vadd.f32 0.0, %v6780
      %v6782 = vpop.f32.mrb[0].mxu0
      %6783 = vmatprep.mubr.f32.mxu0 0.0
      %6784 = vmatmul.mubr.f32.gmra.mrb[0].mxu0 %v6602
      %v6785 = vpop.f32.mrb[0].mxu0
      %v6786 = vadd.f32 0.0, %v6785
      %v6787 = vpop.f32.mrb[0].mxu0
      %6788 = vmatprep.mubr.f32.mxu0 0.0
      %6789 = vmatmul.mubr.f32.gmra.mrb[0].mxu0 %v6605
      %v6790 = vpop.f32.mrb[0].mxu0
      %v6791 = vadd.f32 0.0, %v6790
      %v6792 = vpop.f32.mrb[0].mxu0
      %6793 = vmatprep.mubr.f32.mxu0 0.0
      %6794 = vmatmul.mubr.f32.gmra.mrb[0].mxu0 %v6608
      %v6795 = vpop.f32.mrb[0].mxu0
      %v6796 = vadd.f32 0.0, %v6795
      %v6797 = vpop.f32.mrb[0].mxu0
      %6798 = vmatprep.mubr.f32.mxu0 0.0
      %6799 = vmatmul.mubr.f32.gmra.mrb[0].mxu0 %v6611
      %v6800 = vpop.f32.mrb[0].mxu0
      %v6801 = vadd.f32 0.0, %v6800
      %v6802 = vpop.f32.mrb[0].mxu0
      %6803 = vmatprep.mubr.f32.mxu0 0.0
      %6804 = vmatmul.mubr.f32.gmra.mrb[0].mxu0 %v6614
      %v6805 = vpop.f32.mrb[0].mxu0
      %v6806 = vadd.f32 0.0, %v6805
      %v6807 = vpop.f32.mrb[0].mxu0
      %6808 = vmatprep.mubr.f32.mxu0 0.0
      %6809 = vmatmul.mubr.f32.gmra.mrb[0].mxu0 %v6617
      %v6810 = vpop.f32.mrb[0].mxu0
      %v6811 = vadd.f32 0.0, %v6810
      %v6812 = vpop.f32.mrb[0].mxu0
      %6813 = vmatprep.mubr.f32.mxu0 0.0
      %6814 = vmatmul.mubr.f32.gmra.mrb[0].mxu0 %v6620
      %v6815 = vpop.f32.mrb[0].mxu0
      %v6816 = vadd.f32 0.0, %v6815
      %v6817 = vpop.f32.mrb[0].mxu0
      %6818 = vmatprep.mubr.f32.mxu0 0.0
      %6819 = vmatmul.mubr.f32.gmra.mrb[0].mxu0 %v6623
      %v6820 = vpop.f32.mrb[0].mxu0
      %v6821 = vadd.f32 0.0, %v6820
      %v6822 = vpop.f32.mrb[0].mxu0
      %6823 = vmatprep.mubr.f32.mxu0 0.0
      %6824 = vmatmul.mubr.f32.gmra.mrb[0].mxu0 %v6626
      %v6825 = vpop.f32.mrb[0].mxu0
      %v6826 = vadd.f32 0.0, %v6825
      %v6827 = vpop.f32.mrb[0].mxu0
      %6828 = vmatprep.mubr.f32.mxu0 0.0
      %6829 = vmatmul.mubr.f32.gmra.mrb[0].mxu0 %v6629
      %v6830 = vpop.f32.mrb[0].mxu0
      %v6831 = vadd.f32 0.0, %v6830
      %v6832 = vpop.f32.mrb[0].mxu0
      %6833 = vmatprep.mubr.f32.mxu0 0.0
      %6834 = vmatmul.mubr.f32.gmra.mrb[0].mxu0 %v6632
      %v6835 = vpop.f32.mrb[0].mxu0
      %v6836 = vadd.f32 0.0, %v6835
      %v6837 = vpop.f32.mrb[0].mxu0
      %6838 = vmatprep.mubr.f32.mxu0 0.0
      %6839 = vmatmul.mubr.f32.gmra.mrb[0].mxu0 %v6635
      %v6840 = vpop.f32.mrb[0].mxu0
      %v6841 = vadd.f32 0.0, %v6840
      %v6842 = vpop.f32.mrb[0].mxu0
      %6843 = vmatprep.mubr.f32.mxu0 0.0
      %6844 = vmatmul.mubr.f32.gmra.mrb[0].mxu0 %v6638
      %v6845 = vpop.f32.mrb[0].mxu0
      %v6846 = vadd.f32 0.0, %v6845
      %v6847 = vpop.f32.mrb[0].mxu0
      %6848 = vmatprep.mubr.f32.mxu0 0.0
      %6849 = vmatmul.mubr.f32.gmra.mrb[0].mxu0 %v6641
      %v6850 = vpop.f32.mrb[0].mxu0
      %v6851 = vadd.f32 0.0, %v6850
      %v6852 = vpop.f32.mrb[0].mxu0
      %6853 = vmatprep.mubr.f32.mxu0 0.0
      %6854 = vmatmul.mubr.f32.gmra.mrb[0].mxu0 %v6644
      %v6855 = vpop.f32.mrb[0].mxu0
      %v6856 = vadd.f32 0.0, %v6855
      %v6857 = vpop.f32.mrb[0].mxu0
      %6858 = vmatprep.mubr.f32.mxu0 0.0
      %6859 = vmatmul.mubr.f32.gmra.mrb[0].mxu0 %v6647
      %v6860 = vpop.f32.mrb[0].mxu0
      %v6861 = vadd.f32 0.0, %v6860
      %v6862 = vpop.f32.mrb[0].mxu0
      %6863 = vmatprep.mubr.f32.mxu0 0.0
      %6864 = vmatmul.mubr.f32.gmra.mrb[0].mxu0 %v6650
      %v6865 = vpop.f32.mrb[0].mxu0
      %v6866 = vadd.f32 0.0, %v6865
      %v6867 = vpop.f32.mrb[0].mxu0
      %6868 = vmatprep.mubr.f32.mxu0 0.0
      %6869 = vmatmul.mubr.f32.gmra.mrb[0].mxu0 %v6653
      %v6870 = vpop.f32.mrb[0].mxu0
      %v6871 = vadd.f32 0.0, %v6870
      %v6872 = vpop.f32.mrb[0].mxu0
      %6873 = vmatprep.mubr.f32.mxu0 0.0
      %6874 = vmatmul.mubr.f32.gmra.mrb[0].mxu0 %v6656
      %v6875 = vpop.f32.mrb[0].mxu0
      %v6876 = vadd.f32 0.0, %v6875
      %v6877 = vpop.f32.mrb[0].mxu0
      %6878 = vmatprep.mubr.f32.mxu0 0.0
      %6879 = vmatmul.mubr.f32.gmra.mrb[0].mxu0 %v6659
      %v6880 = vpop.f32.mrb[0].mxu0
      %v6881 = vadd.f32 0.0, %v6880
      %v6882 = vpop.f32.mrb[0].mxu0
      %6883 = vmatprep.mubr.f32.mxu0 0.0
      %6884 = vmatmul.mubr.f32.gmra.mrb[0].mxu0 %v6662
      %v6885 = vpop.f32.mrb[0].mxu0
      %v6886 = vadd.f32 0.0, %v6885
      %v6887 = vpop.f32.mrb[0].mxu0
      %6888 = vdwg.mxu0
      %v6889 = vadd.f32 %v6470, %v6731
      %v6890 = vadd.f32 %v6471, %v6736
      %v6891 = vadd.f32 %v6472, %v6741
      %v6892 = vadd.f32 %v6473, %v6746
      %v6893 = vadd.f32 %v6474, %v6751
      %v6894 = vadd.f32 %v6475, %v6756
      %v6895 = vadd.f32 %v6476, %v6761
      %v6896 = vadd.f32 %v6477, %v6766
      %v6897 = vadd.f32 %v6478, %v6771
      %v6898 = vadd.f32 %v6479, %v6776
      %v6899 = vadd.f32 %v6480, %v6781
      %v6900 = vadd.f32 %v6481, %v6786
      %v6901 = vadd.f32 %v6482, %v6791
      %v6902 = vadd.f32 %v6483, %v6796
      %v6903 = vadd.f32 %v6484, %v6801
      %v6904 = vadd.f32 %v6485, %v6806
      %v6905 = vadd.f32 %v6486, %v6811
      %v6906 = vadd.f32 %v6487, %v6816
      %v6907 = vadd.f32 %v6488, %v6821
      %v6908 = vadd.f32 %v6489, %v6826
      %v6909 = vadd.f32 %v6490, %v6831
      %v6910 = vadd.f32 %v6491, %v6836
      %v6911 = vadd.f32 %v6492, %v6841
      %v6912 = vadd.f32 %v6493, %v6846
      %v6913 = vadd.f32 %v6494, %v6851
      %v6914 = vadd.f32 %v6495, %v6856
      %v6915 = vadd.f32 %v6496, %v6861
      %v6916 = vadd.f32 %v6497, %v6866
      %v6917 = vadd.f32 %v6498, %v6871
      %v6918 = vadd.f32 %v6499, %v6876
      %v6919 = vadd.f32 %v6500, %v6881
      %v6920 = vadd.f32 %v6501, %v6886
      %v6921 = vld [vmem:[#allocation3 + $0x27] sm:$0xff]
      %v6922 = vld [vmem:[#allocation3 + $0x2f] sm:$0xff]
      %v6923 = vld [vmem:[#allocation3 + $0x37] sm:$0xff]
      %v6924 = vld [vmem:[#allocation3 + $0x3f] sm:$0xff]
      %v6925 = vld [vmem:[#allocation3 + $0x47] sm:$0xff]
      %v6926 = vld [vmem:[#allocation3 + $0x4f] sm:$0xff]
      %v6927 = vld [vmem:[#allocation3 + $0x57] sm:$0xff]
      %v6928 = vld [vmem:[#allocation3 + $0x5f] sm:$0xff]
      %v6929 = vld [vmem:[#allocation3 + $0x67] sm:$0xff]
      %v6930 = vld [vmem:[#allocation3 + $0x6f] sm:$0xff]
      %v6931 = vld [vmem:[#allocation3 + $0x77] sm:$0xff]
      %v6932 = vld [vmem:[#allocation3 + $0x7f] sm:$0xff]
      %v6933 = vld [vmem:[#allocation3 + $0x87] sm:$0xff]
      %v6934 = vld [vmem:[#allocation3 + $0x8f] sm:$0xff]
      %v6935 = vld [vmem:[#allocation3 + $0x97] sm:$0xff]
      %v6936 = vld [vmem:[#allocation3 + $0x9f] sm:$0xff]
      %v6937 = vld [vmem:[#allocation3 + $0xa7] sm:$0xff]
      %v6938 = vld [vmem:[#allocation3 + $0xaf] sm:$0xff]
      %v6939 = vld [vmem:[#allocation3 + $0xb7] sm:$0xff]
      %v6940 = vld [vmem:[#allocation3 + $0xbf] sm:$0xff]
      %v6941 = vld [vmem:[#allocation3 + $0xc7] sm:$0xff]
      %v6942 = vld [vmem:[#allocation3 + $0xcf] sm:$0xff]
      %v6943 = vld [vmem:[#allocation3 + $0xd7] sm:$0xff]
      %v6944 = vld [vmem:[#allocation3 + $0xdf] sm:$0xff]
      %v6945 = vld [vmem:[#allocation3 + $0xe7] sm:$0xff]
      %v6946 = vld [vmem:[#allocation3 + $0xef] sm:$0xff]
      %v6947 = vld [vmem:[#allocation3 + $0xf7] sm:$0xff]
      %v6948 = vld [vmem:[#allocation3 + $0xff] sm:$0xff]
      %v6949 = vld [vmem:[#allocation3 + $0x107] sm:$0xff]
      %v6950 = vld [vmem:[#allocation3 + $0x10f] sm:$0xff]
      %v6951 = vld [vmem:[#allocation3 + $0x117] sm:$0xff]
      %v6952 = vld [vmem:[#allocation3 + $0x11f] sm:$0xff]
      %v6953 = vmul.f32 %v6921, %v503
      %v6954 = vmul.f32 %v6922, %v508
      %v6955 = vmul.f32 %v6923, %v513
      %v6956 = vmul.f32 %v6924, %v518
      %v6957 = vmul.f32 %v6925, %v523
      %v6958 = vmul.f32 %v6926, %v528
      %v6959 = vmul.f32 %v6927, %v533
      %v6960 = vmul.f32 %v6928, %v538
      %v6961 = vmul.f32 %v6929, %v543
      %v6962 = vmul.f32 %v6930, %v548
      %v6963 = vmul.f32 %v6931, %v553
      %v6964 = vmul.f32 %v6932, %v558
      %v6965 = vmul.f32 %v6933, %v563
      %v6966 = vmul.f32 %v6934, %v568
      %v6967 = vmul.f32 %v6935, %v573
      %v6968 = vmul.f32 %v6936, %v578
      %v6969 = vmul.f32 %v6937, %v583
      %v6970 = vmul.f32 %v6938, %v588
      %v6971 = vmul.f32 %v6939, %v593
      %v6972 = vmul.f32 %v6940, %v598
      %v6973 = vmul.f32 %v6941, %v603
      %v6974 = vmul.f32 %v6942, %v608
      %v6975 = vmul.f32 %v6943, %v613
      %v6976 = vmul.f32 %v6944, %v618
      %v6977 = vmul.f32 %v6945, %v623
      %v6978 = vmul.f32 %v6946, %v628
      %v6979 = vmul.f32 %v6947, %v633
      %v6980 = vmul.f32 %v6948, %v638
      %v6981 = vmul.f32 %v6949, %v643
      %v6982 = vmul.f32 %v6950, %v648
      %v6983 = vmul.f32 %v6951, %v653
      %v6984 = vmul.f32 %v6952, %v658
      %s6985 = scalar_lea.vmem %s5, 48
      %v6986 = vld [vmem:[%s6985] sm:$0xff]
      %v6988 = vsel %vm4497, %v6953, 0
      %v6991 = vsel %vm4497, %v6954, 0
      %v6994 = vsel %vm4497, %v6955, 0
      %v6997 = vsel %vm4497, %v6956, 0
      %v7000 = vsel %vm4497, %v6957, 0
      %v7003 = vsel %vm4497, %v6958, 0
      %v7006 = vsel %vm4497, %v6959, 0
      %v7009 = vsel %vm4497, %v6960, 0
      %v7012 = vsel %vm4497, %v6961, 0
      %v7015 = vsel %vm4497, %v6962, 0
      %v7018 = vsel %vm4497, %v6963, 0
      %v7021 = vsel %vm4497, %v6964, 0
      %v7024 = vsel %vm4497, %v6965, 0
      %v7027 = vsel %vm4497, %v6966, 0
      %v7030 = vsel %vm4497, %v6967, 0
      %v7033 = vsel %vm4497, %v6968, 0
      %v7036 = vsel %vm4497, %v6969, 0
      %v7039 = vsel %vm4497, %v6970, 0
      %v7042 = vsel %vm4497, %v6971, 0
      %v7045 = vsel %vm4497, %v6972, 0
      %v7048 = vsel %vm4497, %v6973, 0
      %v7051 = vsel %vm4497, %v6974, 0
      %v7054 = vsel %vm4497, %v6975, 0
      %v7057 = vsel %vm4497, %v6976, 0
      %v7060 = vsel %vm4497, %v6977, 0
      %v7063 = vsel %vm4497, %v6978, 0
      %v7066 = vsel %vm4497, %v6979, 0
      %v7069 = vsel %vm4497, %v6980, 0
      %v7072 = vsel %vm4497, %v6981, 0
      %v7075 = vsel %vm4497, %v6982, 0
      %v7078 = vsel %vm4497, %v6983, 0
      %v7081 = vsel %vm4497, %v6984, 0
      %7083 = vmatprep.subr.mxu0 0.0
      %7084 = vmatpush1.msra.mxu0 %v6986
      %7085 = vmatprep.subr.mxu0 0.0
      %7086 = vmatpush1.msra.mxu0 0.0
      %7087 = vmatprep.subr.mxu0 0.0
      %7088 = vmatpush1.msra.mxu0 0.0
      %7089 = vmatprep.subr.mxu0 0.0
      %7090 = vmatpush1.msra.mxu0 0.0
      %7091 = vmatprep.subr.mxu0 0.0
      %7092 = vmatpush1.msra.mxu0 0.0
      %7093 = vmatprep.subr.mxu0 0.0
      %7094 = vmatpush1.msra.mxu0 0.0
      %7095 = vmatprep.subr.mxu0 0.0
      %7096 = vmatpush1.msra.mxu0 0.0
      %7097 = vmatprep.subr.mxu0 0.0
      %7098 = vmatpush1.msra.mxu0 0.0
      %7099 = vmatprep.subr.mxu0 0.0
      %7100 = vmatpush1.msra.mxu0 0.0
      %7101 = vmatprep.subr.mxu0 0.0
      %7102 = vmatpush1.msra.mxu0 0.0
      %7103 = vmatprep.subr.mxu0 0.0
      %7104 = vmatpush1.msra.mxu0 0.0
      %7105 = vmatprep.subr.mxu0 0.0
      %7106 = vmatpush1.msra.mxu0 0.0
      %7107 = vmatprep.subr.mxu0 0.0
      %7108 = vmatpush1.msra.mxu0 0.0
      %7109 = vmatprep.subr.mxu0 0.0
      %7110 = vmatpush1.msra.mxu0 0.0
      %7111 = vmatprep.subr.mxu0 0.0
      %7112 = vmatpush1.msra.mxu0 0.0
      %7113 = vmatprep.subr.mxu0 0.0
      %7114 = vmatpush1.msra.mxu0 0.0
      %7115 = vmatprep.subr.mxu0 0.0
      %7116 = vmatpush1.msra.mxu0 0.0
      %7117 = vmatprep.subr.mxu0 0.0
      %7118 = vmatpush1.msra.mxu0 0.0
      %7119 = vmatprep.subr.mxu0 0.0
      %7120 = vmatpush1.msra.mxu0 0.0
      %7121 = vmatprep.subr.mxu0 0.0
      %7122 = vmatpush1.msra.mxu0 0.0
      %7123 = vmatprep.subr.mxu0 0.0
      %7124 = vmatpush1.msra.mxu0 0.0
      %7125 = vmatprep.subr.mxu0 0.0
      %7126 = vmatpush1.msra.mxu0 0.0
      %7127 = vmatprep.subr.mxu0 0.0
      %7128 = vmatpush1.msra.mxu0 0.0
      %7129 = vmatprep.subr.mxu0 0.0
      %7130 = vmatpush1.msra.mxu0 0.0
      %7131 = vmatprep.subr.mxu0 0.0
      %7132 = vmatpush1.msra.mxu0 0.0
      %7133 = vmatprep.subr.mxu0 0.0
      %7134 = vmatpush1.msra.mxu0 0.0
      %7135 = vmatprep.subr.mxu0 0.0
      %7136 = vmatpush1.msra.mxu0 0.0
      %7137 = vmatprep.subr.mxu0 0.0
      %7138 = vmatpush1.msra.mxu0 0.0
      %7139 = vmatprep.subr.mxu0 0.0
      %7140 = vmatpush1.msra.mxu0 0.0
      %7141 = vmatprep.subr.mxu0 0.0
      %7142 = vmatpush1.msra.mxu0 0.0
      %7143 = vmatprep.subr.mxu0 0.0
      %7144 = vmatpush1.msra.mxu0 0.0
      %7145 = vmatprep.subr.mxu0 0.0
      %7146 = vmatpush1.msra.mxu0 0.0
      %7147 = vmatprep.mubr.f32.mxu0 0.0
      %7148 = vmatmul.mubr.f32.gmra.mrb[0].mxu0 %v6988
      %v7149 = vpop.f32.mrb[0].mxu0
      %v7150 = vadd.f32 0.0, %v7149
      %v7151 = vpop.f32.mrb[0].mxu0
      %7152 = vmatprep.mubr.f32.mxu0 0.0
      %7153 = vmatmul.mubr.f32.gmra.mrb[0].mxu0 %v6991
      %v7154 = vpop.f32.mrb[0].mxu0
      %v7155 = vadd.f32 0.0, %v7154
      %v7156 = vpop.f32.mrb[0].mxu0
      %7157 = vmatprep.mubr.f32.mxu0 0.0
      %7158 = vmatmul.mubr.f32.gmra.mrb[0].mxu0 %v6994
      %v7159 = vpop.f32.mrb[0].mxu0
      %v7160 = vadd.f32 0.0, %v7159
      %v7161 = vpop.f32.mrb[0].mxu0
      %7162 = vmatprep.mubr.f32.mxu0 0.0
      %7163 = vmatmul.mubr.f32.gmra.mrb[0].mxu0 %v6997
      %v7164 = vpop.f32.mrb[0].mxu0
      %v7165 = vadd.f32 0.0, %v7164
      %v7166 = vpop.f32.mrb[0].mxu0
      %7167 = vmatprep.mubr.f32.mxu0 0.0
      %7168 = vmatmul.mubr.f32.gmra.mrb[0].mxu0 %v7000
      %v7169 = vpop.f32.mrb[0].mxu0
      %v7170 = vadd.f32 0.0, %v7169
      %v7171 = vpop.f32.mrb[0].mxu0
      %7172 = vmatprep.mubr.f32.mxu0 0.0
      %7173 = vmatmul.mubr.f32.gmra.mrb[0].mxu0 %v7003
      %v7174 = vpop.f32.mrb[0].mxu0
      %v7175 = vadd.f32 0.0, %v7174
      %v7176 = vpop.f32.mrb[0].mxu0
      %7177 = vmatprep.mubr.f32.mxu0 0.0
      %7178 = vmatmul.mubr.f32.gmra.mrb[0].mxu0 %v7006
      %v7179 = vpop.f32.mrb[0].mxu0
      %v7180 = vadd.f32 0.0, %v7179
      %v7181 = vpop.f32.mrb[0].mxu0
      %7182 = vmatprep.mubr.f32.mxu0 0.0
      %7183 = vmatmul.mubr.f32.gmra.mrb[0].mxu0 %v7009
      %v7184 = vpop.f32.mrb[0].mxu0
      %v7185 = vadd.f32 0.0, %v7184
      %v7186 = vpop.f32.mrb[0].mxu0
      %7187 = vmatprep.mubr.f32.mxu0 0.0
      %7188 = vmatmul.mubr.f32.gmra.mrb[0].mxu0 %v7012
      %v7189 = vpop.f32.mrb[0].mxu0
      %v7190 = vadd.f32 0.0, %v7189
      %v7191 = vpop.f32.mrb[0].mxu0
      %7192 = vmatprep.mubr.f32.mxu0 0.0
      %7193 = vmatmul.mubr.f32.gmra.mrb[0].mxu0 %v7015
      %v7194 = vpop.f32.mrb[0].mxu0
      %v7195 = vadd.f32 0.0, %v7194
      %v7196 = vpop.f32.mrb[0].mxu0
      %7197 = vmatprep.mubr.f32.mxu0 0.0
      %7198 = vmatmul.mubr.f32.gmra.mrb[0].mxu0 %v7018
      %v7199 = vpop.f32.mrb[0].mxu0
      %v7200 = vadd.f32 0.0, %v7199
      %v7201 = vpop.f32.mrb[0].mxu0
      %7202 = vmatprep.mubr.f32.mxu0 0.0
      %7203 = vmatmul.mubr.f32.gmra.mrb[0].mxu0 %v7021
      %v7204 = vpop.f32.mrb[0].mxu0
      %v7205 = vadd.f32 0.0, %v7204
      %v7206 = vpop.f32.mrb[0].mxu0
      %7207 = vmatprep.mubr.f32.mxu0 0.0
      %7208 = vmatmul.mubr.f32.gmra.mrb[0].mxu0 %v7024
      %v7209 = vpop.f32.mrb[0].mxu0
      %v7210 = vadd.f32 0.0, %v7209
      %v7211 = vpop.f32.mrb[0].mxu0
      %7212 = vmatprep.mubr.f32.mxu0 0.0
      %7213 = vmatmul.mubr.f32.gmra.mrb[0].mxu0 %v7027
      %v7214 = vpop.f32.mrb[0].mxu0
      %v7215 = vadd.f32 0.0, %v7214
      %v7216 = vpop.f32.mrb[0].mxu0
      %7217 = vmatprep.mubr.f32.mxu0 0.0
      %7218 = vmatmul.mubr.f32.gmra.mrb[0].mxu0 %v7030
      %v7219 = vpop.f32.mrb[0].mxu0
      %v7220 = vadd.f32 0.0, %v7219
      %v7221 = vpop.f32.mrb[0].mxu0
      %7222 = vmatprep.mubr.f32.mxu0 0.0
      %7223 = vmatmul.mubr.f32.gmra.mrb[0].mxu0 %v7033
      %v7224 = vpop.f32.mrb[0].mxu0
      %v7225 = vadd.f32 0.0, %v7224
      %v7226 = vpop.f32.mrb[0].mxu0
      %7227 = vmatprep.mubr.f32.mxu0 0.0
      %7228 = vmatmul.mubr.f32.gmra.mrb[0].mxu0 %v7036
      %v7229 = vpop.f32.mrb[0].mxu0
      %v7230 = vadd.f32 0.0, %v7229
      %v7231 = vpop.f32.mrb[0].mxu0
      %7232 = vmatprep.mubr.f32.mxu0 0.0
      %7233 = vmatmul.mubr.f32.gmra.mrb[0].mxu0 %v7039
      %v7234 = vpop.f32.mrb[0].mxu0
      %v7235 = vadd.f32 0.0, %v7234
      %v7236 = vpop.f32.mrb[0].mxu0
      %7237 = vmatprep.mubr.f32.mxu0 0.0
      %7238 = vmatmul.mubr.f32.gmra.mrb[0].mxu0 %v7042
      %v7239 = vpop.f32.mrb[0].mxu0
      %v7240 = vadd.f32 0.0, %v7239
      %v7241 = vpop.f32.mrb[0].mxu0
      %7242 = vmatprep.mubr.f32.mxu0 0.0
      %7243 = vmatmul.mubr.f32.gmra.mrb[0].mxu0 %v7045
      %v7244 = vpop.f32.mrb[0].mxu0
      %v7245 = vadd.f32 0.0, %v7244
      %v7246 = vpop.f32.mrb[0].mxu0
      %7247 = vmatprep.mubr.f32.mxu0 0.0
      %7248 = vmatmul.mubr.f32.gmra.mrb[0].mxu0 %v7048
      %v7249 = vpop.f32.mrb[0].mxu0
      %v7250 = vadd.f32 0.0, %v7249
      %v7251 = vpop.f32.mrb[0].mxu0
      %7252 = vmatprep.mubr.f32.mxu0 0.0
      %7253 = vmatmul.mubr.f32.gmra.mrb[0].mxu0 %v7051
      %v7254 = vpop.f32.mrb[0].mxu0
      %v7255 = vadd.f32 0.0, %v7254
      %v7256 = vpop.f32.mrb[0].mxu0
      %7257 = vmatprep.mubr.f32.mxu0 0.0
      %7258 = vmatmul.mubr.f32.gmra.mrb[0].mxu0 %v7054
      %v7259 = vpop.f32.mrb[0].mxu0
      %v7260 = vadd.f32 0.0, %v7259
      %v7261 = vpop.f32.mrb[0].mxu0
      %7262 = vmatprep.mubr.f32.mxu0 0.0
      %7263 = vmatmul.mubr.f32.gmra.mrb[0].mxu0 %v7057
      %v7264 = vpop.f32.mrb[0].mxu0
      %v7265 = vadd.f32 0.0, %v7264
      %v7266 = vpop.f32.mrb[0].mxu0
      %7267 = vmatprep.mubr.f32.mxu0 0.0
      %7268 = vmatmul.mubr.f32.gmra.mrb[0].mxu0 %v7060
      %v7269 = vpop.f32.mrb[0].mxu0
      %v7270 = vadd.f32 0.0, %v7269
      %v7271 = vpop.f32.mrb[0].mxu0
      %7272 = vmatprep.mubr.f32.mxu0 0.0
      %7273 = vmatmul.mubr.f32.gmra.mrb[0].mxu0 %v7063
      %v7274 = vpop.f32.mrb[0].mxu0
      %v7275 = vadd.f32 0.0, %v7274
      %v7276 = vpop.f32.mrb[0].mxu0
      %7277 = vmatprep.mubr.f32.mxu0 0.0
      %7278 = vmatmul.mubr.f32.gmra.mrb[0].mxu0 %v7066
      %v7279 = vpop.f32.mrb[0].mxu0
      %v7280 = vadd.f32 0.0, %v7279
      %v7281 = vpop.f32.mrb[0].mxu0
      %7282 = vmatprep.mubr.f32.mxu0 0.0
      %7283 = vmatmul.mubr.f32.gmra.mrb[0].mxu0 %v7069
      %v7284 = vpop.f32.mrb[0].mxu0
      %v7285 = vadd.f32 0.0, %v7284
      %v7286 = vpop.f32.mrb[0].mxu0
      %7287 = vmatprep.mubr.f32.mxu0 0.0
      %7288 = vmatmul.mubr.f32.gmra.mrb[0].mxu0 %v7072
      %v7289 = vpop.f32.mrb[0].mxu0
      %v7290 = vadd.f32 0.0, %v7289
      %v7291 = vpop.f32.mrb[0].mxu0
      %7292 = vmatprep.mubr.f32.mxu0 0.0
      %7293 = vmatmul.mubr.f32.gmra.mrb[0].mxu0 %v7075
      %v7294 = vpop.f32.mrb[0].mxu0
      %v7295 = vadd.f32 0.0, %v7294
      %v7296 = vpop.f32.mrb[0].mxu0
      %7297 = vmatprep.mubr.f32.mxu0 0.0
      %7298 = vmatmul.mubr.f32.gmra.mrb[0].mxu0 %v7078
      %v7299 = vpop.f32.mrb[0].mxu0
      %v7300 = vadd.f32 0.0, %v7299
      %v7301 = vpop.f32.mrb[0].mxu0
      %7302 = vmatprep.mubr.f32.mxu0 0.0
      %7303 = vmatmul.mubr.f32.gmra.mrb[0].mxu0 %v7081
      %v7304 = vpop.f32.mrb[0].mxu0
      %v7305 = vadd.f32 0.0, %v7304
      %v7306 = vpop.f32.mrb[0].mxu0
      %7307 = vdwg.mxu0
      %v7308 = vadd.f32 %v6889, %v7150
      %v7309 = vadd.f32 %v6890, %v7155
      %v7310 = vadd.f32 %v6891, %v7160
      %v7311 = vadd.f32 %v6892, %v7165
      %v7312 = vadd.f32 %v6893, %v7170
      %v7313 = vadd.f32 %v6894, %v7175
      %v7314 = vadd.f32 %v6895, %v7180
      %v7315 = vadd.f32 %v6896, %v7185
      %v7316 = vadd.f32 %v6897, %v7190
      %v7317 = vadd.f32 %v6898, %v7195
      %v7318 = vadd.f32 %v6899, %v7200
      %v7319 = vadd.f32 %v6900, %v7205
      %v7320 = vadd.f32 %v6901, %v7210
      %v7321 = vadd.f32 %v6902, %v7215
      %v7322 = vadd.f32 %v6903, %v7220
      %v7323 = vadd.f32 %v6904, %v7225
      %v7324 = vadd.f32 %v6905, %v7230
      %v7325 = vadd.f32 %v6906, %v7235
      %v7326 = vadd.f32 %v6907, %v7240
      %v7327 = vadd.f32 %v6908, %v7245
      %v7328 = vadd.f32 %v6909, %v7250
      %v7329 = vadd.f32 %v6910, %v7255
      %v7330 = vadd.f32 %v6911, %v7260
      %v7331 = vadd.f32 %v6912, %v7265
      %v7332 = vadd.f32 %v6913, %v7270
      %v7333 = vadd.f32 %v6914, %v7275
      %v7334 = vadd.f32 %v6915, %v7280
      %v7335 = vadd.f32 %v6916, %v7285
      %v7336 = vadd.f32 %v6917, %v7290
      %v7337 = vadd.f32 %v6918, %v7295
      %v7338 = vadd.f32 %v6919, %v7300
      %v7339 = vadd.f32 %v6920, %v7305
      %v7340 = vld [vmem:[#allocation3 + $0x28] sm:$0xff]
      %v7341 = vld [vmem:[#allocation3 + $0x30] sm:$0xff]
      %v7342 = vld [vmem:[#allocation3 + $0x38] sm:$0xff]
      %v7343 = vld [vmem:[#allocation3 + $0x40] sm:$0xff]
      %v7344 = vld [vmem:[#allocation3 + $0x48] sm:$0xff]
      %v7345 = vld [vmem:[#allocation3 + $0x50] sm:$0xff]
      %v7346 = vld [vmem:[#allocation3 + $0x58] sm:$0xff]
      %v7347 = vld [vmem:[#allocation3 + $0x60] sm:$0xff]
      %v7348 = vld [vmem:[#allocation3 + $0x68] sm:$0xff]
      %v7349 = vld [vmem:[#allocation3 + $0x70] sm:$0xff]
      %v7350 = vld [vmem:[#allocation3 + $0x78] sm:$0xff]
      %v7351 = vld [vmem:[#allocation3 + $0x80] sm:$0xff]
      %v7352 = vld [vmem:[#allocation3 + $0x88] sm:$0xff]
      %v7353 = vld [vmem:[#allocation3 + $0x90] sm:$0xff]
      %v7354 = vld [vmem:[#allocation3 + $0x98] sm:$0xff]
      %v7355 = vld [vmem:[#allocation3 + $0xa0] sm:$0xff]
      %v7356 = vld [vmem:[#allocation3 + $0xa8] sm:$0xff]
      %v7357 = vld [vmem:[#allocation3 + $0xb0] sm:$0xff]
      %v7358 = vld [vmem:[#allocation3 + $0xb8] sm:$0xff]
      %v7359 = vld [vmem:[#allocation3 + $0xc0] sm:$0xff]
      %v7360 = vld [vmem:[#allocation3 + $0xc8] sm:$0xff]
      %v7361 = vld [vmem:[#allocation3 + $0xd0] sm:$0xff]
      %v7362 = vld [vmem:[#allocation3 + $0xd8] sm:$0xff]
      %v7363 = vld [vmem:[#allocation3 + $0xe0] sm:$0xff]
      %v7364 = vld [vmem:[#allocation3 + $0xe8] sm:$0xff]
      %v7365 = vld [vmem:[#allocation3 + $0xf0] sm:$0xff]
      %v7366 = vld [vmem:[#allocation3 + $0xf8] sm:$0xff]
      %v7367 = vld [vmem:[#allocation3 + $0x100] sm:$0xff]
      %v7368 = vld [vmem:[#allocation3 + $0x108] sm:$0xff]
      %v7369 = vld [vmem:[#allocation3 + $0x110] sm:$0xff]
      %v7370 = vld [vmem:[#allocation3 + $0x118] sm:$0xff]
      %v7371 = vld [vmem:[#allocation3 + $0x120] sm:$0xff]
      %s7372 = scalar_lea.vmem %s5, 56
      %v7373 = vld [vmem:[%s7372] sm:$0xff]
      %v7375 = vsel %vm4497, %v7340, 0
      %v7378 = vsel %vm4497, %v7341, 0
      %v7381 = vsel %vm4497, %v7342, 0
      %v7384 = vsel %vm4497, %v7343, 0
      %v7387 = vsel %vm4497, %v7344, 0
      %v7390 = vsel %vm4497, %v7345, 0
      %v7393 = vsel %vm4497, %v7346, 0
      %v7396 = vsel %vm4497, %v7347, 0
      %v7399 = vsel %vm4497, %v7348, 0
      %v7402 = vsel %vm4497, %v7349, 0
      %v7405 = vsel %vm4497, %v7350, 0
      %v7408 = vsel %vm4497, %v7351, 0
      %v7411 = vsel %vm4497, %v7352, 0
      %v7414 = vsel %vm4497, %v7353, 0
      %v7417 = vsel %vm4497, %v7354, 0
      %v7420 = vsel %vm4497, %v7355, 0
      %v7423 = vsel %vm4497, %v7356, 0
      %v7426 = vsel %vm4497, %v7357, 0
      %v7429 = vsel %vm4497, %v7358, 0
      %v7432 = vsel %vm4497, %v7359, 0
      %v7435 = vsel %vm4497, %v7360, 0
      %v7438 = vsel %vm4497, %v7361, 0
      %v7441 = vsel %vm4497, %v7362, 0
      %v7444 = vsel %vm4497, %v7363, 0
      %v7447 = vsel %vm4497, %v7364, 0
      %v7450 = vsel %vm4497, %v7365, 0
      %v7453 = vsel %vm4497, %v7366, 0
      %v7456 = vsel %vm4497, %v7367, 0
      %v7459 = vsel %vm4497, %v7368, 0
      %v7462 = vsel %vm4497, %v7369, 0
      %v7465 = vsel %vm4497, %v7370, 0
      %v7468 = vsel %vm4497, %v7371, 0
      %7470 = vmatprep.subr.mxu0 0.0
      %7471 = vmatpush1.msra.mxu0 %v7373
      %7472 = vmatprep.subr.mxu0 0.0
      %7473 = vmatpush1.msra.mxu0 0.0
      %7474 = vmatprep.subr.mxu0 0.0
      %7475 = vmatpush1.msra.mxu0 0.0
      %7476 = vmatprep.subr.mxu0 0.0
      %7477 = vmatpush1.msra.mxu0 0.0
      %7478 = vmatprep.subr.mxu0 0.0
      %7479 = vmatpush1.msra.mxu0 0.0
      %7480 = vmatprep.subr.mxu0 0.0
      %7481 = vmatpush1.msra.mxu0 0.0
      %7482 = vmatprep.subr.mxu0 0.0
      %7483 = vmatpush1.msra.mxu0 0.0
      %7484 = vmatprep.subr.mxu0 0.0
      %7485 = vmatpush1.msra.mxu0 0.0
      %7486 = vmatprep.subr.mxu0 0.0
      %7487 = vmatpush1.msra.mxu0 0.0
      %7488 = vmatprep.subr.mxu0 0.0
      %7489 = vmatpush1.msra.mxu0 0.0
      %7490 = vmatprep.subr.mxu0 0.0
      %7491 = vmatpush1.msra.mxu0 0.0
      %7492 = vmatprep.subr.mxu0 0.0
      %7493 = vmatpush1.msra.mxu0 0.0
      %7494 = vmatprep.subr.mxu0 0.0
      %7495 = vmatpush1.msra.mxu0 0.0
      %7496 = vmatprep.subr.mxu0 0.0
      %7497 = vmatpush1.msra.mxu0 0.0
      %7498 = vmatprep.subr.mxu0 0.0
      %7499 = vmatpush1.msra.mxu0 0.0
      %7500 = vmatprep.subr.mxu0 0.0
      %7501 = vmatpush1.msra.mxu0 0.0
      %7502 = vmatprep.subr.mxu0 0.0
      %7503 = vmatpush1.msra.mxu0 0.0
      %7504 = vmatprep.subr.mxu0 0.0
      %7505 = vmatpush1.msra.mxu0 0.0
      %7506 = vmatprep.subr.mxu0 0.0
      %7507 = vmatpush1.msra.mxu0 0.0
      %7508 = vmatprep.subr.mxu0 0.0
      %7509 = vmatpush1.msra.mxu0 0.0
      %7510 = vmatprep.subr.mxu0 0.0
      %7511 = vmatpush1.msra.mxu0 0.0
      %7512 = vmatprep.subr.mxu0 0.0
      %7513 = vmatpush1.msra.mxu0 0.0
      %7514 = vmatprep.subr.mxu0 0.0
      %7515 = vmatpush1.msra.mxu0 0.0
      %7516 = vmatprep.subr.mxu0 0.0
      %7517 = vmatpush1.msra.mxu0 0.0
      %7518 = vmatprep.subr.mxu0 0.0
      %7519 = vmatpush1.msra.mxu0 0.0
      %7520 = vmatprep.subr.mxu0 0.0
      %7521 = vmatpush1.msra.mxu0 0.0
      %7522 = vmatprep.subr.mxu0 0.0
      %7523 = vmatpush1.msra.mxu0 0.0
      %7524 = vmatprep.subr.mxu0 0.0
      %7525 = vmatpush1.msra.mxu0 0.0
      %7526 = vmatprep.subr.mxu0 0.0
      %7527 = vmatpush1.msra.mxu0 0.0
      %7528 = vmatprep.subr.mxu0 0.0
      %7529 = vmatpush1.msra.mxu0 0.0
      %7530 = vmatprep.subr.mxu0 0.0
      %7531 = vmatpush1.msra.mxu0 0.0
      %7532 = vmatprep.subr.mxu0 0.0
      %7533 = vmatpush1.msra.mxu0 0.0
      %7534 = vmatprep.mubr.f32.mxu0 0.0
      %7535 = vmatmul.mubr.f32.gmra.mrb[0].mxu0 %v7375
      %v7536 = vpop.f32.mrb[0].mxu0
      %v7537 = vadd.f32 0.0, %v7536
      %v7538 = vpop.f32.mrb[0].mxu0
      %7539 = vmatprep.mubr.f32.mxu0 0.0
      %7540 = vmatmul.mubr.f32.gmra.mrb[0].mxu0 %v7378
      %v7541 = vpop.f32.mrb[0].mxu0
      %v7542 = vadd.f32 0.0, %v7541
      %v7543 = vpop.f32.mrb[0].mxu0
      %7544 = vmatprep.mubr.f32.mxu0 0.0
      %7545 = vmatmul.mubr.f32.gmra.mrb[0].mxu0 %v7381
      %v7546 = vpop.f32.mrb[0].mxu0
      %v7547 = vadd.f32 0.0, %v7546
      %v7548 = vpop.f32.mrb[0].mxu0
      %7549 = vmatprep.mubr.f32.mxu0 0.0
      %7550 = vmatmul.mubr.f32.gmra.mrb[0].mxu0 %v7384
      %v7551 = vpop.f32.mrb[0].mxu0
      %v7552 = vadd.f32 0.0, %v7551
      %v7553 = vpop.f32.mrb[0].mxu0
      %7554 = vmatprep.mubr.f32.mxu0 0.0
      %7555 = vmatmul.mubr.f32.gmra.mrb[0].mxu0 %v7387
      %v7556 = vpop.f32.mrb[0].mxu0
      %v7557 = vadd.f32 0.0, %v7556
      %v7558 = vpop.f32.mrb[0].mxu0
      %7559 = vmatprep.mubr.f32.mxu0 0.0
      %7560 = vmatmul.mubr.f32.gmra.mrb[0].mxu0 %v7390
      %v7561 = vpop.f32.mrb[0].mxu0
      %v7562 = vadd.f32 0.0, %v7561
      %v7563 = vpop.f32.mrb[0].mxu0
      %7564 = vmatprep.mubr.f32.mxu0 0.0
      %7565 = vmatmul.mubr.f32.gmra.mrb[0].mxu0 %v7393
      %v7566 = vpop.f32.mrb[0].mxu0
      %v7567 = vadd.f32 0.0, %v7566
      %v7568 = vpop.f32.mrb[0].mxu0
      %7569 = vmatprep.mubr.f32.mxu0 0.0
      %7570 = vmatmul.mubr.f32.gmra.mrb[0].mxu0 %v7396
      %v7571 = vpop.f32.mrb[0].mxu0
      %v7572 = vadd.f32 0.0, %v7571
      %v7573 = vpop.f32.mrb[0].mxu0
      %7574 = vmatprep.mubr.f32.mxu0 0.0
      %7575 = vmatmul.mubr.f32.gmra.mrb[0].mxu0 %v7399
      %v7576 = vpop.f32.mrb[0].mxu0
      %v7577 = vadd.f32 0.0, %v7576
      %v7578 = vpop.f32.mrb[0].mxu0
      %7579 = vmatprep.mubr.f32.mxu0 0.0
      %7580 = vmatmul.mubr.f32.gmra.mrb[0].mxu0 %v7402
      %v7581 = vpop.f32.mrb[0].mxu0
      %v7582 = vadd.f32 0.0, %v7581
      %v7583 = vpop.f32.mrb[0].mxu0
      %7584 = vmatprep.mubr.f32.mxu0 0.0
      %7585 = vmatmul.mubr.f32.gmra.mrb[0].mxu0 %v7405
      %v7586 = vpop.f32.mrb[0].mxu0
      %v7587 = vadd.f32 0.0, %v7586
      %v7588 = vpop.f32.mrb[0].mxu0
      %7589 = vmatprep.mubr.f32.mxu0 0.0
      %7590 = vmatmul.mubr.f32.gmra.mrb[0].mxu0 %v7408
      %v7591 = vpop.f32.mrb[0].mxu0
      %v7592 = vadd.f32 0.0, %v7591
      %v7593 = vpop.f32.mrb[0].mxu0
      %7594 = vmatprep.mubr.f32.mxu0 0.0
      %7595 = vmatmul.mubr.f32.gmra.mrb[0].mxu0 %v7411
      %v7596 = vpop.f32.mrb[0].mxu0
      %v7597 = vadd.f32 0.0, %v7596
      %v7598 = vpop.f32.mrb[0].mxu0
      %7599 = vmatprep.mubr.f32.mxu0 0.0
      %7600 = vmatmul.mubr.f32.gmra.mrb[0].mxu0 %v7414
      %v7601 = vpop.f32.mrb[0].mxu0
      %v7602 = vadd.f32 0.0, %v7601
      %v7603 = vpop.f32.mrb[0].mxu0
      %7604 = vmatprep.mubr.f32.mxu0 0.0
      %7605 = vmatmul.mubr.f32.gmra.mrb[0].mxu0 %v7417
      %v7606 = vpop.f32.mrb[0].mxu0
      %v7607 = vadd.f32 0.0, %v7606
      %v7608 = vpop.f32.mrb[0].mxu0
      %7609 = vmatprep.mubr.f32.mxu0 0.0
      %7610 = vmatmul.mubr.f32.gmra.mrb[0].mxu0 %v7420
      %v7611 = vpop.f32.mrb[0].mxu0
      %v7612 = vadd.f32 0.0, %v7611
      %v7613 = vpop.f32.mrb[0].mxu0
      %7614 = vmatprep.mubr.f32.mxu0 0.0
      %7615 = vmatmul.mubr.f32.gmra.mrb[0].mxu0 %v7423
      %v7616 = vpop.f32.mrb[0].mxu0
      %v7617 = vadd.f32 0.0, %v7616
      %v7618 = vpop.f32.mrb[0].mxu0
      %7619 = vmatprep.mubr.f32.mxu0 0.0
      %7620 = vmatmul.mubr.f32.gmra.mrb[0].mxu0 %v7426
      %v7621 = vpop.f32.mrb[0].mxu0
      %v7622 = vadd.f32 0.0, %v7621
      %v7623 = vpop.f32.mrb[0].mxu0
      %7624 = vmatprep.mubr.f32.mxu0 0.0
      %7625 = vmatmul.mubr.f32.gmra.mrb[0].mxu0 %v7429
      %v7626 = vpop.f32.mrb[0].mxu0
      %v7627 = vadd.f32 0.0, %v7626
      %v7628 = vpop.f32.mrb[0].mxu0
      %7629 = vmatprep.mubr.f32.mxu0 0.0
      %7630 = vmatmul.mubr.f32.gmra.mrb[0].mxu0 %v7432
      %v7631 = vpop.f32.mrb[0].mxu0
      %v7632 = vadd.f32 0.0, %v7631
      %v7633 = vpop.f32.mrb[0].mxu0
      %7634 = vmatprep.mubr.f32.mxu0 0.0
      %7635 = vmatmul.mubr.f32.gmra.mrb[0].mxu0 %v7435
      %v7636 = vpop.f32.mrb[0].mxu0
      %v7637 = vadd.f32 0.0, %v7636
      %v7638 = vpop.f32.mrb[0].mxu0
      %7639 = vmatprep.mubr.f32.mxu0 0.0
      %7640 = vmatmul.mubr.f32.gmra.mrb[0].mxu0 %v7438
      %v7641 = vpop.f32.mrb[0].mxu0
      %v7642 = vadd.f32 0.0, %v7641
      %v7643 = vpop.f32.mrb[0].mxu0
      %7644 = vmatprep.mubr.f32.mxu0 0.0
      %7645 = vmatmul.mubr.f32.gmra.mrb[0].mxu0 %v7441
      %v7646 = vpop.f32.mrb[0].mxu0
      %v7647 = vadd.f32 0.0, %v7646
      %v7648 = vpop.f32.mrb[0].mxu0
      %7649 = vmatprep.mubr.f32.mxu0 0.0
      %7650 = vmatmul.mubr.f32.gmra.mrb[0].mxu0 %v7444
      %v7651 = vpop.f32.mrb[0].mxu0
      %v7652 = vadd.f32 0.0, %v7651
      %v7653 = vpop.f32.mrb[0].mxu0
      %7654 = vmatprep.mubr.f32.mxu0 0.0
      %7655 = vmatmul.mubr.f32.gmra.mrb[0].mxu0 %v7447
      %v7656 = vpop.f32.mrb[0].mxu0
      %v7657 = vadd.f32 0.0, %v7656
      %v7658 = vpop.f32.mrb[0].mxu0
      %7659 = vmatprep.mubr.f32.mxu0 0.0
      %7660 = vmatmul.mubr.f32.gmra.mrb[0].mxu0 %v7450
      %v7661 = vpop.f32.mrb[0].mxu0
      %v7662 = vadd.f32 0.0, %v7661
      %v7663 = vpop.f32.mrb[0].mxu0
      %7664 = vmatprep.mubr.f32.mxu0 0.0
      %7665 = vmatmul.mubr.f32.gmra.mrb[0].mxu0 %v7453
      %v7666 = vpop.f32.mrb[0].mxu0
      %v7667 = vadd.f32 0.0, %v7666
      %v7668 = vpop.f32.mrb[0].mxu0
      %7669 = vmatprep.mubr.f32.mxu0 0.0
      %7670 = vmatmul.mubr.f32.gmra.mrb[0].mxu0 %v7456
      %v7671 = vpop.f32.mrb[0].mxu0
      %v7672 = vadd.f32 0.0, %v7671
      %v7673 = vpop.f32.mrb[0].mxu0
      %7674 = vmatprep.mubr.f32.mxu0 0.0
      %7675 = vmatmul.mubr.f32.gmra.mrb[0].mxu0 %v7459
      %v7676 = vpop.f32.mrb[0].mxu0
      %v7677 = vadd.f32 0.0, %v7676
      %v7678 = vpop.f32.mrb[0].mxu0
      %7679 = vmatprep.mubr.f32.mxu0 0.0
      %7680 = vmatmul.mubr.f32.gmra.mrb[0].mxu0 %v7462
      %v7681 = vpop.f32.mrb[0].mxu0
      %v7682 = vadd.f32 0.0, %v7681
      %v7683 = vpop.f32.mrb[0].mxu0
      %7684 = vmatprep.mubr.f32.mxu0 0.0
      %7685 = vmatmul.mubr.f32.gmra.mrb[0].mxu0 %v7465
      %v7686 = vpop.f32.mrb[0].mxu0
      %v7687 = vadd.f32 0.0, %v7686
      %v7688 = vpop.f32.mrb[0].mxu0
      %7689 = vmatprep.mubr.f32.mxu0 0.0
      %7690 = vmatmul.mubr.f32.gmra.mrb[0].mxu0 %v7468
      %v7691 = vpop.f32.mrb[0].mxu0
      %v7692 = vadd.f32 0.0, %v7691
      %v7693 = vpop.f32.mrb[0].mxu0
      %7694 = vdwg.mxu0
      %v7695 = vadd.f32 %v7308, %v7537
      %v7696 = vadd.f32 %v7309, %v7542
      %v7697 = vadd.f32 %v7310, %v7547
      %v7698 = vadd.f32 %v7311, %v7552
      %v7699 = vadd.f32 %v7312, %v7557
      %v7700 = vadd.f32 %v7313, %v7562
      %v7701 = vadd.f32 %v7314, %v7567
      %v7702 = vadd.f32 %v7315, %v7572
      %v7703 = vadd.f32 %v7316, %v7577
      %v7704 = vadd.f32 %v7317, %v7582
      %v7705 = vadd.f32 %v7318, %v7587
      %v7706 = vadd.f32 %v7319, %v7592
      %v7707 = vadd.f32 %v7320, %v7597
      %v7708 = vadd.f32 %v7321, %v7602
      %v7709 = vadd.f32 %v7322, %v7607
      %v7710 = vadd.f32 %v7323, %v7612
      %v7711 = vadd.f32 %v7324, %v7617
      %v7712 = vadd.f32 %v7325, %v7622
      %v7713 = vadd.f32 %v7326, %v7627
      %v7714 = vadd.f32 %v7327, %v7632
      %v7715 = vadd.f32 %v7328, %v7637
      %v7716 = vadd.f32 %v7329, %v7642
      %v7717 = vadd.f32 %v7330, %v7647
      %v7718 = vadd.f32 %v7331, %v7652
      %v7719 = vadd.f32 %v7332, %v7657
      %v7720 = vadd.f32 %v7333, %v7662
      %v7721 = vadd.f32 %v7334, %v7667
      %v7722 = vadd.f32 %v7335, %v7672
      %v7723 = vadd.f32 %v7336, %v7677
      %v7724 = vadd.f32 %v7337, %v7682
      %v7725 = vadd.f32 %v7338, %v7687
      %v7726 = vadd.f32 %v7339, %v7692
      %v7727 = vld [vmem:[#allocation3 + $0x29] sm:$0xff]
      %v7728 = vld [vmem:[#allocation3 + $0x31] sm:$0xff]
      %v7729 = vld [vmem:[#allocation3 + $0x39] sm:$0xff]
      %v7730 = vld [vmem:[#allocation3 + $0x41] sm:$0xff]
      %v7731 = vld [vmem:[#allocation3 + $0x49] sm:$0xff]
      %v7732 = vld [vmem:[#allocation3 + $0x51] sm:$0xff]
      %v7733 = vld [vmem:[#allocation3 + $0x59] sm:$0xff]
      %v7734 = vld [vmem:[#allocation3 + $0x61] sm:$0xff]
      %v7735 = vld [vmem:[#allocation3 + $0x69] sm:$0xff]
      %v7736 = vld [vmem:[#allocation3 + $0x71] sm:$0xff]
      %v7737 = vld [vmem:[#allocation3 + $0x79] sm:$0xff]
      %v7738 = vld [vmem:[#allocation3 + $0x81] sm:$0xff]
      %v7739 = vld [vmem:[#allocation3 + $0x89] sm:$0xff]
      %v7740 = vld [vmem:[#allocation3 + $0x91] sm:$0xff]
      %v7741 = vld [vmem:[#allocation3 + $0x99] sm:$0xff]
      %v7742 = vld [vmem:[#allocation3 + $0xa1] sm:$0xff]
      %v7743 = vld [vmem:[#allocation3 + $0xa9] sm:$0xff]
      %v7744 = vld [vmem:[#allocation3 + $0xb1] sm:$0xff]
      %v7745 = vld [vmem:[#allocation3 + $0xb9] sm:$0xff]
      %v7746 = vld [vmem:[#allocation3 + $0xc1] sm:$0xff]
      %v7747 = vld [vmem:[#allocation3 + $0xc9] sm:$0xff]
      %v7748 = vld [vmem:[#allocation3 + $0xd1] sm:$0xff]
      %v7749 = vld [vmem:[#allocation3 + $0xd9] sm:$0xff]
      %v7750 = vld [vmem:[#allocation3 + $0xe1] sm:$0xff]
      %v7751 = vld [vmem:[#allocation3 + $0xe9] sm:$0xff]
      %v7752 = vld [vmem:[#allocation3 + $0xf1] sm:$0xff]
      %v7753 = vld [vmem:[#allocation3 + $0xf9] sm:$0xff]
      %v7754 = vld [vmem:[#allocation3 + $0x101] sm:$0xff]
      %v7755 = vld [vmem:[#allocation3 + $0x109] sm:$0xff]
      %v7756 = vld [vmem:[#allocation3 + $0x111] sm:$0xff]
      %v7757 = vld [vmem:[#allocation3 + $0x119] sm:$0xff]
      %v7758 = vld [vmem:[#allocation3 + $0x121] sm:$0xff]
      %v7759 = vmul.f32 %v7727, %v1411
      %v7760 = vmul.f32 %v7728, %v1416
      %v7761 = vmul.f32 %v7729, %v1421
      %v7762 = vmul.f32 %v7730, %v1426
      %v7763 = vmul.f32 %v7731, %v1431
      %v7764 = vmul.f32 %v7732, %v1436
      %v7765 = vmul.f32 %v7733, %v1441
      %v7766 = vmul.f32 %v7734, %v1446
      %v7767 = vmul.f32 %v7735, %v1451
      %v7768 = vmul.f32 %v7736, %v1456
      %v7769 = vmul.f32 %v7737, %v1461
      %v7770 = vmul.f32 %v7738, %v1466
      %v7771 = vmul.f32 %v7739, %v1471
      %v7772 = vmul.f32 %v7740, %v1476
      %v7773 = vmul.f32 %v7741, %v1481
      %v7774 = vmul.f32 %v7742, %v1486
      %v7775 = vmul.f32 %v7743, %v1491
      %v7776 = vmul.f32 %v7744, %v1496
      %v7777 = vmul.f32 %v7745, %v1501
      %v7778 = vmul.f32 %v7746, %v1506
      %v7779 = vmul.f32 %v7747, %v1511
      %v7780 = vmul.f32 %v7748, %v1516
      %v7781 = vmul.f32 %v7749, %v1521
      %v7782 = vmul.f32 %v7750, %v1526
      %v7783 = vmul.f32 %v7751, %v1531
      %v7784 = vmul.f32 %v7752, %v1536
      %v7785 = vmul.f32 %v7753, %v1541
      %v7786 = vmul.f32 %v7754, %v1546
      %v7787 = vmul.f32 %v7755, %v1551
      %v7788 = vmul.f32 %v7756, %v1556
      %v7789 = vmul.f32 %v7757, %v1561
      %v7790 = vmul.f32 %v7758, %v1566
      %s7791 = scalar_lea.vmem %s5, 64
      %v7792 = vld [vmem:[%s7791] sm:$0xff]
      %v7794 = vsel %vm4497, %v7759, 0
      %v7797 = vsel %vm4497, %v7760, 0
      %v7800 = vsel %vm4497, %v7761, 0
      %v7803 = vsel %vm4497, %v7762, 0
      %v7806 = vsel %vm4497, %v7763, 0
      %v7809 = vsel %vm4497, %v7764, 0
      %v7812 = vsel %vm4497, %v7765, 0
      %v7815 = vsel %vm4497, %v7766, 0
      %v7818 = vsel %vm4497, %v7767, 0
      %v7821 = vsel %vm4497, %v7768, 0
      %v7824 = vsel %vm4497, %v7769, 0
      %v7827 = vsel %vm4497, %v7770, 0
      %v7830 = vsel %vm4497, %v7771, 0
      %v7833 = vsel %vm4497, %v7772, 0
      %v7836 = vsel %vm4497, %v7773, 0
      %v7839 = vsel %vm4497, %v7774, 0
      %v7842 = vsel %vm4497, %v7775, 0
      %v7845 = vsel %vm4497, %v7776, 0
      %v7848 = vsel %vm4497, %v7777, 0
      %v7851 = vsel %vm4497, %v7778, 0
      %v7854 = vsel %vm4497, %v7779, 0
      %v7857 = vsel %vm4497, %v7780, 0
      %v7860 = vsel %vm4497, %v7781, 0
      %v7863 = vsel %vm4497, %v7782, 0
      %v7866 = vsel %vm4497, %v7783, 0
      %v7869 = vsel %vm4497, %v7784, 0
      %v7872 = vsel %vm4497, %v7785, 0
      %v7875 = vsel %vm4497, %v7786, 0
      %v7878 = vsel %vm4497, %v7787, 0
      %v7881 = vsel %vm4497, %v7788, 0
      %v7884 = vsel %vm4497, %v7789, 0
      %v7887 = vsel %vm4497, %v7790, 0
      %7889 = vmatprep.subr.mxu0 0.0
      %7890 = vmatpush1.msra.mxu0 %v7792
      %7891 = vmatprep.subr.mxu0 0.0
      %7892 = vmatpush1.msra.mxu0 0.0
      %7893 = vmatprep.subr.mxu0 0.0
      %7894 = vmatpush1.msra.mxu0 0.0
      %7895 = vmatprep.subr.mxu0 0.0
      %7896 = vmatpush1.msra.mxu0 0.0
      %7897 = vmatprep.subr.mxu0 0.0
      %7898 = vmatpush1.msra.mxu0 0.0
      %7899 = vmatprep.subr.mxu0 0.0
      %7900 = vmatpush1.msra.mxu0 0.0
      %7901 = vmatprep.subr.mxu0 0.0
      %7902 = vmatpush1.msra.mxu0 0.0
      %7903 = vmatprep.subr.mxu0 0.0
      %7904 = vmatpush1.msra.mxu0 0.0
      %7905 = vmatprep.subr.mxu0 0.0
      %7906 = vmatpush1.msra.mxu0 0.0
      %7907 = vmatprep.subr.mxu0 0.0
      %7908 = vmatpush1.msra.mxu0 0.0
      %7909 = vmatprep.subr.mxu0 0.0
      %7910 = vmatpush1.msra.mxu0 0.0
      %7911 = vmatprep.subr.mxu0 0.0
      %7912 = vmatpush1.msra.mxu0 0.0
      %7913 = vmatprep.subr.mxu0 0.0
      %7914 = vmatpush1.msra.mxu0 0.0
      %7915 = vmatprep.subr.mxu0 0.0
      %7916 = vmatpush1.msra.mxu0 0.0
      %7917 = vmatprep.subr.mxu0 0.0
      %7918 = vmatpush1.msra.mxu0 0.0
      %7919 = vmatprep.subr.mxu0 0.0
      %7920 = vmatpush1.msra.mxu0 0.0
      %7921 = vmatprep.subr.mxu0 0.0
      %7922 = vmatpush1.msra.mxu0 0.0
      %7923 = vmatprep.subr.mxu0 0.0
      %7924 = vmatpush1.msra.mxu0 0.0
      %7925 = vmatprep.subr.mxu0 0.0
      %7926 = vmatpush1.msra.mxu0 0.0
      %7927 = vmatprep.subr.mxu0 0.0
      %7928 = vmatpush1.msra.mxu0 0.0
      %7929 = vmatprep.subr.mxu0 0.0
      %7930 = vmatpush1.msra.mxu0 0.0
      %7931 = vmatprep.subr.mxu0 0.0
      %7932 = vmatpush1.msra.mxu0 0.0
      %7933 = vmatprep.subr.mxu0 0.0
      %7934 = vmatpush1.msra.mxu0 0.0
      %7935 = vmatprep.subr.mxu0 0.0
      %7936 = vmatpush1.msra.mxu0 0.0
      %7937 = vmatprep.subr.mxu0 0.0
      %7938 = vmatpush1.msra.mxu0 0.0
      %7939 = vmatprep.subr.mxu0 0.0
      %7940 = vmatpush1.msra.mxu0 0.0
      %7941 = vmatprep.subr.mxu0 0.0
      %7942 = vmatpush1.msra.mxu0 0.0
      %7943 = vmatprep.subr.mxu0 0.0
      %7944 = vmatpush1.msra.mxu0 0.0
      %7945 = vmatprep.subr.mxu0 0.0
      %7946 = vmatpush1.msra.mxu0 0.0
      %7947 = vmatprep.subr.mxu0 0.0
      %7948 = vmatpush1.msra.mxu0 0.0
      %7949 = vmatprep.subr.mxu0 0.0
      %7950 = vmatpush1.msra.mxu0 0.0
      %7951 = vmatprep.subr.mxu0 0.0
      %7952 = vmatpush1.msra.mxu0 0.0
      %7953 = vmatprep.mubr.f32.mxu0 0.0
      %7954 = vmatmul.mubr.f32.gmra.mrb[0].mxu0 %v7794
      %v7955 = vpop.f32.mrb[0].mxu0
      %v7956 = vadd.f32 0.0, %v7955
      %v7957 = vpop.f32.mrb[0].mxu0
      %7958 = vmatprep.mubr.f32.mxu0 0.0
      %7959 = vmatmul.mubr.f32.gmra.mrb[0].mxu0 %v7797
      %v7960 = vpop.f32.mrb[0].mxu0
      %v7961 = vadd.f32 0.0, %v7960
      %v7962 = vpop.f32.mrb[0].mxu0
      %7963 = vmatprep.mubr.f32.mxu0 0.0
      %7964 = vmatmul.mubr.f32.gmra.mrb[0].mxu0 %v7800
      %v7965 = vpop.f32.mrb[0].mxu0
      %v7966 = vadd.f32 0.0, %v7965
      %v7967 = vpop.f32.mrb[0].mxu0
      %7968 = vmatprep.mubr.f32.mxu0 0.0
      %7969 = vmatmul.mubr.f32.gmra.mrb[0].mxu0 %v7803
      %v7970 = vpop.f32.mrb[0].mxu0
      %v7971 = vadd.f32 0.0, %v7970
      %v7972 = vpop.f32.mrb[0].mxu0
      %7973 = vmatprep.mubr.f32.mxu0 0.0
      %7974 = vmatmul.mubr.f32.gmra.mrb[0].mxu0 %v7806
      %v7975 = vpop.f32.mrb[0].mxu0
      %v7976 = vadd.f32 0.0, %v7975
      %v7977 = vpop.f32.mrb[0].mxu0
      %7978 = vmatprep.mubr.f32.mxu0 0.0
      %7979 = vmatmul.mubr.f32.gmra.mrb[0].mxu0 %v7809
      %v7980 = vpop.f32.mrb[0].mxu0
      %v7981 = vadd.f32 0.0, %v7980
      %v7982 = vpop.f32.mrb[0].mxu0
      %7983 = vmatprep.mubr.f32.mxu0 0.0
      %7984 = vmatmul.mubr.f32.gmra.mrb[0].mxu0 %v7812
      %v7985 = vpop.f32.mrb[0].mxu0
      %v7986 = vadd.f32 0.0, %v7985
      %v7987 = vpop.f32.mrb[0].mxu0
      %7988 = vmatprep.mubr.f32.mxu0 0.0
      %7989 = vmatmul.mubr.f32.gmra.mrb[0].mxu0 %v7815
      %v7990 = vpop.f32.mrb[0].mxu0
      %v7991 = vadd.f32 0.0, %v7990
      %v7992 = vpop.f32.mrb[0].mxu0
      %7993 = vmatprep.mubr.f32.mxu0 0.0
      %7994 = vmatmul.mubr.f32.gmra.mrb[0].mxu0 %v7818
      %v7995 = vpop.f32.mrb[0].mxu0
      %v7996 = vadd.f32 0.0, %v7995
      %v7997 = vpop.f32.mrb[0].mxu0
      %7998 = vmatprep.mubr.f32.mxu0 0.0
      %7999 = vmatmul.mubr.f32.gmra.mrb[0].mxu0 %v7821
      %v8000 = vpop.f32.mrb[0].mxu0
      %v8001 = vadd.f32 0.0, %v8000
      %v8002 = vpop.f32.mrb[0].mxu0
      %8003 = vmatprep.mubr.f32.mxu0 0.0
      %8004 = vmatmul.mubr.f32.gmra.mrb[0].mxu0 %v7824
      %v8005 = vpop.f32.mrb[0].mxu0
      %v8006 = vadd.f32 0.0, %v8005
      %v8007 = vpop.f32.mrb[0].mxu0
      %8008 = vmatprep.mubr.f32.mxu0 0.0
      %8009 = vmatmul.mubr.f32.gmra.mrb[0].mxu0 %v7827
      %v8010 = vpop.f32.mrb[0].mxu0
      %v8011 = vadd.f32 0.0, %v8010
      %v8012 = vpop.f32.mrb[0].mxu0
      %8013 = vmatprep.mubr.f32.mxu0 0.0
      %8014 = vmatmul.mubr.f32.gmra.mrb[0].mxu0 %v7830
      %v8015 = vpop.f32.mrb[0].mxu0
      %v8016 = vadd.f32 0.0, %v8015
      %v8017 = vpop.f32.mrb[0].mxu0
      %8018 = vmatprep.mubr.f32.mxu0 0.0
      %8019 = vmatmul.mubr.f32.gmra.mrb[0].mxu0 %v7833
      %v8020 = vpop.f32.mrb[0].mxu0
      %v8021 = vadd.f32 0.0, %v8020
      %v8022 = vpop.f32.mrb[0].mxu0
      %8023 = vmatprep.mubr.f32.mxu0 0.0
      %8024 = vmatmul.mubr.f32.gmra.mrb[0].mxu0 %v7836
      %v8025 = vpop.f32.mrb[0].mxu0
      %v8026 = vadd.f32 0.0, %v8025
      %v8027 = vpop.f32.mrb[0].mxu0
      %8028 = vmatprep.mubr.f32.mxu0 0.0
      %8029 = vmatmul.mubr.f32.gmra.mrb[0].mxu0 %v7839
      %v8030 = vpop.f32.mrb[0].mxu0
      %v8031 = vadd.f32 0.0, %v8030
      %v8032 = vpop.f32.mrb[0].mxu0
      %8033 = vmatprep.mubr.f32.mxu0 0.0
      %8034 = vmatmul.mubr.f32.gmra.mrb[0].mxu0 %v7842
      %v8035 = vpop.f32.mrb[0].mxu0
      %v8036 = vadd.f32 0.0, %v8035
      %v8037 = vpop.f32.mrb[0].mxu0
      %8038 = vmatprep.mubr.f32.mxu0 0.0
      %8039 = vmatmul.mubr.f32.gmra.mrb[0].mxu0 %v7845
      %v8040 = vpop.f32.mrb[0].mxu0
      %v8041 = vadd.f32 0.0, %v8040
      %v8042 = vpop.f32.mrb[0].mxu0
      %8043 = vmatprep.mubr.f32.mxu0 0.0
      %8044 = vmatmul.mubr.f32.gmra.mrb[0].mxu0 %v7848
      %v8045 = vpop.f32.mrb[0].mxu0
      %v8046 = vadd.f32 0.0, %v8045
      %v8047 = vpop.f32.mrb[0].mxu0
      %8048 = vmatprep.mubr.f32.mxu0 0.0
      %8049 = vmatmul.mubr.f32.gmra.mrb[0].mxu0 %v7851
      %v8050 = vpop.f32.mrb[0].mxu0
      %v8051 = vadd.f32 0.0, %v8050
      %v8052 = vpop.f32.mrb[0].mxu0
      %8053 = vmatprep.mubr.f32.mxu0 0.0
      %8054 = vmatmul.mubr.f32.gmra.mrb[0].mxu0 %v7854
      %v8055 = vpop.f32.mrb[0].mxu0
      %v8056 = vadd.f32 0.0, %v8055
      %v8057 = vpop.f32.mrb[0].mxu0
      %8058 = vmatprep.mubr.f32.mxu0 0.0
      %8059 = vmatmul.mubr.f32.gmra.mrb[0].mxu0 %v7857
      %v8060 = vpop.f32.mrb[0].mxu0
      %v8061 = vadd.f32 0.0, %v8060
      %v8062 = vpop.f32.mrb[0].mxu0
      %8063 = vmatprep.mubr.f32.mxu0 0.0
      %8064 = vmatmul.mubr.f32.gmra.mrb[0].mxu0 %v7860
      %v8065 = vpop.f32.mrb[0].mxu0
      %v8066 = vadd.f32 0.0, %v8065
      %v8067 = vpop.f32.mrb[0].mxu0
      %8068 = vmatprep.mubr.f32.mxu0 0.0
      %8069 = vmatmul.mubr.f32.gmra.mrb[0].mxu0 %v7863
      %v8070 = vpop.f32.mrb[0].mxu0
      %v8071 = vadd.f32 0.0, %v8070
      %v8072 = vpop.f32.mrb[0].mxu0
      %8073 = vmatprep.mubr.f32.mxu0 0.0
      %8074 = vmatmul.mubr.f32.gmra.mrb[0].mxu0 %v7866
      %v8075 = vpop.f32.mrb[0].mxu0
      %v8076 = vadd.f32 0.0, %v8075
      %v8077 = vpop.f32.mrb[0].mxu0
      %8078 = vmatprep.mubr.f32.mxu0 0.0
      %8079 = vmatmul.mubr.f32.gmra.mrb[0].mxu0 %v7869
      %v8080 = vpop.f32.mrb[0].mxu0
      %v8081 = vadd.f32 0.0, %v8080
      %v8082 = vpop.f32.mrb[0].mxu0
      %8083 = vmatprep.mubr.f32.mxu0 0.0
      %8084 = vmatmul.mubr.f32.gmra.mrb[0].mxu0 %v7872
      %v8085 = vpop.f32.mrb[0].mxu0
      %v8086 = vadd.f32 0.0, %v8085
      %v8087 = vpop.f32.mrb[0].mxu0
      %8088 = vmatprep.mubr.f32.mxu0 0.0
      %8089 = vmatmul.mubr.f32.gmra.mrb[0].mxu0 %v7875
      %v8090 = vpop.f32.mrb[0].mxu0
      %v8091 = vadd.f32 0.0, %v8090
      %v8092 = vpop.f32.mrb[0].mxu0
      %8093 = vmatprep.mubr.f32.mxu0 0.0
      %8094 = vmatmul.mubr.f32.gmra.mrb[0].mxu0 %v7878
      %v8095 = vpop.f32.mrb[0].mxu0
      %v8096 = vadd.f32 0.0, %v8095
      %v8097 = vpop.f32.mrb[0].mxu0
      %8098 = vmatprep.mubr.f32.mxu0 0.0
      %8099 = vmatmul.mubr.f32.gmra.mrb[0].mxu0 %v7881
      %v8100 = vpop.f32.mrb[0].mxu0
      %v8101 = vadd.f32 0.0, %v8100
      %v8102 = vpop.f32.mrb[0].mxu0
      %8103 = vmatprep.mubr.f32.mxu0 0.0
      %8104 = vmatmul.mubr.f32.gmra.mrb[0].mxu0 %v7884
      %v8105 = vpop.f32.mrb[0].mxu0
      %v8106 = vadd.f32 0.0, %v8105
      %v8107 = vpop.f32.mrb[0].mxu0
      %8108 = vmatprep.mubr.f32.mxu0 0.0
      %8109 = vmatmul.mubr.f32.gmra.mrb[0].mxu0 %v7887
      %v8110 = vpop.f32.mrb[0].mxu0
      %v8111 = vadd.f32 0.0, %v8110
      %v8112 = vpop.f32.mrb[0].mxu0
      %8113 = vdwg.mxu0
      %v8114 = vadd.f32 %v7695, %v7956
      %v8115 = vadd.f32 %v7696, %v7961
      %v8116 = vadd.f32 %v7697, %v7966
      %v8117 = vadd.f32 %v7698, %v7971
      %v8118 = vadd.f32 %v7699, %v7976
      %v8119 = vadd.f32 %v7700, %v7981
      %v8120 = vadd.f32 %v7701, %v7986
      %v8121 = vadd.f32 %v7702, %v7991
      %v8122 = vadd.f32 %v7703, %v7996
      %v8123 = vadd.f32 %v7704, %v8001
      %v8124 = vadd.f32 %v7705, %v8006
      %v8125 = vadd.f32 %v7706, %v8011
      %v8126 = vadd.f32 %v7707, %v8016
      %v8127 = vadd.f32 %v7708, %v8021
      %v8128 = vadd.f32 %v7709, %v8026
      %v8129 = vadd.f32 %v7710, %v8031
      %v8130 = vadd.f32 %v7711, %v8036
      %v8131 = vadd.f32 %v7712, %v8041
      %v8132 = vadd.f32 %v7713, %v8046
      %v8133 = vadd.f32 %v7714, %v8051
      %v8134 = vadd.f32 %v7715, %v8056
      %v8135 = vadd.f32 %v7716, %v8061
      %v8136 = vadd.f32 %v7717, %v8066
      %v8137 = vadd.f32 %v7718, %v8071
      %v8138 = vadd.f32 %v7719, %v8076
      %v8139 = vadd.f32 %v7720, %v8081
      %v8140 = vadd.f32 %v7721, %v8086
      %v8141 = vadd.f32 %v7722, %v8091
      %v8142 = vadd.f32 %v7723, %v8096
      %v8143 = vadd.f32 %v7724, %v8101
      %v8144 = vadd.f32 %v7725, %v8106
      %v8145 = vadd.f32 %v7726, %v8111
      %v8146 = vld [vmem:[%s6] sm:$0x1]
      %v8148 = vlaneseq
      %v8149 = vshrl.u32 %v8148, 7
      %v8150 = vsub.s32 0, %v8149
      %v8151 = vrot.slane %v8146, %v8150
      %v8153 = vadd.f32 %v8114, %v8151
      %v8154 = vadd.f32 %v8115, %v8151
      %v8155 = vadd.f32 %v8116, %v8151
      %v8156 = vadd.f32 %v8117, %v8151
      %v8157 = vadd.f32 %v8118, %v8151
      %v8158 = vadd.f32 %v8119, %v8151
      %v8159 = vadd.f32 %v8120, %v8151
      %v8160 = vadd.f32 %v8121, %v8151
      %v8161 = vadd.f32 %v8122, %v8151
      %v8162 = vadd.f32 %v8123, %v8151
      %v8163 = vadd.f32 %v8124, %v8151
      %v8164 = vadd.f32 %v8125, %v8151
      %v8165 = vadd.f32 %v8126, %v8151
      %v8166 = vadd.f32 %v8127, %v8151
      %v8167 = vadd.f32 %v8128, %v8151
      %v8168 = vadd.f32 %v8129, %v8151
      %v8169 = vadd.f32 %v8130, %v8151
      %v8170 = vadd.f32 %v8131, %v8151
      %v8171 = vadd.f32 %v8132, %v8151
      %v8172 = vadd.f32 %v8133, %v8151
      %v8173 = vadd.f32 %v8134, %v8151
      %v8174 = vadd.f32 %v8135, %v8151
      %v8175 = vadd.f32 %v8136, %v8151
      %v8176 = vadd.f32 %v8137, %v8151
      %v8177 = vadd.f32 %v8138, %v8151
      %v8178 = vadd.f32 %v8139, %v8151
      %v8179 = vadd.f32 %v8140, %v8151
      %v8180 = vadd.f32 %v8141, %v8151
      %v8181 = vadd.f32 %v8142, %v8151
      %v8182 = vadd.f32 %v8143, %v8151
      %v8183 = vadd.f32 %v8144, %v8151
      %v8184 = vadd.f32 %v8145, %v8151
      %v8185 = vld [vmem:[%s7] sm:$0xf]
      %v8186 = vld [vmem:[%s8] sm:$0x1]
      %v8188 = vlaneseq
      %v8189 = vshrl.u32 %v8188, 7
      %v8190 = vsub.s32 0, %v8189
      %v8191 = vrot.slane %v8186, %v8190
      %v8194 = vsel %vm429, %v397, 0
      %v8197 = vsel %vm429, %v398, 0
      %v8200 = vsel %vm429, %v399, 0
      %v8203 = vsel %vm429, %v400, 0
      %v8206 = vsel %vm429, %v401, 0
      %v8209 = vsel %vm429, %v402, 0
      %v8212 = vsel %vm429, %v403, 0
      %v8215 = vsel %vm429, %v404, 0
      %v8218 = vsel %vm429, %v405, 0
      %v8221 = vsel %vm429, %v406, 0
      %v8224 = vsel %vm429, %v407, 0
      %v8227 = vsel %vm429, %v408, 0
      %v8230 = vsel %vm429, %v409, 0
      %v8233 = vsel %vm429, %v410, 0
      %v8236 = vsel %vm429, %v411, 0
      %v8239 = vsel %vm429, %v412, 0
      %v8242 = vsel %vm429, %v413, 0
      %v8245 = vsel %vm429, %v414, 0
      %v8248 = vsel %vm429, %v415, 0
      %v8251 = vsel %vm429, %v416, 0
      %v8254 = vsel %vm429, %v417, 0
      %v8257 = vsel %vm429, %v418, 0
      %v8260 = vsel %vm429, %v419, 0
      %v8263 = vsel %vm429, %v420, 0
      %v8266 = vsel %vm429, %v421, 0
      %v8269 = vsel %vm429, %v422, 0
      %v8272 = vsel %vm429, %v423, 0
      %v8275 = vsel %vm429, %v424, 0
      %v8278 = vsel %vm429, %v425, 0
      %v8281 = vsel %vm429, %v426, 0
      %v8284 = vsel %vm429, %v427, 0
      %v8287 = vsel %vm429, %v428, 0
      %v8290 = vsel %vm823, %v8185, 0
      %8292 = vmatprep.subr.mxu0 0.0
      %8293 = vmatpush1.msra.mxu0 %v8290
      %8294 = vmatprep.subr.mxu0 0.0
      %8295 = vmatpush1.msra.mxu0 0.0
      %8296 = vmatprep.subr.mxu0 0.0
      %8297 = vmatpush1.msra.mxu0 0.0
      %8298 = vmatprep.subr.mxu0 0.0
      %8299 = vmatpush1.msra.mxu0 0.0
      %8300 = vmatprep.subr.mxu0 0.0
      %8301 = vmatpush1.msra.mxu0 0.0
      %8302 = vmatprep.subr.mxu0 0.0
      %8303 = vmatpush1.msra.mxu0 0.0
      %8304 = vmatprep.subr.mxu0 0.0
      %8305 = vmatpush1.msra.mxu0 0.0
      %8306 = vmatprep.subr.mxu0 0.0
      %8307 = vmatpush1.msra.mxu0 0.0
      %8308 = vmatprep.subr.mxu0 0.0
      %8309 = vmatpush1.msra.mxu0 0.0
      %8310 = vmatprep.subr.mxu0 0.0
      %8311 = vmatpush1.msra.mxu0 0.0
      %8312 = vmatprep.subr.mxu0 0.0
      %8313 = vmatpush1.msra.mxu0 0.0
      %8314 = vmatprep.subr.mxu0 0.0
      %8315 = vmatpush1.msra.mxu0 0.0
      %8316 = vmatprep.subr.mxu0 0.0
      %8317 = vmatpush1.msra.mxu0 0.0
      %8318 = vmatprep.subr.mxu0 0.0
      %8319 = vmatpush1.msra.mxu0 0.0
      %8320 = vmatprep.subr.mxu0 0.0
      %8321 = vmatpush1.msra.mxu0 0.0
      %8322 = vmatprep.subr.mxu0 0.0
      %8323 = vmatpush1.msra.mxu0 0.0
      %8324 = vmatprep.subr.mxu0 0.0
      %8325 = vmatpush1.msra.mxu0 0.0
      %8326 = vmatprep.subr.mxu0 0.0
      %8327 = vmatpush1.msra.mxu0 0.0
      %8328 = vmatprep.subr.mxu0 0.0
      %8329 = vmatpush1.msra.mxu0 0.0
      %8330 = vmatprep.subr.mxu0 0.0
      %8331 = vmatpush1.msra.mxu0 0.0
      %8332 = vmatprep.subr.mxu0 0.0
      %8333 = vmatpush1.msra.mxu0 0.0
      %8334 = vmatprep.subr.mxu0 0.0
      %8335 = vmatpush1.msra.mxu0 0.0
      %8336 = vmatprep.subr.mxu0 0.0
      %8337 = vmatpush1.msra.mxu0 0.0
      %8338 = vmatprep.subr.mxu0 0.0
      %8339 = vmatpush1.msra.mxu0 0.0
      %8340 = vmatprep.subr.mxu0 0.0
      %8341 = vmatpush1.msra.mxu0 0.0
      %8342 = vmatprep.subr.mxu0 0.0
      %8343 = vmatpush1.msra.mxu0 0.0
      %8344 = vmatprep.subr.mxu0 0.0
      %8345 = vmatpush1.msra.mxu0 0.0
      %8346 = vmatprep.subr.mxu0 0.0
      %8347 = vmatpush1.msra.mxu0 0.0
      %8348 = vmatprep.subr.mxu0 0.0
      %8349 = vmatpush1.msra.mxu0 0.0
      %8350 = vmatprep.subr.mxu0 0.0
      %8351 = vmatpush1.msra.mxu0 0.0
      %8352 = vmatprep.subr.mxu0 0.0
      %8353 = vmatpush1.msra.mxu0 0.0
      %8354 = vmatprep.subr.mxu0 0.0
      %8355 = vmatpush1.msra.mxu0 0.0
      %8356 = vmatprep.mubr.f32.mxu0 0.0
      %8357 = vmatmul.mubr.f32.gmra.mrb[0].mxu0 %v8194
      %v8358 = vpop.f32.mrb[0].mxu0
      %v8359 = vadd.f32 %v8191, %v8358
      %v8360 = vpop.f32.mrb[0].mxu0
      %8361 = vmatprep.mubr.f32.mxu0 0.0
      %8362 = vmatmul.mubr.f32.gmra.mrb[0].mxu0 %v8197
      %v8363 = vpop.f32.mrb[0].mxu0
      %v8364 = vadd.f32 %v8191, %v8363
      %v8365 = vpop.f32.mrb[0].mxu0
      %8366 = vmatprep.mubr.f32.mxu0 0.0
      %8367 = vmatmul.mubr.f32.gmra.mrb[0].mxu0 %v8200
      %v8368 = vpop.f32.mrb[0].mxu0
      %v8369 = vadd.f32 %v8191, %v8368
      %v8370 = vpop.f32.mrb[0].mxu0
      %8371 = vmatprep.mubr.f32.mxu0 0.0
      %8372 = vmatmul.mubr.f32.gmra.mrb[0].mxu0 %v8203
      %v8373 = vpop.f32.mrb[0].mxu0
      %v8374 = vadd.f32 %v8191, %v8373
      %v8375 = vpop.f32.mrb[0].mxu0
      %8376 = vmatprep.mubr.f32.mxu0 0.0
      %8377 = vmatmul.mubr.f32.gmra.mrb[0].mxu0 %v8206
      %v8378 = vpop.f32.mrb[0].mxu0
      %v8379 = vadd.f32 %v8191, %v8378
      %v8380 = vpop.f32.mrb[0].mxu0
      %8381 = vmatprep.mubr.f32.mxu0 0.0
      %8382 = vmatmul.mubr.f32.gmra.mrb[0].mxu0 %v8209
      %v8383 = vpop.f32.mrb[0].mxu0
      %v8384 = vadd.f32 %v8191, %v8383
      %v8385 = vpop.f32.mrb[0].mxu0
      %8386 = vmatprep.mubr.f32.mxu0 0.0
      %8387 = vmatmul.mubr.f32.gmra.mrb[0].mxu0 %v8212
      %v8388 = vpop.f32.mrb[0].mxu0
      %v8389 = vadd.f32 %v8191, %v8388
      %v8390 = vpop.f32.mrb[0].mxu0
      %8391 = vmatprep.mubr.f32.mxu0 0.0
      %8392 = vmatmul.mubr.f32.gmra.mrb[0].mxu0 %v8215
      %v8393 = vpop.f32.mrb[0].mxu0
      %v8394 = vadd.f32 %v8191, %v8393
      %v8395 = vpop.f32.mrb[0].mxu0
      %8396 = vmatprep.mubr.f32.mxu0 0.0
      %8397 = vmatmul.mubr.f32.gmra.mrb[0].mxu0 %v8218
      %v8398 = vpop.f32.mrb[0].mxu0
      %v8399 = vadd.f32 %v8191, %v8398
      %v8400 = vpop.f32.mrb[0].mxu0
      %8401 = vmatprep.mubr.f32.mxu0 0.0
      %8402 = vmatmul.mubr.f32.gmra.mrb[0].mxu0 %v8221
      %v8403 = vpop.f32.mrb[0].mxu0
      %v8404 = vadd.f32 %v8191, %v8403
      %v8405 = vpop.f32.mrb[0].mxu0
      %8406 = vmatprep.mubr.f32.mxu0 0.0
      %8407 = vmatmul.mubr.f32.gmra.mrb[0].mxu0 %v8224
      %v8408 = vpop.f32.mrb[0].mxu0
      %v8409 = vadd.f32 %v8191, %v8408
      %v8410 = vpop.f32.mrb[0].mxu0
      %8411 = vmatprep.mubr.f32.mxu0 0.0
      %8412 = vmatmul.mubr.f32.gmra.mrb[0].mxu0 %v8227
      %v8413 = vpop.f32.mrb[0].mxu0
      %v8414 = vadd.f32 %v8191, %v8413
      %v8415 = vpop.f32.mrb[0].mxu0
      %8416 = vmatprep.mubr.f32.mxu0 0.0
      %8417 = vmatmul.mubr.f32.gmra.mrb[0].mxu0 %v8230
      %v8418 = vpop.f32.mrb[0].mxu0
      %v8419 = vadd.f32 %v8191, %v8418
      %v8420 = vpop.f32.mrb[0].mxu0
      %8421 = vmatprep.mubr.f32.mxu0 0.0
      %8422 = vmatmul.mubr.f32.gmra.mrb[0].mxu0 %v8233
      %v8423 = vpop.f32.mrb[0].mxu0
      %v8424 = vadd.f32 %v8191, %v8423
      %v8425 = vpop.f32.mrb[0].mxu0
      %8426 = vmatprep.mubr.f32.mxu0 0.0
      %8427 = vmatmul.mubr.f32.gmra.mrb[0].mxu0 %v8236
      %v8428 = vpop.f32.mrb[0].mxu0
      %v8429 = vadd.f32 %v8191, %v8428
      %v8430 = vpop.f32.mrb[0].mxu0
      %8431 = vmatprep.mubr.f32.mxu0 0.0
      %8432 = vmatmul.mubr.f32.gmra.mrb[0].mxu0 %v8239
      %v8433 = vpop.f32.mrb[0].mxu0
      %v8434 = vadd.f32 %v8191, %v8433
      %v8435 = vpop.f32.mrb[0].mxu0
      %8436 = vmatprep.mubr.f32.mxu0 0.0
      %8437 = vmatmul.mubr.f32.gmra.mrb[0].mxu0 %v8242
      %v8438 = vpop.f32.mrb[0].mxu0
      %v8439 = vadd.f32 %v8191, %v8438
      %v8440 = vpop.f32.mrb[0].mxu0
      %8441 = vmatprep.mubr.f32.mxu0 0.0
      %8442 = vmatmul.mubr.f32.gmra.mrb[0].mxu0 %v8245
      %v8443 = vpop.f32.mrb[0].mxu0
      %v8444 = vadd.f32 %v8191, %v8443
      %v8445 = vpop.f32.mrb[0].mxu0
      %8446 = vmatprep.mubr.f32.mxu0 0.0
      %8447 = vmatmul.mubr.f32.gmra.mrb[0].mxu0 %v8248
      %v8448 = vpop.f32.mrb[0].mxu0
      %v8449 = vadd.f32 %v8191, %v8448
      %v8450 = vpop.f32.mrb[0].mxu0
      %8451 = vmatprep.mubr.f32.mxu0 0.0
      %8452 = vmatmul.mubr.f32.gmra.mrb[0].mxu0 %v8251
      %v8453 = vpop.f32.mrb[0].mxu0
      %v8454 = vadd.f32 %v8191, %v8453
      %v8455 = vpop.f32.mrb[0].mxu0
      %8456 = vmatprep.mubr.f32.mxu0 0.0
      %8457 = vmatmul.mubr.f32.gmra.mrb[0].mxu0 %v8254
      %v8458 = vpop.f32.mrb[0].mxu0
      %v8459 = vadd.f32 %v8191, %v8458
      %v8460 = vpop.f32.mrb[0].mxu0
      %8461 = vmatprep.mubr.f32.mxu0 0.0
      %8462 = vmatmul.mubr.f32.gmra.mrb[0].mxu0 %v8257
      %v8463 = vpop.f32.mrb[0].mxu0
      %v8464 = vadd.f32 %v8191, %v8463
      %v8465 = vpop.f32.mrb[0].mxu0
      %8466 = vmatprep.mubr.f32.mxu0 0.0
      %8467 = vmatmul.mubr.f32.gmra.mrb[0].mxu0 %v8260
      %v8468 = vpop.f32.mrb[0].mxu0
      %v8469 = vadd.f32 %v8191, %v8468
      %v8470 = vpop.f32.mrb[0].mxu0
      %8471 = vmatprep.mubr.f32.mxu0 0.0
      %8472 = vmatmul.mubr.f32.gmra.mrb[0].mxu0 %v8263
      %v8473 = vpop.f32.mrb[0].mxu0
      %v8474 = vadd.f32 %v8191, %v8473
      %v8475 = vpop.f32.mrb[0].mxu0
      %8476 = vmatprep.mubr.f32.mxu0 0.0
      %8477 = vmatmul.mubr.f32.gmra.mrb[0].mxu0 %v8266
      %v8478 = vpop.f32.mrb[0].mxu0
      %v8479 = vadd.f32 %v8191, %v8478
      %v8480 = vpop.f32.mrb[0].mxu0
      %8481 = vmatprep.mubr.f32.mxu0 0.0
      %8482 = vmatmul.mubr.f32.gmra.mrb[0].mxu0 %v8269
      %v8483 = vpop.f32.mrb[0].mxu0
      %v8484 = vadd.f32 %v8191, %v8483
      %v8485 = vpop.f32.mrb[0].mxu0
      %8486 = vmatprep.mubr.f32.mxu0 0.0
      %8487 = vmatmul.mubr.f32.gmra.mrb[0].mxu0 %v8272
      %v8488 = vpop.f32.mrb[0].mxu0
      %v8489 = vadd.f32 %v8191, %v8488
      %v8490 = vpop.f32.mrb[0].mxu0
      %8491 = vmatprep.mubr.f32.mxu0 0.0
      %8492 = vmatmul.mubr.f32.gmra.mrb[0].mxu0 %v8275
      %v8493 = vpop.f32.mrb[0].mxu0
      %v8494 = vadd.f32 %v8191, %v8493
      %v8495 = vpop.f32.mrb[0].mxu0
      %8496 = vmatprep.mubr.f32.mxu0 0.0
      %8497 = vmatmul.mubr.f32.gmra.mrb[0].mxu0 %v8278
      %v8498 = vpop.f32.mrb[0].mxu0
      %v8499 = vadd.f32 %v8191, %v8498
      %v8500 = vpop.f32.mrb[0].mxu0
      %8501 = vmatprep.mubr.f32.mxu0 0.0
      %8502 = vmatmul.mubr.f32.gmra.mrb[0].mxu0 %v8281
      %v8503 = vpop.f32.mrb[0].mxu0
      %v8504 = vadd.f32 %v8191, %v8503
      %v8505 = vpop.f32.mrb[0].mxu0
      %8506 = vmatprep.mubr.f32.mxu0 0.0
      %8507 = vmatmul.mubr.f32.gmra.mrb[0].mxu0 %v8284
      %v8508 = vpop.f32.mrb[0].mxu0
      %v8509 = vadd.f32 %v8191, %v8508
      %v8510 = vpop.f32.mrb[0].mxu0
      %8511 = vmatprep.mubr.f32.mxu0 0.0
      %8512 = vmatmul.mubr.f32.gmra.mrb[0].mxu0 %v8287
      %v8513 = vpop.f32.mrb[0].mxu0
      %v8514 = vadd.f32 %v8191, %v8513
      %v8515 = vpop.f32.mrb[0].mxu0
      %8516 = vdwg.mxu0
      %v8517 = vadd.f32 %v8153, %v8359
      %v8518 = vadd.f32 %v8154, %v8364
      %v8519 = vadd.f32 %v8155, %v8369
      %v8520 = vadd.f32 %v8156, %v8374
      %v8521 = vadd.f32 %v8157, %v8379
      %v8522 = vadd.f32 %v8158, %v8384
      %v8523 = vadd.f32 %v8159, %v8389
      %v8524 = vadd.f32 %v8160, %v8394
      %v8525 = vadd.f32 %v8161, %v8399
      %v8526 = vadd.f32 %v8162, %v8404
      %v8527 = vadd.f32 %v8163, %v8409
      %v8528 = vadd.f32 %v8164, %v8414
      %v8529 = vadd.f32 %v8165, %v8419
      %v8530 = vadd.f32 %v8166, %v8424
      %v8531 = vadd.f32 %v8167, %v8429
      %v8532 = vadd.f32 %v8168, %v8434
      %v8533 = vadd.f32 %v8169, %v8439
      %v8534 = vadd.f32 %v8170, %v8444
      %v8535 = vadd.f32 %v8171, %v8449
      %v8536 = vadd.f32 %v8172, %v8454
      %v8537 = vadd.f32 %v8173, %v8459
      %v8538 = vadd.f32 %v8174, %v8464
      %v8539 = vadd.f32 %v8175, %v8469
      %v8540 = vadd.f32 %v8176, %v8474
      %v8541 = vadd.f32 %v8177, %v8479
      %v8542 = vadd.f32 %v8178, %v8484
      %v8543 = vadd.f32 %v8179, %v8489
      %v8544 = vadd.f32 %v8180, %v8494
      %v8545 = vadd.f32 %v8181, %v8499
      %v8546 = vadd.f32 %v8182, %v8504
      %v8547 = vadd.f32 %v8183, %v8509
      %v8548 = vadd.f32 %v8184, %v8514
      %v8549 = vmax.f32 %v8517, 0.0
      %v8550 = vmax.f32 %v8518, 0.0
      %v8551 = vmax.f32 %v8519, 0.0
      %v8552 = vmax.f32 %v8520, 0.0
      %v8553 = vmax.f32 %v8521, 0.0
      %v8554 = vmax.f32 %v8522, 0.0
      %v8555 = vmax.f32 %v8523, 0.0
      %v8556 = vmax.f32 %v8524, 0.0
      %v8557 = vmax.f32 %v8525, 0.0
      %v8558 = vmax.f32 %v8526, 0.0
      %v8559 = vmax.f32 %v8527, 0.0
      %v8560 = vmax.f32 %v8528, 0.0
      %v8561 = vmax.f32 %v8529, 0.0
      %v8562 = vmax.f32 %v8530, 0.0
      %v8563 = vmax.f32 %v8531, 0.0
      %v8564 = vmax.f32 %v8532, 0.0
      %v8565 = vmax.f32 %v8533, 0.0
      %v8566 = vmax.f32 %v8534, 0.0
      %v8567 = vmax.f32 %v8535, 0.0
      %v8568 = vmax.f32 %v8536, 0.0
      %v8569 = vmax.f32 %v8537, 0.0
      %v8570 = vmax.f32 %v8538, 0.0
      %v8571 = vmax.f32 %v8539, 0.0
      %v8572 = vmax.f32 %v8540, 0.0
      %v8573 = vmax.f32 %v8541, 0.0
      %v8574 = vmax.f32 %v8542, 0.0
      %v8575 = vmax.f32 %v8543, 0.0
      %v8576 = vmax.f32 %v8544, 0.0
      %v8577 = vmax.f32 %v8545, 0.0
      %v8578 = vmax.f32 %v8546, 0.0
      %v8579 = vmax.f32 %v8547, 0.0
      %v8580 = vmax.f32 %v8548, 0.0
      %8581 = vst.msk [vmem:[%s332] sm:$0xff] %vm4497, %v8549
      %8582 = vst.msk [vmem:[%s332 + $0x8] sm:$0xff] %vm4497, %v8550
      %8583 = vst.msk [vmem:[%s332 + $0x10] sm:$0xff] %vm4497, %v8551
      %8584 = vst.msk [vmem:[%s332 + $0x18] sm:$0xff] %vm4497, %v8552
      %8585 = vst.msk [vmem:[%s332 + $0x20] sm:$0xff] %vm4497, %v8553
      %8586 = vst.msk [vmem:[%s332 + $0x28] sm:$0xff] %vm4497, %v8554
      %8587 = vst.msk [vmem:[%s332 + $0x30] sm:$0xff] %vm4497, %v8555
      %8588 = vst.msk [vmem:[%s332 + $0x38] sm:$0xff] %vm4497, %v8556
      %8589 = vst.msk [vmem:[%s332 + $0x40] sm:$0xff] %vm4497, %v8557
      %8590 = vst.msk [vmem:[%s332 + $0x48] sm:$0xff] %vm4497, %v8558
      %8591 = vst.msk [vmem:[%s332 + $0x50] sm:$0xff] %vm4497, %v8559
      %8592 = vst.msk [vmem:[%s332 + $0x58] sm:$0xff] %vm4497, %v8560
      %8593 = vst.msk [vmem:[%s332 + $0x60] sm:$0xff] %vm4497, %v8561
      %8594 = vst.msk [vmem:[%s332 + $0x68] sm:$0xff] %vm4497, %v8562
      %8595 = vst.msk [vmem:[%s332 + $0x70] sm:$0xff] %vm4497, %v8563
      %8596 = vst.msk [vmem:[%s332 + $0x78] sm:$0xff] %vm4497, %v8564
      %8597 = vst.msk [vmem:[%s332 + $0x80] sm:$0xff] %vm4497, %v8565
      %8598 = vst.msk [vmem:[%s332 + $0x88] sm:$0xff] %vm4497, %v8566
      %8599 = vst.msk [vmem:[%s332 + $0x90] sm:$0xff] %vm4497, %v8567
      %8600 = vst.msk [vmem:[%s332 + $0x98] sm:$0xff] %vm4497, %v8568
      %8601 = vst.msk [vmem:[%s332 + $0xa0] sm:$0xff] %vm4497, %v8569
      %8602 = vst.msk [vmem:[%s332 + $0xa8] sm:$0xff] %vm4497, %v8570
      %8603 = vst.msk [vmem:[%s332 + $0xb0] sm:$0xff] %vm4497, %v8571
      %8604 = vst.msk [vmem:[%s332 + $0xb8] sm:$0xff] %vm4497, %v8572
      %8605 = vst.msk [vmem:[%s332 + $0xc0] sm:$0xff] %vm4497, %v8573
      %8606 = vst.msk [vmem:[%s332 + $0xc8] sm:$0xff] %vm4497, %v8574
      %8607 = vst.msk [vmem:[%s332 + $0xd0] sm:$0xff] %vm4497, %v8575
      %8608 = vst.msk [vmem:[%s332 + $0xd8] sm:$0xff] %vm4497, %v8576
      %8609 = vst.msk [vmem:[%s332 + $0xe0] sm:$0xff] %vm4497, %v8577
      %8610 = vst.msk [vmem:[%s332 + $0xe8] sm:$0xff] %vm4497, %v8578
      %8611 = vst.msk [vmem:[%s332 + $0xf0] sm:$0xff] %vm4497, %v8579
      %8612 = vst.msk [vmem:[%s332 + $0xf8] sm:$0xff] %vm4497, %v8580
      %p8613 = scmp.lt.s32.totalorder %s20, 1
      %s8614 = scalar_select %p8613, %s20, 1
      %s8615 = smul.addr %s8614, 32
      %s8616 = smul.addr %s8615, 8
      %s8617 = scalar_lea.vmem %s9, %s8616
      // Predicated region
      $region57: #{tpu_custom_call.1} parent=55 // pred_check
        %p8618 = pneg %p232
      $region58: #{tpu_custom_call.1} parent=55 // pred_check_branch
        %8620 = sbr.rel (%p8618) target = $region60
      $region59: #{tpu_custom_call.1} parent=55 // pred_region
        _
      $region60: #{tpu_custom_call.1} parent=55 // pred_fallthru
        _
    $region56: #{tpu_custom_call.1} parent=5 // pred_fallthru
      _
    %p8621 = scmp.le.s32.totalorder 2, %s15
    // Predicated region
    $region61: #{tpu_custom_call.1} parent=5 // pred_check
      %p8622 = pneg %p8621
    $region62: #{tpu_custom_call.1} parent=5 // pred_check_branch
      %8624 = sbr.rel (%p8622) target = $region64
    $region63: #{tpu_custom_call.1} parent=5 // pred_region
      %s8625 = ssub.s32 %s15, 2
      // Predicated region
      $region65: #{tpu_custom_call.1} parent=63 // pred_check
        %p8626 = pneg %p238
      $region66: #{tpu_custom_call.1} parent=63 // pred_check_branch
        %8628 = sbr.rel (%p8626) target = $region68
      $region67: #{tpu_custom_call.1} parent=63 // pred_region
        %p8629 = scmp.lt.s32.totalorder %s21, 1
        %s8630 = scalar_select %p8629, %s21, 1
        %s8631 = smul.addr %s8630, 32
        %s8632 = smul.addr %s8631, 8
        %s8633 = scalar_lea.vmem %s9, %s8632
      $region68: #{tpu_custom_call.1} parent=63 // pred_fallthru
        _
    $region64: #{tpu_custom_call.1} parent=5 // pred_fallthru
      _
  $region6: #{tpu_custom_call.1} parent=0 // loop_footer
    %s19 = sadd.s32 1, %s15
  $region7: #{tpu_custom_call.1} parent=0 // loop_footer_branch
    %14 = sbr.rel target = $region3
  $region8: #{tpu_custom_call.1} parent=0 // loop_exit
    _

</llo_original>
